<compile_context>
chip_gen: v7x
topology: tpu7x:2x2x1
jax: 0.10.0
libtpu: 0.0.40
codegen_flags: <defaults>
</compile_context>

<pallas_src>
import numpy as np
import jax
import jax.numpy as jnp
from jax import lax
from jax.experimental import pallas as pl
from jax.experimental.pallas import tpu as pltpu

NUM_POINT = 21      # num_point hard-coded in AAGCN.__init__
NUM_SUBSET = 3      # spatial-strategy adjacency subsets
COFF = 4            # coff_embedding -> inter_channels = out_channels // 4
BN_EPS = 1e-5
V_PAD = 128         # lane-dense padding of the node axis (21 -> 128)


def build_adjacency(num_point):
    # TODO(synk): Graph(layout='inhard', strategy='spatial') source not provided;
    # deterministic stand-in: chain skeleton, spatial partition (self/in/out),
    # column-normalized like normalize_digraph.
    eye = np.eye(num_point, dtype=np.float32)
    inward = np.zeros((num_point, num_point), dtype=np.float32)
    for i in range(1, num_point):
        inward[i, i - 1] = 1.0
    outward = inward.T.copy()

    def col_norm(a):
        d = a.sum(axis=0)
        dn = np.where(d > 0, 1.0 / np.maximum(d, 1e-12), 0.0)
        return (a * dn[None, :]).astype(np.float32)

    return np.stack([col_norm(eye), col_norm(inward), col_norm(outward)])


def toeplitz_from_conv1d(w, length, pad):
    """Conv1d(C->1, K, padding=pad) weight (1, C, K) -> dense (C*length, length)
    so conv1d(x)[l] == (x.reshape(1, C*length) @ M)[0, l]  (bias added separately)."""
    Cc, K = w.shape[1], w.shape[2]
    M = np.zeros((Cc, length, length), dtype=np.float32)
    for l in range(length):
        for k in range(K):
            u = l - pad + k
            if 0 <= u < length:
                M[:, u, l] = w[0, :, k]
    return M.reshape(Cc * length, length)


# ----------------------------- Pallas kernel --------------------------------
def aagcn_kernel(scal_ref, x_ref, dbn_ref, pa_ref, wab_ref, bab_ref,
                 wd_ref, wdn_ref, pbias_ref, wsa_ref, kta_ref,
                 w1_ref, b1_ref, w2_ref, b2_ref, o_ref):
    _, C, T, Vp = x_ref.shape
    n_sub, two_ic, _ = wab_ref.shape
    interC = two_ic // 2
    outC = wd_ref.shape[1]
    K_sa = wsa_ref.shape[0]
    pad_sa = (K_sa - 1) // 2
    f32 = jnp.float32
    bf16 = jnp.bfloat16

    alpha = scal_ref[0]      # adaptive-adjacency mixing coefficient
    b_sa = scal_ref[1]       # spatial-attention conv bias
    b_ta = scal_ref[2]       # temporal-attention conv bias

    # data_bn (eval mode), folded to a per-(channel, node) affine.  Padded
    # lanes of x / scale / shift are all zero, so they stay zero here.
    xs = x_ref[0] * dbn_ref[0][:, None, :] + dbn_ref[1][:, None, :]   # (C, T, Vp)
    x2 = xs.reshape(C, T * Vp)                    # 1x1-conv view
    x_g = xs.reshape(C * T, Vp).astype(bf16)      # graph-matmul view

    y = jnp.zeros((outC, T * Vp), f32)
    for i in range(n_sub):                        # 3 subsets, unrolled
        # conv_a / conv_b fused; the 1/(interC*T) norm is pre-folded into the b half
        ab = jnp.dot(wab_ref[i], x2, preferred_element_type=f32) + bab_ref[i]
        xa = ab[:interC].reshape(interC * T, Vp).astype(bf16)
        xb = ab[interC:].reshape(interC * T, Vp).astype(bf16)
        # S[u, v] = sum_{c,t} xa[c,t,u] * xb[c,t,v]
        s = lax.dot_general(xa, xb, (((0,), (0,)), ((), ())),
                            preferred_element_type=f32)
        a1 = (pa_ref[i] + jnp.tanh(s) * alpha).astype(bf16)           # (Vp, Vp)
        xz = jnp.dot(x_g, a1, preferred_element_type=f32).reshape(C, T * Vp)
        y = y + jnp.dot(wd_ref[i], xz, preferred_element_type=f32)    # self.bn folded in

    # residual "down" branch (1x1 conv; both BatchNorm2d folded into the
    # weights and the single post-bias), then ReLU.
    y = y + jnp.dot(wdn_ref[...], x2, preferred_element_type=f32) + pbias_ref[...]
    y3 = jnp.maximum(y, 0.0).reshape(outC, T, Vp)

    # keep padded lanes exactly zero so the V-reductions below stay exact
    vmask = (lax.broadcasted_iota(jnp.int32, (1, 1, Vp), 2) < NUM_POINT).astype(f32)
    y3 = y3 * vmask

    # --- spatial attention: Conv1d(outC->1, K_sa, pad) over nodes ------------
    se_s = jnp.mean(y3, axis=1)                                       # (outC, Vp)
    taps = jnp.dot(wsa_ref[...], se_s, preferred_element_type=f32)    # (K_sa, Vp)
    zpad = jnp.zeros((K_sa, pad_sa), f32)
    taps_ext = jnp.concatenate([zpad, taps, zpad], axis=1)            # (K_sa, Vp+2*pad)
    conv = jnp.zeros((1, Vp), f32)
    for k in range(K_sa):                         # static diagonal gather
        conv = conv + lax.slice(taps_ext, (k, k), (k + 1, k + Vp))
    sa = jax.nn.sigmoid(conv + b_sa)                                  # (1, Vp)
    y3 = y3 * sa[:, None, :] + y3

    # --- temporal attention: Conv1d(outC->1, 9, pad=4) over time -------------
    se_t = jnp.sum(y3, axis=2) * (1.0 / NUM_POINT)                    # (outC, T)
    ta = jnp.dot(se_t.reshape(1, outC * T), kta_ref[...],
                 preferred_element_type=f32) + b_ta
    ta = jax.nn.sigmoid(ta)                                           # (1, T)
    y3 = y3 * ta.reshape(1, T, 1) + y3

    # --- channel attention: squeeze-excite MLP -------------------------------
    se_c = jnp.sum(jnp.sum(y3, axis=2), axis=1, keepdims=True) * (1.0 / (T * NUM_POINT))
    h = jnp.maximum(jnp.dot(w1_ref[...], se_c, preferred_element_type=f32)
                    + b1_ref[...], 0.0)                               # (outC//2, 1)
    ca = jax.nn.sigmoid(jnp.dot(w2_ref[...], h, preferred_element_type=f32)
                        + b2_ref[...])                                # (outC, 1)
    y3 = y3 * ca[:, :, None] + y3

    # AAGCN_unit final ReLU
    o_ref[0] = jnp.maximum(y3, 0.0)


# ------------------------------ wrapper --------------------------------------
def _bn_fold(raw):
    g, b, m, v = raw
    s = g / jnp.sqrt(v + BN_EPS)
    return s, b - m * s


def aagcn_forward(x, a_unused, p):
    """AAGCN.forward(x, A) -- the module never uses its A argument."""
    del a_unused
    N, C, T, V = x.shape
    outC = p["wd"].shape[1]
    interC = p["wa"].shape[1]
    Vp = V_PAD
    assert V <= Vp and T % 8 == 0, (V, T)
    f32 = jnp.float32

    # Exact reproduction of the module's permute/view dance around data_bn
    # (a pure data permutation; the BN affine is folded below, in-kernel).
    xp = jnp.transpose(x, (0, 3, 2, 1)).reshape(N, V * C, T)
    xp = xp.reshape(N, V, C, T).transpose(0, 2, 3, 1).reshape(N, C, T, V)
    x_p = jnp.pad(xp.astype(f32), ((0, 0), (0, 0), (0, 0), (0, Vp - V)))

    # data_bn folded to (C, V) scale/shift (BN channel j = v*C + c), V-padded.
    dsc, dsh = _bn_fold(p["data_bn_raw"])
    dbn = jnp.stack([dsc.reshape(V, C).T, dsh.reshape(V, C).T])       # (2, C, V)
    dbn = jnp.pad(dbn, ((0, 0), (0, 0), (0, Vp - V)))

    pa = jnp.pad(p["pa"].astype(f32), ((0, 0), (0, Vp - V), (0, Vp - V)))

    # conv_a / conv_b stacked; 1/(interC*T) similarity norm folded into b half.
    norm = 1.0 / float(interC * T)
    wab = jnp.concatenate([p["wa"], p["wb"] * norm], axis=1)          # (3, 2*ic, C)
    bab = jnp.concatenate([p["ba"], p["bb"] * norm], axis=1)          # (3, 2*ic, 1)

    # fold self.bn into conv_d, the residual-path BN into the down conv, and
    # gather every additive per-channel term into a single post-bias.
    gsc, gsh = _bn_fold(p["bn_raw"])
    nsc, nsh = _bn_fold(p["down_bn_raw"])
    wd_f = p["wd"] * gsc[None, :, None]
    wdn_f = p["wdn"] * nsc[:, None]
    pbias = (gsc * jnp.sum(p["bd"][:, :, 0], axis=0) + gsh
             + nsc * p["bdn"][:, 0] + nsh).reshape(outC, 1)

    wsa = p["w_sa"][0].T                                              # (K_sa, outC)
    kta = jnp.asarray(toeplitz_from_conv1d(np.asarray(p["w_ta"]), T, 4))
    w1, b1 = p["w1"], p["b1"].reshape(-1, 1)
    w2, b2 = p["w2"], p["b2"].reshape(-1, 1)

    scal = jnp.array([p["alpha"], p["b_sa"], p["b_ta"]], dtype=f32)   # SMEM scalars

    args = [scal, x_p, dbn, pa, wab, bab, wd_f, wdn_f, pbias, wsa, kta,
            w1, b1, w2, b2]

    def const_spec(arr):
        nd = arr.ndim
        return pl.BlockSpec(arr.shape, lambda n, s, _nd=nd: (0,) * _nd)

    in_specs = [pl.BlockSpec((1, C, T, Vp), lambda n, s: (n, 0, 0, 0))]
    in_specs += [const_spec(a) for a in args[2:]]

    out = pl.pallas_call(
        aagcn_kernel,
        out_shape=jax.ShapeDtypeStruct((N, outC, T, Vp), f32),
        grid_spec=pltpu.PrefetchScalarGridSpec(
            num_scalar_prefetch=1,
            grid=(N,),
            in_specs=in_specs,
            out_specs=pl.BlockSpec((1, outC, T, Vp), lambda n, s: (n, 0, 0, 0)),
        ),
        compiler_params=pltpu.CompilerParams(
            dimension_semantics=("parallel",)),
    )(*args)
    return out[..., :V]


# ------------------------- deterministic parameters --------------------------
def init_params(key, in_channels, out_channels, T):
    C, V, outC = in_channels, NUM_POINT, out_channels
    interC = out_channels // COFF
    keys = iter(jax.random.split(key, 64))

    def normal(shape, scale=0.1):
        return scale * jax.random.normal(next(keys), shape, dtype=jnp.float32)

    def bn_raw(n):
        g = 1.0 + 0.1 * jax.random.normal(next(keys), (n,), jnp.float32)
        b = 0.05 * jax.random.normal(next(keys), (n,), jnp.float32)
        m = 0.05 * jax.random.normal(next(keys), (n,), jnp.float32)
        v = 1.0 + 0.1 * jnp.abs(jax.random.normal(next(keys), (n,), jnp.float32))
        return (g, b, m, v)

    p = {}
    p["data_bn_raw"] = bn_raw(V * C)                        # BatchNorm1d(C*V)
    p["pa"] = jnp.asarray(build_adjacency(V))               # adaptive adjacency PA
    p["alpha"] = 0.3      # PyTorch inits alpha=0; nonzero exercises the adaptive path
    p["wa"] = normal((NUM_SUBSET, interC, C)); p["ba"] = normal((NUM_SUBSET, interC, 1), 0.05)
    p["wb"] = normal((NUM_SUBSET, interC, C)); p["bb"] = normal((NUM_SUBSET, interC, 1), 0.05)
    p["wd"] = normal((NUM_SUBSET, outC, C));   p["bd"] = normal((NUM_SUBSET, outC, 1), 0.05)
    p["bn_raw"] = bn_raw(outC)                              # self.bn
    p["wdn"] = normal((outC, C)); p["bdn"] = normal((outC, 1), 0.05)   # down conv 1x1
    p["down_bn_raw"] = bn_raw(outC)                         # down BN
    ker_jpt = V - 1 if V % 2 == 0 else V
    p["pad_sa"] = (ker_jpt - 1) // 2
    p["w_sa"] = normal((1, outC, ker_jpt))
    p["b_sa"] = float(0.05 * jax.random.normal(next(keys), (), jnp.float32))
    p["w_ta"] = normal((1, outC, 9))
    p["b_ta"] = float(0.05 * jax.random.normal(next(keys), (), jnp.float32))
    p["w1"] = normal((outC // 2, outC)); p["b1"] = normal((outC // 2,), 0.05)
    p["w2"] = normal((outC, outC // 2)); p["b2"] = normal((outC,), 0.05)
    return p


# ------------------------------ pure-JAX reference ----------------------------
def _conv1d_same(x, w, bias, pad):
    # x: (C, L), w: (1, C, K) -> (L,)
    L, K = x.shape[1], w.shape[2]
    xp = jnp.pad(x, ((0, 0), (pad, pad)))
    cols = [jnp.sum(xp[:, l:l + K] * w[0], axis=(0, 1)) for l in range(L)]
    return jnp.stack(cols) + bias


def reference_forward(x, p):
    N, C, T, V = x.shape
    outC, interC = p["wd"].shape[1], p["wa"].shape[1]
    g, b, m, v = p["data_bn_raw"]

    x1 = jnp.transpose(x, (0, 3, 2, 1)).reshape(N, V * C, T)
    scale = g / jnp.sqrt(v + BN_EPS)
    x1 = (x1 - m[None, :, None]) * scale[None, :, None] + b[None, :, None]
    x1 = x1.reshape(N, V, C, T).transpose(0, 2, 3, 1).reshape(N, C, T, V)

    gsc, gsh = _bn_fold(p["bn_raw"])
    nsc, nsh = _bn_fold(p["down_bn_raw"])
    alpha = p["alpha"]
    outs = []
    for n in range(N):
        xs = x1[n]
        x2 = xs.reshape(C, T * V)
        y = jnp.zeros((outC, T * V), jnp.float32)
        for i in range(NUM_SUBSET):
            xa = (p["wa"][i] @ x2 + p["ba"][i]).reshape(interC * T, V)
            xb = (p["wb"][i] @ x2 + p["bb"][i]).reshape(interC * T, V)
            s = jnp.tanh((xa.T @ xb) / float(interC * T))
            a1 = p["pa"][i] + alpha * s
            xz = (xs.reshape(C * T, V) @ a1).reshape(C, T * V)
            y = y + p["wd"][i] @ xz + p["bd"][i]
        y = y * gsc[:, None] + gsh[:, None]
        d = (p["wdn"] @ x2 + p["bdn"]) * nsc[:, None] + nsh[:, None]
        y = jnp.maximum(y + d, 0.0).reshape(outC, T, V)

        se = y.mean(axis=1)
        sa = jax.nn.sigmoid(_conv1d_same(se, p["w_sa"], p["b_sa"], p["pad_sa"]))
        y = y * sa[None, None, :] + y
        se = y.mean(axis=2)
        ta = jax.nn.sigmoid(_conv1d_same(se, p["w_ta"], p["b_ta"], 4))
        y = y * ta[None, :, None] + y
        se = y.mean(axis=(1, 2))
        h = jnp.maximum(p["w1"] @ se + p["b1"], 0.0)
        ca = jax.nn.sigmoid(p["w2"] @ h + p["b2"])
        y = y * ca[:, None, None] + y
        outs.append(jnp.maximum(y, 0.0))
    return jnp.stack(outs)


if __name__ == "__main__":
    N, C_in, C_out, T = 2, 4, 32, 8
    V = NUM_POINT

    key = jax.random.PRNGKey(0)
    kx, kp = jax.random.split(key)
    x = jax.random.normal(kx, (N, C_in, T, V), dtype=jnp.float32)
    A_in = jnp.asarray(build_adjacency(V))   # (K, V, V); unused by forward (matches module)

    params = init_params(kp, C_in, C_out, T)

    out = jax.block_until_ready(aagcn_forward(x, A_in, params))
    ref = jax.block_until_ready(reference_forward(x, params))

    assert out.shape == (N, C_out, T, V), out.shape
    err = float(jnp.max(jnp.abs(out - ref)))
    # 1% of the output scale (bf16 operands on the two large-K MXU contractions)
    tol = 1e-2 * (1.0 + float(jnp.max(jnp.abs(ref))))
    if not np.isfinite(err) or err > tol:
        raise SystemExit(f"mismatch vs reference: max abs err = {err} (tol {tol})")
    print("KERNEL_OK")
</pallas_src>

<mosaic_0001>
module attributes {stable_mosaic.version = 11 : i64} {
  func.func @aagcn_kernel(%arg0: i32, %arg1: memref<3xf32, #tpu.memory_space<smem>>, %arg2: memref<1x4x8x128xf32, #tpu.memory_space<vmem>>, %arg3: memref<2x4x128xf32, #tpu.memory_space<vmem>>, %arg4: memref<3x128x128xf32, #tpu.memory_space<vmem>>, %arg5: memref<3x16x4xf32, #tpu.memory_space<vmem>>, %arg6: memref<3x16x1xf32, #tpu.memory_space<vmem>>, %arg7: memref<3x32x4xf32, #tpu.memory_space<vmem>>, %arg8: memref<32x4xf32, #tpu.memory_space<vmem>>, %arg9: memref<32x1xf32, #tpu.memory_space<vmem>>, %arg10: memref<21x32xf32, #tpu.memory_space<vmem>>, %arg11: memref<256x8xf32, #tpu.memory_space<vmem>>, %arg12: memref<16x32xf32, #tpu.memory_space<vmem>>, %arg13: memref<16x1xf32, #tpu.memory_space<vmem>>, %arg14: memref<32x16xf32, #tpu.memory_space<vmem>>, %arg15: memref<32x1xf32, #tpu.memory_space<vmem>>, %arg16: memref<1x32x8x128xf32, #tpu.memory_space<vmem>>) attributes {dimension_semantics = [#tpu.dimension_semantics<parallel>], iteration_bounds = array<i64: 2>, scalar_prefetch = 1 : i64, scratch_operands = 0 : i64, tpu.core_type = #tpu.core_type<tc>, window_params = [{transform_indices = @transform_0, window_bounds = array<i64: 1, 4, 8, 128>}, {pipeline_mode = #tpu.pipeline_mode<synchronous>, transform_indices = @transform_1, window_bounds = array<i64: 2, 4, 128>}, {pipeline_mode = #tpu.pipeline_mode<synchronous>, transform_indices = @transform_2, window_bounds = array<i64: 3, 128, 128>}, {pipeline_mode = #tpu.pipeline_mode<synchronous>, transform_indices = @transform_3, window_bounds = array<i64: 3, 16, 4>}, {pipeline_mode = #tpu.pipeline_mode<synchronous>, transform_indices = @transform_4, window_bounds = array<i64: 3, 16, 1>}, {pipeline_mode = #tpu.pipeline_mode<synchronous>, transform_indices = @transform_5, window_bounds = array<i64: 3, 32, 4>}, {pipeline_mode = #tpu.pipeline_mode<synchronous>, transform_indices = @transform_6, window_bounds = array<i64: 32, 4>}, {pipeline_mode = #tpu.pipeline_mode<synchronous>, transform_indices = @transform_7, window_bounds = array<i64: 32, 1>}, {pipeline_mode = #tpu.pipeline_mode<synchronous>, transform_indices = @transform_8, window_bounds = array<i64: 21, 32>}, {pipeline_mode = #tpu.pipeline_mode<synchronous>, transform_indices = @transform_9, window_bounds = array<i64: 256, 8>}, {pipeline_mode = #tpu.pipeline_mode<synchronous>, transform_indices = @transform_10, window_bounds = array<i64: 16, 32>}, {pipeline_mode = #tpu.pipeline_mode<synchronous>, transform_indices = @transform_11, window_bounds = array<i64: 16, 1>}, {pipeline_mode = #tpu.pipeline_mode<synchronous>, transform_indices = @transform_12, window_bounds = array<i64: 32, 16>}, {pipeline_mode = #tpu.pipeline_mode<synchronous>, transform_indices = @transform_13, window_bounds = array<i64: 32, 1>}, {transform_indices = @transform_14, window_bounds = array<i64: 1, 32, 8, 128>}]} {
    %c0 = arith.constant 0 : index
    %0 = memref.load %arg1[%c0] : memref<3xf32, #tpu.memory_space<smem>>
    %c1 = arith.constant 1 : index
    %1 = memref.load %arg1[%c1] : memref<3xf32, #tpu.memory_space<smem>>
    %c2 = arith.constant 2 : index
    %2 = memref.load %arg1[%c2] : memref<3xf32, #tpu.memory_space<smem>>
    %c0_0 = arith.constant 0 : index
    %c0_1 = arith.constant 0 : index
    %c0_2 = arith.constant 0 : index
    %c0_3 = arith.constant 0 : index
    %3 = vector.load %arg2[%c0_0, %c0_1, %c0_2, %c0_3] : memref<1x4x8x128xf32, #tpu.memory_space<vmem>>, vector<1x4x8x128xf32>
    %4 = vector.shape_cast %3 : vector<1x4x8x128xf32> to vector<4x8x128xf32>
    %c0_4 = arith.constant 0 : index
    %c0_5 = arith.constant 0 : index
    %c0_6 = arith.constant 0 : index
    %5 = vector.load %arg3[%c0_4, %c0_5, %c0_6] : memref<2x4x128xf32, #tpu.memory_space<vmem>>, vector<1x4x128xf32>
    %6 = vector.shape_cast %5 : vector<1x4x128xf32> to vector<4x128xf32>
    %7 = vector.shape_cast %6 : vector<4x128xf32> to vector<4x1x128xf32>
    %8 = vector.broadcast %7 : vector<4x1x128xf32> to vector<4x8x128xf32>
    %9 = arith.mulf %4, %8 : vector<4x8x128xf32>
    %c1_7 = arith.constant 1 : index
    %c0_8 = arith.constant 0 : index
    %c0_9 = arith.constant 0 : index
    %10 = vector.load %arg3[%c1_7, %c0_8, %c0_9] : memref<2x4x128xf32, #tpu.memory_space<vmem>>, vector<1x4x128xf32>
    %11 = vector.shape_cast %10 : vector<1x4x128xf32> to vector<4x128xf32>
    %12 = vector.shape_cast %11 : vector<4x128xf32> to vector<4x1x128xf32>
    %13 = vector.broadcast %12 : vector<4x1x128xf32> to vector<4x8x128xf32>
    %14 = arith.addf %9, %13 : vector<4x8x128xf32>
    %15 = vector.shape_cast %14 : vector<4x8x128xf32> to vector<4x1024xf32>
    %16 = vector.shape_cast %14 : vector<4x8x128xf32> to vector<32x128xf32>
    %17 = arith.truncf %16 : vector<32x128xf32> to vector<32x128xbf16>
    %cst = arith.constant 0.000000e+00 : f32
    %18 = vector.broadcast %cst : f32 to vector<32x1024xf32>
    %c0_10 = arith.constant 0 : index
    %c0_11 = arith.constant 0 : index
    %c0_12 = arith.constant 0 : index
    %19 = vector.load %arg5[%c0_10, %c0_11, %c0_12] : memref<3x16x4xf32, #tpu.memory_space<vmem>>, vector<1x16x4xf32>
    %20 = vector.shape_cast %19 : vector<1x16x4xf32> to vector<16x4xf32>
    %cst_13 = arith.constant dense<0.000000e+00> : vector<16x1024xf32>
    %21 = tpu.matmul %20, %15, %cst_13 {dimension_numbers = #tpu.dot_dimension_numbers<[1], [0], [0], [1], [0, 0, 1, 1], [], []>} : vector<16x4xf32>, vector<4x1024xf32>, vector<16x1024xf32> -> vector<16x1024xf32>
    %c0_14 = arith.constant 0 : index
    %c0_15 = arith.constant 0 : index
    %c0_16 = arith.constant 0 : index
    %22 = vector.load %arg6[%c0_14, %c0_15, %c0_16] : memref<3x16x1xf32, #tpu.memory_space<vmem>>, vector<1x16x1xf32>
    %23 = vector.shape_cast %22 : vector<1x16x1xf32> to vector<16x1xf32>
    %24 = vector.broadcast %23 : vector<16x1xf32> to vector<16x1024xf32>
    %25 = arith.addf %21, %24 : vector<16x1024xf32>
    %26 = vector.extract_strided_slice %25 {offsets = [0, 0], sizes = [8, 1024], strides = [1, 1]} : vector<16x1024xf32> to vector<8x1024xf32>
    %27 = vector.shape_cast %26 : vector<8x1024xf32> to vector<64x128xf32>
    %28 = arith.truncf %27 : vector<64x128xf32> to vector<64x128xbf16>
    %29 = vector.extract_strided_slice %25 {offsets = [8, 0], sizes = [8, 1024], strides = [1, 1]} : vector<16x1024xf32> to vector<8x1024xf32>
    %30 = vector.shape_cast %29 : vector<8x1024xf32> to vector<64x128xf32>
    %31 = arith.truncf %30 : vector<64x128xf32> to vector<64x128xbf16>
    %cst_17 = arith.constant dense<0.000000e+00> : vector<128x128xf32>
    %32 = tpu.matmul %28, %31, %cst_17 {dimension_numbers = #tpu.dot_dimension_numbers<[0], [0], [1], [1], [0, 1, 1, 1], [], []>} : vector<64x128xbf16>, vector<64x128xbf16>, vector<128x128xf32> -> vector<128x128xf32>
    %c0_18 = arith.constant 0 : index
    %c0_19 = arith.constant 0 : index
    %c0_20 = arith.constant 0 : index
    %33 = vector.load %arg4[%c0_18, %c0_19, %c0_20] : memref<3x128x128xf32, #tpu.memory_space<vmem>>, vector<1x128x128xf32>
    %34 = vector.shape_cast %33 : vector<1x128x128xf32> to vector<128x128xf32>
    %35 = math.tanh %32 : vector<128x128xf32>
    %36 = vector.broadcast %0 : f32 to vector<128x128xf32>
    %37 = arith.mulf %35, %36 : vector<128x128xf32>
    %38 = arith.addf %34, %37 : vector<128x128xf32>
    %39 = arith.truncf %38 : vector<128x128xf32> to vector<128x128xbf16>
    %cst_21 = arith.constant dense<0.000000e+00> : vector<32x128xf32>
    %40 = tpu.matmul %17, %39, %cst_21 {dimension_numbers = #tpu.dot_dimension_numbers<[1], [0], [0], [1], [0, 0, 1, 1], [], []>} : vector<32x128xbf16>, vector<128x128xbf16>, vector<32x128xf32> -> vector<32x128xf32>
    %41 = vector.shape_cast %40 : vector<32x128xf32> to vector<4x1024xf32>
    %c0_22 = arith.constant 0 : index
    %c0_23 = arith.constant 0 : index
    %c0_24 = arith.constant 0 : index
    %42 = vector.load %arg7[%c0_22, %c0_23, %c0_24] : memref<3x32x4xf32, #tpu.memory_space<vmem>>, vector<1x32x4xf32>
    %43 = vector.shape_cast %42 : vector<1x32x4xf32> to vector<32x4xf32>
    %cst_25 = arith.constant dense<0.000000e+00> : vector<32x1024xf32>
    %44 = tpu.matmul %43, %41, %cst_25 {dimension_numbers = #tpu.dot_dimension_numbers<[1], [0], [0], [1], [0, 0, 1, 1], [], []>} : vector<32x4xf32>, vector<4x1024xf32>, vector<32x1024xf32> -> vector<32x1024xf32>
    %45 = arith.addf %18, %44 : vector<32x1024xf32>
    %c1_26 = arith.constant 1 : index
    %c0_27 = arith.constant 0 : index
    %c0_28 = arith.constant 0 : index
    %46 = vector.load %arg5[%c1_26, %c0_27, %c0_28] : memref<3x16x4xf32, #tpu.memory_space<vmem>>, vector<1x16x4xf32>
    %47 = vector.shape_cast %46 : vector<1x16x4xf32> to vector<16x4xf32>
    %cst_29 = arith.constant dense<0.000000e+00> : vector<16x1024xf32>
    %48 = tpu.matmul %47, %15, %cst_29 {dimension_numbers = #tpu.dot_dimension_numbers<[1], [0], [0], [1], [0, 0, 1, 1], [], []>} : vector<16x4xf32>, vector<4x1024xf32>, vector<16x1024xf32> -> vector<16x1024xf32>
    %c1_30 = arith.constant 1 : index
    %c0_31 = arith.constant 0 : index
    %c0_32 = arith.constant 0 : index
    %49 = vector.load %arg6[%c1_30, %c0_31, %c0_32] : memref<3x16x1xf32, #tpu.memory_space<vmem>>, vector<1x16x1xf32>
    %50 = vector.shape_cast %49 : vector<1x16x1xf32> to vector<16x1xf32>
    %51 = vector.broadcast %50 : vector<16x1xf32> to vector<16x1024xf32>
    %52 = arith.addf %48, %51 : vector<16x1024xf32>
    %53 = vector.extract_strided_slice %52 {offsets = [0, 0], sizes = [8, 1024], strides = [1, 1]} : vector<16x1024xf32> to vector<8x1024xf32>
    %54 = vector.shape_cast %53 : vector<8x1024xf32> to vector<64x128xf32>
    %55 = arith.truncf %54 : vector<64x128xf32> to vector<64x128xbf16>
    %56 = vector.extract_strided_slice %52 {offsets = [8, 0], sizes = [8, 1024], strides = [1, 1]} : vector<16x1024xf32> to vector<8x1024xf32>
    %57 = vector.shape_cast %56 : vector<8x1024xf32> to vector<64x128xf32>
    %58 = arith.truncf %57 : vector<64x128xf32> to vector<64x128xbf16>
    %cst_33 = arith.constant dense<0.000000e+00> : vector<128x128xf32>
    %59 = tpu.matmul %55, %58, %cst_33 {dimension_numbers = #tpu.dot_dimension_numbers<[0], [0], [1], [1], [0, 1, 1, 1], [], []>} : vector<64x128xbf16>, vector<64x128xbf16>, vector<128x128xf32> -> vector<128x128xf32>
    %c1_34 = arith.constant 1 : index
    %c0_35 = arith.constant 0 : index
    %c0_36 = arith.constant 0 : index
    %60 = vector.load %arg4[%c1_34, %c0_35, %c0_36] : memref<3x128x128xf32, #tpu.memory_space<vmem>>, vector<1x128x128xf32>
    %61 = vector.shape_cast %60 : vector<1x128x128xf32> to vector<128x128xf32>
    %62 = math.tanh %59 : vector<128x128xf32>
    %63 = vector.broadcast %0 : f32 to vector<128x128xf32>
    %64 = arith.mulf %62, %63 : vector<128x128xf32>
    %65 = arith.addf %61, %64 : vector<128x128xf32>
    %66 = arith.truncf %65 : vector<128x128xf32> to vector<128x128xbf16>
    %cst_37 = arith.constant dense<0.000000e+00> : vector<32x128xf32>
    %67 = tpu.matmul %17, %66, %cst_37 {dimension_numbers = #tpu.dot_dimension_numbers<[1], [0], [0], [1], [0, 0, 1, 1], [], []>} : vector<32x128xbf16>, vector<128x128xbf16>, vector<32x128xf32> -> vector<32x128xf32>
    %68 = vector.shape_cast %67 : vector<32x128xf32> to vector<4x1024xf32>
    %c1_38 = arith.constant 1 : index
    %c0_39 = arith.constant 0 : index
    %c0_40 = arith.constant 0 : index
    %69 = vector.load %arg7[%c1_38, %c0_39, %c0_40] : memref<3x32x4xf32, #tpu.memory_space<vmem>>, vector<1x32x4xf32>
    %70 = vector.shape_cast %69 : vector<1x32x4xf32> to vector<32x4xf32>
    %cst_41 = arith.constant dense<0.000000e+00> : vector<32x1024xf32>
    %71 = tpu.matmul %70, %68, %cst_41 {dimension_numbers = #tpu.dot_dimension_numbers<[1], [0], [0], [1], [0, 0, 1, 1], [], []>} : vector<32x4xf32>, vector<4x1024xf32>, vector<32x1024xf32> -> vector<32x1024xf32>
    %72 = arith.addf %45, %71 : vector<32x1024xf32>
    %c2_42 = arith.constant 2 : index
    %c0_43 = arith.constant 0 : index
    %c0_44 = arith.constant 0 : index
    %73 = vector.load %arg5[%c2_42, %c0_43, %c0_44] : memref<3x16x4xf32, #tpu.memory_space<vmem>>, vector<1x16x4xf32>
    %74 = vector.shape_cast %73 : vector<1x16x4xf32> to vector<16x4xf32>
    %cst_45 = arith.constant dense<0.000000e+00> : vector<16x1024xf32>
    %75 = tpu.matmul %74, %15, %cst_45 {dimension_numbers = #tpu.dot_dimension_numbers<[1], [0], [0], [1], [0, 0, 1, 1], [], []>} : vector<16x4xf32>, vector<4x1024xf32>, vector<16x1024xf32> -> vector<16x1024xf32>
    %c2_46 = arith.constant 2 : index
    %c0_47 = arith.constant 0 : index
    %c0_48 = arith.constant 0 : index
    %76 = vector.load %arg6[%c2_46, %c0_47, %c0_48] : memref<3x16x1xf32, #tpu.memory_space<vmem>>, vector<1x16x1xf32>
    %77 = vector.shape_cast %76 : vector<1x16x1xf32> to vector<16x1xf32>
    %78 = vector.broadcast %77 : vector<16x1xf32> to vector<16x1024xf32>
    %79 = arith.addf %75, %78 : vector<16x1024xf32>
    %80 = vector.extract_strided_slice %79 {offsets = [0, 0], sizes = [8, 1024], strides = [1, 1]} : vector<16x1024xf32> to vector<8x1024xf32>
    %81 = vector.shape_cast %80 : vector<8x1024xf32> to vector<64x128xf32>
    %82 = arith.truncf %81 : vector<64x128xf32> to vector<64x128xbf16>
    %83 = vector.extract_strided_slice %79 {offsets = [8, 0], sizes = [8, 1024], strides = [1, 1]} : vector<16x1024xf32> to vector<8x1024xf32>
    %84 = vector.shape_cast %83 : vector<8x1024xf32> to vector<64x128xf32>
    %85 = arith.truncf %84 : vector<64x128xf32> to vector<64x128xbf16>
    %cst_49 = arith.constant dense<0.000000e+00> : vector<128x128xf32>
    %86 = tpu.matmul %82, %85, %cst_49 {dimension_numbers = #tpu.dot_dimension_numbers<[0], [0], [1], [1], [0, 1, 1, 1], [], []>} : vector<64x128xbf16>, vector<64x128xbf16>, vector<128x128xf32> -> vector<128x128xf32>
    %c2_50 = arith.constant 2 : index
    %c0_51 = arith.constant 0 : index
    %c0_52 = arith.constant 0 : index
    %87 = vector.load %arg4[%c2_50, %c0_51, %c0_52] : memref<3x128x128xf32, #tpu.memory_space<vmem>>, vector<1x128x128xf32>
    %88 = vector.shape_cast %87 : vector<1x128x128xf32> to vector<128x128xf32>
    %89 = math.tanh %86 : vector<128x128xf32>
    %90 = vector.broadcast %0 : f32 to vector<128x128xf32>
    %91 = arith.mulf %89, %90 : vector<128x128xf32>
    %92 = arith.addf %88, %91 : vector<128x128xf32>
    %93 = arith.truncf %92 : vector<128x128xf32> to vector<128x128xbf16>
    %cst_53 = arith.constant dense<0.000000e+00> : vector<32x128xf32>
    %94 = tpu.matmul %17, %93, %cst_53 {dimension_numbers = #tpu.dot_dimension_numbers<[1], [0], [0], [1], [0, 0, 1, 1], [], []>} : vector<32x128xbf16>, vector<128x128xbf16>, vector<32x128xf32> -> vector<32x128xf32>
    %95 = vector.shape_cast %94 : vector<32x128xf32> to vector<4x1024xf32>
    %c2_54 = arith.constant 2 : index
    %c0_55 = arith.constant 0 : index
    %c0_56 = arith.constant 0 : index
    %96 = vector.load %arg7[%c2_54, %c0_55, %c0_56] : memref<3x32x4xf32, #tpu.memory_space<vmem>>, vector<1x32x4xf32>
    %97 = vector.shape_cast %96 : vector<1x32x4xf32> to vector<32x4xf32>
    %cst_57 = arith.constant dense<0.000000e+00> : vector<32x1024xf32>
    %98 = tpu.matmul %97, %95, %cst_57 {dimension_numbers = #tpu.dot_dimension_numbers<[1], [0], [0], [1], [0, 0, 1, 1], [], []>} : vector<32x4xf32>, vector<4x1024xf32>, vector<32x1024xf32> -> vector<32x1024xf32>
    %99 = arith.addf %72, %98 : vector<32x1024xf32>
    %c0_58 = arith.constant 0 : index
    %c0_59 = arith.constant 0 : index
    %100 = vector.load %arg8[%c0_58, %c0_59] : memref<32x4xf32, #tpu.memory_space<vmem>>, vector<32x4xf32>
    %cst_60 = arith.constant dense<0.000000e+00> : vector<32x1024xf32>
    %101 = tpu.matmul %100, %15, %cst_60 {dimension_numbers = #tpu.dot_dimension_numbers<[1], [0], [0], [1], [0, 0, 1, 1], [], []>} : vector<32x4xf32>, vector<4x1024xf32>, vector<32x1024xf32> -> vector<32x1024xf32>
    %102 = arith.addf %99, %101 : vector<32x1024xf32>
    %c0_61 = arith.constant 0 : index
    %c0_62 = arith.constant 0 : index
    %103 = vector.load %arg9[%c0_61, %c0_62] : memref<32x1xf32, #tpu.memory_space<vmem>>, vector<32x1xf32>
    %104 = vector.broadcast %103 : vector<32x1xf32> to vector<32x1024xf32>
    %105 = arith.addf %102, %104 : vector<32x1024xf32>
    %cst_63 = arith.constant 0.000000e+00 : f32
    %106 = vector.broadcast %cst_63 : f32 to vector<32x1024xf32>
    %107 = arith.maximumf %105, %106 : vector<32x1024xf32>
    %108 = vector.shape_cast %107 : vector<32x1024xf32> to vector<32x8x128xf32>
    %109 = tpu.iota {dimensions = array<i32: 2>} : vector<1x1x128xi32>
    %c21_i32 = arith.constant 21 : i32
    %110 = vector.broadcast %c21_i32 : i32 to vector<1x1x128xi32>
    %111 = arith.cmpi slt, %109, %110 : vector<1x1x128xi32>
    %112 = arith.extui %111 : vector<1x1x128xi1> to vector<1x1x128xi32>
    %113 = arith.sitofp %112 : vector<1x1x128xi32> to vector<1x1x128xf32>
    %114 = vector.broadcast %113 : vector<1x1x128xf32> to vector<32x8x128xf32>
    %115 = arith.mulf %108, %114 : vector<32x8x128xf32>
    %cst_64 = arith.constant dense<0.000000e+00> : vector<32x128xf32>
    %116 = vector.multi_reduction <add>, %115, %cst_64 [1] : vector<32x8x128xf32> to vector<32x128xf32>
    %cst_65 = arith.constant 8.000000e+00 : f32
    %117 = vector.broadcast %cst_65 : f32 to vector<32x128xf32>
    %118 = arith.divf %116, %117 : vector<32x128xf32>
    %c0_66 = arith.constant 0 : index
    %c0_67 = arith.constant 0 : index
    %119 = vector.load %arg10[%c0_66, %c0_67] : memref<21x32xf32, #tpu.memory_space<vmem>>, vector<21x32xf32>
    %cst_68 = arith.constant dense<0.000000e+00> : vector<21x128xf32>
    %120 = tpu.matmul %119, %118, %cst_68 {dimension_numbers = #tpu.dot_dimension_numbers<[1], [0], [0], [1], [0, 0, 1, 1], [], []>} : vector<21x32xf32>, vector<32x128xf32>, vector<21x128xf32> -> vector<21x128xf32>
    %cst_69 = arith.constant 0.000000e+00 : f32
    %121 = vector.broadcast %cst_69 : f32 to vector<21x10xf32>
    %122 = tpu.concatenate %121, %120, %121 in 1 : vector<21x10xf32>, vector<21x128xf32>, vector<21x10xf32> -> vector<21x148xf32>
    %cst_70 = arith.constant 0.000000e+00 : f32
    %123 = vector.broadcast %cst_70 : f32 to vector<1x128xf32>
    %124 = vector.extract_strided_slice %122 {offsets = [0, 0], sizes = [1, 128], strides = [1, 1]} : vector<21x148xf32> to vector<1x128xf32>
    %125 = arith.addf %123, %124 : vector<1x128xf32>
    %126 = vector.extract_strided_slice %122 {offsets = [1, 1], sizes = [1, 128], strides = [1, 1]} : vector<21x148xf32> to vector<1x128xf32>
    %127 = arith.addf %125, %126 : vector<1x128xf32>
    %128 = vector.extract_strided_slice %122 {offsets = [2, 2], sizes = [1, 128], strides = [1, 1]} : vector<21x148xf32> to vector<1x128xf32>
    %129 = arith.addf %127, %128 : vector<1x128xf32>
    %130 = vector.extract_strided_slice %122 {offsets = [3, 3], sizes = [1, 128], strides = [1, 1]} : vector<21x148xf32> to vector<1x128xf32>
    %131 = arith.addf %129, %130 : vector<1x128xf32>
    %132 = vector.extract_strided_slice %122 {offsets = [4, 4], sizes = [1, 128], strides = [1, 1]} : vector<21x148xf32> to vector<1x128xf32>
    %133 = arith.addf %131, %132 : vector<1x128xf32>
    %134 = vector.extract_strided_slice %122 {offsets = [5, 5], sizes = [1, 128], strides = [1, 1]} : vector<21x148xf32> to vector<1x128xf32>
    %135 = arith.addf %133, %134 : vector<1x128xf32>
    %136 = vector.extract_strided_slice %122 {offsets = [6, 6], sizes = [1, 128], strides = [1, 1]} : vector<21x148xf32> to vector<1x128xf32>
    %137 = arith.addf %135, %136 : vector<1x128xf32>
    %138 = vector.extract_strided_slice %122 {offsets = [7, 7], sizes = [1, 128], strides = [1, 1]} : vector<21x148xf32> to vector<1x128xf32>
    %139 = arith.addf %137, %138 : vector<1x128xf32>
    %140 = vector.extract_strided_slice %122 {offsets = [8, 8], sizes = [1, 128], strides = [1, 1]} : vector<21x148xf32> to vector<1x128xf32>
    %141 = arith.addf %139, %140 : vector<1x128xf32>
    %142 = vector.extract_strided_slice %122 {offsets = [9, 9], sizes = [1, 128], strides = [1, 1]} : vector<21x148xf32> to vector<1x128xf32>
    %143 = arith.addf %141, %142 : vector<1x128xf32>
    %144 = vector.extract_strided_slice %122 {offsets = [10, 10], sizes = [1, 128], strides = [1, 1]} : vector<21x148xf32> to vector<1x128xf32>
    %145 = arith.addf %143, %144 : vector<1x128xf32>
    %146 = vector.extract_strided_slice %122 {offsets = [11, 11], sizes = [1, 128], strides = [1, 1]} : vector<21x148xf32> to vector<1x128xf32>
    %147 = arith.addf %145, %146 : vector<1x128xf32>
    %148 = vector.extract_strided_slice %122 {offsets = [12, 12], sizes = [1, 128], strides = [1, 1]} : vector<21x148xf32> to vector<1x128xf32>
    %149 = arith.addf %147, %148 : vector<1x128xf32>
    %150 = vector.extract_strided_slice %122 {offsets = [13, 13], sizes = [1, 128], strides = [1, 1]} : vector<21x148xf32> to vector<1x128xf32>
    %151 = arith.addf %149, %150 : vector<1x128xf32>
    %152 = vector.extract_strided_slice %122 {offsets = [14, 14], sizes = [1, 128], strides = [1, 1]} : vector<21x148xf32> to vector<1x128xf32>
    %153 = arith.addf %151, %152 : vector<1x128xf32>
    %154 = vector.extract_strided_slice %122 {offsets = [15, 15], sizes = [1, 128], strides = [1, 1]} : vector<21x148xf32> to vector<1x128xf32>
    %155 = arith.addf %153, %154 : vector<1x128xf32>
    %156 = vector.extract_strided_slice %122 {offsets = [16, 16], sizes = [1, 128], strides = [1, 1]} : vector<21x148xf32> to vector<1x128xf32>
    %157 = arith.addf %155, %156 : vector<1x128xf32>
    %158 = vector.extract_strided_slice %122 {offsets = [17, 17], sizes = [1, 128], strides = [1, 1]} : vector<21x148xf32> to vector<1x128xf32>
    %159 = arith.addf %157, %158 : vector<1x128xf32>
    %160 = vector.extract_strided_slice %122 {offsets = [18, 18], sizes = [1, 128], strides = [1, 1]} : vector<21x148xf32> to vector<1x128xf32>
    %161 = arith.addf %159, %160 : vector<1x128xf32>
    %162 = vector.extract_strided_slice %122 {offsets = [19, 19], sizes = [1, 128], strides = [1, 1]} : vector<21x148xf32> to vector<1x128xf32>
    %163 = arith.addf %161, %162 : vector<1x128xf32>
    %164 = vector.extract_strided_slice %122 {offsets = [20, 20], sizes = [1, 128], strides = [1, 1]} : vector<21x148xf32> to vector<1x128xf32>
    %165 = arith.addf %163, %164 : vector<1x128xf32>
    %166 = vector.broadcast %1 : f32 to vector<1x128xf32>
    %167 = arith.addf %165, %166 : vector<1x128xf32>
    %168 = arith.negf %167 : vector<1x128xf32>
    %169 = math.exp %168 : vector<1x128xf32>
    %cst_71 = arith.constant 1.000000e+00 : f32
    %170 = vector.broadcast %cst_71 : f32 to vector<1x128xf32>
    %171 = arith.addf %170, %169 : vector<1x128xf32>
    %172 = arith.divf %170, %171 : vector<1x128xf32>
    %173 = vector.shape_cast %172 : vector<1x128xf32> to vector<1x1x128xf32>
    %174 = vector.broadcast %173 : vector<1x1x128xf32> to vector<32x8x128xf32>
    %175 = arith.mulf %115, %174 : vector<32x8x128xf32>
    %176 = arith.addf %175, %115 : vector<32x8x128xf32>
    %cst_72 = arith.constant dense<0.000000e+00> : vector<32x8xf32>
    %177 = vector.multi_reduction <add>, %176, %cst_72 [2] : vector<32x8x128xf32> to vector<32x8xf32>
    %cst_73 = arith.constant 0.0476190485 : f32
    %178 = vector.broadcast %cst_73 : f32 to vector<32x8xf32>
    %179 = arith.mulf %177, %178 : vector<32x8xf32>
    %180 = vector.shape_cast %179 : vector<32x8xf32> to vector<1x256xf32>
    %c0_74 = arith.constant 0 : index
    %c0_75 = arith.constant 0 : index
    %181 = vector.load %arg11[%c0_74, %c0_75] : memref<256x8xf32, #tpu.memory_space<vmem>>, vector<256x8xf32>
    %cst_76 = arith.constant dense<0.000000e+00> : vector<1x8xf32>
    %182 = tpu.matmul %180, %181, %cst_76 {dimension_numbers = #tpu.dot_dimension_numbers<[1], [0], [0], [1], [0, 0, 1, 1], [], []>} : vector<1x256xf32>, vector<256x8xf32>, vector<1x8xf32> -> vector<1x8xf32>
    %183 = vector.broadcast %2 : f32 to vector<1x8xf32>
    %184 = arith.addf %182, %183 : vector<1x8xf32>
    %185 = arith.negf %184 : vector<1x8xf32>
    %186 = math.exp %185 : vector<1x8xf32>
    %cst_77 = arith.constant 1.000000e+00 : f32
    %187 = vector.broadcast %cst_77 : f32 to vector<1x8xf32>
    %188 = arith.addf %187, %186 : vector<1x8xf32>
    %189 = arith.divf %187, %188 : vector<1x8xf32>
    %190 = vector.shape_cast %189 : vector<1x8xf32> to vector<1x8x1xf32>
    %191 = vector.broadcast %190 : vector<1x8x1xf32> to vector<32x8x128xf32>
    %192 = arith.mulf %176, %191 : vector<32x8x128xf32>
    %193 = arith.addf %192, %176 : vector<32x8x128xf32>
    %cst_78 = arith.constant dense<0.000000e+00> : vector<32x8xf32>
    %194 = vector.multi_reduction <add>, %193, %cst_78 [2] : vector<32x8x128xf32> to vector<32x8xf32>
    %cst_79 = arith.constant dense<0.000000e+00> : vector<32xf32>
    %195 = vector.multi_reduction <add>, %194, %cst_79 [1] : vector<32x8xf32> to vector<32xf32>
    %196 = vector.shape_cast %195 : vector<32xf32> to vector<32x1xf32>
    %cst_80 = arith.constant 0.00595238106 : f32
    %197 = vector.broadcast %cst_80 : f32 to vector<32x1xf32>
    %198 = arith.mulf %196, %197 : vector<32x1xf32>
    %c0_81 = arith.constant 0 : index
    %c0_82 = arith.constant 0 : index
    %199 = vector.load %arg12[%c0_81, %c0_82] : memref<16x32xf32, #tpu.memory_space<vmem>>, vector<16x32xf32>
    %cst_83 = arith.constant dense<0.000000e+00> : vector<16x1xf32>
    %200 = tpu.matmul %199, %198, %cst_83 {dimension_numbers = #tpu.dot_dimension_numbers<[1], [0], [0], [1], [0, 0, 1, 1], [], []>} : vector<16x32xf32>, vector<32x1xf32>, vector<16x1xf32> -> vector<16x1xf32>
    %c0_84 = arith.constant 0 : index
    %c0_85 = arith.constant 0 : index
    %201 = vector.load %arg13[%c0_84, %c0_85] : memref<16x1xf32, #tpu.memory_space<vmem>>, vector<16x1xf32>
    %202 = arith.addf %200, %201 : vector<16x1xf32>
    %cst_86 = arith.constant 0.000000e+00 : f32
    %203 = vector.broadcast %cst_86 : f32 to vector<16x1xf32>
    %204 = arith.maximumf %202, %203 : vector<16x1xf32>
    %c0_87 = arith.constant 0 : index
    %c0_88 = arith.constant 0 : index
    %205 = vector.load %arg14[%c0_87, %c0_88] : memref<32x16xf32, #tpu.memory_space<vmem>>, vector<32x16xf32>
    %cst_89 = arith.constant dense<0.000000e+00> : vector<32x1xf32>
    %206 = tpu.matmul %205, %204, %cst_89 {dimension_numbers = #tpu.dot_dimension_numbers<[1], [0], [0], [1], [0, 0, 1, 1], [], []>} : vector<32x16xf32>, vector<16x1xf32>, vector<32x1xf32> -> vector<32x1xf32>
    %c0_90 = arith.constant 0 : index
    %c0_91 = arith.constant 0 : index
    %207 = vector.load %arg15[%c0_90, %c0_91] : memref<32x1xf32, #tpu.memory_space<vmem>>, vector<32x1xf32>
    %208 = arith.addf %206, %207 : vector<32x1xf32>
    %209 = arith.negf %208 : vector<32x1xf32>
    %210 = math.exp %209 : vector<32x1xf32>
    %cst_92 = arith.constant 1.000000e+00 : f32
    %211 = vector.broadcast %cst_92 : f32 to vector<32x1xf32>
    %212 = arith.addf %211, %210 : vector<32x1xf32>
    %213 = arith.divf %211, %212 : vector<32x1xf32>
    %214 = vector.shape_cast %213 : vector<32x1xf32> to vector<32x1x1xf32>
    %215 = vector.broadcast %214 : vector<32x1x1xf32> to vector<32x8x128xf32>
    %216 = arith.mulf %193, %215 : vector<32x8x128xf32>
    %217 = arith.addf %216, %193 : vector<32x8x128xf32>
    %cst_93 = arith.constant 0.000000e+00 : f32
    %218 = vector.broadcast %cst_93 : f32 to vector<32x8x128xf32>
    %219 = arith.maximumf %217, %218 : vector<32x8x128xf32>
    %c0_94 = arith.constant 0 : index
    %c0_95 = arith.constant 0 : index
    %c0_96 = arith.constant 0 : index
    %c0_97 = arith.constant 0 : index
    %220 = vector.load %arg16[%c0_94, %c0_95, %c0_96, %c0_97] : memref<1x32x8x128xf32, #tpu.memory_space<vmem>>, vector<1x32x8x128xf32>
    %221 = vector.shape_cast %220 : vector<1x32x8x128xf32> to vector<32x8x128xf32>
    %222 = vector.shape_cast %219 : vector<32x8x128xf32> to vector<1x32x8x128xf32>
    tpu.vector_store %arg16[%c0_94, %c0_95, %c0_96, %c0_97], %222 {strides = array<i32>} : memref<1x32x8x128xf32, #tpu.memory_space<vmem>>, vector<1x32x8x128xf32>,
    return
  }
  func.func @transform_0(%arg0: i32, %arg1: memref<3xf32, #tpu.memory_space<smem>>) -> (i32, i32, i32, i32) {
    %c0_i32 = arith.constant 0 : i32
    %c0_i32_0 = arith.constant 0 : i32
    %c0_i32_1 = arith.constant 0 : i32
    %c0_i32_2 = arith.constant 0 : i32
    return %arg0, %c0_i32, %c0_i32_0, %c0_i32_1 : i32, i32, i32, i32
  }
  func.func @transform_1(%arg0: i32, %arg1: memref<3xf32, #tpu.memory_space<smem>>) -> (i32, i32, i32) {
    %c0_i32 = arith.constant 0 : i32
    %c0_i32_0 = arith.constant 0 : i32
    %c0_i32_1 = arith.constant 0 : i32
    %c0_i32_2 = arith.constant 0 : i32
    return %c0_i32, %c0_i32_0, %c0_i32_1 : i32, i32, i32
  }
  func.func @transform_2(%arg0: i32, %arg1: memref<3xf32, #tpu.memory_space<smem>>) -> (i32, i32, i32) {
    %c0_i32 = arith.constant 0 : i32
    %c0_i32_0 = arith.constant 0 : i32
    %c0_i32_1 = arith.constant 0 : i32
    %c0_i32_2 = arith.constant 0 : i32
    return %c0_i32, %c0_i32_0, %c0_i32_1 : i32, i32, i32
  }
  func.func @transform_3(%arg0: i32, %arg1: memref<3xf32, #tpu.memory_space<smem>>) -> (i32, i32, i32) {
    %c0_i32 = arith.constant 0 : i32
    %c0_i32_0 = arith.constant 0 : i32
    %c0_i32_1 = arith.constant 0 : i32
    %c0_i32_2 = arith.constant 0 : i32
    return %c0_i32, %c0_i32_0, %c0_i32_1 : i32, i32, i32
  }
  func.func @transform_4(%arg0: i32, %arg1: memref<3xf32, #tpu.memory_space<smem>>) -> (i32, i32, i32) {
    %c0_i32 = arith.constant 0 : i32
    %c0_i32_0 = arith.constant 0 : i32
    %c0_i32_1 = arith.constant 0 : i32
    %c0_i32_2 = arith.constant 0 : i32
    return %c0_i32, %c0_i32_0, %c0_i32_1 : i32, i32, i32
  }
  func.func @transform_5(%arg0: i32, %arg1: memref<3xf32, #tpu.memory_space<smem>>) -> (i32, i32, i32) {
    %c0_i32 = arith.constant 0 : i32
    %c0_i32_0 = arith.constant 0 : i32
    %c0_i32_1 = arith.constant 0 : i32
    %c0_i32_2 = arith.constant 0 : i32
    return %c0_i32, %c0_i32_0, %c0_i32_1 : i32, i32, i32
  }
  func.func @transform_6(%arg0: i32, %arg1: memref<3xf32, #tpu.memory_space<smem>>) -> (i32, i32) {
    %c0_i32 = arith.constant 0 : i32
    %c0_i32_0 = arith.constant 0 : i32
    %c0_i32_1 = arith.constant 0 : i32
    return %c0_i32, %c0_i32_0 : i32, i32
  }
  func.func @transform_7(%arg0: i32, %arg1: memref<3xf32, #tpu.memory_space<smem>>) -> (i32, i32) {
    %c0_i32 = arith.constant 0 : i32
    %c0_i32_0 = arith.constant 0 : i32
    %c0_i32_1 = arith.constant 0 : i32
    return %c0_i32, %c0_i32_0 : i32, i32
  }
  func.func @transform_8(%arg0: i32, %arg1: memref<3xf32, #tpu.memory_space<smem>>) -> (i32, i32) {
    %c0_i32 = arith.constant 0 : i32
    %c0_i32_0 = arith.constant 0 : i32
    %c0_i32_1 = arith.constant 0 : i32
    return %c0_i32, %c0_i32_0 : i32, i32
  }
  func.func @transform_9(%arg0: i32, %arg1: memref<3xf32, #tpu.memory_space<smem>>) -> (i32, i32) {
    %c0_i32 = arith.constant 0 : i32
    %c0_i32_0 = arith.constant 0 : i32
    %c0_i32_1 = arith.constant 0 : i32
    return %c0_i32, %c0_i32_0 : i32, i32
  }
  func.func @transform_10(%arg0: i32, %arg1: memref<3xf32, #tpu.memory_space<smem>>) -> (i32, i32) {
    %c0_i32 = arith.constant 0 : i32
    %c0_i32_0 = arith.constant 0 : i32
    %c0_i32_1 = arith.constant 0 : i32
    return %c0_i32, %c0_i32_0 : i32, i32
  }
  func.func @transform_11(%arg0: i32, %arg1: memref<3xf32, #tpu.memory_space<smem>>) -> (i32, i32) {
    %c0_i32 = arith.constant 0 : i32
    %c0_i32_0 = arith.constant 0 : i32
    %c0_i32_1 = arith.constant 0 : i32
    return %c0_i32, %c0_i32_0 : i32, i32
  }
  func.func @transform_12(%arg0: i32, %arg1: memref<3xf32, #tpu.memory_space<smem>>) -> (i32, i32) {
    %c0_i32 = arith.constant 0 : i32
    %c0_i32_0 = arith.constant 0 : i32
    %c0_i32_1 = arith.constant 0 : i32
    return %c0_i32, %c0_i32_0 : i32, i32
  }
  func.func @transform_13(%arg0: i32, %arg1: memref<3xf32, #tpu.memory_space<smem>>) -> (i32, i32) {
    %c0_i32 = arith.constant 0 : i32
    %c0_i32_0 = arith.constant 0 : i32
    %c0_i32_1 = arith.constant 0 : i32
    return %c0_i32, %c0_i32_0 : i32, i32
  }
  func.func @transform_14(%arg0: i32, %arg1: memref<3xf32, #tpu.memory_space<smem>>) -> (i32, i32, i32, i32) {
    %c0_i32 = arith.constant 0 : i32
    %c0_i32_0 = arith.constant 0 : i32
    %c0_i32_1 = arith.constant 0 : i32
    %c0_i32_2 = arith.constant 0 : i32
    return %arg0, %c0_i32, %c0_i32_0, %c0_i32_1 : i32, i32, i32, i32
  }
}

</mosaic_0001>

<llo_original>
// kernel: tpu_custom_call.1
$region0: #{tpu_custom_call.1}
  #allocation0 [shape = 'u32[]', space=smem, size = 0x4, offset = 0x4, fixed_abs, tag = 'smem constant byte address 0x4 - core index']
  #allocation1 [shape = 'u32[144,128]{1,0:T(1,128)}', space=vmem, size = 0x12000, scoped, tag = 'internal scratch']
  #allocation2 [shape = 's32[1]{0}', space=sflag, size = 0x4, scoped, tag = 'scoped memory for tpu_custom_call.1']
  #allocation3 [shape = 'u8[512]{0}', space=smem, size = 0x200, scoped, tag = 'prefetched SMEM operand 0']
  %s0 = inlined_call_operand.vmem [shape: f32[3], index: 0, kind: input, shape index: {}]
  %s1 = inlined_call_operand.vmem [shape: f32[2,4,8,128], index: 1, kind: input, shape index: {}]
  %s2 = inlined_call_operand.vmem [shape: f32[2,4,128], index: 2, kind: input, shape index: {}]
  %s3 = inlined_call_operand.vmem [shape: f32[3,128,128], index: 3, kind: input, shape index: {}]
  %s4 = inlined_call_operand.vmem [shape: f32[3,16,4], index: 4, kind: input, shape index: {}]
  %s5 = inlined_call_operand.vmem [shape: f32[3,16,1], index: 5, kind: input, shape index: {}]
  %s6 = inlined_call_operand.vmem [shape: f32[3,32,4], index: 6, kind: input, shape index: {}]
  %s7 = inlined_call_operand.vmem [shape: f32[32,4], index: 7, kind: input, shape index: {}]
  %s8 = inlined_call_operand.vmem [shape: f32[32,1], index: 8, kind: input, shape index: {}]
  %s9 = inlined_call_operand.vmem [shape: f32[21,32], index: 9, kind: input, shape index: {}]
  %s10 = inlined_call_operand.vmem [shape: f32[256,8], index: 10, kind: input, shape index: {}]
  %s11 = inlined_call_operand.vmem [shape: f32[16,32], index: 11, kind: input, shape index: {}]
  %s12 = inlined_call_operand.vmem [shape: f32[16,1], index: 12, kind: input, shape index: {}]
  %s13 = inlined_call_operand.vmem [shape: f32[32,16], index: 13, kind: input, shape index: {}]
  %s14 = inlined_call_operand.vmem [shape: f32[32,1], index: 14, kind: input, shape index: {}]
  %s15 = inlined_call_operand.hbm [shape: f32[2,32,8,128], index: 15, kind: output, shape index: {}]
  %s16 = sld [smem:[#allocation0]]
  $region89: #{tpu_custom_call.1} parent=0
    _
  %s18 = ssub.s32 1, %s16
  %s19 = scalar_select 0, %s18, %s16
  %s20 = sshll.u32 %s0, 4
  %s21 = int_to_ptr.vmem [resolvable:$true] %s20
  %23 = dma.vmem_to_smem %s21, 16, [#allocation3], [#allocation2]
  %24 = dma.done [#allocation2], 16
  %25 = sfence
  $region1: #{tpu_custom_call.1} parent=0
    #allocation4 [shape = 'u8[262144]{0}', space=vmem, size = 0x40000, scoped, tag = 'output window, operand 0']
    #allocation5 [shape = 's32[2]{0}', space=sflag, size = 0x8, scoped, tag = 'scoped memory for tpu_custom_call.1']
    %26 = vsyncpa [#allocation5], 0
    %s27 = scalar_lea.sflag [#allocation5], 1
    %28 = vsyncpa %s27, 0
    loop: start=0, step=1, limit=4
    $region2: #{tpu_custom_call.1} parent=1 // loop_pre_header
      _
    $region3: #{tpu_custom_call.1} parent=1 // loop_header
      %s30 = sphi 0, %s34
      %p31 = scmp.ge.s32.totalorder %s30, 4
      %s40 = sphi 0, %s42
      %s43 = sphi 0, %s40
      %s44 = sphi 0, %s43
      %s60 = sphi 0, %s44
      %s64 = sphi 0, %s64
      %s66 = sphi 0, %s64
      %s67 = sphi 0, %s66
      %s81 = sphi 0, %s67
      %s85 = sphi 0, %s85
      %s87 = sphi 0, %s85
      %s88 = sphi 0, %s87
      %s102 = sphi 0, %s88
      %s106 = sphi 0, %s106
      %s108 = sphi 0, %s106
      %s109 = sphi 0, %s108
      %s123 = sphi 0, %s109
      %s127 = sphi 0, %s127
      %s129 = sphi 0, %s127
      %s130 = sphi 0, %s129
      %s144 = sphi 0, %s130
      %s148 = sphi 0, %s148
      %s150 = sphi 0, %s148
      %s151 = sphi 0, %s150
      %s165 = sphi 0, %s151
      %s169 = sphi 0, %s169
      %s171 = sphi 0, %s169
      %s172 = sphi 0, %s171
      %s186 = sphi 0, %s172
      %s190 = sphi 0, %s190
      %s192 = sphi 0, %s190
      %s193 = sphi 0, %s192
      %s207 = sphi 0, %s193
      %s211 = sphi 0, %s211
      %s213 = sphi 0, %s211
      %s214 = sphi 0, %s213
      %s228 = sphi 0, %s214
      %s232 = sphi 0, %s232
      %s234 = sphi 0, %s232
      %s235 = sphi 0, %s234
      %s249 = sphi 0, %s235
      %s253 = sphi 0, %s253
      %s255 = sphi 0, %s253
      %s256 = sphi 0, %s255
      %s270 = sphi 0, %s256
      %s274 = sphi 0, %s274
      %s276 = sphi 0, %s274
      %s277 = sphi 0, %s276
      %s291 = sphi 0, %s277
      %s295 = sphi 0, %s295
      %s297 = sphi 0, %s295
      %s298 = sphi 0, %s297
      %s312 = sphi 0, %s298
      %s316 = sphi 0, %s316
      %s318 = sphi 0, %s316
      %s319 = sphi 0, %s318
      %s333 = sphi 0, %s319
      %s339 = sphi 0, %s341
      %s342 = sphi 0, %s339
      %s343 = sphi 0, %s342
      %s359 = sphi 0, %s343
    $region4: #{tpu_custom_call.1} parent=1 // loop_header_branch
      %33 = sbr.rel (%p31) target = $region8
    $region5: #{tpu_custom_call.1} parent=1 // loop_body
      %s35 = ssub.s32 %s30, 1
      %s36 = ssub.s32 %s30, 2
      %s37 = sadd.s32 %s30, 1
      %s38 = ssub.s32 %s30, %s37
      %p39 = scmp.eq.s32.totalorder %s38, 0
      %s41 = sadd.s32 %s40, 1
      %s42 = scalar_select %p39, %s40, %s41
      %p45 = pneg %p39
      %p46 = scmp.eq.s32.totalorder %s30, 1
      %p47 = por %p45, %p46
      %p48 = scmp.ne.s32.totalorder %s40, %s43
      %p49 = scmp.eq.s32.totalorder %s30, 0
      %p50 = por %p48, %p49
      %p51 = scmp.ne.s32.totalorder %s40, %s43
      %p52 = scmp.eq.s32.totalorder %s35, 1
      %p53 = por %p51, %p52
      %p54 = scmp.ne.s32.totalorder %s43, %s44
      %p55 = scmp.eq.s32.totalorder %s35, 0
      %p56 = por %p54, %p55
      %p57 = scmp.ne.s32.totalorder %s43, %s44
      %p58 = scmp.eq.s32.totalorder %s36, 1
      %p59 = por %p57, %p58
      %p61 = scmp.ne.s32.totalorder %s44, %s60
      %p62 = scmp.eq.s32.totalorder %s36, 0
      %p63 = por %p61, %p62
      %s65 = sadd.s32 %s64, 1
      %p68 = scmp.eq.s32.totalorder %s30, 1
      %p69 = scmp.ne.s32.totalorder %s64, %s66
      %p70 = scmp.eq.s32.totalorder %s30, 0
      %p71 = por %p69, %p70
      %p72 = scmp.ne.s32.totalorder %s64, %s66
      %p73 = scmp.eq.s32.totalorder %s35, 1
      %p74 = por %p72, %p73
      %p75 = scmp.ne.s32.totalorder %s66, %s67
      %p76 = scmp.eq.s32.totalorder %s35, 0
      %p77 = por %p75, %p76
      %p78 = scmp.ne.s32.totalorder %s66, %s67
      %p79 = scmp.eq.s32.totalorder %s36, 1
      %p80 = por %p78, %p79
      %p82 = scmp.ne.s32.totalorder %s67, %s81
      %p83 = scmp.eq.s32.totalorder %s36, 0
      %p84 = por %p82, %p83
      %s86 = sadd.s32 %s85, 1
      %p89 = scmp.eq.s32.totalorder %s30, 1
      %p90 = scmp.ne.s32.totalorder %s85, %s87
      %p91 = scmp.eq.s32.totalorder %s30, 0
      %p92 = por %p90, %p91
      %p93 = scmp.ne.s32.totalorder %s85, %s87
      %p94 = scmp.eq.s32.totalorder %s35, 1
      %p95 = por %p93, %p94
      %p96 = scmp.ne.s32.totalorder %s87, %s88
      %p97 = scmp.eq.s32.totalorder %s35, 0
      %p98 = por %p96, %p97
      %p99 = scmp.ne.s32.totalorder %s87, %s88
      %p100 = scmp.eq.s32.totalorder %s36, 1
      %p101 = por %p99, %p100
      %p103 = scmp.ne.s32.totalorder %s88, %s102
      %p104 = scmp.eq.s32.totalorder %s36, 0
      %p105 = por %p103, %p104
      %s107 = sadd.s32 %s106, 1
      %p110 = scmp.eq.s32.totalorder %s30, 1
      %p111 = scmp.ne.s32.totalorder %s106, %s108
      %p112 = scmp.eq.s32.totalorder %s30, 0
      %p113 = por %p111, %p112
      %p114 = scmp.ne.s32.totalorder %s106, %s108
      %p115 = scmp.eq.s32.totalorder %s35, 1
      %p116 = por %p114, %p115
      %p117 = scmp.ne.s32.totalorder %s108, %s109
      %p118 = scmp.eq.s32.totalorder %s35, 0
      %p119 = por %p117, %p118
      %p120 = scmp.ne.s32.totalorder %s108, %s109
      %p121 = scmp.eq.s32.totalorder %s36, 1
      %p122 = por %p120, %p121
      %p124 = scmp.ne.s32.totalorder %s109, %s123
      %p125 = scmp.eq.s32.totalorder %s36, 0
      %p126 = por %p124, %p125
      %s128 = sadd.s32 %s127, 1
      %p131 = scmp.eq.s32.totalorder %s30, 1
      %p132 = scmp.ne.s32.totalorder %s127, %s129
      %p133 = scmp.eq.s32.totalorder %s30, 0
      %p134 = por %p132, %p133
      %p135 = scmp.ne.s32.totalorder %s127, %s129
      %p136 = scmp.eq.s32.totalorder %s35, 1
      %p137 = por %p135, %p136
      %p138 = scmp.ne.s32.totalorder %s129, %s130
      %p139 = scmp.eq.s32.totalorder %s35, 0
      %p140 = por %p138, %p139
      %p141 = scmp.ne.s32.totalorder %s129, %s130
      %p142 = scmp.eq.s32.totalorder %s36, 1
      %p143 = por %p141, %p142
      %p145 = scmp.ne.s32.totalorder %s130, %s144
      %p146 = scmp.eq.s32.totalorder %s36, 0
      %p147 = por %p145, %p146
      %s149 = sadd.s32 %s148, 1
      %p152 = scmp.eq.s32.totalorder %s30, 1
      %p153 = scmp.ne.s32.totalorder %s148, %s150
      %p154 = scmp.eq.s32.totalorder %s30, 0
      %p155 = por %p153, %p154
      %p156 = scmp.ne.s32.totalorder %s148, %s150
      %p157 = scmp.eq.s32.totalorder %s35, 1
      %p158 = por %p156, %p157
      %p159 = scmp.ne.s32.totalorder %s150, %s151
      %p160 = scmp.eq.s32.totalorder %s35, 0
      %p161 = por %p159, %p160
      %p162 = scmp.ne.s32.totalorder %s150, %s151
      %p163 = scmp.eq.s32.totalorder %s36, 1
      %p164 = por %p162, %p163
      %p166 = scmp.ne.s32.totalorder %s151, %s165
      %p167 = scmp.eq.s32.totalorder %s36, 0
      %p168 = por %p166, %p167
      %s170 = sadd.s32 %s169, 1
      %p173 = scmp.eq.s32.totalorder %s30, 1
      %p174 = scmp.ne.s32.totalorder %s169, %s171
      %p175 = scmp.eq.s32.totalorder %s30, 0
      %p176 = por %p174, %p175
      %p177 = scmp.ne.s32.totalorder %s169, %s171
      %p178 = scmp.eq.s32.totalorder %s35, 1
      %p179 = por %p177, %p178
      %p180 = scmp.ne.s32.totalorder %s171, %s172
      %p181 = scmp.eq.s32.totalorder %s35, 0
      %p182 = por %p180, %p181
      %p183 = scmp.ne.s32.totalorder %s171, %s172
      %p184 = scmp.eq.s32.totalorder %s36, 1
      %p185 = por %p183, %p184
      %p187 = scmp.ne.s32.totalorder %s172, %s186
      %p188 = scmp.eq.s32.totalorder %s36, 0
      %p189 = por %p187, %p188
      %s191 = sadd.s32 %s190, 1
      %p194 = scmp.eq.s32.totalorder %s30, 1
      %p195 = scmp.ne.s32.totalorder %s190, %s192
      %p196 = scmp.eq.s32.totalorder %s30, 0
      %p197 = por %p195, %p196
      %p198 = scmp.ne.s32.totalorder %s190, %s192
      %p199 = scmp.eq.s32.totalorder %s35, 1
      %p200 = por %p198, %p199
      %p201 = scmp.ne.s32.totalorder %s192, %s193
      %p202 = scmp.eq.s32.totalorder %s35, 0
      %p203 = por %p201, %p202
      %p204 = scmp.ne.s32.totalorder %s192, %s193
      %p205 = scmp.eq.s32.totalorder %s36, 1
      %p206 = por %p204, %p205
      %p208 = scmp.ne.s32.totalorder %s193, %s207
      %p209 = scmp.eq.s32.totalorder %s36, 0
      %p210 = por %p208, %p209
      %s212 = sadd.s32 %s211, 1
      %p215 = scmp.eq.s32.totalorder %s30, 1
      %p216 = scmp.ne.s32.totalorder %s211, %s213
      %p217 = scmp.eq.s32.totalorder %s30, 0
      %p218 = por %p216, %p217
      %p219 = scmp.ne.s32.totalorder %s211, %s213
      %p220 = scmp.eq.s32.totalorder %s35, 1
      %p221 = por %p219, %p220
      %p222 = scmp.ne.s32.totalorder %s213, %s214
      %p223 = scmp.eq.s32.totalorder %s35, 0
      %p224 = por %p222, %p223
      %p225 = scmp.ne.s32.totalorder %s213, %s214
      %p226 = scmp.eq.s32.totalorder %s36, 1
      %p227 = por %p225, %p226
      %p229 = scmp.ne.s32.totalorder %s214, %s228
      %p230 = scmp.eq.s32.totalorder %s36, 0
      %p231 = por %p229, %p230
      %s233 = sadd.s32 %s232, 1
      %p236 = scmp.eq.s32.totalorder %s30, 1
      %p237 = scmp.ne.s32.totalorder %s232, %s234
      %p238 = scmp.eq.s32.totalorder %s30, 0
      %p239 = por %p237, %p238
      %p240 = scmp.ne.s32.totalorder %s232, %s234
      %p241 = scmp.eq.s32.totalorder %s35, 1
      %p242 = por %p240, %p241
      %p243 = scmp.ne.s32.totalorder %s234, %s235
      %p244 = scmp.eq.s32.totalorder %s35, 0
      %p245 = por %p243, %p244
      %p246 = scmp.ne.s32.totalorder %s234, %s235
      %p247 = scmp.eq.s32.totalorder %s36, 1
      %p248 = por %p246, %p247
      %p250 = scmp.ne.s32.totalorder %s235, %s249
      %p251 = scmp.eq.s32.totalorder %s36, 0
      %p252 = por %p250, %p251
      %s254 = sadd.s32 %s253, 1
      %p257 = scmp.eq.s32.totalorder %s30, 1
      %p258 = scmp.ne.s32.totalorder %s253, %s255
      %p259 = scmp.eq.s32.totalorder %s30, 0
      %p260 = por %p258, %p259
      %p261 = scmp.ne.s32.totalorder %s253, %s255
      %p262 = scmp.eq.s32.totalorder %s35, 1
      %p263 = por %p261, %p262
      %p264 = scmp.ne.s32.totalorder %s255, %s256
      %p265 = scmp.eq.s32.totalorder %s35, 0
      %p266 = por %p264, %p265
      %p267 = scmp.ne.s32.totalorder %s255, %s256
      %p268 = scmp.eq.s32.totalorder %s36, 1
      %p269 = por %p267, %p268
      %p271 = scmp.ne.s32.totalorder %s256, %s270
      %p272 = scmp.eq.s32.totalorder %s36, 0
      %p273 = por %p271, %p272
      %s275 = sadd.s32 %s274, 1
      %p278 = scmp.eq.s32.totalorder %s30, 1
      %p279 = scmp.ne.s32.totalorder %s274, %s276
      %p280 = scmp.eq.s32.totalorder %s30, 0
      %p281 = por %p279, %p280
      %p282 = scmp.ne.s32.totalorder %s274, %s276
      %p283 = scmp.eq.s32.totalorder %s35, 1
      %p284 = por %p282, %p283
      %p285 = scmp.ne.s32.totalorder %s276, %s277
      %p286 = scmp.eq.s32.totalorder %s35, 0
      %p287 = por %p285, %p286
      %p288 = scmp.ne.s32.totalorder %s276, %s277
      %p289 = scmp.eq.s32.totalorder %s36, 1
      %p290 = por %p288, %p289
      %p292 = scmp.ne.s32.totalorder %s277, %s291
      %p293 = scmp.eq.s32.totalorder %s36, 0
      %p294 = por %p292, %p293
      %s296 = sadd.s32 %s295, 1
      %p299 = scmp.eq.s32.totalorder %s30, 1
      %p300 = scmp.ne.s32.totalorder %s295, %s297
      %p301 = scmp.eq.s32.totalorder %s30, 0
      %p302 = por %p300, %p301
      %p303 = scmp.ne.s32.totalorder %s295, %s297
      %p304 = scmp.eq.s32.totalorder %s35, 1
      %p305 = por %p303, %p304
      %p306 = scmp.ne.s32.totalorder %s297, %s298
      %p307 = scmp.eq.s32.totalorder %s35, 0
      %p308 = por %p306, %p307
      %p309 = scmp.ne.s32.totalorder %s297, %s298
      %p310 = scmp.eq.s32.totalorder %s36, 1
      %p311 = por %p309, %p310
      %p313 = scmp.ne.s32.totalorder %s298, %s312
      %p314 = scmp.eq.s32.totalorder %s36, 0
      %p315 = por %p313, %p314
      %s317 = sadd.s32 %s316, 1
      %p320 = scmp.eq.s32.totalorder %s30, 1
      %p321 = scmp.ne.s32.totalorder %s316, %s318
      %p322 = scmp.eq.s32.totalorder %s30, 0
      %p323 = por %p321, %p322
      %p324 = scmp.ne.s32.totalorder %s316, %s318
      %p325 = scmp.eq.s32.totalorder %s35, 1
      %p326 = por %p324, %p325
      %p327 = scmp.ne.s32.totalorder %s318, %s319
      %p328 = scmp.eq.s32.totalorder %s35, 0
      %p329 = por %p327, %p328
      %p330 = scmp.ne.s32.totalorder %s318, %s319
      %p331 = scmp.eq.s32.totalorder %s36, 1
      %p332 = por %p330, %p331
      %p334 = scmp.ne.s32.totalorder %s319, %s333
      %p335 = scmp.eq.s32.totalorder %s36, 0
      %p336 = por %p334, %p335
      %s337 = ssub.s32 %s30, %s37
      %p338 = scmp.eq.s32.totalorder %s337, 0
      %s340 = sadd.s32 %s339, 1
      %s341 = scalar_select %p338, %s339, %s340
      %p344 = pneg %p338
      %p345 = scmp.eq.s32.totalorder %s30, 1
      %p346 = por %p344, %p345
      %p347 = scmp.ne.s32.totalorder %s339, %s342
      %p348 = scmp.eq.s32.totalorder %s30, 0
      %p349 = por %p347, %p348
      %p350 = scmp.ne.s32.totalorder %s339, %s342
      %p351 = scmp.eq.s32.totalorder %s35, 1
      %p352 = por %p350, %p351
      %p353 = scmp.ne.s32.totalorder %s342, %s343
      %p354 = scmp.eq.s32.totalorder %s35, 0
      %p355 = por %p353, %p354
      %p356 = scmp.ne.s32.totalorder %s342, %s343
      %p357 = scmp.eq.s32.totalorder %s36, 1
      %p358 = por %p356, %p357
      %p360 = scmp.ne.s32.totalorder %s343, %s359
      %p361 = scmp.eq.s32.totalorder %s36, 0
      %p362 = por %p360, %p361
      %p363 = scmp.le.s32.totalorder 1, %s30
      %p364 = scmp.lt.s32.totalorder %s30, 3
      %p365 = pnand %p363, %p364
      %p366 = pneg %p365
      // Predicated region
      $region9: #{tpu_custom_call.1} parent=5 // pred_check
        _
      $region10: #{tpu_custom_call.1} parent=5 // pred_check_branch
        %368 = sbr.rel (%p365) target = $region12
      $region11: #{tpu_custom_call.1} parent=5 // pred_region
        %s369 = ssub.s32 %s30, 1
        // Predicated region
        $region13: #{tpu_custom_call.1} parent=11 // pred_check
          %p370 = pneg %p77
        $region14: #{tpu_custom_call.1} parent=11 // pred_check_branch
          %372 = sbr.rel (%p370) target = $region16
        $region15: #{tpu_custom_call.1} parent=11 // pred_region
          _
        $region16: #{tpu_custom_call.1} parent=11 // pred_fallthru
          _
        // Predicated region
        $region17: #{tpu_custom_call.1} parent=11 // pred_check
          %p373 = pneg %p98
        $region18: #{tpu_custom_call.1} parent=11 // pred_check_branch
          %375 = sbr.rel (%p373) target = $region20
        $region19: #{tpu_custom_call.1} parent=11 // pred_region
          _
        $region20: #{tpu_custom_call.1} parent=11 // pred_fallthru
          _
        // Predicated region
        $region21: #{tpu_custom_call.1} parent=11 // pred_check
          %p376 = pneg %p119
        $region22: #{tpu_custom_call.1} parent=11 // pred_check_branch
          %378 = sbr.rel (%p376) target = $region24
        $region23: #{tpu_custom_call.1} parent=11 // pred_region
          _
        $region24: #{tpu_custom_call.1} parent=11 // pred_fallthru
          _
        // Predicated region
        $region25: #{tpu_custom_call.1} parent=11 // pred_check
          %p379 = pneg %p140
        $region26: #{tpu_custom_call.1} parent=11 // pred_check_branch
          %381 = sbr.rel (%p379) target = $region28
        $region27: #{tpu_custom_call.1} parent=11 // pred_region
          _
        $region28: #{tpu_custom_call.1} parent=11 // pred_fallthru
          _
        // Predicated region
        $region29: #{tpu_custom_call.1} parent=11 // pred_check
          %p382 = pneg %p161
        $region30: #{tpu_custom_call.1} parent=11 // pred_check_branch
          %384 = sbr.rel (%p382) target = $region32
        $region31: #{tpu_custom_call.1} parent=11 // pred_region
          _
        $region32: #{tpu_custom_call.1} parent=11 // pred_fallthru
          _
        // Predicated region
        $region33: #{tpu_custom_call.1} parent=11 // pred_check
          %p385 = pneg %p182
        $region34: #{tpu_custom_call.1} parent=11 // pred_check_branch
          %387 = sbr.rel (%p385) target = $region36
        $region35: #{tpu_custom_call.1} parent=11 // pred_region
          _
        $region36: #{tpu_custom_call.1} parent=11 // pred_fallthru
          _
        // Predicated region
        $region37: #{tpu_custom_call.1} parent=11 // pred_check
          %p388 = pneg %p203
        $region38: #{tpu_custom_call.1} parent=11 // pred_check_branch
          %390 = sbr.rel (%p388) target = $region40
        $region39: #{tpu_custom_call.1} parent=11 // pred_region
          _
        $region40: #{tpu_custom_call.1} parent=11 // pred_fallthru
          _
        // Predicated region
        $region41: #{tpu_custom_call.1} parent=11 // pred_check
          %p391 = pneg %p224
        $region42: #{tpu_custom_call.1} parent=11 // pred_check_branch
          %393 = sbr.rel (%p391) target = $region44
        $region43: #{tpu_custom_call.1} parent=11 // pred_region
          _
        $region44: #{tpu_custom_call.1} parent=11 // pred_fallthru
          _
        // Predicated region
        $region45: #{tpu_custom_call.1} parent=11 // pred_check
          %p394 = pneg %p245
        $region46: #{tpu_custom_call.1} parent=11 // pred_check_branch
          %396 = sbr.rel (%p394) target = $region48
        $region47: #{tpu_custom_call.1} parent=11 // pred_region
          _
        $region48: #{tpu_custom_call.1} parent=11 // pred_fallthru
          _
        // Predicated region
        $region49: #{tpu_custom_call.1} parent=11 // pred_check
          %p397 = pneg %p266
        $region50: #{tpu_custom_call.1} parent=11 // pred_check_branch
          %399 = sbr.rel (%p397) target = $region52
        $region51: #{tpu_custom_call.1} parent=11 // pred_region
          _
        $region52: #{tpu_custom_call.1} parent=11 // pred_fallthru
          _
        // Predicated region
        $region53: #{tpu_custom_call.1} parent=11 // pred_check
          %p400 = pneg %p287
        $region54: #{tpu_custom_call.1} parent=11 // pred_check_branch
          %402 = sbr.rel (%p400) target = $region56
        $region55: #{tpu_custom_call.1} parent=11 // pred_region
          _
        $region56: #{tpu_custom_call.1} parent=11 // pred_fallthru
          _
        // Predicated region
        $region57: #{tpu_custom_call.1} parent=11 // pred_check
          %p403 = pneg %p308
        $region58: #{tpu_custom_call.1} parent=11 // pred_check_branch
          %405 = sbr.rel (%p403) target = $region60
        $region59: #{tpu_custom_call.1} parent=11 // pred_region
          _
        $region60: #{tpu_custom_call.1} parent=11 // pred_fallthru
          _
        // Predicated region
        $region61: #{tpu_custom_call.1} parent=11 // pred_check
          %p406 = pneg %p329
        $region62: #{tpu_custom_call.1} parent=11 // pred_check_branch
          %408 = sbr.rel (%p406) target = $region64
        $region63: #{tpu_custom_call.1} parent=11 // pred_region
          _
        $region64: #{tpu_custom_call.1} parent=11 // pred_fallthru
          _
      $region12: #{tpu_custom_call.1} parent=5 // pred_fallthru
        _
      %p409 = scmp.lt.s32.totalorder %s30, 2
      // Predicated region
      $region65: #{tpu_custom_call.1} parent=5 // pred_check
        %p410 = pneg %p409
      $region66: #{tpu_custom_call.1} parent=5 // pred_check_branch
        %412 = sbr.rel (%p410) target = $region68
      $region67: #{tpu_custom_call.1} parent=5 // pred_region
        // Predicated region
        $region69: #{tpu_custom_call.1} parent=67 // pred_check
          %p413 = pneg %p50
        $region70: #{tpu_custom_call.1} parent=67 // pred_check_branch
          %415 = sbr.rel (%p413) target = $region72
        $region71: #{tpu_custom_call.1} parent=67 // pred_region
          %p416 = scmp.lt.s32.totalorder %s30, 1
          %s417 = scalar_select %p416, %s30, 1
          %s418 = smul.addr %s417, 4
          %s419 = smul.addr %s418, 8
          %s420 = scalar_lea.vmem %s1, %s419
        $region72: #{tpu_custom_call.1} parent=67 // pred_fallthru
          _
      $region68: #{tpu_custom_call.1} parent=5 // pred_fallthru
        _
      %p421 = scmp.le.s32.totalorder 1, %s30
      %p422 = scmp.lt.s32.totalorder %s30, 3
      %p423 = pnand %p421, %p422
      %p424 = pneg %p423
      // Predicated region
      $region73: #{tpu_custom_call.1} parent=5 // pred_check
        _
      $region74: #{tpu_custom_call.1} parent=5 // pred_check_branch
        %426 = sbr.rel (%p423) target = $region76
      $region75: #{tpu_custom_call.1} parent=5 // pred_region
        %s427 = ssub.s32 %s30, 1
        %p428 = scmp.lt.s32.totalorder %s35, 1
        %s429 = scalar_select %p428, %s35, 1
        %s430 = smul.addr %s429, 4
        %s431 = smul.addr %s430, 8
        %s432 = scalar_lea.vmem %s1, %s431
        %p433 = pneg %p56
        %p434 = pneg %p53
        %p435 = pneg %p77
        %p436 = pneg %p74
        %p437 = pneg %p98
        %p438 = pneg %p95
        %p439 = pneg %p119
        %p440 = pneg %p116
        %p441 = pneg %p140
        %p442 = pneg %p137
        %p443 = pneg %p161
        %p444 = pneg %p158
        %p445 = pneg %p182
        %p446 = pneg %p179
        %p447 = pneg %p203
        %p448 = pneg %p200
        %p449 = pneg %p224
        %p450 = pneg %p221
        %p451 = pneg %p245
        %p452 = pneg %p242
        %p453 = pneg %p266
        %p454 = pneg %p263
        %p455 = pneg %p287
        %p456 = pneg %p284
        %p457 = pneg %p308
        %p458 = pneg %p305
        %p459 = pneg %p329
        %p460 = pneg %p326
        %p461 = pneg %p355
        %p462 = pneg %p352
        %s463 = sand.u32 %s342, 1
        %s464 = scalar_lea.sflag [#allocation5], %s463
        %s465 = sand.u32 %s342, 1
        %s466 = smul.addr %s465, 256
        %s467 = scalar_lea.vmem [#allocation4], %s466
        %p468 = scmp.lt.s32.totalorder %s35, 1
        %s469 = scalar_select %p468, %s35, 1
        %s470 = smul.addr %s469, 4
        %s471 = smul.addr %s470, 8
        %s472 = scalar_lea.vmem %s1, %s471
        %s474 = sld [smem:[#allocation3]]
        %s475 = sld [smem:[#allocation3 + $0x1]]
        %s476 = sld [smem:[#allocation3 + $0x2]]
        %v477 = vld [vmem:[%s472] sm:$0xff]
        %v478 = vld [vmem:[%s472 + $0x8] sm:$0xff]
        %v479 = vld [vmem:[%s472 + $0x10] sm:$0xff]
        %v480 = vld [vmem:[%s472 + $0x18] sm:$0xff]
        %v481 = vld [vmem:[%s2] sm:$0xf]
        %v484 = vunpack.c.l.s4 1966171168
        %v485 = vunpack.c.0.s8 %v484
        %v486 = vlaneseq
        %v487 = vshrl.u32 %v486, 7
        %v488 = vsub.s32 %v485, %v487
        %v489 = vrot.slane %v481, %v488
        %v490 = vcombine.high %v489, %v489
        %v492 = vunpack.c.l.s4 1966171168
        %v493 = vunpack.c.0.s8 %v492
        %v494 = vlaneseq
        %v495 = vshrl.u32 %v494, 7
        %v496 = vsub.s32 %v493, %v495
        %v497 = vrot.slane %v489, %v496
        %v499 = vunpack.c.l.s4 1966171168
        %v500 = vunpack.c.0.s8 %v499
        %v501 = vlaneseq
        %v502 = vshrl.u32 %v501, 7
        %v503 = vsub.s32 %v500, %v502
        %v504 = vrot.slane %v490, %v503
        %v505 = vcombine.high %v497, %v497
        %v506 = vcombine.high %v504, %v504
        %v507 = vlaneseq
        %v508 = vshrl.u32 %v507, 7
        %v509 = vsub.s32 0, %v508
        %v510 = vrot.slane %v497, %v509
        %v511 = vlaneseq
        %v512 = vshrl.u32 %v511, 7
        %v513 = vsub.s32 0, %v512
        %v514 = vrot.slane %v504, %v513
        %v515 = vlaneseq
        %v516 = vshrl.u32 %v515, 7
        %v517 = vsub.s32 0, %v516
        %v518 = vrot.slane %v505, %v517
        %v519 = vlaneseq
        %v520 = vshrl.u32 %v519, 7
        %v521 = vsub.s32 0, %v520
        %v522 = vrot.slane %v506, %v521
        %v527 = vmul.f32 %v477, %v510
        %v528 = vmul.f32 %v478, %v514
        %v529 = vmul.f32 %v479, %v518
        %v530 = vmul.f32 %v480, %v522
        %s531 = scalar_lea.vmem %s2, 4
        %v532 = vld [vmem:[%s531] sm:$0xf]
        %v535 = vunpack.c.l.s4 1966171168
        %v536 = vunpack.c.0.s8 %v535
        %v537 = vlaneseq
        %v538 = vshrl.u32 %v537, 7
        %v539 = vsub.s32 %v536, %v538
        %v540 = vrot.slane %v532, %v539
        %v541 = vcombine.high %v540, %v540
        %v543 = vunpack.c.l.s4 1966171168
        %v544 = vunpack.c.0.s8 %v543
        %v545 = vlaneseq
        %v546 = vshrl.u32 %v545, 7
        %v547 = vsub.s32 %v544, %v546
        %v548 = vrot.slane %v540, %v547
        %v550 = vunpack.c.l.s4 1966171168
        %v551 = vunpack.c.0.s8 %v550
        %v552 = vlaneseq
        %v553 = vshrl.u32 %v552, 7
        %v554 = vsub.s32 %v551, %v553
        %v555 = vrot.slane %v541, %v554
        %v556 = vcombine.high %v548, %v548
        %v557 = vcombine.high %v555, %v555
        %v558 = vlaneseq
        %v559 = vshrl.u32 %v558, 7
        %v560 = vsub.s32 0, %v559
        %v561 = vrot.slane %v548, %v560
        %v562 = vlaneseq
        %v563 = vshrl.u32 %v562, 7
        %v564 = vsub.s32 0, %v563
        %v565 = vrot.slane %v555, %v564
        %v566 = vlaneseq
        %v567 = vshrl.u32 %v566, 7
        %v568 = vsub.s32 0, %v567
        %v569 = vrot.slane %v556, %v568
        %v570 = vlaneseq
        %v571 = vshrl.u32 %v570, 7
        %v572 = vsub.s32 0, %v571
        %v573 = vrot.slane %v557, %v572
        %v578 = vadd.f32 %v527, %v561
        %v579 = vadd.f32 %v528, %v565
        %v580 = vadd.f32 %v529, %v569
        %v581 = vadd.f32 %v530, %v573
        %v582 = vcombine.low %v578, %v580
        %v583 = vcombine.high %v578, %v580
        %v585 = vunpack.c.l.s4 1983009808
        %v586 = vunpack.c.0.s8 %v585
        %v587 = vlaneseq
        %v588 = vshrl.u32 %v587, 7
        %v589 = vsub.s32 %v586, %v588
        %v590 = vrot.slane %v582, %v589
        %v592 = vunpack.c.l.s4 1983009808
        %v593 = vunpack.c.0.s8 %v592
        %v594 = vlaneseq
        %v595 = vshrl.u32 %v594, 7
        %v596 = vsub.s32 %v593, %v595
        %v597 = vrot.slane %v583, %v596
        %v598 = vcombine.low %v579, %v581
        %v599 = vcombine.high %v579, %v581
        %v601 = vunpack.c.l.s4 1983009808
        %v602 = vunpack.c.0.s8 %v601
        %v603 = vlaneseq
        %v604 = vshrl.u32 %v603, 7
        %v605 = vsub.s32 %v602, %v604
        %v606 = vrot.slane %v598, %v605
        %v608 = vunpack.c.l.s4 1983009808
        %v609 = vunpack.c.0.s8 %v608
        %v610 = vlaneseq
        %v611 = vshrl.u32 %v610, 7
        %v612 = vsub.s32 %v609, %v611
        %v613 = vrot.slane %v599, %v612
        %v614 = vcombine.low %v590, %v606
        %v615 = vcombine.high %v590, %v606
        %v617 = vunpack.c.l.s4 1934713408
        %v618 = vunpack.c.0.s8 %v617
        %v619 = vlaneseq
        %v620 = vshrl.u32 %v619, 7
        %v621 = vsub.s32 %v618, %v620
        %v622 = vrot.slane %v614, %v621
        %v624 = vunpack.c.l.s4 1934713408
        %v625 = vunpack.c.0.s8 %v624
        %v626 = vlaneseq
        %v627 = vshrl.u32 %v626, 7
        %v628 = vsub.s32 %v625, %v627
        %v629 = vrot.slane %v615, %v628
        %v630 = vcombine.low %v597, %v613
        %v631 = vcombine.high %v597, %v613
        %v633 = vunpack.c.l.s4 1934713408
        %v634 = vunpack.c.0.s8 %v633
        %v635 = vlaneseq
        %v636 = vshrl.u32 %v635, 7
        %v637 = vsub.s32 %v634, %v636
        %v638 = vrot.slane %v630, %v637
        %v640 = vunpack.c.l.s4 1934713408
        %v641 = vunpack.c.0.s8 %v640
        %v642 = vlaneseq
        %v643 = vshrl.u32 %v642, 7
        %v644 = vsub.s32 %v641, %v643
        %v645 = vrot.slane %v631, %v644
        %v646 = vcombine.high %v622, 0.0
        %v647 = vcombine.high %v629, 0.0
        %v648 = vcombine.high %v638, 0.0
        %v649 = vcombine.high %v645, 0.0
        %v650 = vpack.c.bf16 %v579, %v578
        %v651 = vpack.c.bf16 %v581, %v580
        %v652 = vld [vmem:[%s4] sm:$0xff]
        %v653 = vld [vmem:[%s4 + $0x8] sm:$0xff]
        %v654 = vld [vmem:[%s5] sm:$0xff]
        %v655 = vld [vmem:[%s5 + $0x8] sm:$0xff]
        %657 = vset.pattern.permute.xlu0 0
        %658 = vperm.xlu0 %657, %v654
        %v659 = vpop.permute.xlu0 %658
        %662 = vset.pattern.permute.xlu0 0
        %663 = vperm.xlu0 %662, %v655
        %v664 = vpop.permute.xlu0 %663
        %vm666 = vcmask 31744
        %v668 = vsel %vm666, %v652, 0
        %v671 = vsel %vm666, %v653, 0
        %vm673 = vcmask 1043456
        %v675 = vsel %vm673, %v622, 0
        %v678 = vsel %vm673, %v646, 0
        %v681 = vsel %vm673, %v629, 0
        %v684 = vsel %vm673, %v647, 0
        %v687 = vsel %vm673, %v638, 0
        %v690 = vsel %vm673, %v648, 0
        %v693 = vsel %vm673, %v645, 0
        %v696 = vsel %vm673, %v649, 0
        %698 = vmatprep.subr.mxu0 %v678
        %699 = vmatpush1.msra.mxu0 %v675
        %700 = vmatprep.subr.mxu0 0.0
        %701 = vmatpush1.msra.mxu0 0.0
        %702 = vmatprep.subr.mxu0 0.0
        %703 = vmatpush1.msra.mxu0 0.0
        %704 = vmatprep.subr.mxu0 0.0
        %705 = vmatpush1.msra.mxu0 0.0
        %706 = vmatprep.subr.mxu0 0.0
        %707 = vmatpush1.msra.mxu0 0.0
        %708 = vmatprep.subr.mxu0 0.0
        %709 = vmatpush1.msra.mxu0 0.0
        %710 = vmatprep.subr.mxu0 0.0
        %711 = vmatpush1.msra.mxu0 0.0
        %712 = vmatprep.subr.mxu0 0.0
        %713 = vmatpush1.msra.mxu0 0.0
        %714 = vmatprep.subr.mxu0 0.0
        %715 = vmatpush1.msra.mxu0 0.0
        %716 = vmatprep.subr.mxu0 0.0
        %717 = vmatpush1.msra.mxu0 0.0
        %718 = vmatprep.subr.mxu0 0.0
        %719 = vmatpush1.msra.mxu0 0.0
        %720 = vmatprep.subr.mxu0 0.0
        %721 = vmatpush1.msra.mxu0 0.0
        %722 = vmatprep.subr.mxu0 0.0
        %723 = vmatpush1.msra.mxu0 0.0
        %724 = vmatprep.subr.mxu0 0.0
        %725 = vmatpush1.msra.mxu0 0.0
        %726 = vmatprep.subr.mxu0 0.0
        %727 = vmatpush1.msra.mxu0 0.0
        %728 = vmatprep.subr.mxu0 0.0
        %729 = vmatpush1.msra.mxu0 0.0
        %730 = vmatprep.subr.mxu0 0.0
        %731 = vmatpush1.msra.mxu0 0.0
        %732 = vmatprep.subr.mxu0 0.0
        %733 = vmatpush1.msra.mxu0 0.0
        %734 = vmatprep.subr.mxu0 0.0
        %735 = vmatpush1.msra.mxu0 0.0
        %736 = vmatprep.subr.mxu0 0.0
        %737 = vmatpush1.msra.mxu0 0.0
        %738 = vmatprep.subr.mxu0 0.0
        %739 = vmatpush1.msra.mxu0 0.0
        %740 = vmatprep.subr.mxu0 0.0
        %741 = vmatpush1.msra.mxu0 0.0
        %742 = vmatprep.subr.mxu0 0.0
        %743 = vmatpush1.msra.mxu0 0.0
        %744 = vmatprep.subr.mxu0 0.0
        %745 = vmatpush1.msra.mxu0 0.0
        %746 = vmatprep.subr.mxu0 0.0
        %747 = vmatpush1.msra.mxu0 0.0
        %748 = vmatprep.subr.mxu0 0.0
        %749 = vmatpush1.msra.mxu0 0.0
        %750 = vmatprep.subr.mxu0 0.0
        %751 = vmatpush1.msra.mxu0 0.0
        %752 = vmatprep.subr.mxu0 0.0
        %753 = vmatpush1.msra.mxu0 0.0
        %754 = vmatprep.subr.mxu0 0.0
        %755 = vmatpush1.msra.mxu0 0.0
        %756 = vmatprep.subr.mxu0 0.0
        %757 = vmatpush1.msra.mxu0 0.0
        %758 = vmatprep.subr.mxu0 0.0
        %759 = vmatpush1.msra.mxu0 0.0
        %760 = vmatprep.subr.mxu0 0.0
        %761 = vmatpush1.msra.mxu0 0.0
        %762 = vmatprep.mubr.f32.mxu0 0.0
        %763 = vmatmul.mubr.f32.gmra.mrb[0].mxu0 %v668
        %v764 = vpop.f32.mrb[0].mxu0
        %v765 = vadd.f32 %v659, %v764
        %v766 = vpop.f32.mrb[0].mxu0
        %v767 = vadd.f32 %v659, %v766
        %768 = vmatprep.mubr.f32.mxu0 0.0
        %769 = vmatmul.mubr.f32.gmra.mrb[0].mxu0 %v671
        %v770 = vpop.f32.mrb[0].mxu0
        %v771 = vadd.f32 %v664, %v770
        %v772 = vpop.f32.mrb[0].mxu0
        %v773 = vadd.f32 %v664, %v772
        %774 = vdwg.mxu0
        %775 = vmatprep.subr.mxu0 %v684
        %776 = vmatpush1.msra.mxu0 %v681
        %777 = vmatprep.subr.mxu0 0.0
        %778 = vmatpush1.msra.mxu0 0.0
        %779 = vmatprep.subr.mxu0 0.0
        %780 = vmatpush1.msra.mxu0 0.0
        %781 = vmatprep.subr.mxu0 0.0
        %782 = vmatpush1.msra.mxu0 0.0
        %783 = vmatprep.subr.mxu0 0.0
        %784 = vmatpush1.msra.mxu0 0.0
        %785 = vmatprep.subr.mxu0 0.0
        %786 = vmatpush1.msra.mxu0 0.0
        %787 = vmatprep.subr.mxu0 0.0
        %788 = vmatpush1.msra.mxu0 0.0
        %789 = vmatprep.subr.mxu0 0.0
        %790 = vmatpush1.msra.mxu0 0.0
        %791 = vmatprep.subr.mxu0 0.0
        %792 = vmatpush1.msra.mxu0 0.0
        %793 = vmatprep.subr.mxu0 0.0
        %794 = vmatpush1.msra.mxu0 0.0
        %795 = vmatprep.subr.mxu0 0.0
        %796 = vmatpush1.msra.mxu0 0.0
        %797 = vmatprep.subr.mxu0 0.0
        %798 = vmatpush1.msra.mxu0 0.0
        %799 = vmatprep.subr.mxu0 0.0
        %800 = vmatpush1.msra.mxu0 0.0
        %801 = vmatprep.subr.mxu0 0.0
        %802 = vmatpush1.msra.mxu0 0.0
        %803 = vmatprep.subr.mxu0 0.0
        %804 = vmatpush1.msra.mxu0 0.0
        %805 = vmatprep.subr.mxu0 0.0
        %806 = vmatpush1.msra.mxu0 0.0
        %807 = vmatprep.subr.mxu0 0.0
        %808 = vmatpush1.msra.mxu0 0.0
        %809 = vmatprep.subr.mxu0 0.0
        %810 = vmatpush1.msra.mxu0 0.0
        %811 = vmatprep.subr.mxu0 0.0
        %812 = vmatpush1.msra.mxu0 0.0
        %813 = vmatprep.subr.mxu0 0.0
        %814 = vmatpush1.msra.mxu0 0.0
        %815 = vmatprep.subr.mxu0 0.0
        %816 = vmatpush1.msra.mxu0 0.0
        %817 = vmatprep.subr.mxu0 0.0
        %818 = vmatpush1.msra.mxu0 0.0
        %819 = vmatprep.subr.mxu0 0.0
        %820 = vmatpush1.msra.mxu0 0.0
        %821 = vmatprep.subr.mxu0 0.0
        %822 = vmatpush1.msra.mxu0 0.0
        %823 = vmatprep.subr.mxu0 0.0
        %824 = vmatpush1.msra.mxu0 0.0
        %825 = vmatprep.subr.mxu0 0.0
        %826 = vmatpush1.msra.mxu0 0.0
        %827 = vmatprep.subr.mxu0 0.0
        %828 = vmatpush1.msra.mxu0 0.0
        %829 = vmatprep.subr.mxu0 0.0
        %830 = vmatpush1.msra.mxu0 0.0
        %831 = vmatprep.subr.mxu0 0.0
        %832 = vmatpush1.msra.mxu0 0.0
        %833 = vmatprep.subr.mxu0 0.0
        %834 = vmatpush1.msra.mxu0 0.0
        %835 = vmatprep.subr.mxu0 0.0
        %836 = vmatpush1.msra.mxu0 0.0
        %837 = vmatprep.subr.mxu0 0.0
        %838 = vmatpush1.msra.mxu0 0.0
        %839 = vmatprep.mubr.f32.mxu0 0.0
        %840 = vmatmul.mubr.f32.gmra.mrb[0].mxu0 %v668
        %v841 = vpop.f32.mrb[0].mxu0
        %v842 = vadd.f32 %v659, %v841
        %v843 = vpop.f32.mrb[0].mxu0
        %v844 = vadd.f32 %v659, %v843
        %845 = vmatprep.mubr.f32.mxu0 0.0
        %846 = vmatmul.mubr.f32.gmra.mrb[0].mxu0 %v671
        %v847 = vpop.f32.mrb[0].mxu0
        %v848 = vadd.f32 %v664, %v847
        %v849 = vpop.f32.mrb[0].mxu0
        %v850 = vadd.f32 %v664, %v849
        %851 = vdwg.mxu0
        %852 = vmatprep.subr.mxu0 %v690
        %853 = vmatpush1.msra.mxu0 %v687
        %854 = vmatprep.subr.mxu0 0.0
        %855 = vmatpush1.msra.mxu0 0.0
        %856 = vmatprep.subr.mxu0 0.0
        %857 = vmatpush1.msra.mxu0 0.0
        %858 = vmatprep.subr.mxu0 0.0
        %859 = vmatpush1.msra.mxu0 0.0
        %860 = vmatprep.subr.mxu0 0.0
        %861 = vmatpush1.msra.mxu0 0.0
        %862 = vmatprep.subr.mxu0 0.0
        %863 = vmatpush1.msra.mxu0 0.0
        %864 = vmatprep.subr.mxu0 0.0
        %865 = vmatpush1.msra.mxu0 0.0
        %866 = vmatprep.subr.mxu0 0.0
        %867 = vmatpush1.msra.mxu0 0.0
        %868 = vmatprep.subr.mxu0 0.0
        %869 = vmatpush1.msra.mxu0 0.0
        %870 = vmatprep.subr.mxu0 0.0
        %871 = vmatpush1.msra.mxu0 0.0
        %872 = vmatprep.subr.mxu0 0.0
        %873 = vmatpush1.msra.mxu0 0.0
        %874 = vmatprep.subr.mxu0 0.0
        %875 = vmatpush1.msra.mxu0 0.0
        %876 = vmatprep.subr.mxu0 0.0
        %877 = vmatpush1.msra.mxu0 0.0
        %878 = vmatprep.subr.mxu0 0.0
        %879 = vmatpush1.msra.mxu0 0.0
        %880 = vmatprep.subr.mxu0 0.0
        %881 = vmatpush1.msra.mxu0 0.0
        %882 = vmatprep.subr.mxu0 0.0
        %883 = vmatpush1.msra.mxu0 0.0
        %884 = vmatprep.subr.mxu0 0.0
        %885 = vmatpush1.msra.mxu0 0.0
        %886 = vmatprep.subr.mxu0 0.0
        %887 = vmatpush1.msra.mxu0 0.0
        %888 = vmatprep.subr.mxu0 0.0
        %889 = vmatpush1.msra.mxu0 0.0
        %890 = vmatprep.subr.mxu0 0.0
        %891 = vmatpush1.msra.mxu0 0.0
        %892 = vmatprep.subr.mxu0 0.0
        %893 = vmatpush1.msra.mxu0 0.0
        %894 = vmatprep.subr.mxu0 0.0
        %895 = vmatpush1.msra.mxu0 0.0
        %896 = vmatprep.subr.mxu0 0.0
        %897 = vmatpush1.msra.mxu0 0.0
        %898 = vmatprep.subr.mxu0 0.0
        %899 = vmatpush1.msra.mxu0 0.0
        %900 = vmatprep.subr.mxu0 0.0
        %901 = vmatpush1.msra.mxu0 0.0
        %902 = vmatprep.subr.mxu0 0.0
        %903 = vmatpush1.msra.mxu0 0.0
        %904 = vmatprep.subr.mxu0 0.0
        %905 = vmatpush1.msra.mxu0 0.0
        %906 = vmatprep.subr.mxu0 0.0
        %907 = vmatpush1.msra.mxu0 0.0
        %908 = vmatprep.subr.mxu0 0.0
        %909 = vmatpush1.msra.mxu0 0.0
        %910 = vmatprep.subr.mxu0 0.0
        %911 = vmatpush1.msra.mxu0 0.0
        %912 = vmatprep.subr.mxu0 0.0
        %913 = vmatpush1.msra.mxu0 0.0
        %914 = vmatprep.subr.mxu0 0.0
        %915 = vmatpush1.msra.mxu0 0.0
        %916 = vmatprep.mubr.f32.mxu0 0.0
        %917 = vmatmul.mubr.f32.gmra.mrb[0].mxu0 %v668
        %v918 = vpop.f32.mrb[0].mxu0
        %v919 = vadd.f32 %v659, %v918
        %v920 = vpop.f32.mrb[0].mxu0
        %v921 = vadd.f32 %v659, %v920
        %922 = vmatprep.mubr.f32.mxu0 0.0
        %923 = vmatmul.mubr.f32.gmra.mrb[0].mxu0 %v671
        %v924 = vpop.f32.mrb[0].mxu0
        %v925 = vadd.f32 %v664, %v924
        %v926 = vpop.f32.mrb[0].mxu0
        %v927 = vadd.f32 %v664, %v926
        %928 = vdwg.mxu0
        %929 = vmatprep.subr.mxu0 %v696
        %930 = vmatpush1.msra.mxu0 %v693
        %931 = vmatprep.subr.mxu0 0.0
        %932 = vmatpush1.msra.mxu0 0.0
        %933 = vmatprep.subr.mxu0 0.0
        %934 = vmatpush1.msra.mxu0 0.0
        %935 = vmatprep.subr.mxu0 0.0
        %936 = vmatpush1.msra.mxu0 0.0
        %937 = vmatprep.subr.mxu0 0.0
        %938 = vmatpush1.msra.mxu0 0.0
        %939 = vmatprep.subr.mxu0 0.0
        %940 = vmatpush1.msra.mxu0 0.0
        %941 = vmatprep.subr.mxu0 0.0
        %942 = vmatpush1.msra.mxu0 0.0
        %943 = vmatprep.subr.mxu0 0.0
        %944 = vmatpush1.msra.mxu0 0.0
        %945 = vmatprep.subr.mxu0 0.0
        %946 = vmatpush1.msra.mxu0 0.0
        %947 = vmatprep.subr.mxu0 0.0
        %948 = vmatpush1.msra.mxu0 0.0
        %949 = vmatprep.subr.mxu0 0.0
        %950 = vmatpush1.msra.mxu0 0.0
        %951 = vmatprep.subr.mxu0 0.0
        %952 = vmatpush1.msra.mxu0 0.0
        %953 = vmatprep.subr.mxu0 0.0
        %954 = vmatpush1.msra.mxu0 0.0
        %955 = vmatprep.subr.mxu0 0.0
        %956 = vmatpush1.msra.mxu0 0.0
        %957 = vmatprep.subr.mxu0 0.0
        %958 = vmatpush1.msra.mxu0 0.0
        %959 = vmatprep.subr.mxu0 0.0
        %960 = vmatpush1.msra.mxu0 0.0
        %961 = vmatprep.subr.mxu0 0.0
        %962 = vmatpush1.msra.mxu0 0.0
        %963 = vmatprep.subr.mxu0 0.0
        %964 = vmatpush1.msra.mxu0 0.0
        %965 = vmatprep.subr.mxu0 0.0
        %966 = vmatpush1.msra.mxu0 0.0
        %967 = vmatprep.subr.mxu0 0.0
        %968 = vmatpush1.msra.mxu0 0.0
        %969 = vmatprep.subr.mxu0 0.0
        %970 = vmatpush1.msra.mxu0 0.0
        %971 = vmatprep.subr.mxu0 0.0
        %972 = vmatpush1.msra.mxu0 0.0
        %973 = vmatprep.subr.mxu0 0.0
        %974 = vmatpush1.msra.mxu0 0.0
        %975 = vmatprep.subr.mxu0 0.0
        %976 = vmatpush1.msra.mxu0 0.0
        %977 = vmatprep.subr.mxu0 0.0
        %978 = vmatpush1.msra.mxu0 0.0
        %979 = vmatprep.subr.mxu0 0.0
        %980 = vmatpush1.msra.mxu0 0.0
        %981 = vmatprep.subr.mxu0 0.0
        %982 = vmatpush1.msra.mxu0 0.0
        %983 = vmatprep.subr.mxu0 0.0
        %984 = vmatpush1.msra.mxu0 0.0
        %985 = vmatprep.subr.mxu0 0.0
        %986 = vmatpush1.msra.mxu0 0.0
        %987 = vmatprep.subr.mxu0 0.0
        %988 = vmatpush1.msra.mxu0 0.0
        %989 = vmatprep.subr.mxu0 0.0
        %990 = vmatpush1.msra.mxu0 0.0
        %991 = vmatprep.subr.mxu0 0.0
        %992 = vmatpush1.msra.mxu0 0.0
        %993 = vmatprep.mubr.f32.mxu0 0.0
        %994 = vmatmul.mubr.f32.gmra.mrb[0].mxu0 %v668
        %v995 = vpop.f32.mrb[0].mxu0
        %v996 = vadd.f32 %v659, %v995
        %v997 = vpop.f32.mrb[0].mxu0
        %v998 = vadd.f32 %v659, %v997
        %999 = vmatprep.mubr.f32.mxu0 0.0
        %1000 = vmatmul.mubr.f32.gmra.mrb[0].mxu0 %v671
        %v1001 = vpop.f32.mrb[0].mxu0
        %v1002 = vadd.f32 %v664, %v1001
        %v1003 = vpop.f32.mrb[0].mxu0
        %v1004 = vadd.f32 %v664, %v1003
        %1005 = vdwg.mxu0
        %v1014 = vcombine.low %v765, %v767
        %v1015 = vcombine.high %v765, %v767
        %v1016 = vcombine.low %v842, %v844
        %v1017 = vcombine.high %v842, %v844
        %v1018 = vcombine.low %v919, %v921
        %v1019 = vcombine.high %v919, %v921
        %v1020 = vcombine.low %v996, %v998
        %v1021 = vcombine.high %v996, %v998
        %v1023 = vunpack.c.l.s4 1966171168
        %v1024 = vunpack.c.0.s8 %v1023
        %v1025 = vlaneseq
        %v1026 = vshrl.u32 %v1025, 7
        %v1027 = vsub.s32 %v1024, %v1026
        %v1028 = vrot.slane %v1014, %v1027
        %v1030 = vunpack.c.l.s4 1966171168
        %v1031 = vunpack.c.0.s8 %v1030
        %v1032 = vlaneseq
        %v1033 = vshrl.u32 %v1032, 7
        %v1034 = vsub.s32 %v1031, %v1033
        %v1035 = vrot.slane %v1015, %v1034
        %v1037 = vunpack.c.l.s4 1966171168
        %v1038 = vunpack.c.0.s8 %v1037
        %v1039 = vlaneseq
        %v1040 = vshrl.u32 %v1039, 7
        %v1041 = vsub.s32 %v1038, %v1040
        %v1042 = vrot.slane %v1016, %v1041
        %v1044 = vunpack.c.l.s4 1966171168
        %v1045 = vunpack.c.0.s8 %v1044
        %v1046 = vlaneseq
        %v1047 = vshrl.u32 %v1046, 7
        %v1048 = vsub.s32 %v1045, %v1047
        %v1049 = vrot.slane %v1017, %v1048
        %v1051 = vunpack.c.l.s4 1966171168
        %v1052 = vunpack.c.0.s8 %v1051
        %v1053 = vlaneseq
        %v1054 = vshrl.u32 %v1053, 7
        %v1055 = vsub.s32 %v1052, %v1054
        %v1056 = vrot.slane %v1018, %v1055
        %v1058 = vunpack.c.l.s4 1966171168
        %v1059 = vunpack.c.0.s8 %v1058
        %v1060 = vlaneseq
        %v1061 = vshrl.u32 %v1060, 7
        %v1062 = vsub.s32 %v1059, %v1061
        %v1063 = vrot.slane %v1019, %v1062
        %v1065 = vunpack.c.l.s4 1966171168
        %v1066 = vunpack.c.0.s8 %v1065
        %v1067 = vlaneseq
        %v1068 = vshrl.u32 %v1067, 7
        %v1069 = vsub.s32 %v1066, %v1068
        %v1070 = vrot.slane %v1020, %v1069
        %v1072 = vunpack.c.l.s4 1966171168
        %v1073 = vunpack.c.0.s8 %v1072
        %v1074 = vlaneseq
        %v1075 = vshrl.u32 %v1074, 7
        %v1076 = vsub.s32 %v1073, %v1075
        %v1077 = vrot.slane %v1021, %v1076
        %v1078 = vcombine.low %v1028, %v1042
        %v1079 = vcombine.high %v1028, %v1042
        %v1080 = vcombine.low %v1035, %v1049
        %v1081 = vcombine.high %v1035, %v1049
        %v1082 = vcombine.low %v1056, %v1070
        %v1083 = vcombine.high %v1056, %v1070
        %v1084 = vcombine.low %v1063, %v1077
        %v1085 = vcombine.high %v1063, %v1077
        %v1087 = vunpack.c.l.s4 1966171168
        %v1088 = vunpack.c.0.s8 %v1087
        %v1089 = vlaneseq
        %v1090 = vshrl.u32 %v1089, 7
        %v1091 = vsub.s32 %v1088, %v1090
        %v1092 = vrot.slane %v1078, %v1091
        %v1094 = vunpack.c.l.s4 1966171168
        %v1095 = vunpack.c.0.s8 %v1094
        %v1096 = vlaneseq
        %v1097 = vshrl.u32 %v1096, 7
        %v1098 = vsub.s32 %v1095, %v1097
        %v1099 = vrot.slane %v1080, %v1098
        %v1101 = vunpack.c.l.s4 1966171168
        %v1102 = vunpack.c.0.s8 %v1101
        %v1103 = vlaneseq
        %v1104 = vshrl.u32 %v1103, 7
        %v1105 = vsub.s32 %v1102, %v1104
        %v1106 = vrot.slane %v1079, %v1105
        %v1108 = vunpack.c.l.s4 1966171168
        %v1109 = vunpack.c.0.s8 %v1108
        %v1110 = vlaneseq
        %v1111 = vshrl.u32 %v1110, 7
        %v1112 = vsub.s32 %v1109, %v1111
        %v1113 = vrot.slane %v1081, %v1112
        %v1115 = vunpack.c.l.s4 1966171168
        %v1116 = vunpack.c.0.s8 %v1115
        %v1117 = vlaneseq
        %v1118 = vshrl.u32 %v1117, 7
        %v1119 = vsub.s32 %v1116, %v1118
        %v1120 = vrot.slane %v1082, %v1119
        %v1122 = vunpack.c.l.s4 1966171168
        %v1123 = vunpack.c.0.s8 %v1122
        %v1124 = vlaneseq
        %v1125 = vshrl.u32 %v1124, 7
        %v1126 = vsub.s32 %v1123, %v1125
        %v1127 = vrot.slane %v1084, %v1126
        %v1129 = vunpack.c.l.s4 1966171168
        %v1130 = vunpack.c.0.s8 %v1129
        %v1131 = vlaneseq
        %v1132 = vshrl.u32 %v1131, 7
        %v1133 = vsub.s32 %v1130, %v1132
        %v1134 = vrot.slane %v1083, %v1133
        %v1136 = vunpack.c.l.s4 1966171168
        %v1137 = vunpack.c.0.s8 %v1136
        %v1138 = vlaneseq
        %v1139 = vshrl.u32 %v1138, 7
        %v1140 = vsub.s32 %v1137, %v1139
        %v1141 = vrot.slane %v1085, %v1140
        %v1142 = vcombine.low %v1092, %v1120
        %v1143 = vcombine.high %v1092, %v1120
        %v1144 = vcombine.low %v1099, %v1127
        %v1145 = vcombine.high %v1099, %v1127
        %v1146 = vcombine.low %v1106, %v1134
        %v1147 = vcombine.high %v1106, %v1134
        %v1148 = vcombine.low %v1113, %v1141
        %v1149 = vcombine.high %v1113, %v1141
        %v1158 = vpack.c.bf16 %v1146, %v1142
        %v1159 = vpack.c.bf16 %v1147, %v1143
        %v1160 = vpack.c.bf16 %v1148, %v1144
        %v1161 = vpack.c.bf16 %v1149, %v1145
        %v1170 = vcombine.low %v771, %v773
        %v1171 = vcombine.high %v771, %v773
        %v1172 = vcombine.low %v848, %v850
        %v1173 = vcombine.high %v848, %v850
        %v1174 = vcombine.low %v925, %v927
        %v1175 = vcombine.high %v925, %v927
        %v1176 = vcombine.low %v1002, %v1004
        %v1177 = vcombine.high %v1002, %v1004
        %v1179 = vunpack.c.l.s4 1966171168
        %v1180 = vunpack.c.0.s8 %v1179
        %v1181 = vlaneseq
        %v1182 = vshrl.u32 %v1181, 7
        %v1183 = vsub.s32 %v1180, %v1182
        %v1184 = vrot.slane %v1170, %v1183
        %v1186 = vunpack.c.l.s4 1966171168
        %v1187 = vunpack.c.0.s8 %v1186
        %v1188 = vlaneseq
        %v1189 = vshrl.u32 %v1188, 7
        %v1190 = vsub.s32 %v1187, %v1189
        %v1191 = vrot.slane %v1171, %v1190
        %v1193 = vunpack.c.l.s4 1966171168
        %v1194 = vunpack.c.0.s8 %v1193
        %v1195 = vlaneseq
        %v1196 = vshrl.u32 %v1195, 7
        %v1197 = vsub.s32 %v1194, %v1196
        %v1198 = vrot.slane %v1172, %v1197
        %v1200 = vunpack.c.l.s4 1966171168
        %v1201 = vunpack.c.0.s8 %v1200
        %v1202 = vlaneseq
        %v1203 = vshrl.u32 %v1202, 7
        %v1204 = vsub.s32 %v1201, %v1203
        %v1205 = vrot.slane %v1173, %v1204
        %v1207 = vunpack.c.l.s4 1966171168
        %v1208 = vunpack.c.0.s8 %v1207
        %v1209 = vlaneseq
        %v1210 = vshrl.u32 %v1209, 7
        %v1211 = vsub.s32 %v1208, %v1210
        %v1212 = vrot.slane %v1174, %v1211
        %v1214 = vunpack.c.l.s4 1966171168
        %v1215 = vunpack.c.0.s8 %v1214
        %v1216 = vlaneseq
        %v1217 = vshrl.u32 %v1216, 7
        %v1218 = vsub.s32 %v1215, %v1217
        %v1219 = vrot.slane %v1175, %v1218
        %v1221 = vunpack.c.l.s4 1966171168
        %v1222 = vunpack.c.0.s8 %v1221
        %v1223 = vlaneseq
        %v1224 = vshrl.u32 %v1223, 7
        %v1225 = vsub.s32 %v1222, %v1224
        %v1226 = vrot.slane %v1176, %v1225
        %v1228 = vunpack.c.l.s4 1966171168
        %v1229 = vunpack.c.0.s8 %v1228
        %v1230 = vlaneseq
        %v1231 = vshrl.u32 %v1230, 7
        %v1232 = vsub.s32 %v1229, %v1231
        %v1233 = vrot.slane %v1177, %v1232
        %v1234 = vcombine.low %v1184, %v1198
        %v1235 = vcombine.high %v1184, %v1198
        %v1236 = vcombine.low %v1191, %v1205
        %v1237 = vcombine.high %v1191, %v1205
        %v1238 = vcombine.low %v1212, %v1226
        %v1239 = vcombine.high %v1212, %v1226
        %v1240 = vcombine.low %v1219, %v1233
        %v1241 = vcombine.high %v1219, %v1233
        %v1243 = vunpack.c.l.s4 1966171168
        %v1244 = vunpack.c.0.s8 %v1243
        %v1245 = vlaneseq
        %v1246 = vshrl.u32 %v1245, 7
        %v1247 = vsub.s32 %v1244, %v1246
        %v1248 = vrot.slane %v1234, %v1247
        %v1250 = vunpack.c.l.s4 1966171168
        %v1251 = vunpack.c.0.s8 %v1250
        %v1252 = vlaneseq
        %v1253 = vshrl.u32 %v1252, 7
        %v1254 = vsub.s32 %v1251, %v1253
        %v1255 = vrot.slane %v1236, %v1254
        %v1257 = vunpack.c.l.s4 1966171168
        %v1258 = vunpack.c.0.s8 %v1257
        %v1259 = vlaneseq
        %v1260 = vshrl.u32 %v1259, 7
        %v1261 = vsub.s32 %v1258, %v1260
        %v1262 = vrot.slane %v1235, %v1261
        %v1264 = vunpack.c.l.s4 1966171168
        %v1265 = vunpack.c.0.s8 %v1264
        %v1266 = vlaneseq
        %v1267 = vshrl.u32 %v1266, 7
        %v1268 = vsub.s32 %v1265, %v1267
        %v1269 = vrot.slane %v1237, %v1268
        %v1271 = vunpack.c.l.s4 1966171168
        %v1272 = vunpack.c.0.s8 %v1271
        %v1273 = vlaneseq
        %v1274 = vshrl.u32 %v1273, 7
        %v1275 = vsub.s32 %v1272, %v1274
        %v1276 = vrot.slane %v1238, %v1275
        %v1278 = vunpack.c.l.s4 1966171168
        %v1279 = vunpack.c.0.s8 %v1278
        %v1280 = vlaneseq
        %v1281 = vshrl.u32 %v1280, 7
        %v1282 = vsub.s32 %v1279, %v1281
        %v1283 = vrot.slane %v1240, %v1282
        %v1285 = vunpack.c.l.s4 1966171168
        %v1286 = vunpack.c.0.s8 %v1285
        %v1287 = vlaneseq
        %v1288 = vshrl.u32 %v1287, 7
        %v1289 = vsub.s32 %v1286, %v1288
        %v1290 = vrot.slane %v1239, %v1289
        %v1292 = vunpack.c.l.s4 1966171168
        %v1293 = vunpack.c.0.s8 %v1292
        %v1294 = vlaneseq
        %v1295 = vshrl.u32 %v1294, 7
        %v1296 = vsub.s32 %v1293, %v1295
        %v1297 = vrot.slane %v1241, %v1296
        %v1298 = vcombine.low %v1248, %v1276
        %v1299 = vcombine.high %v1248, %v1276
        %v1300 = vcombine.low %v1255, %v1283
        %v1301 = vcombine.high %v1255, %v1283
        %v1302 = vcombine.low %v1262, %v1290
        %v1303 = vcombine.high %v1262, %v1290
        %v1304 = vcombine.low %v1269, %v1297
        %v1305 = vcombine.high %v1269, %v1297
        %v1314 = vpack.c.bf16 %v1302, %v1298
        %v1315 = vpack.c.bf16 %v1303, %v1299
        %v1316 = vpack.c.bf16 %v1304, %v1300
        %v1317 = vpack.c.bf16 %v1305, %v1301
        %1318 = vxpose.xlu0.c.b16.start [1/8] %v1158, 128
        %1319 = vxpose.xlu0.c.b16.cont [2/8] %v1159, 128
        %1320 = vxpose.xlu0.c.b16.cont [3/8] %v1160, 128
        %1321 = vxpose.xlu0.c.b16.cont [4/8] %v1161, 128
        %1322 = vxpose.xlu0.c.b16.cont [5/8] 0, 128
        %1323 = vxpose.xlu0.c.b16.cont [6/8] 0, 128
        %1324 = vxpose.xlu0.c.b16.cont [7/8] 0, 128
        %1325 = vxpose.xlu0.c.b16.end [8/8] 0, 128
        %v1326 = vpop.trf.xlu0
        %v1327 = vpop.trf.xlu0
        %v1328 = vpop.trf.xlu0
        %v1329 = vpop.trf.xlu0
        %v1330 = vpop.trf.xlu0
        %v1331 = vpop.trf.xlu0
        %v1332 = vpop.trf.xlu0
        %v1333 = vpop.trf.xlu0
        %vm1334 = vcmask 523264
        %v1336 = vsel %vm1334, %v1326, 0
        %v1339 = vsel %vm1334, %v1327, 0
        %v1342 = vsel %vm1334, %v1328, 0
        %v1345 = vsel %vm1334, %v1329, 0
        %v1348 = vsel %vm1334, %v1330, 0
        %v1351 = vsel %vm1334, %v1331, 0
        %v1354 = vsel %vm1334, %v1332, 0
        %v1357 = vsel %vm1334, %v1333, 0
        %1359 = vmatprep.subr.bf16.mxu0 0
        %1360 = vmatpush1.bf16.msra.mxu0 %v1314
        %1361 = vmatprep.subr.bf16.mxu0 0
        %1362 = vmatpush1.bf16.msra.mxu0 %v1315
        %1363 = vmatprep.subr.bf16.mxu0 0
        %1364 = vmatpush1.bf16.msra.mxu0 %v1316
        %1365 = vmatprep.subr.bf16.mxu0 0
        %1366 = vmatpush1.bf16.msra.mxu0 %v1317
        %1367 = vmatprep.subr.bf16.mxu0 0
        %1368 = vmatpush1.bf16.msra.mxu0 0
        %1369 = vmatprep.subr.bf16.mxu0 0
        %1370 = vmatpush1.bf16.msra.mxu0 0
        %1371 = vmatprep.subr.bf16.mxu0 0
        %1372 = vmatpush1.bf16.msra.mxu0 0
        %1373 = vmatprep.subr.bf16.mxu0 0
        %1374 = vmatpush1.bf16.msra.mxu0 0
        %1375 = vmatprep.subr.bf16.mxu0 0
        %1376 = vmatpush1.bf16.msra.mxu0 0
        %1377 = vmatprep.subr.bf16.mxu0 0
        %1378 = vmatpush1.bf16.msra.mxu0 0
        %1379 = vmatprep.subr.bf16.mxu0 0
        %1380 = vmatpush1.bf16.msra.mxu0 0
        %1381 = vmatprep.subr.bf16.mxu0 0
        %1382 = vmatpush1.bf16.msra.mxu0 0
        %1383 = vmatprep.subr.bf16.mxu0 0
        %1384 = vmatpush1.bf16.msra.mxu0 0
        %1385 = vmatprep.subr.bf16.mxu0 0
        %1386 = vmatpush1.bf16.msra.mxu0 0
        %1387 = vmatprep.subr.bf16.mxu0 0
        %1388 = vmatpush1.bf16.msra.mxu0 0
        %1389 = vmatprep.subr.bf16.mxu0 0
        %1390 = vmatpush1.bf16.msra.mxu0 0
        %1391 = vmatprep.mubr.bf16.mxu0 0
        %1392 = vmatmul.mubr.bf16.gmra.mrb[0].mxu0 %v1336
        %v1393 = vpop.f32.mrb[0].mxu0
        %v1394 = vadd.f32 0.0, %v1393
        %v1395 = vpop.f32.mrb[0].mxu0
        %v1396 = vpop.f32.mrb[0].mxu0
        %v1397 = vadd.f32 0.0, %v1396
        %v1398 = vpop.f32.mrb[0].mxu0
        %1399 = vmatprep.mubr.bf16.mxu0 0
        %1400 = vmatmul.mubr.bf16.gmra.mrb[0].mxu0 %v1339
        %v1401 = vpop.f32.mrb[0].mxu0
        %v1402 = vadd.f32 0.0, %v1401
        %v1403 = vpop.f32.mrb[0].mxu0
        %v1404 = vpop.f32.mrb[0].mxu0
        %v1405 = vadd.f32 0.0, %v1404
        %v1406 = vpop.f32.mrb[0].mxu0
        %1407 = vmatprep.mubr.bf16.mxu0 0
        %1408 = vmatmul.mubr.bf16.gmra.mrb[0].mxu0 %v1342
        %v1409 = vpop.f32.mrb[0].mxu0
        %v1410 = vadd.f32 0.0, %v1409
        %v1411 = vpop.f32.mrb[0].mxu0
        %v1412 = vpop.f32.mrb[0].mxu0
        %v1413 = vadd.f32 0.0, %v1412
        %v1414 = vpop.f32.mrb[0].mxu0
        %1415 = vmatprep.mubr.bf16.mxu0 0
        %1416 = vmatmul.mubr.bf16.gmra.mrb[0].mxu0 %v1345
        %v1417 = vpop.f32.mrb[0].mxu0
        %v1418 = vadd.f32 0.0, %v1417
        %v1419 = vpop.f32.mrb[0].mxu0
        %v1420 = vpop.f32.mrb[0].mxu0
        %v1421 = vadd.f32 0.0, %v1420
        %v1422 = vpop.f32.mrb[0].mxu0
        %1423 = vmatprep.mubr.bf16.mxu0 0
        %1424 = vmatmul.mubr.bf16.gmra.mrb[0].mxu0 %v1348
        %v1425 = vpop.f32.mrb[0].mxu0
        %v1426 = vadd.f32 0.0, %v1425
        %v1427 = vpop.f32.mrb[0].mxu0
        %v1428 = vpop.f32.mrb[0].mxu0
        %v1429 = vadd.f32 0.0, %v1428
        %v1430 = vpop.f32.mrb[0].mxu0
        %1431 = vmatprep.mubr.bf16.mxu0 0
        %1432 = vmatmul.mubr.bf16.gmra.mrb[0].mxu0 %v1351
        %v1433 = vpop.f32.mrb[0].mxu0
        %v1434 = vadd.f32 0.0, %v1433
        %v1435 = vpop.f32.mrb[0].mxu0
        %v1436 = vpop.f32.mrb[0].mxu0
        %v1437 = vadd.f32 0.0, %v1436
        %v1438 = vpop.f32.mrb[0].mxu0
        %1439 = vmatprep.mubr.bf16.mxu0 0
        %1440 = vmatmul.mubr.bf16.gmra.mrb[0].mxu0 %v1354
        %v1441 = vpop.f32.mrb[0].mxu0
        %v1442 = vadd.f32 0.0, %v1441
        %v1443 = vpop.f32.mrb[0].mxu0
        %v1444 = vpop.f32.mrb[0].mxu0
        %v1445 = vadd.f32 0.0, %v1444
        %v1446 = vpop.f32.mrb[0].mxu0
        %1447 = vmatprep.mubr.bf16.mxu0 0
        %1448 = vmatmul.mubr.bf16.gmra.mrb[0].mxu0 %v1357
        %v1449 = vpop.f32.mrb[0].mxu0
        %v1450 = vadd.f32 0.0, %v1449
        %v1451 = vpop.f32.mrb[0].mxu0
        %v1452 = vpop.f32.mrb[0].mxu0
        %v1453 = vadd.f32 0.0, %v1452
        %v1454 = vpop.f32.mrb[0].mxu0
        %1455 = vdwg.mxu0
        %v1456 = vld [vmem:[%s3] sm:$0xff]
        %v1457 = vld [vmem:[%s3 + $0x8] sm:$0xff]
        %v1458 = vld [vmem:[%s3 + $0x10] sm:$0xff]
        %v1459 = vld [vmem:[%s3 + $0x18] sm:$0xff]
        %v1460 = vld [vmem:[%s3 + $0x20] sm:$0xff]
        %v1461 = vld [vmem:[%s3 + $0x28] sm:$0xff]
        %v1462 = vld [vmem:[%s3 + $0x30] sm:$0xff]
        %v1463 = vld [vmem:[%s3 + $0x38] sm:$0xff]
        %v1464 = vld [vmem:[%s3 + $0x40] sm:$0xff]
        %v1465 = vld [vmem:[%s3 + $0x48] sm:$0xff]
        %v1466 = vld [vmem:[%s3 + $0x50] sm:$0xff]
        %v1467 = vld [vmem:[%s3 + $0x58] sm:$0xff]
        %v1468 = vld [vmem:[%s3 + $0x60] sm:$0xff]
        %v1469 = vld [vmem:[%s3 + $0x68] sm:$0xff]
        %v1470 = vld [vmem:[%s3 + $0x70] sm:$0xff]
        %v1471 = vld [vmem:[%s3 + $0x78] sm:$0xff]
        %v1472 = vtanh.pop %v1394
        %v1473 = vtanh.pop %v1397
        %v1474 = vtanh.pop %v1402
        %v1475 = vtanh.pop %v1405
        %v1476 = vtanh.pop %v1410
        %v1477 = vtanh.pop %v1413
        %v1478 = vtanh.pop %v1418
        %v1479 = vtanh.pop %v1421
        %v1480 = vtanh.pop %v1426
        %v1481 = vtanh.pop %v1429
        %v1482 = vtanh.pop %v1434
        %v1483 = vtanh.pop %v1437
        %v1484 = vtanh.pop %v1442
        %v1485 = vtanh.pop %v1445
        %v1486 = vtanh.pop %v1450
        %v1487 = vtanh.pop %v1453
        %v1488 = vstv %s474
        %v1489 = vmul.f32 %v1472, %v1488
        %v1490 = vmul.f32 %v1473, %v1488
        %v1491 = vmul.f32 %v1474, %v1488
        %v1492 = vmul.f32 %v1475, %v1488
        %v1493 = vmul.f32 %v1476, %v1488
        %v1494 = vmul.f32 %v1477, %v1488
        %v1495 = vmul.f32 %v1478, %v1488
        %v1496 = vmul.f32 %v1479, %v1488
        %v1497 = vmul.f32 %v1480, %v1488
        %v1498 = vmul.f32 %v1481, %v1488
        %v1499 = vmul.f32 %v1482, %v1488
        %v1500 = vmul.f32 %v1483, %v1488
        %v1501 = vmul.f32 %v1484, %v1488
        %v1502 = vmul.f32 %v1485, %v1488
        %v1503 = vmul.f32 %v1486, %v1488
        %v1504 = vmul.f32 %v1487, %v1488
        %v1505 = vadd.f32 %v1456, %v1489
        %v1506 = vadd.f32 %v1457, %v1490
        %v1507 = vadd.f32 %v1458, %v1491
        %v1508 = vadd.f32 %v1459, %v1492
        %v1509 = vadd.f32 %v1460, %v1493
        %v1510 = vadd.f32 %v1461, %v1494
        %v1511 = vadd.f32 %v1462, %v1495
        %v1512 = vadd.f32 %v1463, %v1496
        %v1513 = vadd.f32 %v1464, %v1497
        %v1514 = vadd.f32 %v1465, %v1498
        %v1515 = vadd.f32 %v1466, %v1499
        %v1516 = vadd.f32 %v1467, %v1500
        %v1517 = vadd.f32 %v1468, %v1501
        %v1518 = vadd.f32 %v1469, %v1502
        %v1519 = vadd.f32 %v1470, %v1503
        %v1520 = vadd.f32 %v1471, %v1504
        %v1521 = vpack.c.bf16 %v1506, %v1505
        %v1522 = vpack.c.bf16 %v1508, %v1507
        %v1523 = vpack.c.bf16 %v1510, %v1509
        %v1524 = vpack.c.bf16 %v1512, %v1511
        %v1525 = vpack.c.bf16 %v1514, %v1513
        %v1526 = vpack.c.bf16 %v1516, %v1515
        %v1527 = vpack.c.bf16 %v1518, %v1517
        %v1528 = vpack.c.bf16 %v1520, %v1519
        %1529 = vmatprep.subr.bf16.mxu0 0
        %1530 = vmatpush1.bf16.msra.mxu0 %v1521
        %1531 = vmatprep.subr.bf16.mxu0 0
        %1532 = vmatpush1.bf16.msra.mxu0 %v1522
        %1533 = vmatprep.subr.bf16.mxu0 0
        %1534 = vmatpush1.bf16.msra.mxu0 %v1523
        %1535 = vmatprep.subr.bf16.mxu0 0
        %1536 = vmatpush1.bf16.msra.mxu0 %v1524
        %1537 = vmatprep.subr.bf16.mxu0 0
        %1538 = vmatpush1.bf16.msra.mxu0 %v1525
        %1539 = vmatprep.subr.bf16.mxu0 0
        %1540 = vmatpush1.bf16.msra.mxu0 %v1526
        %1541 = vmatprep.subr.bf16.mxu0 0
        %1542 = vmatpush1.bf16.msra.mxu0 %v1527
        %1543 = vmatprep.subr.bf16.mxu0 0
        %1544 = vmatpush1.bf16.msra.mxu0 %v1528
        %1545 = vmatprep.subr.bf16.mxu0 0
        %1546 = vmatpush1.bf16.msra.mxu0 0
        %1547 = vmatprep.subr.bf16.mxu0 0
        %1548 = vmatpush1.bf16.msra.mxu0 0
        %1549 = vmatprep.subr.bf16.mxu0 0
        %1550 = vmatpush1.bf16.msra.mxu0 0
        %1551 = vmatprep.subr.bf16.mxu0 0
        %1552 = vmatpush1.bf16.msra.mxu0 0
        %1553 = vmatprep.subr.bf16.mxu0 0
        %1554 = vmatpush1.bf16.msra.mxu0 0
        %1555 = vmatprep.subr.bf16.mxu0 0
        %1556 = vmatpush1.bf16.msra.mxu0 0
        %1557 = vmatprep.subr.bf16.mxu0 0
        %1558 = vmatpush1.bf16.msra.mxu0 0
        %1559 = vmatprep.subr.bf16.mxu0 0
        %1560 = vmatpush1.bf16.msra.mxu0 0
        %1561 = vmatprep.mubr.bf16.mxu0 0
        %1562 = vmatmul.mubr.bf16.gmra.mrb[0].mxu0 %v650
        %v1563 = vpop.f32.mrb[0].mxu0
        %v1564 = vadd.f32 0.0, %v1563
        %v1565 = vpop.f32.mrb[0].mxu0
        %v1566 = vpop.f32.mrb[0].mxu0
        %v1567 = vadd.f32 0.0, %v1566
        %v1568 = vpop.f32.mrb[0].mxu0
        %1569 = vmatprep.mubr.bf16.mxu0 0
        %1570 = vmatmul.mubr.bf16.gmra.mrb[0].mxu0 %v651
        %v1571 = vpop.f32.mrb[0].mxu0
        %v1572 = vadd.f32 0.0, %v1571
        %v1573 = vpop.f32.mrb[0].mxu0
        %v1574 = vpop.f32.mrb[0].mxu0
        %v1575 = vadd.f32 0.0, %v1574
        %v1576 = vpop.f32.mrb[0].mxu0
        %1577 = vdwg.mxu0
        %v1578 = vld [vmem:[%s6] sm:$0xff]
        %v1579 = vld [vmem:[%s6 + $0x8] sm:$0xff]
        %v1580 = vld [vmem:[%s6 + $0x10] sm:$0xff]
        %v1581 = vld [vmem:[%s6 + $0x18] sm:$0xff]
        %s1582 = scalar_lea.vmem %s4, 16
        %v1583 = vld [vmem:[%s1582] sm:$0xff]
        %v1584 = vld [vmem:[%s1582 + $0x8] sm:$0xff]
        %s1585 = scalar_lea.vmem %s5, 16
        %v1586 = vld [vmem:[%s1585] sm:$0xff]
        %v1587 = vld [vmem:[%s1585 + $0x8] sm:$0xff]
        %1589 = vset.pattern.permute.xlu0 0
        %1590 = vperm.xlu0 %1589, %v1586
        %v1591 = vpop.permute.xlu0 %1590
        %1594 = vset.pattern.permute.xlu0 0
        %1595 = vperm.xlu0 %1594, %v1587
        %v1596 = vpop.permute.xlu0 %1595
        %v1599 = vsel %vm666, %v1583, 0
        %v1602 = vsel %vm666, %v1584, 0
        %1604 = vmatprep.subr.mxu0 %v678
        %1605 = vmatpush1.msra.mxu0 %v675
        %1606 = vmatprep.subr.mxu0 0.0
        %1607 = vmatpush1.msra.mxu0 0.0
        %1608 = vmatprep.subr.mxu0 0.0
        %1609 = vmatpush1.msra.mxu0 0.0
        %1610 = vmatprep.subr.mxu0 0.0
        %1611 = vmatpush1.msra.mxu0 0.0
        %1612 = vmatprep.subr.mxu0 0.0
        %1613 = vmatpush1.msra.mxu0 0.0
        %1614 = vmatprep.subr.mxu0 0.0
        %1615 = vmatpush1.msra.mxu0 0.0
        %1616 = vmatprep.subr.mxu0 0.0
        %1617 = vmatpush1.msra.mxu0 0.0
        %1618 = vmatprep.subr.mxu0 0.0
        %1619 = vmatpush1.msra.mxu0 0.0
        %1620 = vmatprep.subr.mxu0 0.0
        %1621 = vmatpush1.msra.mxu0 0.0
        %1622 = vmatprep.subr.mxu0 0.0
        %1623 = vmatpush1.msra.mxu0 0.0
        %1624 = vmatprep.subr.mxu0 0.0
        %1625 = vmatpush1.msra.mxu0 0.0
        %1626 = vmatprep.subr.mxu0 0.0
        %1627 = vmatpush1.msra.mxu0 0.0
        %1628 = vmatprep.subr.mxu0 0.0
        %1629 = vmatpush1.msra.mxu0 0.0
        %1630 = vmatprep.subr.mxu0 0.0
        %1631 = vmatpush1.msra.mxu0 0.0
        %1632 = vmatprep.subr.mxu0 0.0
        %1633 = vmatpush1.msra.mxu0 0.0
        %1634 = vmatprep.subr.mxu0 0.0
        %1635 = vmatpush1.msra.mxu0 0.0
        %1636 = vmatprep.subr.mxu0 0.0
        %1637 = vmatpush1.msra.mxu0 0.0
        %1638 = vmatprep.subr.mxu0 0.0
        %1639 = vmatpush1.msra.mxu0 0.0
        %1640 = vmatprep.subr.mxu0 0.0
        %1641 = vmatpush1.msra.mxu0 0.0
        %1642 = vmatprep.subr.mxu0 0.0
        %1643 = vmatpush1.msra.mxu0 0.0
        %1644 = vmatprep.subr.mxu0 0.0
        %1645 = vmatpush1.msra.mxu0 0.0
        %1646 = vmatprep.subr.mxu0 0.0
        %1647 = vmatpush1.msra.mxu0 0.0
        %1648 = vmatprep.subr.mxu0 0.0
        %1649 = vmatpush1.msra.mxu0 0.0
        %1650 = vmatprep.subr.mxu0 0.0
        %1651 = vmatpush1.msra.mxu0 0.0
        %1652 = vmatprep.subr.mxu0 0.0
        %1653 = vmatpush1.msra.mxu0 0.0
        %1654 = vmatprep.subr.mxu0 0.0
        %1655 = vmatpush1.msra.mxu0 0.0
        %1656 = vmatprep.subr.mxu0 0.0
        %1657 = vmatpush1.msra.mxu0 0.0
        %1658 = vmatprep.subr.mxu0 0.0
        %1659 = vmatpush1.msra.mxu0 0.0
        %1660 = vmatprep.subr.mxu0 0.0
        %1661 = vmatpush1.msra.mxu0 0.0
        %1662 = vmatprep.subr.mxu0 0.0
        %1663 = vmatpush1.msra.mxu0 0.0
        %1664 = vmatprep.subr.mxu0 0.0
        %1665 = vmatpush1.msra.mxu0 0.0
        %1666 = vmatprep.subr.mxu0 0.0
        %1667 = vmatpush1.msra.mxu0 0.0
        %1668 = vmatprep.mubr.f32.mxu0 0.0
        %1669 = vmatmul.mubr.f32.gmra.mrb[0].mxu0 %v1599
        %v1670 = vpop.f32.mrb[0].mxu0
        %v1671 = vadd.f32 %v1591, %v1670
        %v1672 = vpop.f32.mrb[0].mxu0
        %v1673 = vadd.f32 %v1591, %v1672
        %1674 = vmatprep.mubr.f32.mxu0 0.0
        %1675 = vmatmul.mubr.f32.gmra.mrb[0].mxu0 %v1602
        %v1676 = vpop.f32.mrb[0].mxu0
        %v1677 = vadd.f32 %v1596, %v1676
        %v1678 = vpop.f32.mrb[0].mxu0
        %v1679 = vadd.f32 %v1596, %v1678
        %1680 = vdwg.mxu0
        %1681 = vmatprep.subr.mxu0 %v684
        %1682 = vmatpush1.msra.mxu0 %v681
        %1683 = vmatprep.subr.mxu0 0.0
        %1684 = vmatpush1.msra.mxu0 0.0
        %1685 = vmatprep.subr.mxu0 0.0
        %1686 = vmatpush1.msra.mxu0 0.0
        %1687 = vmatprep.subr.mxu0 0.0
        %1688 = vmatpush1.msra.mxu0 0.0
        %1689 = vmatprep.subr.mxu0 0.0
        %1690 = vmatpush1.msra.mxu0 0.0
        %1691 = vmatprep.subr.mxu0 0.0
        %1692 = vmatpush1.msra.mxu0 0.0
        %1693 = vmatprep.subr.mxu0 0.0
        %1694 = vmatpush1.msra.mxu0 0.0
        %1695 = vmatprep.subr.mxu0 0.0
        %1696 = vmatpush1.msra.mxu0 0.0
        %1697 = vmatprep.subr.mxu0 0.0
        %1698 = vmatpush1.msra.mxu0 0.0
        %1699 = vmatprep.subr.mxu0 0.0
        %1700 = vmatpush1.msra.mxu0 0.0
        %1701 = vmatprep.subr.mxu0 0.0
        %1702 = vmatpush1.msra.mxu0 0.0
        %1703 = vmatprep.subr.mxu0 0.0
        %1704 = vmatpush1.msra.mxu0 0.0
        %1705 = vmatprep.subr.mxu0 0.0
        %1706 = vmatpush1.msra.mxu0 0.0
        %1707 = vmatprep.subr.mxu0 0.0
        %1708 = vmatpush1.msra.mxu0 0.0
        %1709 = vmatprep.subr.mxu0 0.0
        %1710 = vmatpush1.msra.mxu0 0.0
        %1711 = vmatprep.subr.mxu0 0.0
        %1712 = vmatpush1.msra.mxu0 0.0
        %1713 = vmatprep.subr.mxu0 0.0
        %1714 = vmatpush1.msra.mxu0 0.0
        %1715 = vmatprep.subr.mxu0 0.0
        %1716 = vmatpush1.msra.mxu0 0.0
        %1717 = vmatprep.subr.mxu0 0.0
        %1718 = vmatpush1.msra.mxu0 0.0
        %1719 = vmatprep.subr.mxu0 0.0
        %1720 = vmatpush1.msra.mxu0 0.0
        %1721 = vmatprep.subr.mxu0 0.0
        %1722 = vmatpush1.msra.mxu0 0.0
        %1723 = vmatprep.subr.mxu0 0.0
        %1724 = vmatpush1.msra.mxu0 0.0
        %1725 = vmatprep.subr.mxu0 0.0
        %1726 = vmatpush1.msra.mxu0 0.0
        %1727 = vmatprep.subr.mxu0 0.0
        %1728 = vmatpush1.msra.mxu0 0.0
        %1729 = vmatprep.subr.mxu0 0.0
        %1730 = vmatpush1.msra.mxu0 0.0
        %1731 = vmatprep.subr.mxu0 0.0
        %1732 = vmatpush1.msra.mxu0 0.0
        %1733 = vmatprep.subr.mxu0 0.0
        %1734 = vmatpush1.msra.mxu0 0.0
        %1735 = vmatprep.subr.mxu0 0.0
        %1736 = vmatpush1.msra.mxu0 0.0
        %1737 = vmatprep.subr.mxu0 0.0
        %1738 = vmatpush1.msra.mxu0 0.0
        %1739 = vmatprep.subr.mxu0 0.0
        %1740 = vmatpush1.msra.mxu0 0.0
        %1741 = vmatprep.subr.mxu0 0.0
        %1742 = vmatpush1.msra.mxu0 0.0
        %1743 = vmatprep.subr.mxu0 0.0
        %1744 = vmatpush1.msra.mxu0 0.0
        %1745 = vmatprep.mubr.f32.mxu0 0.0
        %1746 = vmatmul.mubr.f32.gmra.mrb[0].mxu0 %v1599
        %v1747 = vpop.f32.mrb[0].mxu0
        %v1748 = vadd.f32 %v1591, %v1747
        %v1749 = vpop.f32.mrb[0].mxu0
        %v1750 = vadd.f32 %v1591, %v1749
        %1751 = vmatprep.mubr.f32.mxu0 0.0
        %1752 = vmatmul.mubr.f32.gmra.mrb[0].mxu0 %v1602
        %v1753 = vpop.f32.mrb[0].mxu0
        %v1754 = vadd.f32 %v1596, %v1753
        %v1755 = vpop.f32.mrb[0].mxu0
        %v1756 = vadd.f32 %v1596, %v1755
        %1757 = vdwg.mxu0
        %1758 = vmatprep.subr.mxu0 %v690
        %1759 = vmatpush1.msra.mxu0 %v687
        %1760 = vmatprep.subr.mxu0 0.0
        %1761 = vmatpush1.msra.mxu0 0.0
        %1762 = vmatprep.subr.mxu0 0.0
        %1763 = vmatpush1.msra.mxu0 0.0
        %1764 = vmatprep.subr.mxu0 0.0
        %1765 = vmatpush1.msra.mxu0 0.0
        %1766 = vmatprep.subr.mxu0 0.0
        %1767 = vmatpush1.msra.mxu0 0.0
        %1768 = vmatprep.subr.mxu0 0.0
        %1769 = vmatpush1.msra.mxu0 0.0
        %1770 = vmatprep.subr.mxu0 0.0
        %1771 = vmatpush1.msra.mxu0 0.0
        %1772 = vmatprep.subr.mxu0 0.0
        %1773 = vmatpush1.msra.mxu0 0.0
        %1774 = vmatprep.subr.mxu0 0.0
        %1775 = vmatpush1.msra.mxu0 0.0
        %1776 = vmatprep.subr.mxu0 0.0
        %1777 = vmatpush1.msra.mxu0 0.0
        %1778 = vmatprep.subr.mxu0 0.0
        %1779 = vmatpush1.msra.mxu0 0.0
        %1780 = vmatprep.subr.mxu0 0.0
        %1781 = vmatpush1.msra.mxu0 0.0
        %1782 = vmatprep.subr.mxu0 0.0
        %1783 = vmatpush1.msra.mxu0 0.0
        %1784 = vmatprep.subr.mxu0 0.0
        %1785 = vmatpush1.msra.mxu0 0.0
        %1786 = vmatprep.subr.mxu0 0.0
        %1787 = vmatpush1.msra.mxu0 0.0
        %1788 = vmatprep.subr.mxu0 0.0
        %1789 = vmatpush1.msra.mxu0 0.0
        %1790 = vmatprep.subr.mxu0 0.0
        %1791 = vmatpush1.msra.mxu0 0.0
        %1792 = vmatprep.subr.mxu0 0.0
        %1793 = vmatpush1.msra.mxu0 0.0
        %1794 = vmatprep.subr.mxu0 0.0
        %1795 = vmatpush1.msra.mxu0 0.0
        %1796 = vmatprep.subr.mxu0 0.0
        %1797 = vmatpush1.msra.mxu0 0.0
        %1798 = vmatprep.subr.mxu0 0.0
        %1799 = vmatpush1.msra.mxu0 0.0
        %1800 = vmatprep.subr.mxu0 0.0
        %1801 = vmatpush1.msra.mxu0 0.0
        %1802 = vmatprep.subr.mxu0 0.0
        %1803 = vmatpush1.msra.mxu0 0.0
        %1804 = vmatprep.subr.mxu0 0.0
        %1805 = vmatpush1.msra.mxu0 0.0
        %1806 = vmatprep.subr.mxu0 0.0
        %1807 = vmatpush1.msra.mxu0 0.0
        %1808 = vmatprep.subr.mxu0 0.0
        %1809 = vmatpush1.msra.mxu0 0.0
        %1810 = vmatprep.subr.mxu0 0.0
        %1811 = vmatpush1.msra.mxu0 0.0
        %1812 = vmatprep.subr.mxu0 0.0
        %1813 = vmatpush1.msra.mxu0 0.0
        %1814 = vmatprep.subr.mxu0 0.0
        %1815 = vmatpush1.msra.mxu0 0.0
        %1816 = vmatprep.subr.mxu0 0.0
        %1817 = vmatpush1.msra.mxu0 0.0
        %1818 = vmatprep.subr.mxu0 0.0
        %1819 = vmatpush1.msra.mxu0 0.0
        %1820 = vmatprep.subr.mxu0 0.0
        %1821 = vmatpush1.msra.mxu0 0.0
        %1822 = vmatprep.mubr.f32.mxu0 0.0
        %1823 = vmatmul.mubr.f32.gmra.mrb[0].mxu0 %v1599
        %v1824 = vpop.f32.mrb[0].mxu0
        %v1825 = vadd.f32 %v1591, %v1824
        %v1826 = vpop.f32.mrb[0].mxu0
        %v1827 = vadd.f32 %v1591, %v1826
        %1828 = vmatprep.mubr.f32.mxu0 0.0
        %1829 = vmatmul.mubr.f32.gmra.mrb[0].mxu0 %v1602
        %v1830 = vpop.f32.mrb[0].mxu0
        %v1831 = vadd.f32 %v1596, %v1830
        %v1832 = vpop.f32.mrb[0].mxu0
        %v1833 = vadd.f32 %v1596, %v1832
        %1834 = vdwg.mxu0
        %1835 = vmatprep.subr.mxu0 %v696
        %1836 = vmatpush1.msra.mxu0 %v693
        %1837 = vmatprep.subr.mxu0 0.0
        %1838 = vmatpush1.msra.mxu0 0.0
        %1839 = vmatprep.subr.mxu0 0.0
        %1840 = vmatpush1.msra.mxu0 0.0
        %1841 = vmatprep.subr.mxu0 0.0
        %1842 = vmatpush1.msra.mxu0 0.0
        %1843 = vmatprep.subr.mxu0 0.0
        %1844 = vmatpush1.msra.mxu0 0.0
        %1845 = vmatprep.subr.mxu0 0.0
        %1846 = vmatpush1.msra.mxu0 0.0
        %1847 = vmatprep.subr.mxu0 0.0
        %1848 = vmatpush1.msra.mxu0 0.0
        %1849 = vmatprep.subr.mxu0 0.0
        %1850 = vmatpush1.msra.mxu0 0.0
        %1851 = vmatprep.subr.mxu0 0.0
        %1852 = vmatpush1.msra.mxu0 0.0
        %1853 = vmatprep.subr.mxu0 0.0
        %1854 = vmatpush1.msra.mxu0 0.0
        %1855 = vmatprep.subr.mxu0 0.0
        %1856 = vmatpush1.msra.mxu0 0.0
        %1857 = vmatprep.subr.mxu0 0.0
        %1858 = vmatpush1.msra.mxu0 0.0
        %1859 = vmatprep.subr.mxu0 0.0
        %1860 = vmatpush1.msra.mxu0 0.0
        %1861 = vmatprep.subr.mxu0 0.0
        %1862 = vmatpush1.msra.mxu0 0.0
        %1863 = vmatprep.subr.mxu0 0.0
        %1864 = vmatpush1.msra.mxu0 0.0
        %1865 = vmatprep.subr.mxu0 0.0
        %1866 = vmatpush1.msra.mxu0 0.0
        %1867 = vmatprep.subr.mxu0 0.0
        %1868 = vmatpush1.msra.mxu0 0.0
        %1869 = vmatprep.subr.mxu0 0.0
        %1870 = vmatpush1.msra.mxu0 0.0
        %1871 = vmatprep.subr.mxu0 0.0
        %1872 = vmatpush1.msra.mxu0 0.0
        %1873 = vmatprep.subr.mxu0 0.0
        %1874 = vmatpush1.msra.mxu0 0.0
        %1875 = vmatprep.subr.mxu0 0.0
        %1876 = vmatpush1.msra.mxu0 0.0
        %1877 = vmatprep.subr.mxu0 0.0
        %1878 = vmatpush1.msra.mxu0 0.0
        %1879 = vmatprep.subr.mxu0 0.0
        %1880 = vmatpush1.msra.mxu0 0.0
        %1881 = vmatprep.subr.mxu0 0.0
        %1882 = vmatpush1.msra.mxu0 0.0
        %1883 = vmatprep.subr.mxu0 0.0
        %1884 = vmatpush1.msra.mxu0 0.0
        %1885 = vmatprep.subr.mxu0 0.0
        %1886 = vmatpush1.msra.mxu0 0.0
        %1887 = vmatprep.subr.mxu0 0.0
        %1888 = vmatpush1.msra.mxu0 0.0
        %1889 = vmatprep.subr.mxu0 0.0
        %1890 = vmatpush1.msra.mxu0 0.0
        %1891 = vmatprep.subr.mxu0 0.0
        %1892 = vmatpush1.msra.mxu0 0.0
        %1893 = vmatprep.subr.mxu0 0.0
        %1894 = vmatpush1.msra.mxu0 0.0
        %1895 = vmatprep.subr.mxu0 0.0
        %1896 = vmatpush1.msra.mxu0 0.0
        %1897 = vmatprep.subr.mxu0 0.0
        %1898 = vmatpush1.msra.mxu0 0.0
        %1899 = vmatprep.mubr.f32.mxu0 0.0
        %1900 = vmatmul.mubr.f32.gmra.mrb[0].mxu0 %v1599
        %v1901 = vpop.f32.mrb[0].mxu0
        %v1902 = vadd.f32 %v1591, %v1901
        %v1903 = vpop.f32.mrb[0].mxu0
        %v1904 = vadd.f32 %v1591, %v1903
        %1905 = vmatprep.mubr.f32.mxu0 0.0
        %1906 = vmatmul.mubr.f32.gmra.mrb[0].mxu0 %v1602
        %v1907 = vpop.f32.mrb[0].mxu0
        %v1908 = vadd.f32 %v1596, %v1907
        %v1909 = vpop.f32.mrb[0].mxu0
        %v1910 = vadd.f32 %v1596, %v1909
        %1911 = vdwg.mxu0
        %v1920 = vcombine.low %v1671, %v1673
        %v1921 = vcombine.high %v1671, %v1673
        %v1922 = vcombine.low %v1748, %v1750
        %v1923 = vcombine.high %v1748, %v1750
        %v1924 = vcombine.low %v1825, %v1827
        %v1925 = vcombine.high %v1825, %v1827
        %v1926 = vcombine.low %v1902, %v1904
        %v1927 = vcombine.high %v1902, %v1904
        %v1929 = vunpack.c.l.s4 1966171168
        %v1930 = vunpack.c.0.s8 %v1929
        %v1931 = vlaneseq
        %v1932 = vshrl.u32 %v1931, 7
        %v1933 = vsub.s32 %v1930, %v1932
        %v1934 = vrot.slane %v1920, %v1933
        %v1936 = vunpack.c.l.s4 1966171168
        %v1937 = vunpack.c.0.s8 %v1936
        %v1938 = vlaneseq
        %v1939 = vshrl.u32 %v1938, 7
        %v1940 = vsub.s32 %v1937, %v1939
        %v1941 = vrot.slane %v1921, %v1940
        %v1943 = vunpack.c.l.s4 1966171168
        %v1944 = vunpack.c.0.s8 %v1943
        %v1945 = vlaneseq
        %v1946 = vshrl.u32 %v1945, 7
        %v1947 = vsub.s32 %v1944, %v1946
        %v1948 = vrot.slane %v1922, %v1947
        %v1950 = vunpack.c.l.s4 1966171168
        %v1951 = vunpack.c.0.s8 %v1950
        %v1952 = vlaneseq
        %v1953 = vshrl.u32 %v1952, 7
        %v1954 = vsub.s32 %v1951, %v1953
        %v1955 = vrot.slane %v1923, %v1954
        %v1957 = vunpack.c.l.s4 1966171168
        %v1958 = vunpack.c.0.s8 %v1957
        %v1959 = vlaneseq
        %v1960 = vshrl.u32 %v1959, 7
        %v1961 = vsub.s32 %v1958, %v1960
        %v1962 = vrot.slane %v1924, %v1961
        %v1964 = vunpack.c.l.s4 1966171168
        %v1965 = vunpack.c.0.s8 %v1964
        %v1966 = vlaneseq
        %v1967 = vshrl.u32 %v1966, 7
        %v1968 = vsub.s32 %v1965, %v1967
        %v1969 = vrot.slane %v1925, %v1968
        %v1971 = vunpack.c.l.s4 1966171168
        %v1972 = vunpack.c.0.s8 %v1971
        %v1973 = vlaneseq
        %v1974 = vshrl.u32 %v1973, 7
        %v1975 = vsub.s32 %v1972, %v1974
        %v1976 = vrot.slane %v1926, %v1975
        %v1978 = vunpack.c.l.s4 1966171168
        %v1979 = vunpack.c.0.s8 %v1978
        %v1980 = vlaneseq
        %v1981 = vshrl.u32 %v1980, 7
        %v1982 = vsub.s32 %v1979, %v1981
        %v1983 = vrot.slane %v1927, %v1982
        %v1984 = vcombine.low %v1934, %v1948
        %v1985 = vcombine.high %v1934, %v1948
        %v1986 = vcombine.low %v1941, %v1955
        %v1987 = vcombine.high %v1941, %v1955
        %v1988 = vcombine.low %v1962, %v1976
        %v1989 = vcombine.high %v1962, %v1976
        %v1990 = vcombine.low %v1969, %v1983
        %v1991 = vcombine.high %v1969, %v1983
        %v1993 = vunpack.c.l.s4 1966171168
        %v1994 = vunpack.c.0.s8 %v1993
        %v1995 = vlaneseq
        %v1996 = vshrl.u32 %v1995, 7
        %v1997 = vsub.s32 %v1994, %v1996
        %v1998 = vrot.slane %v1984, %v1997
        %v2000 = vunpack.c.l.s4 1966171168
        %v2001 = vunpack.c.0.s8 %v2000
        %v2002 = vlaneseq
        %v2003 = vshrl.u32 %v2002, 7
        %v2004 = vsub.s32 %v2001, %v2003
        %v2005 = vrot.slane %v1986, %v2004
        %v2007 = vunpack.c.l.s4 1966171168
        %v2008 = vunpack.c.0.s8 %v2007
        %v2009 = vlaneseq
        %v2010 = vshrl.u32 %v2009, 7
        %v2011 = vsub.s32 %v2008, %v2010
        %v2012 = vrot.slane %v1985, %v2011
        %v2014 = vunpack.c.l.s4 1966171168
        %v2015 = vunpack.c.0.s8 %v2014
        %v2016 = vlaneseq
        %v2017 = vshrl.u32 %v2016, 7
        %v2018 = vsub.s32 %v2015, %v2017
        %v2019 = vrot.slane %v1987, %v2018
        %v2021 = vunpack.c.l.s4 1966171168
        %v2022 = vunpack.c.0.s8 %v2021
        %v2023 = vlaneseq
        %v2024 = vshrl.u32 %v2023, 7
        %v2025 = vsub.s32 %v2022, %v2024
        %v2026 = vrot.slane %v1988, %v2025
        %v2028 = vunpack.c.l.s4 1966171168
        %v2029 = vunpack.c.0.s8 %v2028
        %v2030 = vlaneseq
        %v2031 = vshrl.u32 %v2030, 7
        %v2032 = vsub.s32 %v2029, %v2031
        %v2033 = vrot.slane %v1990, %v2032
        %v2035 = vunpack.c.l.s4 1966171168
        %v2036 = vunpack.c.0.s8 %v2035
        %v2037 = vlaneseq
        %v2038 = vshrl.u32 %v2037, 7
        %v2039 = vsub.s32 %v2036, %v2038
        %v2040 = vrot.slane %v1989, %v2039
        %v2042 = vunpack.c.l.s4 1966171168
        %v2043 = vunpack.c.0.s8 %v2042
        %v2044 = vlaneseq
        %v2045 = vshrl.u32 %v2044, 7
        %v2046 = vsub.s32 %v2043, %v2045
        %v2047 = vrot.slane %v1991, %v2046
        %v2048 = vcombine.low %v1998, %v2026
        %v2049 = vcombine.high %v1998, %v2026
        %v2050 = vcombine.low %v2005, %v2033
        %v2051 = vcombine.high %v2005, %v2033
        %v2052 = vcombine.low %v2012, %v2040
        %v2053 = vcombine.high %v2012, %v2040
        %v2054 = vcombine.low %v2019, %v2047
        %v2055 = vcombine.high %v2019, %v2047
        %v2064 = vpack.c.bf16 %v2052, %v2048
        %v2065 = vpack.c.bf16 %v2053, %v2049
        %v2066 = vpack.c.bf16 %v2054, %v2050
        %v2067 = vpack.c.bf16 %v2055, %v2051
        %v2076 = vcombine.low %v1677, %v1679
        %v2077 = vcombine.high %v1677, %v1679
        %v2078 = vcombine.low %v1754, %v1756
        %v2079 = vcombine.high %v1754, %v1756
        %v2080 = vcombine.low %v1831, %v1833
        %v2081 = vcombine.high %v1831, %v1833
        %v2082 = vcombine.low %v1908, %v1910
        %v2083 = vcombine.high %v1908, %v1910
        %v2085 = vunpack.c.l.s4 1966171168
        %v2086 = vunpack.c.0.s8 %v2085
        %v2087 = vlaneseq
        %v2088 = vshrl.u32 %v2087, 7
        %v2089 = vsub.s32 %v2086, %v2088
        %v2090 = vrot.slane %v2076, %v2089
        %v2092 = vunpack.c.l.s4 1966171168
        %v2093 = vunpack.c.0.s8 %v2092
        %v2094 = vlaneseq
        %v2095 = vshrl.u32 %v2094, 7
        %v2096 = vsub.s32 %v2093, %v2095
        %v2097 = vrot.slane %v2077, %v2096
        %v2099 = vunpack.c.l.s4 1966171168
        %v2100 = vunpack.c.0.s8 %v2099
        %v2101 = vlaneseq
        %v2102 = vshrl.u32 %v2101, 7
        %v2103 = vsub.s32 %v2100, %v2102
        %v2104 = vrot.slane %v2078, %v2103
        %v2106 = vunpack.c.l.s4 1966171168
        %v2107 = vunpack.c.0.s8 %v2106
        %v2108 = vlaneseq
        %v2109 = vshrl.u32 %v2108, 7
        %v2110 = vsub.s32 %v2107, %v2109
        %v2111 = vrot.slane %v2079, %v2110
        %v2113 = vunpack.c.l.s4 1966171168
        %v2114 = vunpack.c.0.s8 %v2113
        %v2115 = vlaneseq
        %v2116 = vshrl.u32 %v2115, 7
        %v2117 = vsub.s32 %v2114, %v2116
        %v2118 = vrot.slane %v2080, %v2117
        %v2120 = vunpack.c.l.s4 1966171168
        %v2121 = vunpack.c.0.s8 %v2120
        %v2122 = vlaneseq
        %v2123 = vshrl.u32 %v2122, 7
        %v2124 = vsub.s32 %v2121, %v2123
        %v2125 = vrot.slane %v2081, %v2124
        %v2127 = vunpack.c.l.s4 1966171168
        %v2128 = vunpack.c.0.s8 %v2127
        %v2129 = vlaneseq
        %v2130 = vshrl.u32 %v2129, 7
        %v2131 = vsub.s32 %v2128, %v2130
        %v2132 = vrot.slane %v2082, %v2131
        %v2134 = vunpack.c.l.s4 1966171168
        %v2135 = vunpack.c.0.s8 %v2134
        %v2136 = vlaneseq
        %v2137 = vshrl.u32 %v2136, 7
        %v2138 = vsub.s32 %v2135, %v2137
        %v2139 = vrot.slane %v2083, %v2138
        %v2140 = vcombine.low %v2090, %v2104
        %v2141 = vcombine.high %v2090, %v2104
        %v2142 = vcombine.low %v2097, %v2111
        %v2143 = vcombine.high %v2097, %v2111
        %v2144 = vcombine.low %v2118, %v2132
        %v2145 = vcombine.high %v2118, %v2132
        %v2146 = vcombine.low %v2125, %v2139
        %v2147 = vcombine.high %v2125, %v2139
        %v2149 = vunpack.c.l.s4 1966171168
        %v2150 = vunpack.c.0.s8 %v2149
        %v2151 = vlaneseq
        %v2152 = vshrl.u32 %v2151, 7
        %v2153 = vsub.s32 %v2150, %v2152
        %v2154 = vrot.slane %v2140, %v2153
        %v2156 = vunpack.c.l.s4 1966171168
        %v2157 = vunpack.c.0.s8 %v2156
        %v2158 = vlaneseq
        %v2159 = vshrl.u32 %v2158, 7
        %v2160 = vsub.s32 %v2157, %v2159
        %v2161 = vrot.slane %v2142, %v2160
        %v2163 = vunpack.c.l.s4 1966171168
        %v2164 = vunpack.c.0.s8 %v2163
        %v2165 = vlaneseq
        %v2166 = vshrl.u32 %v2165, 7
        %v2167 = vsub.s32 %v2164, %v2166
        %v2168 = vrot.slane %v2141, %v2167
        %v2170 = vunpack.c.l.s4 1966171168
        %v2171 = vunpack.c.0.s8 %v2170
        %v2172 = vlaneseq
        %v2173 = vshrl.u32 %v2172, 7
        %v2174 = vsub.s32 %v2171, %v2173
        %v2175 = vrot.slane %v2143, %v2174
        %v2177 = vunpack.c.l.s4 1966171168
        %v2178 = vunpack.c.0.s8 %v2177
        %v2179 = vlaneseq
        %v2180 = vshrl.u32 %v2179, 7
        %v2181 = vsub.s32 %v2178, %v2180
        %v2182 = vrot.slane %v2144, %v2181
        %v2184 = vunpack.c.l.s4 1966171168
        %v2185 = vunpack.c.0.s8 %v2184
        %v2186 = vlaneseq
        %v2187 = vshrl.u32 %v2186, 7
        %v2188 = vsub.s32 %v2185, %v2187
        %v2189 = vrot.slane %v2146, %v2188
        %v2191 = vunpack.c.l.s4 1966171168
        %v2192 = vunpack.c.0.s8 %v2191
        %v2193 = vlaneseq
        %v2194 = vshrl.u32 %v2193, 7
        %v2195 = vsub.s32 %v2192, %v2194
        %v2196 = vrot.slane %v2145, %v2195
        %v2198 = vunpack.c.l.s4 1966171168
        %v2199 = vunpack.c.0.s8 %v2198
        %v2200 = vlaneseq
        %v2201 = vshrl.u32 %v2200, 7
        %v2202 = vsub.s32 %v2199, %v2201
        %v2203 = vrot.slane %v2147, %v2202
        %v2204 = vcombine.low %v2154, %v2182
        %v2205 = vcombine.high %v2154, %v2182
        %v2206 = vcombine.low %v2161, %v2189
        %v2207 = vcombine.high %v2161, %v2189
        %v2208 = vcombine.low %v2168, %v2196
        %v2209 = vcombine.high %v2168, %v2196
        %v2210 = vcombine.low %v2175, %v2203
        %v2211 = vcombine.high %v2175, %v2203
        %v2220 = vpack.c.bf16 %v2208, %v2204
        %v2221 = vpack.c.bf16 %v2209, %v2205
        %v2222 = vpack.c.bf16 %v2210, %v2206
        %v2223 = vpack.c.bf16 %v2211, %v2207
        %2224 = vxpose.xlu0.c.b16.start [1/8] %v2064, 128
        %2225 = vxpose.xlu0.c.b16.cont [2/8] %v2065, 128
        %2226 = vxpose.xlu0.c.b16.cont [3/8] %v2066, 128
        %2227 = vxpose.xlu0.c.b16.cont [4/8] %v2067, 128
        %2228 = vxpose.xlu0.c.b16.cont [5/8] 0, 128
        %2229 = vxpose.xlu0.c.b16.cont [6/8] 0, 128
        %2230 = vxpose.xlu0.c.b16.cont [7/8] 0, 128
        %2231 = vxpose.xlu0.c.b16.end [8/8] 0, 128
        %v2232 = vpop.trf.xlu0
        %v2233 = vpop.trf.xlu0
        %v2234 = vpop.trf.xlu0
        %v2235 = vpop.trf.xlu0
        %v2236 = vpop.trf.xlu0
        %v2237 = vpop.trf.xlu0
        %v2238 = vpop.trf.xlu0
        %v2239 = vpop.trf.xlu0
        %v2241 = vsel %vm1334, %v2232, 0
        %v2244 = vsel %vm1334, %v2233, 0
        %v2247 = vsel %vm1334, %v2234, 0
        %v2250 = vsel %vm1334, %v2235, 0
        %v2253 = vsel %vm1334, %v2236, 0
        %v2256 = vsel %vm1334, %v2237, 0
        %v2259 = vsel %vm1334, %v2238, 0
        %v2262 = vsel %vm1334, %v2239, 0
        %2264 = vmatprep.subr.bf16.mxu0 0
        %2265 = vmatpush1.bf16.msra.mxu0 %v2220
        %2266 = vmatprep.subr.bf16.mxu0 0
        %2267 = vmatpush1.bf16.msra.mxu0 %v2221
        %2268 = vmatprep.subr.bf16.mxu0 0
        %2269 = vmatpush1.bf16.msra.mxu0 %v2222
        %2270 = vmatprep.subr.bf16.mxu0 0
        %2271 = vmatpush1.bf16.msra.mxu0 %v2223
        %2272 = vmatprep.subr.bf16.mxu0 0
        %2273 = vmatpush1.bf16.msra.mxu0 0
        %2274 = vmatprep.subr.bf16.mxu0 0
        %2275 = vmatpush1.bf16.msra.mxu0 0
        %2276 = vmatprep.subr.bf16.mxu0 0
        %2277 = vmatpush1.bf16.msra.mxu0 0
        %2278 = vmatprep.subr.bf16.mxu0 0
        %2279 = vmatpush1.bf16.msra.mxu0 0
        %2280 = vmatprep.subr.bf16.mxu0 0
        %2281 = vmatpush1.bf16.msra.mxu0 0
        %2282 = vmatprep.subr.bf16.mxu0 0
        %2283 = vmatpush1.bf16.msra.mxu0 0
        %2284 = vmatprep.subr.bf16.mxu0 0
        %2285 = vmatpush1.bf16.msra.mxu0 0
        %2286 = vmatprep.subr.bf16.mxu0 0
        %2287 = vmatpush1.bf16.msra.mxu0 0
        %2288 = vmatprep.subr.bf16.mxu0 0
        %2289 = vmatpush1.bf16.msra.mxu0 0
        %2290 = vmatprep.subr.bf16.mxu0 0
        %2291 = vmatpush1.bf16.msra.mxu0 0
        %2292 = vmatprep.subr.bf16.mxu0 0
        %2293 = vmatpush1.bf16.msra.mxu0 0
        %2294 = vmatprep.subr.bf16.mxu0 0
        %2295 = vmatpush1.bf16.msra.mxu0 0
        %2296 = vmatprep.mubr.bf16.mxu0 0
        %2297 = vmatmul.mubr.bf16.gmra.mrb[0].mxu0 %v2241
        %v2298 = vpop.f32.mrb[0].mxu0
        %v2299 = vadd.f32 0.0, %v2298
        %v2300 = vpop.f32.mrb[0].mxu0
        %v2301 = vpop.f32.mrb[0].mxu0
        %v2302 = vadd.f32 0.0, %v2301
        %v2303 = vpop.f32.mrb[0].mxu0
        %2304 = vmatprep.mubr.bf16.mxu0 0
        %2305 = vmatmul.mubr.bf16.gmra.mrb[0].mxu0 %v2244
        %v2306 = vpop.f32.mrb[0].mxu0
        %v2307 = vadd.f32 0.0, %v2306
        %v2308 = vpop.f32.mrb[0].mxu0
        %v2309 = vpop.f32.mrb[0].mxu0
        %v2310 = vadd.f32 0.0, %v2309
        %v2311 = vpop.f32.mrb[0].mxu0
        %2312 = vmatprep.mubr.bf16.mxu0 0
        %2313 = vmatmul.mubr.bf16.gmra.mrb[0].mxu0 %v2247
        %v2314 = vpop.f32.mrb[0].mxu0
        %v2315 = vadd.f32 0.0, %v2314
        %v2316 = vpop.f32.mrb[0].mxu0
        %v2317 = vpop.f32.mrb[0].mxu0
        %v2318 = vadd.f32 0.0, %v2317
        %v2319 = vpop.f32.mrb[0].mxu0
        %2320 = vmatprep.mubr.bf16.mxu0 0
        %2321 = vmatmul.mubr.bf16.gmra.mrb[0].mxu0 %v2250
        %v2322 = vpop.f32.mrb[0].mxu0
        %v2323 = vadd.f32 0.0, %v2322
        %v2324 = vpop.f32.mrb[0].mxu0
        %v2325 = vpop.f32.mrb[0].mxu0
        %v2326 = vadd.f32 0.0, %v2325
        %v2327 = vpop.f32.mrb[0].mxu0
        %2328 = vmatprep.mubr.bf16.mxu0 0
        %2329 = vmatmul.mubr.bf16.gmra.mrb[0].mxu0 %v2253
        %v2330 = vpop.f32.mrb[0].mxu0
        %v2331 = vadd.f32 0.0, %v2330
        %v2332 = vpop.f32.mrb[0].mxu0
        %v2333 = vpop.f32.mrb[0].mxu0
        %v2334 = vadd.f32 0.0, %v2333
        %v2335 = vpop.f32.mrb[0].mxu0
        %2336 = vmatprep.mubr.bf16.mxu0 0
        %2337 = vmatmul.mubr.bf16.gmra.mrb[0].mxu0 %v2256
        %v2338 = vpop.f32.mrb[0].mxu0
        %v2339 = vadd.f32 0.0, %v2338
        %v2340 = vpop.f32.mrb[0].mxu0
        %v2341 = vpop.f32.mrb[0].mxu0
        %v2342 = vadd.f32 0.0, %v2341
        %v2343 = vpop.f32.mrb[0].mxu0
        %2344 = vmatprep.mubr.bf16.mxu0 0
        %2345 = vmatmul.mubr.bf16.gmra.mrb[0].mxu0 %v2259
        %v2346 = vpop.f32.mrb[0].mxu0
        %v2347 = vadd.f32 0.0, %v2346
        %v2348 = vpop.f32.mrb[0].mxu0
        %v2349 = vpop.f32.mrb[0].mxu0
        %v2350 = vadd.f32 0.0, %v2349
        %v2351 = vpop.f32.mrb[0].mxu0
        %2352 = vmatprep.mubr.bf16.mxu0 0
        %2353 = vmatmul.mubr.bf16.gmra.mrb[0].mxu0 %v2262
        %v2354 = vpop.f32.mrb[0].mxu0
        %v2355 = vadd.f32 0.0, %v2354
        %v2356 = vpop.f32.mrb[0].mxu0
        %v2357 = vpop.f32.mrb[0].mxu0
        %v2358 = vadd.f32 0.0, %v2357
        %v2359 = vpop.f32.mrb[0].mxu0
        %2360 = vdwg.mxu0
        %s2361 = scalar_lea.vmem %s3, 128
        %v2362 = vld [vmem:[%s2361] sm:$0xff]
        %v2363 = vld [vmem:[%s2361 + $0x8] sm:$0xff]
        %v2364 = vld [vmem:[%s2361 + $0x10] sm:$0xff]
        %v2365 = vld [vmem:[%s2361 + $0x18] sm:$0xff]
        %v2366 = vld [vmem:[%s2361 + $0x20] sm:$0xff]
        %v2367 = vld [vmem:[%s2361 + $0x28] sm:$0xff]
        %v2368 = vld [vmem:[%s2361 + $0x30] sm:$0xff]
        %v2369 = vld [vmem:[%s2361 + $0x38] sm:$0xff]
        %v2370 = vld [vmem:[%s2361 + $0x40] sm:$0xff]
        %v2371 = vld [vmem:[%s2361 + $0x48] sm:$0xff]
        %v2372 = vld [vmem:[%s2361 + $0x50] sm:$0xff]
        %v2373 = vld [vmem:[%s2361 + $0x58] sm:$0xff]
        %v2374 = vld [vmem:[%s2361 + $0x60] sm:$0xff]
        %v2375 = vld [vmem:[%s2361 + $0x68] sm:$0xff]
        %v2376 = vld [vmem:[%s2361 + $0x70] sm:$0xff]
        %v2377 = vld [vmem:[%s2361 + $0x78] sm:$0xff]
        %v2378 = vtanh.pop %v2299
        %v2379 = vtanh.pop %v2302
        %v2380 = vtanh.pop %v2307
        %v2381 = vtanh.pop %v2310
        %v2382 = vtanh.pop %v2315
        %v2383 = vtanh.pop %v2318
        %v2384 = vtanh.pop %v2323
        %v2385 = vtanh.pop %v2326
        %v2386 = vtanh.pop %v2331
        %v2387 = vtanh.pop %v2334
        %v2388 = vtanh.pop %v2339
        %v2389 = vtanh.pop %v2342
        %v2390 = vtanh.pop %v2347
        %v2391 = vtanh.pop %v2350
        %v2392 = vtanh.pop %v2355
        %v2393 = vtanh.pop %v2358
        %v2394 = vmul.f32 %v2378, %v1488
        %v2395 = vmul.f32 %v2379, %v1488
        %v2396 = vmul.f32 %v2380, %v1488
        %v2397 = vmul.f32 %v2381, %v1488
        %v2398 = vmul.f32 %v2382, %v1488
        %v2399 = vmul.f32 %v2383, %v1488
        %v2400 = vmul.f32 %v2384, %v1488
        %v2401 = vmul.f32 %v2385, %v1488
        %v2402 = vmul.f32 %v2386, %v1488
        %v2403 = vmul.f32 %v2387, %v1488
        %v2404 = vmul.f32 %v2388, %v1488
        %v2405 = vmul.f32 %v2389, %v1488
        %v2406 = vmul.f32 %v2390, %v1488
        %v2407 = vmul.f32 %v2391, %v1488
        %v2408 = vmul.f32 %v2392, %v1488
        %v2409 = vmul.f32 %v2393, %v1488
        %v2410 = vadd.f32 %v2362, %v2394
        %v2411 = vadd.f32 %v2363, %v2395
        %v2412 = vadd.f32 %v2364, %v2396
        %v2413 = vadd.f32 %v2365, %v2397
        %v2414 = vadd.f32 %v2366, %v2398
        %v2415 = vadd.f32 %v2367, %v2399
        %v2416 = vadd.f32 %v2368, %v2400
        %v2417 = vadd.f32 %v2369, %v2401
        %v2418 = vadd.f32 %v2370, %v2402
        %v2419 = vadd.f32 %v2371, %v2403
        %v2420 = vadd.f32 %v2372, %v2404
        %v2421 = vadd.f32 %v2373, %v2405
        %v2422 = vadd.f32 %v2374, %v2406
        %v2423 = vadd.f32 %v2375, %v2407
        %v2424 = vadd.f32 %v2376, %v2408
        %v2425 = vadd.f32 %v2377, %v2409
        %v2426 = vpack.c.bf16 %v2411, %v2410
        %v2427 = vpack.c.bf16 %v2413, %v2412
        %v2428 = vpack.c.bf16 %v2415, %v2414
        %v2429 = vpack.c.bf16 %v2417, %v2416
        %v2430 = vpack.c.bf16 %v2419, %v2418
        %v2431 = vpack.c.bf16 %v2421, %v2420
        %v2432 = vpack.c.bf16 %v2423, %v2422
        %v2433 = vpack.c.bf16 %v2425, %v2424
        %2434 = vmatprep.subr.bf16.mxu0 0
        %2435 = vmatpush1.bf16.msra.mxu0 %v2426
        %2436 = vmatprep.subr.bf16.mxu0 0
        %2437 = vmatpush1.bf16.msra.mxu0 %v2427
        %2438 = vmatprep.subr.bf16.mxu0 0
        %2439 = vmatpush1.bf16.msra.mxu0 %v2428
        %2440 = vmatprep.subr.bf16.mxu0 0
        %2441 = vmatpush1.bf16.msra.mxu0 %v2429
        %2442 = vmatprep.subr.bf16.mxu0 0
        %2443 = vmatpush1.bf16.msra.mxu0 %v2430
        %2444 = vmatprep.subr.bf16.mxu0 0
        %2445 = vmatpush1.bf16.msra.mxu0 %v2431
        %2446 = vmatprep.subr.bf16.mxu0 0
        %2447 = vmatpush1.bf16.msra.mxu0 %v2432
        %2448 = vmatprep.subr.bf16.mxu0 0
        %2449 = vmatpush1.bf16.msra.mxu0 %v2433
        %2450 = vmatprep.subr.bf16.mxu0 0
        %2451 = vmatpush1.bf16.msra.mxu0 0
        %2452 = vmatprep.subr.bf16.mxu0 0
        %2453 = vmatpush1.bf16.msra.mxu0 0
        %2454 = vmatprep.subr.bf16.mxu0 0
        %2455 = vmatpush1.bf16.msra.mxu0 0
        %2456 = vmatprep.subr.bf16.mxu0 0
        %2457 = vmatpush1.bf16.msra.mxu0 0
        %2458 = vmatprep.subr.bf16.mxu0 0
        %2459 = vmatpush1.bf16.msra.mxu0 0
        %2460 = vmatprep.subr.bf16.mxu0 0
        %2461 = vmatpush1.bf16.msra.mxu0 0
        %2462 = vmatprep.subr.bf16.mxu0 0
        %2463 = vmatpush1.bf16.msra.mxu0 0
        %2464 = vmatprep.subr.bf16.mxu0 0
        %2465 = vmatpush1.bf16.msra.mxu0 0
        %2466 = vmatprep.mubr.bf16.mxu0 0
        %2467 = vmatmul.mubr.bf16.gmra.mrb[0].mxu0 %v650
        %v2468 = vpop.f32.mrb[0].mxu0
        %v2469 = vadd.f32 0.0, %v2468
        %v2470 = vpop.f32.mrb[0].mxu0
        %v2471 = vpop.f32.mrb[0].mxu0
        %v2472 = vadd.f32 0.0, %v2471
        %v2473 = vpop.f32.mrb[0].mxu0
        %2474 = vmatprep.mubr.bf16.mxu0 0
        %2475 = vmatmul.mubr.bf16.gmra.mrb[0].mxu0 %v651
        %v2476 = vpop.f32.mrb[0].mxu0
        %v2477 = vadd.f32 0.0, %v2476
        %v2478 = vpop.f32.mrb[0].mxu0
        %v2479 = vpop.f32.mrb[0].mxu0
        %v2480 = vadd.f32 0.0, %v2479
        %v2481 = vpop.f32.mrb[0].mxu0
        %2482 = vdwg.mxu0
        %s2483 = scalar_lea.vmem %s6, 32
        %v2484 = vld [vmem:[%s2483] sm:$0xff]
        %v2485 = vld [vmem:[%s2483 + $0x8] sm:$0xff]
        %v2486 = vld [vmem:[%s2483 + $0x10] sm:$0xff]
        %v2487 = vld [vmem:[%s2483 + $0x18] sm:$0xff]
        %v2492 = vcombine.low %v2469, %v2472
        %v2493 = vcombine.high %v2469, %v2472
        %v2494 = vcombine.low %v2477, %v2480
        %v2495 = vcombine.high %v2477, %v2480
        %v2497 = vunpack.c.l.s4 1966171168
        %v2498 = vunpack.c.0.s8 %v2497
        %v2499 = vlaneseq
        %v2500 = vshrl.u32 %v2499, 7
        %v2501 = vsub.s32 %v2498, %v2500
        %v2502 = vrot.slane %v2492, %v2501
        %v2504 = vunpack.c.l.s4 1966171168
        %v2505 = vunpack.c.0.s8 %v2504
        %v2506 = vlaneseq
        %v2507 = vshrl.u32 %v2506, 7
        %v2508 = vsub.s32 %v2505, %v2507
        %v2509 = vrot.slane %v2493, %v2508
        %v2511 = vunpack.c.l.s4 1966171168
        %v2512 = vunpack.c.0.s8 %v2511
        %v2513 = vlaneseq
        %v2514 = vshrl.u32 %v2513, 7
        %v2515 = vsub.s32 %v2512, %v2514
        %v2516 = vrot.slane %v2494, %v2515
        %v2518 = vunpack.c.l.s4 1966171168
        %v2519 = vunpack.c.0.s8 %v2518
        %v2520 = vlaneseq
        %v2521 = vshrl.u32 %v2520, 7
        %v2522 = vsub.s32 %v2519, %v2521
        %v2523 = vrot.slane %v2495, %v2522
        %v2524 = vcombine.low %v2502, %v2516
        %v2525 = vcombine.high %v2502, %v2516
        %v2526 = vcombine.low %v2509, %v2523
        %v2527 = vcombine.high %v2509, %v2523
        %v2529 = vunpack.c.l.s4 1966171168
        %v2530 = vunpack.c.0.s8 %v2529
        %v2531 = vlaneseq
        %v2532 = vshrl.u32 %v2531, 7
        %v2533 = vsub.s32 %v2530, %v2532
        %v2534 = vrot.slane %v2524, %v2533
        %v2536 = vunpack.c.l.s4 1966171168
        %v2537 = vunpack.c.0.s8 %v2536
        %v2538 = vlaneseq
        %v2539 = vshrl.u32 %v2538, 7
        %v2540 = vsub.s32 %v2537, %v2539
        %v2541 = vrot.slane %v2526, %v2540
        %v2543 = vunpack.c.l.s4 1966171168
        %v2544 = vunpack.c.0.s8 %v2543
        %v2545 = vlaneseq
        %v2546 = vshrl.u32 %v2545, 7
        %v2547 = vsub.s32 %v2544, %v2546
        %v2548 = vrot.slane %v2525, %v2547
        %v2550 = vunpack.c.l.s4 1966171168
        %v2551 = vunpack.c.0.s8 %v2550
        %v2552 = vlaneseq
        %v2553 = vshrl.u32 %v2552, 7
        %v2554 = vsub.s32 %v2551, %v2553
        %v2555 = vrot.slane %v2527, %v2554
        %v2556 = vcombine.high %v2534, %v2534
        %v2557 = vcombine.high %v2541, %v2541
        %v2558 = vcombine.high %v2548, %v2548
        %v2559 = vcombine.high %v2555, %v2555
        %v2561 = vsel %vm666, %v2484, 0
        %v2564 = vsel %vm666, %v2485, 0
        %v2567 = vsel %vm666, %v2486, 0
        %v2570 = vsel %vm666, %v2487, 0
        %v2572 = vsel %vm673, %v2534, 0
        %v2574 = vsel %vm673, %v2548, 0
        %v2576 = vsel %vm673, %v2556, 0
        %v2578 = vsel %vm673, %v2558, 0
        %v2580 = vsel %vm673, %v2541, 0
        %v2582 = vsel %vm673, %v2555, 0
        %v2584 = vsel %vm673, %v2557, 0
        %v2586 = vsel %vm673, %v2559, 0
        %2588 = vmatprep.subr.mxu0 %v2574
        %2589 = vmatpush1.msra.mxu0 %v2572
        %2590 = vmatprep.subr.mxu0 0.0
        %2591 = vmatpush1.msra.mxu0 0.0
        %2592 = vmatprep.subr.mxu0 0.0
        %2593 = vmatpush1.msra.mxu0 0.0
        %2594 = vmatprep.subr.mxu0 0.0
        %2595 = vmatpush1.msra.mxu0 0.0
        %2596 = vmatprep.subr.mxu0 0.0
        %2597 = vmatpush1.msra.mxu0 0.0
        %2598 = vmatprep.subr.mxu0 0.0
        %2599 = vmatpush1.msra.mxu0 0.0
        %2600 = vmatprep.subr.mxu0 0.0
        %2601 = vmatpush1.msra.mxu0 0.0
        %2602 = vmatprep.subr.mxu0 0.0
        %2603 = vmatpush1.msra.mxu0 0.0
        %2604 = vmatprep.subr.mxu0 0.0
        %2605 = vmatpush1.msra.mxu0 0.0
        %2606 = vmatprep.subr.mxu0 0.0
        %2607 = vmatpush1.msra.mxu0 0.0
        %2608 = vmatprep.subr.mxu0 0.0
        %2609 = vmatpush1.msra.mxu0 0.0
        %2610 = vmatprep.subr.mxu0 0.0
        %2611 = vmatpush1.msra.mxu0 0.0
        %2612 = vmatprep.subr.mxu0 0.0
        %2613 = vmatpush1.msra.mxu0 0.0
        %2614 = vmatprep.subr.mxu0 0.0
        %2615 = vmatpush1.msra.mxu0 0.0
        %2616 = vmatprep.subr.mxu0 0.0
        %2617 = vmatpush1.msra.mxu0 0.0
        %2618 = vmatprep.subr.mxu0 0.0
        %2619 = vmatpush1.msra.mxu0 0.0
        %2620 = vmatprep.subr.mxu0 0.0
        %2621 = vmatpush1.msra.mxu0 0.0
        %2622 = vmatprep.subr.mxu0 0.0
        %2623 = vmatpush1.msra.mxu0 0.0
        %2624 = vmatprep.subr.mxu0 0.0
        %2625 = vmatpush1.msra.mxu0 0.0
        %2626 = vmatprep.subr.mxu0 0.0
        %2627 = vmatpush1.msra.mxu0 0.0
        %2628 = vmatprep.subr.mxu0 0.0
        %2629 = vmatpush1.msra.mxu0 0.0
        %2630 = vmatprep.subr.mxu0 0.0
        %2631 = vmatpush1.msra.mxu0 0.0
        %2632 = vmatprep.subr.mxu0 0.0
        %2633 = vmatpush1.msra.mxu0 0.0
        %2634 = vmatprep.subr.mxu0 0.0
        %2635 = vmatpush1.msra.mxu0 0.0
        %2636 = vmatprep.subr.mxu0 0.0
        %2637 = vmatpush1.msra.mxu0 0.0
        %2638 = vmatprep.subr.mxu0 0.0
        %2639 = vmatpush1.msra.mxu0 0.0
        %2640 = vmatprep.subr.mxu0 0.0
        %2641 = vmatpush1.msra.mxu0 0.0
        %2642 = vmatprep.subr.mxu0 0.0
        %2643 = vmatpush1.msra.mxu0 0.0
        %2644 = vmatprep.subr.mxu0 0.0
        %2645 = vmatpush1.msra.mxu0 0.0
        %2646 = vmatprep.subr.mxu0 0.0
        %2647 = vmatpush1.msra.mxu0 0.0
        %2648 = vmatprep.subr.mxu0 0.0
        %2649 = vmatpush1.msra.mxu0 0.0
        %2650 = vmatprep.subr.mxu0 0.0
        %2651 = vmatpush1.msra.mxu0 0.0
        %2652 = vmatprep.mubr.f32.mxu0 0.0
        %2653 = vmatmul.mubr.f32.gmra.mrb[0].mxu0 %v2561
        %v2654 = vpop.f32.mrb[0].mxu0
        %v2655 = vadd.f32 0.0, %v2654
        %v2656 = vpop.f32.mrb[0].mxu0
        %v2657 = vadd.f32 0.0, %v2656
        %2658 = vmatprep.mubr.f32.mxu0 0.0
        %2659 = vmatmul.mubr.f32.gmra.mrb[0].mxu0 %v2564
        %v2660 = vpop.f32.mrb[0].mxu0
        %v2661 = vadd.f32 0.0, %v2660
        %v2662 = vpop.f32.mrb[0].mxu0
        %v2663 = vadd.f32 0.0, %v2662
        %2664 = vmatprep.mubr.f32.mxu0 0.0
        %2665 = vmatmul.mubr.f32.gmra.mrb[0].mxu0 %v2567
        %v2666 = vpop.f32.mrb[0].mxu0
        %v2667 = vadd.f32 0.0, %v2666
        %v2668 = vpop.f32.mrb[0].mxu0
        %v2669 = vadd.f32 0.0, %v2668
        %2670 = vmatprep.mubr.f32.mxu0 0.0
        %2671 = vmatmul.mubr.f32.gmra.mrb[0].mxu0 %v2570
        %v2672 = vpop.f32.mrb[0].mxu0
        %v2673 = vadd.f32 0.0, %v2672
        %v2674 = vpop.f32.mrb[0].mxu0
        %v2675 = vadd.f32 0.0, %v2674
        %2676 = vdwg.mxu0
        %2677 = vmatprep.subr.mxu0 %v2578
        %2678 = vmatpush1.msra.mxu0 %v2576
        %2679 = vmatprep.subr.mxu0 0.0
        %2680 = vmatpush1.msra.mxu0 0.0
        %2681 = vmatprep.subr.mxu0 0.0
        %2682 = vmatpush1.msra.mxu0 0.0
        %2683 = vmatprep.subr.mxu0 0.0
        %2684 = vmatpush1.msra.mxu0 0.0
        %2685 = vmatprep.subr.mxu0 0.0
        %2686 = vmatpush1.msra.mxu0 0.0
        %2687 = vmatprep.subr.mxu0 0.0
        %2688 = vmatpush1.msra.mxu0 0.0
        %2689 = vmatprep.subr.mxu0 0.0
        %2690 = vmatpush1.msra.mxu0 0.0
        %2691 = vmatprep.subr.mxu0 0.0
        %2692 = vmatpush1.msra.mxu0 0.0
        %2693 = vmatprep.subr.mxu0 0.0
        %2694 = vmatpush1.msra.mxu0 0.0
        %2695 = vmatprep.subr.mxu0 0.0
        %2696 = vmatpush1.msra.mxu0 0.0
        %2697 = vmatprep.subr.mxu0 0.0
        %2698 = vmatpush1.msra.mxu0 0.0
        %2699 = vmatprep.subr.mxu0 0.0
        %2700 = vmatpush1.msra.mxu0 0.0
        %2701 = vmatprep.subr.mxu0 0.0
        %2702 = vmatpush1.msra.mxu0 0.0
        %2703 = vmatprep.subr.mxu0 0.0
        %2704 = vmatpush1.msra.mxu0 0.0
        %2705 = vmatprep.subr.mxu0 0.0
        %2706 = vmatpush1.msra.mxu0 0.0
        %2707 = vmatprep.subr.mxu0 0.0
        %2708 = vmatpush1.msra.mxu0 0.0
        %2709 = vmatprep.subr.mxu0 0.0
        %2710 = vmatpush1.msra.mxu0 0.0
        %2711 = vmatprep.subr.mxu0 0.0
        %2712 = vmatpush1.msra.mxu0 0.0
        %2713 = vmatprep.subr.mxu0 0.0
        %2714 = vmatpush1.msra.mxu0 0.0
        %2715 = vmatprep.subr.mxu0 0.0
        %2716 = vmatpush1.msra.mxu0 0.0
        %2717 = vmatprep.subr.mxu0 0.0
        %2718 = vmatpush1.msra.mxu0 0.0
        %2719 = vmatprep.subr.mxu0 0.0
        %2720 = vmatpush1.msra.mxu0 0.0
        %2721 = vmatprep.subr.mxu0 0.0
        %2722 = vmatpush1.msra.mxu0 0.0
        %2723 = vmatprep.subr.mxu0 0.0
        %2724 = vmatpush1.msra.mxu0 0.0
        %2725 = vmatprep.subr.mxu0 0.0
        %2726 = vmatpush1.msra.mxu0 0.0
        %2727 = vmatprep.subr.mxu0 0.0
        %2728 = vmatpush1.msra.mxu0 0.0
        %2729 = vmatprep.subr.mxu0 0.0
        %2730 = vmatpush1.msra.mxu0 0.0
        %2731 = vmatprep.subr.mxu0 0.0
        %2732 = vmatpush1.msra.mxu0 0.0
        %2733 = vmatprep.subr.mxu0 0.0
        %2734 = vmatpush1.msra.mxu0 0.0
        %2735 = vmatprep.subr.mxu0 0.0
        %2736 = vmatpush1.msra.mxu0 0.0
        %2737 = vmatprep.subr.mxu0 0.0
        %2738 = vmatpush1.msra.mxu0 0.0
        %2739 = vmatprep.subr.mxu0 0.0
        %2740 = vmatpush1.msra.mxu0 0.0
        %2741 = vmatprep.mubr.f32.mxu0 0.0
        %2742 = vmatmul.mubr.f32.gmra.mrb[0].mxu0 %v2561
        %v2743 = vpop.f32.mrb[0].mxu0
        %v2744 = vadd.f32 0.0, %v2743
        %v2745 = vpop.f32.mrb[0].mxu0
        %v2746 = vadd.f32 0.0, %v2745
        %2747 = vmatprep.mubr.f32.mxu0 0.0
        %2748 = vmatmul.mubr.f32.gmra.mrb[0].mxu0 %v2564
        %v2749 = vpop.f32.mrb[0].mxu0
        %v2750 = vadd.f32 0.0, %v2749
        %v2751 = vpop.f32.mrb[0].mxu0
        %v2752 = vadd.f32 0.0, %v2751
        %2753 = vmatprep.mubr.f32.mxu0 0.0
        %2754 = vmatmul.mubr.f32.gmra.mrb[0].mxu0 %v2567
        %v2755 = vpop.f32.mrb[0].mxu0
        %v2756 = vadd.f32 0.0, %v2755
        %v2757 = vpop.f32.mrb[0].mxu0
        %v2758 = vadd.f32 0.0, %v2757
        %2759 = vmatprep.mubr.f32.mxu0 0.0
        %2760 = vmatmul.mubr.f32.gmra.mrb[0].mxu0 %v2570
        %v2761 = vpop.f32.mrb[0].mxu0
        %v2762 = vadd.f32 0.0, %v2761
        %v2763 = vpop.f32.mrb[0].mxu0
        %v2764 = vadd.f32 0.0, %v2763
        %2765 = vdwg.mxu0
        %2766 = vmatprep.subr.mxu0 %v2582
        %2767 = vmatpush1.msra.mxu0 %v2580
        %2768 = vmatprep.subr.mxu0 0.0
        %2769 = vmatpush1.msra.mxu0 0.0
        %2770 = vmatprep.subr.mxu0 0.0
        %2771 = vmatpush1.msra.mxu0 0.0
        %2772 = vmatprep.subr.mxu0 0.0
        %2773 = vmatpush1.msra.mxu0 0.0
        %2774 = vmatprep.subr.mxu0 0.0
        %2775 = vmatpush1.msra.mxu0 0.0
        %2776 = vmatprep.subr.mxu0 0.0
        %2777 = vmatpush1.msra.mxu0 0.0
        %2778 = vmatprep.subr.mxu0 0.0
        %2779 = vmatpush1.msra.mxu0 0.0
        %2780 = vmatprep.subr.mxu0 0.0
        %2781 = vmatpush1.msra.mxu0 0.0
        %2782 = vmatprep.subr.mxu0 0.0
        %2783 = vmatpush1.msra.mxu0 0.0
        %2784 = vmatprep.subr.mxu0 0.0
        %2785 = vmatpush1.msra.mxu0 0.0
        %2786 = vmatprep.subr.mxu0 0.0
        %2787 = vmatpush1.msra.mxu0 0.0
        %2788 = vmatprep.subr.mxu0 0.0
        %2789 = vmatpush1.msra.mxu0 0.0
        %2790 = vmatprep.subr.mxu0 0.0
        %2791 = vmatpush1.msra.mxu0 0.0
        %2792 = vmatprep.subr.mxu0 0.0
        %2793 = vmatpush1.msra.mxu0 0.0
        %2794 = vmatprep.subr.mxu0 0.0
        %2795 = vmatpush1.msra.mxu0 0.0
        %2796 = vmatprep.subr.mxu0 0.0
        %2797 = vmatpush1.msra.mxu0 0.0
        %2798 = vmatprep.subr.mxu0 0.0
        %2799 = vmatpush1.msra.mxu0 0.0
        %2800 = vmatprep.subr.mxu0 0.0
        %2801 = vmatpush1.msra.mxu0 0.0
        %2802 = vmatprep.subr.mxu0 0.0
        %2803 = vmatpush1.msra.mxu0 0.0
        %2804 = vmatprep.subr.mxu0 0.0
        %2805 = vmatpush1.msra.mxu0 0.0
        %2806 = vmatprep.subr.mxu0 0.0
        %2807 = vmatpush1.msra.mxu0 0.0
        %2808 = vmatprep.subr.mxu0 0.0
        %2809 = vmatpush1.msra.mxu0 0.0
        %2810 = vmatprep.subr.mxu0 0.0
        %2811 = vmatpush1.msra.mxu0 0.0
        %2812 = vmatprep.subr.mxu0 0.0
        %2813 = vmatpush1.msra.mxu0 0.0
        %2814 = vmatprep.subr.mxu0 0.0
        %2815 = vmatpush1.msra.mxu0 0.0
        %2816 = vmatprep.subr.mxu0 0.0
        %2817 = vmatpush1.msra.mxu0 0.0
        %2818 = vmatprep.subr.mxu0 0.0
        %2819 = vmatpush1.msra.mxu0 0.0
        %2820 = vmatprep.subr.mxu0 0.0
        %2821 = vmatpush1.msra.mxu0 0.0
        %2822 = vmatprep.subr.mxu0 0.0
        %2823 = vmatpush1.msra.mxu0 0.0
        %2824 = vmatprep.subr.mxu0 0.0
        %2825 = vmatpush1.msra.mxu0 0.0
        %2826 = vmatprep.subr.mxu0 0.0
        %2827 = vmatpush1.msra.mxu0 0.0
        %2828 = vmatprep.subr.mxu0 0.0
        %2829 = vmatpush1.msra.mxu0 0.0
        %2830 = vmatprep.mubr.f32.mxu0 0.0
        %2831 = vmatmul.mubr.f32.gmra.mrb[0].mxu0 %v2561
        %v2832 = vpop.f32.mrb[0].mxu0
        %v2833 = vadd.f32 0.0, %v2832
        %v2834 = vpop.f32.mrb[0].mxu0
        %v2835 = vadd.f32 0.0, %v2834
        %2836 = vmatprep.mubr.f32.mxu0 0.0
        %2837 = vmatmul.mubr.f32.gmra.mrb[0].mxu0 %v2564
        %v2838 = vpop.f32.mrb[0].mxu0
        %v2839 = vadd.f32 0.0, %v2838
        %v2840 = vpop.f32.mrb[0].mxu0
        %v2841 = vadd.f32 0.0, %v2840
        %2842 = vmatprep.mubr.f32.mxu0 0.0
        %2843 = vmatmul.mubr.f32.gmra.mrb[0].mxu0 %v2567
        %v2844 = vpop.f32.mrb[0].mxu0
        %v2845 = vadd.f32 0.0, %v2844
        %v2846 = vpop.f32.mrb[0].mxu0
        %v2847 = vadd.f32 0.0, %v2846
        %2848 = vmatprep.mubr.f32.mxu0 0.0
        %2849 = vmatmul.mubr.f32.gmra.mrb[0].mxu0 %v2570
        %v2850 = vpop.f32.mrb[0].mxu0
        %v2851 = vadd.f32 0.0, %v2850
        %v2852 = vpop.f32.mrb[0].mxu0
        %v2853 = vadd.f32 0.0, %v2852
        %2854 = vdwg.mxu0
        %2855 = vmatprep.subr.mxu0 %v2586
        %2856 = vmatpush1.msra.mxu0 %v2584
        %2857 = vmatprep.subr.mxu0 0.0
        %2858 = vmatpush1.msra.mxu0 0.0
        %2859 = vmatprep.subr.mxu0 0.0
        %2860 = vmatpush1.msra.mxu0 0.0
        %2861 = vmatprep.subr.mxu0 0.0
        %2862 = vmatpush1.msra.mxu0 0.0
        %2863 = vmatprep.subr.mxu0 0.0
        %2864 = vmatpush1.msra.mxu0 0.0
        %2865 = vmatprep.subr.mxu0 0.0
        %2866 = vmatpush1.msra.mxu0 0.0
        %2867 = vmatprep.subr.mxu0 0.0
        %2868 = vmatpush1.msra.mxu0 0.0
        %2869 = vmatprep.subr.mxu0 0.0
        %2870 = vmatpush1.msra.mxu0 0.0
        %2871 = vmatprep.subr.mxu0 0.0
        %2872 = vmatpush1.msra.mxu0 0.0
        %2873 = vmatprep.subr.mxu0 0.0
        %2874 = vmatpush1.msra.mxu0 0.0
        %2875 = vmatprep.subr.mxu0 0.0
        %2876 = vmatpush1.msra.mxu0 0.0
        %2877 = vmatprep.subr.mxu0 0.0
        %2878 = vmatpush1.msra.mxu0 0.0
        %2879 = vmatprep.subr.mxu0 0.0
        %2880 = vmatpush1.msra.mxu0 0.0
        %2881 = vmatprep.subr.mxu0 0.0
        %2882 = vmatpush1.msra.mxu0 0.0
        %2883 = vmatprep.subr.mxu0 0.0
        %2884 = vmatpush1.msra.mxu0 0.0
        %2885 = vmatprep.subr.mxu0 0.0
        %2886 = vmatpush1.msra.mxu0 0.0
        %2887 = vmatprep.subr.mxu0 0.0
        %2888 = vmatpush1.msra.mxu0 0.0
        %2889 = vmatprep.subr.mxu0 0.0
        %2890 = vmatpush1.msra.mxu0 0.0
        %2891 = vmatprep.subr.mxu0 0.0
        %2892 = vmatpush1.msra.mxu0 0.0
        %2893 = vmatprep.subr.mxu0 0.0
        %2894 = vmatpush1.msra.mxu0 0.0
        %2895 = vmatprep.subr.mxu0 0.0
        %2896 = vmatpush1.msra.mxu0 0.0
        %2897 = vmatprep.subr.mxu0 0.0
        %2898 = vmatpush1.msra.mxu0 0.0
        %2899 = vmatprep.subr.mxu0 0.0
        %2900 = vmatpush1.msra.mxu0 0.0
        %2901 = vmatprep.subr.mxu0 0.0
        %2902 = vmatpush1.msra.mxu0 0.0
        %2903 = vmatprep.subr.mxu0 0.0
        %2904 = vmatpush1.msra.mxu0 0.0
        %2905 = vmatprep.subr.mxu0 0.0
        %2906 = vmatpush1.msra.mxu0 0.0
        %2907 = vmatprep.subr.mxu0 0.0
        %2908 = vmatpush1.msra.mxu0 0.0
        %2909 = vmatprep.subr.mxu0 0.0
        %2910 = vmatpush1.msra.mxu0 0.0
        %2911 = vmatprep.subr.mxu0 0.0
        %2912 = vmatpush1.msra.mxu0 0.0
        %2913 = vmatprep.subr.mxu0 0.0
        %2914 = vmatpush1.msra.mxu0 0.0
        %2915 = vmatprep.subr.mxu0 0.0
        %2916 = vmatpush1.msra.mxu0 0.0
        %2917 = vmatprep.subr.mxu0 0.0
        %2918 = vmatpush1.msra.mxu0 0.0
        %2919 = vmatprep.mubr.f32.mxu0 0.0
        %2920 = vmatmul.mubr.f32.gmra.mrb[0].mxu0 %v2561
        %v2921 = vpop.f32.mrb[0].mxu0
        %v2922 = vadd.f32 0.0, %v2921
        %v2923 = vpop.f32.mrb[0].mxu0
        %v2924 = vadd.f32 0.0, %v2923
        %2925 = vmatprep.mubr.f32.mxu0 0.0
        %2926 = vmatmul.mubr.f32.gmra.mrb[0].mxu0 %v2564
        %v2927 = vpop.f32.mrb[0].mxu0
        %v2928 = vadd.f32 0.0, %v2927
        %v2929 = vpop.f32.mrb[0].mxu0
        %v2930 = vadd.f32 0.0, %v2929
        %2931 = vmatprep.mubr.f32.mxu0 0.0
        %2932 = vmatmul.mubr.f32.gmra.mrb[0].mxu0 %v2567
        %v2933 = vpop.f32.mrb[0].mxu0
        %v2934 = vadd.f32 0.0, %v2933
        %v2935 = vpop.f32.mrb[0].mxu0
        %v2936 = vadd.f32 0.0, %v2935
        %2937 = vmatprep.mubr.f32.mxu0 0.0
        %2938 = vmatmul.mubr.f32.gmra.mrb[0].mxu0 %v2570
        %v2939 = vpop.f32.mrb[0].mxu0
        %v2940 = vadd.f32 0.0, %v2939
        %v2941 = vpop.f32.mrb[0].mxu0
        %v2942 = vadd.f32 0.0, %v2941
        %2943 = vdwg.mxu0
        %v2948 = vcombine.low %v1564, %v1567
        %v2949 = vcombine.high %v1564, %v1567
        %v2950 = vcombine.low %v1572, %v1575
        %v2951 = vcombine.high %v1572, %v1575
        %v2953 = vunpack.c.l.s4 1966171168
        %v2954 = vunpack.c.0.s8 %v2953
        %v2955 = vlaneseq
        %v2956 = vshrl.u32 %v2955, 7
        %v2957 = vsub.s32 %v2954, %v2956
        %v2958 = vrot.slane %v2948, %v2957
        %v2960 = vunpack.c.l.s4 1966171168
        %v2961 = vunpack.c.0.s8 %v2960
        %v2962 = vlaneseq
        %v2963 = vshrl.u32 %v2962, 7
        %v2964 = vsub.s32 %v2961, %v2963
        %v2965 = vrot.slane %v2949, %v2964
        %v2967 = vunpack.c.l.s4 1966171168
        %v2968 = vunpack.c.0.s8 %v2967
        %v2969 = vlaneseq
        %v2970 = vshrl.u32 %v2969, 7
        %v2971 = vsub.s32 %v2968, %v2970
        %v2972 = vrot.slane %v2950, %v2971
        %v2974 = vunpack.c.l.s4 1966171168
        %v2975 = vunpack.c.0.s8 %v2974
        %v2976 = vlaneseq
        %v2977 = vshrl.u32 %v2976, 7
        %v2978 = vsub.s32 %v2975, %v2977
        %v2979 = vrot.slane %v2951, %v2978
        %v2980 = vcombine.low %v2958, %v2972
        %v2981 = vcombine.high %v2958, %v2972
        %v2982 = vcombine.low %v2965, %v2979
        %v2983 = vcombine.high %v2965, %v2979
        %v2985 = vunpack.c.l.s4 1966171168
        %v2986 = vunpack.c.0.s8 %v2985
        %v2987 = vlaneseq
        %v2988 = vshrl.u32 %v2987, 7
        %v2989 = vsub.s32 %v2986, %v2988
        %v2990 = vrot.slane %v2980, %v2989
        %v2992 = vunpack.c.l.s4 1966171168
        %v2993 = vunpack.c.0.s8 %v2992
        %v2994 = vlaneseq
        %v2995 = vshrl.u32 %v2994, 7
        %v2996 = vsub.s32 %v2993, %v2995
        %v2997 = vrot.slane %v2982, %v2996
        %v2999 = vunpack.c.l.s4 1966171168
        %v3000 = vunpack.c.0.s8 %v2999
        %v3001 = vlaneseq
        %v3002 = vshrl.u32 %v3001, 7
        %v3003 = vsub.s32 %v3000, %v3002
        %v3004 = vrot.slane %v2981, %v3003
        %v3006 = vunpack.c.l.s4 1966171168
        %v3007 = vunpack.c.0.s8 %v3006
        %v3008 = vlaneseq
        %v3009 = vshrl.u32 %v3008, 7
        %v3010 = vsub.s32 %v3007, %v3009
        %v3011 = vrot.slane %v2983, %v3010
        %v3012 = vcombine.high %v2990, %v2990
        %v3013 = vcombine.high %v2997, %v2997
        %v3014 = vcombine.high %v3004, %v3004
        %v3015 = vcombine.high %v3011, %v3011
        %v3017 = vsel %vm666, %v1578, 0
        %v3020 = vsel %vm666, %v1579, 0
        %v3023 = vsel %vm666, %v1580, 0
        %v3026 = vsel %vm666, %v1581, 0
        %v3028 = vsel %vm673, %v2990, 0
        %v3030 = vsel %vm673, %v3004, 0
        %v3032 = vsel %vm673, %v3012, 0
        %v3034 = vsel %vm673, %v3014, 0
        %v3036 = vsel %vm673, %v2997, 0
        %v3038 = vsel %vm673, %v3011, 0
        %v3040 = vsel %vm673, %v3013, 0
        %v3042 = vsel %vm673, %v3015, 0
        %3044 = vmatprep.subr.mxu0 %v3030
        %3045 = vmatpush1.msra.mxu0 %v3028
        %3046 = vmatprep.subr.mxu0 0.0
        %3047 = vmatpush1.msra.mxu0 0.0
        %3048 = vmatprep.subr.mxu0 0.0
        %3049 = vmatpush1.msra.mxu0 0.0
        %3050 = vmatprep.subr.mxu0 0.0
        %3051 = vmatpush1.msra.mxu0 0.0
        %3052 = vmatprep.subr.mxu0 0.0
        %3053 = vmatpush1.msra.mxu0 0.0
        %3054 = vmatprep.subr.mxu0 0.0
        %3055 = vmatpush1.msra.mxu0 0.0
        %3056 = vmatprep.subr.mxu0 0.0
        %3057 = vmatpush1.msra.mxu0 0.0
        %3058 = vmatprep.subr.mxu0 0.0
        %3059 = vmatpush1.msra.mxu0 0.0
        %3060 = vmatprep.subr.mxu0 0.0
        %3061 = vmatpush1.msra.mxu0 0.0
        %3062 = vmatprep.subr.mxu0 0.0
        %3063 = vmatpush1.msra.mxu0 0.0
        %3064 = vmatprep.subr.mxu0 0.0
        %3065 = vmatpush1.msra.mxu0 0.0
        %3066 = vmatprep.subr.mxu0 0.0
        %3067 = vmatpush1.msra.mxu0 0.0
        %3068 = vmatprep.subr.mxu0 0.0
        %3069 = vmatpush1.msra.mxu0 0.0
        %3070 = vmatprep.subr.mxu0 0.0
        %3071 = vmatpush1.msra.mxu0 0.0
        %3072 = vmatprep.subr.mxu0 0.0
        %3073 = vmatpush1.msra.mxu0 0.0
        %3074 = vmatprep.subr.mxu0 0.0
        %3075 = vmatpush1.msra.mxu0 0.0
        %3076 = vmatprep.subr.mxu0 0.0
        %3077 = vmatpush1.msra.mxu0 0.0
        %3078 = vmatprep.subr.mxu0 0.0
        %3079 = vmatpush1.msra.mxu0 0.0
        %3080 = vmatprep.subr.mxu0 0.0
        %3081 = vmatpush1.msra.mxu0 0.0
        %3082 = vmatprep.subr.mxu0 0.0
        %3083 = vmatpush1.msra.mxu0 0.0
        %3084 = vmatprep.subr.mxu0 0.0
        %3085 = vmatpush1.msra.mxu0 0.0
        %3086 = vmatprep.subr.mxu0 0.0
        %3087 = vmatpush1.msra.mxu0 0.0
        %3088 = vmatprep.subr.mxu0 0.0
        %3089 = vmatpush1.msra.mxu0 0.0
        %3090 = vmatprep.subr.mxu0 0.0
        %3091 = vmatpush1.msra.mxu0 0.0
        %3092 = vmatprep.subr.mxu0 0.0
        %3093 = vmatpush1.msra.mxu0 0.0
        %3094 = vmatprep.subr.mxu0 0.0
        %3095 = vmatpush1.msra.mxu0 0.0
        %3096 = vmatprep.subr.mxu0 0.0
        %3097 = vmatpush1.msra.mxu0 0.0
        %3098 = vmatprep.subr.mxu0 0.0
        %3099 = vmatpush1.msra.mxu0 0.0
        %3100 = vmatprep.subr.mxu0 0.0
        %3101 = vmatpush1.msra.mxu0 0.0
        %3102 = vmatprep.subr.mxu0 0.0
        %3103 = vmatpush1.msra.mxu0 0.0
        %3104 = vmatprep.subr.mxu0 0.0
        %3105 = vmatpush1.msra.mxu0 0.0
        %3106 = vmatprep.subr.mxu0 0.0
        %3107 = vmatpush1.msra.mxu0 0.0
        %3108 = vmatprep.mubr.f32.mxu0 0.0
        %3109 = vmatmul.mubr.f32.gmra.mrb[0].mxu0 %v3017
        %v3110 = vpop.f32.mrb[0].mxu0
        %v3111 = vadd.f32 %v2655, %v3110
        %v3112 = vpop.f32.mrb[0].mxu0
        %v3113 = vadd.f32 %v2657, %v3112
        %3114 = vmatprep.mubr.f32.mxu0 0.0
        %3115 = vmatmul.mubr.f32.gmra.mrb[0].mxu0 %v3020
        %v3116 = vpop.f32.mrb[0].mxu0
        %v3117 = vadd.f32 %v2661, %v3116
        %v3118 = vpop.f32.mrb[0].mxu0
        %v3119 = vadd.f32 %v2663, %v3118
        %3120 = vmatprep.mubr.f32.mxu0 0.0
        %3121 = vmatmul.mubr.f32.gmra.mrb[0].mxu0 %v3023
        %v3122 = vpop.f32.mrb[0].mxu0
        %v3123 = vadd.f32 %v2667, %v3122
        %v3124 = vpop.f32.mrb[0].mxu0
        %v3125 = vadd.f32 %v2669, %v3124
        %3126 = vmatprep.mubr.f32.mxu0 0.0
        %3127 = vmatmul.mubr.f32.gmra.mrb[0].mxu0 %v3026
        %v3128 = vpop.f32.mrb[0].mxu0
        %v3129 = vadd.f32 %v2673, %v3128
        %v3130 = vpop.f32.mrb[0].mxu0
        %v3131 = vadd.f32 %v2675, %v3130
        %3132 = vdwg.mxu0
        %3133 = vmatprep.subr.mxu0 %v3034
        %3134 = vmatpush1.msra.mxu0 %v3032
        %3135 = vmatprep.subr.mxu0 0.0
        %3136 = vmatpush1.msra.mxu0 0.0
        %3137 = vmatprep.subr.mxu0 0.0
        %3138 = vmatpush1.msra.mxu0 0.0
        %3139 = vmatprep.subr.mxu0 0.0
        %3140 = vmatpush1.msra.mxu0 0.0
        %3141 = vmatprep.subr.mxu0 0.0
        %3142 = vmatpush1.msra.mxu0 0.0
        %3143 = vmatprep.subr.mxu0 0.0
        %3144 = vmatpush1.msra.mxu0 0.0
        %3145 = vmatprep.subr.mxu0 0.0
        %3146 = vmatpush1.msra.mxu0 0.0
        %3147 = vmatprep.subr.mxu0 0.0
        %3148 = vmatpush1.msra.mxu0 0.0
        %3149 = vmatprep.subr.mxu0 0.0
        %3150 = vmatpush1.msra.mxu0 0.0
        %3151 = vmatprep.subr.mxu0 0.0
        %3152 = vmatpush1.msra.mxu0 0.0
        %3153 = vmatprep.subr.mxu0 0.0
        %3154 = vmatpush1.msra.mxu0 0.0
        %3155 = vmatprep.subr.mxu0 0.0
        %3156 = vmatpush1.msra.mxu0 0.0
        %3157 = vmatprep.subr.mxu0 0.0
        %3158 = vmatpush1.msra.mxu0 0.0
        %3159 = vmatprep.subr.mxu0 0.0
        %3160 = vmatpush1.msra.mxu0 0.0
        %3161 = vmatprep.subr.mxu0 0.0
        %3162 = vmatpush1.msra.mxu0 0.0
        %3163 = vmatprep.subr.mxu0 0.0
        %3164 = vmatpush1.msra.mxu0 0.0
        %3165 = vmatprep.subr.mxu0 0.0
        %3166 = vmatpush1.msra.mxu0 0.0
        %3167 = vmatprep.subr.mxu0 0.0
        %3168 = vmatpush1.msra.mxu0 0.0
        %3169 = vmatprep.subr.mxu0 0.0
        %3170 = vmatpush1.msra.mxu0 0.0
        %3171 = vmatprep.subr.mxu0 0.0
        %3172 = vmatpush1.msra.mxu0 0.0
        %3173 = vmatprep.subr.mxu0 0.0
        %3174 = vmatpush1.msra.mxu0 0.0
        %3175 = vmatprep.subr.mxu0 0.0
        %3176 = vmatpush1.msra.mxu0 0.0
        %3177 = vmatprep.subr.mxu0 0.0
        %3178 = vmatpush1.msra.mxu0 0.0
        %3179 = vmatprep.subr.mxu0 0.0
        %3180 = vmatpush1.msra.mxu0 0.0
        %3181 = vmatprep.subr.mxu0 0.0
        %3182 = vmatpush1.msra.mxu0 0.0
        %3183 = vmatprep.subr.mxu0 0.0
        %3184 = vmatpush1.msra.mxu0 0.0
        %3185 = vmatprep.subr.mxu0 0.0
        %3186 = vmatpush1.msra.mxu0 0.0
        %3187 = vmatprep.subr.mxu0 0.0
        %3188 = vmatpush1.msra.mxu0 0.0
        %3189 = vmatprep.subr.mxu0 0.0
        %3190 = vmatpush1.msra.mxu0 0.0
        %3191 = vmatprep.subr.mxu0 0.0
        %3192 = vmatpush1.msra.mxu0 0.0
        %3193 = vmatprep.subr.mxu0 0.0
        %3194 = vmatpush1.msra.mxu0 0.0
        %3195 = vmatprep.subr.mxu0 0.0
        %3196 = vmatpush1.msra.mxu0 0.0
        %3197 = vmatprep.mubr.f32.mxu0 0.0
        %3198 = vmatmul.mubr.f32.gmra.mrb[0].mxu0 %v3017
        %v3199 = vpop.f32.mrb[0].mxu0
        %v3200 = vadd.f32 %v2744, %v3199
        %v3201 = vpop.f32.mrb[0].mxu0
        %v3202 = vadd.f32 %v2746, %v3201
        %3203 = vmatprep.mubr.f32.mxu0 0.0
        %3204 = vmatmul.mubr.f32.gmra.mrb[0].mxu0 %v3020
        %v3205 = vpop.f32.mrb[0].mxu0
        %v3206 = vadd.f32 %v2750, %v3205
        %v3207 = vpop.f32.mrb[0].mxu0
        %v3208 = vadd.f32 %v2752, %v3207
        %3209 = vmatprep.mubr.f32.mxu0 0.0
        %3210 = vmatmul.mubr.f32.gmra.mrb[0].mxu0 %v3023
        %v3211 = vpop.f32.mrb[0].mxu0
        %v3212 = vadd.f32 %v2756, %v3211
        %v3213 = vpop.f32.mrb[0].mxu0
        %v3214 = vadd.f32 %v2758, %v3213
        %3215 = vmatprep.mubr.f32.mxu0 0.0
        %3216 = vmatmul.mubr.f32.gmra.mrb[0].mxu0 %v3026
        %v3217 = vpop.f32.mrb[0].mxu0
        %v3218 = vadd.f32 %v2762, %v3217
        %v3219 = vpop.f32.mrb[0].mxu0
        %v3220 = vadd.f32 %v2764, %v3219
        %3221 = vdwg.mxu0
        %3222 = vmatprep.subr.mxu0 %v3038
        %3223 = vmatpush1.msra.mxu0 %v3036
        %3224 = vmatprep.subr.mxu0 0.0
        %3225 = vmatpush1.msra.mxu0 0.0
        %3226 = vmatprep.subr.mxu0 0.0
        %3227 = vmatpush1.msra.mxu0 0.0
        %3228 = vmatprep.subr.mxu0 0.0
        %3229 = vmatpush1.msra.mxu0 0.0
        %3230 = vmatprep.subr.mxu0 0.0
        %3231 = vmatpush1.msra.mxu0 0.0
        %3232 = vmatprep.subr.mxu0 0.0
        %3233 = vmatpush1.msra.mxu0 0.0
        %3234 = vmatprep.subr.mxu0 0.0
        %3235 = vmatpush1.msra.mxu0 0.0
        %3236 = vmatprep.subr.mxu0 0.0
        %3237 = vmatpush1.msra.mxu0 0.0
        %3238 = vmatprep.subr.mxu0 0.0
        %3239 = vmatpush1.msra.mxu0 0.0
        %3240 = vmatprep.subr.mxu0 0.0
        %3241 = vmatpush1.msra.mxu0 0.0
        %3242 = vmatprep.subr.mxu0 0.0
        %3243 = vmatpush1.msra.mxu0 0.0
        %3244 = vmatprep.subr.mxu0 0.0
        %3245 = vmatpush1.msra.mxu0 0.0
        %3246 = vmatprep.subr.mxu0 0.0
        %3247 = vmatpush1.msra.mxu0 0.0
        %3248 = vmatprep.subr.mxu0 0.0
        %3249 = vmatpush1.msra.mxu0 0.0
        %3250 = vmatprep.subr.mxu0 0.0
        %3251 = vmatpush1.msra.mxu0 0.0
        %3252 = vmatprep.subr.mxu0 0.0
        %3253 = vmatpush1.msra.mxu0 0.0
        %3254 = vmatprep.subr.mxu0 0.0
        %3255 = vmatpush1.msra.mxu0 0.0
        %3256 = vmatprep.subr.mxu0 0.0
        %3257 = vmatpush1.msra.mxu0 0.0
        %3258 = vmatprep.subr.mxu0 0.0
        %3259 = vmatpush1.msra.mxu0 0.0
        %3260 = vmatprep.subr.mxu0 0.0
        %3261 = vmatpush1.msra.mxu0 0.0
        %3262 = vmatprep.subr.mxu0 0.0
        %3263 = vmatpush1.msra.mxu0 0.0
        %3264 = vmatprep.subr.mxu0 0.0
        %3265 = vmatpush1.msra.mxu0 0.0
        %3266 = vmatprep.subr.mxu0 0.0
        %3267 = vmatpush1.msra.mxu0 0.0
        %3268 = vmatprep.subr.mxu0 0.0
        %3269 = vmatpush1.msra.mxu0 0.0
        %3270 = vmatprep.subr.mxu0 0.0
        %3271 = vmatpush1.msra.mxu0 0.0
        %3272 = vmatprep.subr.mxu0 0.0
        %3273 = vmatpush1.msra.mxu0 0.0
        %3274 = vmatprep.subr.mxu0 0.0
        %3275 = vmatpush1.msra.mxu0 0.0
        %3276 = vmatprep.subr.mxu0 0.0
        %3277 = vmatpush1.msra.mxu0 0.0
        %3278 = vmatprep.subr.mxu0 0.0
        %3279 = vmatpush1.msra.mxu0 0.0
        %3280 = vmatprep.subr.mxu0 0.0
        %3281 = vmatpush1.msra.mxu0 0.0
        %3282 = vmatprep.subr.mxu0 0.0
        %3283 = vmatpush1.msra.mxu0 0.0
        %3284 = vmatprep.subr.mxu0 0.0
        %3285 = vmatpush1.msra.mxu0 0.0
        %3286 = vmatprep.mubr.f32.mxu0 0.0
        %3287 = vmatmul.mubr.f32.gmra.mrb[0].mxu0 %v3017
        %v3288 = vpop.f32.mrb[0].mxu0
        %v3289 = vadd.f32 %v2833, %v3288
        %v3290 = vpop.f32.mrb[0].mxu0
        %v3291 = vadd.f32 %v2835, %v3290
        %3292 = vmatprep.mubr.f32.mxu0 0.0
        %3293 = vmatmul.mubr.f32.gmra.mrb[0].mxu0 %v3020
        %v3294 = vpop.f32.mrb[0].mxu0
        %v3295 = vadd.f32 %v2839, %v3294
        %v3296 = vpop.f32.mrb[0].mxu0
        %v3297 = vadd.f32 %v2841, %v3296
        %3298 = vmatprep.mubr.f32.mxu0 0.0
        %3299 = vmatmul.mubr.f32.gmra.mrb[0].mxu0 %v3023
        %v3300 = vpop.f32.mrb[0].mxu0
        %v3301 = vadd.f32 %v2845, %v3300
        %v3302 = vpop.f32.mrb[0].mxu0
        %v3303 = vadd.f32 %v2847, %v3302
        %3304 = vmatprep.mubr.f32.mxu0 0.0
        %3305 = vmatmul.mubr.f32.gmra.mrb[0].mxu0 %v3026
        %v3306 = vpop.f32.mrb[0].mxu0
        %v3307 = vadd.f32 %v2851, %v3306
        %v3308 = vpop.f32.mrb[0].mxu0
        %v3309 = vadd.f32 %v2853, %v3308
        %3310 = vdwg.mxu0
        %3311 = vmatprep.subr.mxu0 %v3042
        %3312 = vmatpush1.msra.mxu0 %v3040
        %3313 = vmatprep.subr.mxu0 0.0
        %3314 = vmatpush1.msra.mxu0 0.0
        %3315 = vmatprep.subr.mxu0 0.0
        %3316 = vmatpush1.msra.mxu0 0.0
        %3317 = vmatprep.subr.mxu0 0.0
        %3318 = vmatpush1.msra.mxu0 0.0
        %3319 = vmatprep.subr.mxu0 0.0
        %3320 = vmatpush1.msra.mxu0 0.0
        %3321 = vmatprep.subr.mxu0 0.0
        %3322 = vmatpush1.msra.mxu0 0.0
        %3323 = vmatprep.subr.mxu0 0.0
        %3324 = vmatpush1.msra.mxu0 0.0
        %3325 = vmatprep.subr.mxu0 0.0
        %3326 = vmatpush1.msra.mxu0 0.0
        %3327 = vmatprep.subr.mxu0 0.0
        %3328 = vmatpush1.msra.mxu0 0.0
        %3329 = vmatprep.subr.mxu0 0.0
        %3330 = vmatpush1.msra.mxu0 0.0
        %3331 = vmatprep.subr.mxu0 0.0
        %3332 = vmatpush1.msra.mxu0 0.0
        %3333 = vmatprep.subr.mxu0 0.0
        %3334 = vmatpush1.msra.mxu0 0.0
        %3335 = vmatprep.subr.mxu0 0.0
        %3336 = vmatpush1.msra.mxu0 0.0
        %3337 = vmatprep.subr.mxu0 0.0
        %3338 = vmatpush1.msra.mxu0 0.0
        %3339 = vmatprep.subr.mxu0 0.0
        %3340 = vmatpush1.msra.mxu0 0.0
        %3341 = vmatprep.subr.mxu0 0.0
        %3342 = vmatpush1.msra.mxu0 0.0
        %3343 = vmatprep.subr.mxu0 0.0
        %3344 = vmatpush1.msra.mxu0 0.0
        %3345 = vmatprep.subr.mxu0 0.0
        %3346 = vmatpush1.msra.mxu0 0.0
        %3347 = vmatprep.subr.mxu0 0.0
        %3348 = vmatpush1.msra.mxu0 0.0
        %3349 = vmatprep.subr.mxu0 0.0
        %3350 = vmatpush1.msra.mxu0 0.0
        %3351 = vmatprep.subr.mxu0 0.0
        %3352 = vmatpush1.msra.mxu0 0.0
        %3353 = vmatprep.subr.mxu0 0.0
        %3354 = vmatpush1.msra.mxu0 0.0
        %3355 = vmatprep.subr.mxu0 0.0
        %3356 = vmatpush1.msra.mxu0 0.0
        %3357 = vmatprep.subr.mxu0 0.0
        %3358 = vmatpush1.msra.mxu0 0.0
        %3359 = vmatprep.subr.mxu0 0.0
        %3360 = vmatpush1.msra.mxu0 0.0
        %3361 = vmatprep.subr.mxu0 0.0
        %3362 = vmatpush1.msra.mxu0 0.0
        %3363 = vmatprep.subr.mxu0 0.0
        %3364 = vmatpush1.msra.mxu0 0.0
        %3365 = vmatprep.subr.mxu0 0.0
        %3366 = vmatpush1.msra.mxu0 0.0
        %3367 = vmatprep.subr.mxu0 0.0
        %3368 = vmatpush1.msra.mxu0 0.0
        %3369 = vmatprep.subr.mxu0 0.0
        %3370 = vmatpush1.msra.mxu0 0.0
        %3371 = vmatprep.subr.mxu0 0.0
        %3372 = vmatpush1.msra.mxu0 0.0
        %3373 = vmatprep.subr.mxu0 0.0
        %3374 = vmatpush1.msra.mxu0 0.0
        %3375 = vmatprep.mubr.f32.mxu0 0.0
        %3376 = vmatmul.mubr.f32.gmra.mrb[0].mxu0 %v3017
        %v3377 = vpop.f32.mrb[0].mxu0
        %v3378 = vadd.f32 %v2922, %v3377
        %v3379 = vpop.f32.mrb[0].mxu0
        %v3380 = vadd.f32 %v2924, %v3379
        %3381 = vmatprep.mubr.f32.mxu0 0.0
        %3382 = vmatmul.mubr.f32.gmra.mrb[0].mxu0 %v3020
        %v3383 = vpop.f32.mrb[0].mxu0
        %v3384 = vadd.f32 %v2928, %v3383
        %v3385 = vpop.f32.mrb[0].mxu0
        %v3386 = vadd.f32 %v2930, %v3385
        %3387 = vmatprep.mubr.f32.mxu0 0.0
        %3388 = vmatmul.mubr.f32.gmra.mrb[0].mxu0 %v3023
        %v3389 = vpop.f32.mrb[0].mxu0
        %v3390 = vadd.f32 %v2934, %v3389
        %v3391 = vpop.f32.mrb[0].mxu0
        %v3392 = vadd.f32 %v2936, %v3391
        %3393 = vmatprep.mubr.f32.mxu0 0.0
        %3394 = vmatmul.mubr.f32.gmra.mrb[0].mxu0 %v3026
        %v3395 = vpop.f32.mrb[0].mxu0
        %v3396 = vadd.f32 %v2940, %v3395
        %v3397 = vpop.f32.mrb[0].mxu0
        %v3398 = vadd.f32 %v2942, %v3397
        %3399 = vdwg.mxu0
        %s3400 = scalar_lea.vmem %s4, 32
        %v3401 = vld [vmem:[%s3400] sm:$0xff]
        %v3402 = vld [vmem:[%s3400 + $0x8] sm:$0xff]
        %s3403 = scalar_lea.vmem %s5, 32
        %v3404 = vld [vmem:[%s3403] sm:$0xff]
        %v3405 = vld [vmem:[%s3403 + $0x8] sm:$0xff]
        %3407 = vset.pattern.permute.xlu0 0
        %3408 = vperm.xlu0 %3407, %v3404
        %v3409 = vpop.permute.xlu0 %3408
        %3412 = vset.pattern.permute.xlu0 0
        %3413 = vperm.xlu0 %3412, %v3405
        %v3414 = vpop.permute.xlu0 %3413
        %v3417 = vsel %vm666, %v3401, 0
        %v3420 = vsel %vm666, %v3402, 0
        %3422 = vmatprep.subr.mxu0 %v678
        %3423 = vmatpush1.msra.mxu0 %v675
        %3424 = vmatprep.subr.mxu0 0.0
        %3425 = vmatpush1.msra.mxu0 0.0
        %3426 = vmatprep.subr.mxu0 0.0
        %3427 = vmatpush1.msra.mxu0 0.0
        %3428 = vmatprep.subr.mxu0 0.0
        %3429 = vmatpush1.msra.mxu0 0.0
        %3430 = vmatprep.subr.mxu0 0.0
        %3431 = vmatpush1.msra.mxu0 0.0
        %3432 = vmatprep.subr.mxu0 0.0
        %3433 = vmatpush1.msra.mxu0 0.0
        %3434 = vmatprep.subr.mxu0 0.0
        %3435 = vmatpush1.msra.mxu0 0.0
        %3436 = vmatprep.subr.mxu0 0.0
        %3437 = vmatpush1.msra.mxu0 0.0
        %3438 = vmatprep.subr.mxu0 0.0
        %3439 = vmatpush1.msra.mxu0 0.0
        %3440 = vmatprep.subr.mxu0 0.0
        %3441 = vmatpush1.msra.mxu0 0.0
        %3442 = vmatprep.subr.mxu0 0.0
        %3443 = vmatpush1.msra.mxu0 0.0
        %3444 = vmatprep.subr.mxu0 0.0
        %3445 = vmatpush1.msra.mxu0 0.0
        %3446 = vmatprep.subr.mxu0 0.0
        %3447 = vmatpush1.msra.mxu0 0.0
        %3448 = vmatprep.subr.mxu0 0.0
        %3449 = vmatpush1.msra.mxu0 0.0
        %3450 = vmatprep.subr.mxu0 0.0
        %3451 = vmatpush1.msra.mxu0 0.0
        %3452 = vmatprep.subr.mxu0 0.0
        %3453 = vmatpush1.msra.mxu0 0.0
        %3454 = vmatprep.subr.mxu0 0.0
        %3455 = vmatpush1.msra.mxu0 0.0
        %3456 = vmatprep.subr.mxu0 0.0
        %3457 = vmatpush1.msra.mxu0 0.0
        %3458 = vmatprep.subr.mxu0 0.0
        %3459 = vmatpush1.msra.mxu0 0.0
        %3460 = vmatprep.subr.mxu0 0.0
        %3461 = vmatpush1.msra.mxu0 0.0
        %3462 = vmatprep.subr.mxu0 0.0
        %3463 = vmatpush1.msra.mxu0 0.0
        %3464 = vmatprep.subr.mxu0 0.0
        %3465 = vmatpush1.msra.mxu0 0.0
        %3466 = vmatprep.subr.mxu0 0.0
        %3467 = vmatpush1.msra.mxu0 0.0
        %3468 = vmatprep.subr.mxu0 0.0
        %3469 = vmatpush1.msra.mxu0 0.0
        %3470 = vmatprep.subr.mxu0 0.0
        %3471 = vmatpush1.msra.mxu0 0.0
        %3472 = vmatprep.subr.mxu0 0.0
        %3473 = vmatpush1.msra.mxu0 0.0
        %3474 = vmatprep.subr.mxu0 0.0
        %3475 = vmatpush1.msra.mxu0 0.0
        %3476 = vmatprep.subr.mxu0 0.0
        %3477 = vmatpush1.msra.mxu0 0.0
        %3478 = vmatprep.subr.mxu0 0.0
        %3479 = vmatpush1.msra.mxu0 0.0
        %3480 = vmatprep.subr.mxu0 0.0
        %3481 = vmatpush1.msra.mxu0 0.0
        %3482 = vmatprep.subr.mxu0 0.0
        %3483 = vmatpush1.msra.mxu0 0.0
        %3484 = vmatprep.subr.mxu0 0.0
        %3485 = vmatpush1.msra.mxu0 0.0
        %3486 = vmatprep.mubr.f32.mxu0 0.0
        %3487 = vmatmul.mubr.f32.gmra.mrb[0].mxu0 %v3417
        %v3488 = vpop.f32.mrb[0].mxu0
        %v3489 = vadd.f32 %v3409, %v3488
        %v3490 = vpop.f32.mrb[0].mxu0
        %v3491 = vadd.f32 %v3409, %v3490
        %3492 = vmatprep.mubr.f32.mxu0 0.0
        %3493 = vmatmul.mubr.f32.gmra.mrb[0].mxu0 %v3420
        %v3494 = vpop.f32.mrb[0].mxu0
        %v3495 = vadd.f32 %v3414, %v3494
        %v3496 = vpop.f32.mrb[0].mxu0
        %v3497 = vadd.f32 %v3414, %v3496
        %3498 = vdwg.mxu0
        %3499 = vmatprep.subr.mxu0 %v684
        %3500 = vmatpush1.msra.mxu0 %v681
        %3501 = vmatprep.subr.mxu0 0.0
        %3502 = vmatpush1.msra.mxu0 0.0
        %3503 = vmatprep.subr.mxu0 0.0
        %3504 = vmatpush1.msra.mxu0 0.0
        %3505 = vmatprep.subr.mxu0 0.0
        %3506 = vmatpush1.msra.mxu0 0.0
        %3507 = vmatprep.subr.mxu0 0.0
        %3508 = vmatpush1.msra.mxu0 0.0
        %3509 = vmatprep.subr.mxu0 0.0
        %3510 = vmatpush1.msra.mxu0 0.0
        %3511 = vmatprep.subr.mxu0 0.0
        %3512 = vmatpush1.msra.mxu0 0.0
        %3513 = vmatprep.subr.mxu0 0.0
        %3514 = vmatpush1.msra.mxu0 0.0
        %3515 = vmatprep.subr.mxu0 0.0
        %3516 = vmatpush1.msra.mxu0 0.0
        %3517 = vmatprep.subr.mxu0 0.0
        %3518 = vmatpush1.msra.mxu0 0.0
        %3519 = vmatprep.subr.mxu0 0.0
        %3520 = vmatpush1.msra.mxu0 0.0
        %3521 = vmatprep.subr.mxu0 0.0
        %3522 = vmatpush1.msra.mxu0 0.0
        %3523 = vmatprep.subr.mxu0 0.0
        %3524 = vmatpush1.msra.mxu0 0.0
        %3525 = vmatprep.subr.mxu0 0.0
        %3526 = vmatpush1.msra.mxu0 0.0
        %3527 = vmatprep.subr.mxu0 0.0
        %3528 = vmatpush1.msra.mxu0 0.0
        %3529 = vmatprep.subr.mxu0 0.0
        %3530 = vmatpush1.msra.mxu0 0.0
        %3531 = vmatprep.subr.mxu0 0.0
        %3532 = vmatpush1.msra.mxu0 0.0
        %3533 = vmatprep.subr.mxu0 0.0
        %3534 = vmatpush1.msra.mxu0 0.0
        %3535 = vmatprep.subr.mxu0 0.0
        %3536 = vmatpush1.msra.mxu0 0.0
        %3537 = vmatprep.subr.mxu0 0.0
        %3538 = vmatpush1.msra.mxu0 0.0
        %3539 = vmatprep.subr.mxu0 0.0
        %3540 = vmatpush1.msra.mxu0 0.0
        %3541 = vmatprep.subr.mxu0 0.0
        %3542 = vmatpush1.msra.mxu0 0.0
        %3543 = vmatprep.subr.mxu0 0.0
        %3544 = vmatpush1.msra.mxu0 0.0
        %3545 = vmatprep.subr.mxu0 0.0
        %3546 = vmatpush1.msra.mxu0 0.0
        %3547 = vmatprep.subr.mxu0 0.0
        %3548 = vmatpush1.msra.mxu0 0.0
        %3549 = vmatprep.subr.mxu0 0.0
        %3550 = vmatpush1.msra.mxu0 0.0
        %3551 = vmatprep.subr.mxu0 0.0
        %3552 = vmatpush1.msra.mxu0 0.0
        %3553 = vmatprep.subr.mxu0 0.0
        %3554 = vmatpush1.msra.mxu0 0.0
        %3555 = vmatprep.subr.mxu0 0.0
        %3556 = vmatpush1.msra.mxu0 0.0
        %3557 = vmatprep.subr.mxu0 0.0
        %3558 = vmatpush1.msra.mxu0 0.0
        %3559 = vmatprep.subr.mxu0 0.0
        %3560 = vmatpush1.msra.mxu0 0.0
        %3561 = vmatprep.subr.mxu0 0.0
        %3562 = vmatpush1.msra.mxu0 0.0
        %3563 = vmatprep.mubr.f32.mxu0 0.0
        %3564 = vmatmul.mubr.f32.gmra.mrb[0].mxu0 %v3417
        %v3565 = vpop.f32.mrb[0].mxu0
        %v3566 = vadd.f32 %v3409, %v3565
        %v3567 = vpop.f32.mrb[0].mxu0
        %v3568 = vadd.f32 %v3409, %v3567
        %3569 = vmatprep.mubr.f32.mxu0 0.0
        %3570 = vmatmul.mubr.f32.gmra.mrb[0].mxu0 %v3420
        %v3571 = vpop.f32.mrb[0].mxu0
        %v3572 = vadd.f32 %v3414, %v3571
        %v3573 = vpop.f32.mrb[0].mxu0
        %v3574 = vadd.f32 %v3414, %v3573
        %3575 = vdwg.mxu0
        %3576 = vmatprep.subr.mxu0 %v690
        %3577 = vmatpush1.msra.mxu0 %v687
        %3578 = vmatprep.subr.mxu0 0.0
        %3579 = vmatpush1.msra.mxu0 0.0
        %3580 = vmatprep.subr.mxu0 0.0
        %3581 = vmatpush1.msra.mxu0 0.0
        %3582 = vmatprep.subr.mxu0 0.0
        %3583 = vmatpush1.msra.mxu0 0.0
        %3584 = vmatprep.subr.mxu0 0.0
        %3585 = vmatpush1.msra.mxu0 0.0
        %3586 = vmatprep.subr.mxu0 0.0
        %3587 = vmatpush1.msra.mxu0 0.0
        %3588 = vmatprep.subr.mxu0 0.0
        %3589 = vmatpush1.msra.mxu0 0.0
        %3590 = vmatprep.subr.mxu0 0.0
        %3591 = vmatpush1.msra.mxu0 0.0
        %3592 = vmatprep.subr.mxu0 0.0
        %3593 = vmatpush1.msra.mxu0 0.0
        %3594 = vmatprep.subr.mxu0 0.0
        %3595 = vmatpush1.msra.mxu0 0.0
        %3596 = vmatprep.subr.mxu0 0.0
        %3597 = vmatpush1.msra.mxu0 0.0
        %3598 = vmatprep.subr.mxu0 0.0
        %3599 = vmatpush1.msra.mxu0 0.0
        %3600 = vmatprep.subr.mxu0 0.0
        %3601 = vmatpush1.msra.mxu0 0.0
        %3602 = vmatprep.subr.mxu0 0.0
        %3603 = vmatpush1.msra.mxu0 0.0
        %3604 = vmatprep.subr.mxu0 0.0
        %3605 = vmatpush1.msra.mxu0 0.0
        %3606 = vmatprep.subr.mxu0 0.0
        %3607 = vmatpush1.msra.mxu0 0.0
        %3608 = vmatprep.subr.mxu0 0.0
        %3609 = vmatpush1.msra.mxu0 0.0
        %3610 = vmatprep.subr.mxu0 0.0
        %3611 = vmatpush1.msra.mxu0 0.0
        %3612 = vmatprep.subr.mxu0 0.0
        %3613 = vmatpush1.msra.mxu0 0.0
        %3614 = vmatprep.subr.mxu0 0.0
        %3615 = vmatpush1.msra.mxu0 0.0
        %3616 = vmatprep.subr.mxu0 0.0
        %3617 = vmatpush1.msra.mxu0 0.0
        %3618 = vmatprep.subr.mxu0 0.0
        %3619 = vmatpush1.msra.mxu0 0.0
        %3620 = vmatprep.subr.mxu0 0.0
        %3621 = vmatpush1.msra.mxu0 0.0
        %3622 = vmatprep.subr.mxu0 0.0
        %3623 = vmatpush1.msra.mxu0 0.0
        %3624 = vmatprep.subr.mxu0 0.0
        %3625 = vmatpush1.msra.mxu0 0.0
        %3626 = vmatprep.subr.mxu0 0.0
        %3627 = vmatpush1.msra.mxu0 0.0
        %3628 = vmatprep.subr.mxu0 0.0
        %3629 = vmatpush1.msra.mxu0 0.0
        %3630 = vmatprep.subr.mxu0 0.0
        %3631 = vmatpush1.msra.mxu0 0.0
        %3632 = vmatprep.subr.mxu0 0.0
        %3633 = vmatpush1.msra.mxu0 0.0
        %3634 = vmatprep.subr.mxu0 0.0
        %3635 = vmatpush1.msra.mxu0 0.0
        %3636 = vmatprep.subr.mxu0 0.0
        %3637 = vmatpush1.msra.mxu0 0.0
        %3638 = vmatprep.subr.mxu0 0.0
        %3639 = vmatpush1.msra.mxu0 0.0
        %3640 = vmatprep.mubr.f32.mxu0 0.0
        %3641 = vmatmul.mubr.f32.gmra.mrb[0].mxu0 %v3417
        %v3642 = vpop.f32.mrb[0].mxu0
        %v3643 = vadd.f32 %v3409, %v3642
        %v3644 = vpop.f32.mrb[0].mxu0
        %v3645 = vadd.f32 %v3409, %v3644
        %3646 = vmatprep.mubr.f32.mxu0 0.0
        %3647 = vmatmul.mubr.f32.gmra.mrb[0].mxu0 %v3420
        %v3648 = vpop.f32.mrb[0].mxu0
        %v3649 = vadd.f32 %v3414, %v3648
        %v3650 = vpop.f32.mrb[0].mxu0
        %v3651 = vadd.f32 %v3414, %v3650
        %3652 = vdwg.mxu0
        %3653 = vmatprep.subr.mxu0 %v696
        %3654 = vmatpush1.msra.mxu0 %v693
        %3655 = vmatprep.subr.mxu0 0.0
        %3656 = vmatpush1.msra.mxu0 0.0
        %3657 = vmatprep.subr.mxu0 0.0
        %3658 = vmatpush1.msra.mxu0 0.0
        %3659 = vmatprep.subr.mxu0 0.0
        %3660 = vmatpush1.msra.mxu0 0.0
        %3661 = vmatprep.subr.mxu0 0.0
        %3662 = vmatpush1.msra.mxu0 0.0
        %3663 = vmatprep.subr.mxu0 0.0
        %3664 = vmatpush1.msra.mxu0 0.0
        %3665 = vmatprep.subr.mxu0 0.0
        %3666 = vmatpush1.msra.mxu0 0.0
        %3667 = vmatprep.subr.mxu0 0.0
        %3668 = vmatpush1.msra.mxu0 0.0
        %3669 = vmatprep.subr.mxu0 0.0
        %3670 = vmatpush1.msra.mxu0 0.0
        %3671 = vmatprep.subr.mxu0 0.0
        %3672 = vmatpush1.msra.mxu0 0.0
        %3673 = vmatprep.subr.mxu0 0.0
        %3674 = vmatpush1.msra.mxu0 0.0
        %3675 = vmatprep.subr.mxu0 0.0
        %3676 = vmatpush1.msra.mxu0 0.0
        %3677 = vmatprep.subr.mxu0 0.0
        %3678 = vmatpush1.msra.mxu0 0.0
        %3679 = vmatprep.subr.mxu0 0.0
        %3680 = vmatpush1.msra.mxu0 0.0
        %3681 = vmatprep.subr.mxu0 0.0
        %3682 = vmatpush1.msra.mxu0 0.0
        %3683 = vmatprep.subr.mxu0 0.0
        %3684 = vmatpush1.msra.mxu0 0.0
        %3685 = vmatprep.subr.mxu0 0.0
        %3686 = vmatpush1.msra.mxu0 0.0
        %3687 = vmatprep.subr.mxu0 0.0
        %3688 = vmatpush1.msra.mxu0 0.0
        %3689 = vmatprep.subr.mxu0 0.0
        %3690 = vmatpush1.msra.mxu0 0.0
        %3691 = vmatprep.subr.mxu0 0.0
        %3692 = vmatpush1.msra.mxu0 0.0
        %3693 = vmatprep.subr.mxu0 0.0
        %3694 = vmatpush1.msra.mxu0 0.0
        %3695 = vmatprep.subr.mxu0 0.0
        %3696 = vmatpush1.msra.mxu0 0.0
        %3697 = vmatprep.subr.mxu0 0.0
        %3698 = vmatpush1.msra.mxu0 0.0
        %3699 = vmatprep.subr.mxu0 0.0
        %3700 = vmatpush1.msra.mxu0 0.0
        %3701 = vmatprep.subr.mxu0 0.0
        %3702 = vmatpush1.msra.mxu0 0.0
        %3703 = vmatprep.subr.mxu0 0.0
        %3704 = vmatpush1.msra.mxu0 0.0
        %3705 = vmatprep.subr.mxu0 0.0
        %3706 = vmatpush1.msra.mxu0 0.0
        %3707 = vmatprep.subr.mxu0 0.0
        %3708 = vmatpush1.msra.mxu0 0.0
        %3709 = vmatprep.subr.mxu0 0.0
        %3710 = vmatpush1.msra.mxu0 0.0
        %3711 = vmatprep.subr.mxu0 0.0
        %3712 = vmatpush1.msra.mxu0 0.0
        %3713 = vmatprep.subr.mxu0 0.0
        %3714 = vmatpush1.msra.mxu0 0.0
        %3715 = vmatprep.subr.mxu0 0.0
        %3716 = vmatpush1.msra.mxu0 0.0
        %3717 = vmatprep.mubr.f32.mxu0 0.0
        %3718 = vmatmul.mubr.f32.gmra.mrb[0].mxu0 %v3417
        %v3719 = vpop.f32.mrb[0].mxu0
        %v3720 = vadd.f32 %v3409, %v3719
        %v3721 = vpop.f32.mrb[0].mxu0
        %v3722 = vadd.f32 %v3409, %v3721
        %3723 = vmatprep.mubr.f32.mxu0 0.0
        %3724 = vmatmul.mubr.f32.gmra.mrb[0].mxu0 %v3420
        %v3725 = vpop.f32.mrb[0].mxu0
        %v3726 = vadd.f32 %v3414, %v3725
        %v3727 = vpop.f32.mrb[0].mxu0
        %v3728 = vadd.f32 %v3414, %v3727
        %3729 = vdwg.mxu0
        %v3738 = vcombine.low %v3489, %v3491
        %v3739 = vcombine.high %v3489, %v3491
        %v3740 = vcombine.low %v3566, %v3568
        %v3741 = vcombine.high %v3566, %v3568
        %v3742 = vcombine.low %v3643, %v3645
        %v3743 = vcombine.high %v3643, %v3645
        %v3744 = vcombine.low %v3720, %v3722
        %v3745 = vcombine.high %v3720, %v3722
        %v3747 = vunpack.c.l.s4 1966171168
        %v3748 = vunpack.c.0.s8 %v3747
        %v3749 = vlaneseq
        %v3750 = vshrl.u32 %v3749, 7
        %v3751 = vsub.s32 %v3748, %v3750
        %v3752 = vrot.slane %v3738, %v3751
        %v3754 = vunpack.c.l.s4 1966171168
        %v3755 = vunpack.c.0.s8 %v3754
        %v3756 = vlaneseq
        %v3757 = vshrl.u32 %v3756, 7
        %v3758 = vsub.s32 %v3755, %v3757
        %v3759 = vrot.slane %v3739, %v3758
        %v3761 = vunpack.c.l.s4 1966171168
        %v3762 = vunpack.c.0.s8 %v3761
        %v3763 = vlaneseq
        %v3764 = vshrl.u32 %v3763, 7
        %v3765 = vsub.s32 %v3762, %v3764
        %v3766 = vrot.slane %v3740, %v3765
        %v3768 = vunpack.c.l.s4 1966171168
        %v3769 = vunpack.c.0.s8 %v3768
        %v3770 = vlaneseq
        %v3771 = vshrl.u32 %v3770, 7
        %v3772 = vsub.s32 %v3769, %v3771
        %v3773 = vrot.slane %v3741, %v3772
        %v3775 = vunpack.c.l.s4 1966171168
        %v3776 = vunpack.c.0.s8 %v3775
        %v3777 = vlaneseq
        %v3778 = vshrl.u32 %v3777, 7
        %v3779 = vsub.s32 %v3776, %v3778
        %v3780 = vrot.slane %v3742, %v3779
        %v3782 = vunpack.c.l.s4 1966171168
        %v3783 = vunpack.c.0.s8 %v3782
        %v3784 = vlaneseq
        %v3785 = vshrl.u32 %v3784, 7
        %v3786 = vsub.s32 %v3783, %v3785
        %v3787 = vrot.slane %v3743, %v3786
        %v3789 = vunpack.c.l.s4 1966171168
        %v3790 = vunpack.c.0.s8 %v3789
        %v3791 = vlaneseq
        %v3792 = vshrl.u32 %v3791, 7
        %v3793 = vsub.s32 %v3790, %v3792
        %v3794 = vrot.slane %v3744, %v3793
        %v3796 = vunpack.c.l.s4 1966171168
        %v3797 = vunpack.c.0.s8 %v3796
        %v3798 = vlaneseq
        %v3799 = vshrl.u32 %v3798, 7
        %v3800 = vsub.s32 %v3797, %v3799
        %v3801 = vrot.slane %v3745, %v3800
        %v3802 = vcombine.low %v3752, %v3766
        %v3803 = vcombine.high %v3752, %v3766
        %v3804 = vcombine.low %v3759, %v3773
        %v3805 = vcombine.high %v3759, %v3773
        %v3806 = vcombine.low %v3780, %v3794
        %v3807 = vcombine.high %v3780, %v3794
        %v3808 = vcombine.low %v3787, %v3801
        %v3809 = vcombine.high %v3787, %v3801
        %v3811 = vunpack.c.l.s4 1966171168
        %v3812 = vunpack.c.0.s8 %v3811
        %v3813 = vlaneseq
        %v3814 = vshrl.u32 %v3813, 7
        %v3815 = vsub.s32 %v3812, %v3814
        %v3816 = vrot.slane %v3802, %v3815
        %v3818 = vunpack.c.l.s4 1966171168
        %v3819 = vunpack.c.0.s8 %v3818
        %v3820 = vlaneseq
        %v3821 = vshrl.u32 %v3820, 7
        %v3822 = vsub.s32 %v3819, %v3821
        %v3823 = vrot.slane %v3804, %v3822
        %v3825 = vunpack.c.l.s4 1966171168
        %v3826 = vunpack.c.0.s8 %v3825
        %v3827 = vlaneseq
        %v3828 = vshrl.u32 %v3827, 7
        %v3829 = vsub.s32 %v3826, %v3828
        %v3830 = vrot.slane %v3803, %v3829
        %v3832 = vunpack.c.l.s4 1966171168
        %v3833 = vunpack.c.0.s8 %v3832
        %v3834 = vlaneseq
        %v3835 = vshrl.u32 %v3834, 7
        %v3836 = vsub.s32 %v3833, %v3835
        %v3837 = vrot.slane %v3805, %v3836
        %v3839 = vunpack.c.l.s4 1966171168
        %v3840 = vunpack.c.0.s8 %v3839
        %v3841 = vlaneseq
        %v3842 = vshrl.u32 %v3841, 7
        %v3843 = vsub.s32 %v3840, %v3842
        %v3844 = vrot.slane %v3806, %v3843
        %v3846 = vunpack.c.l.s4 1966171168
        %v3847 = vunpack.c.0.s8 %v3846
        %v3848 = vlaneseq
        %v3849 = vshrl.u32 %v3848, 7
        %v3850 = vsub.s32 %v3847, %v3849
        %v3851 = vrot.slane %v3808, %v3850
        %v3853 = vunpack.c.l.s4 1966171168
        %v3854 = vunpack.c.0.s8 %v3853
        %v3855 = vlaneseq
        %v3856 = vshrl.u32 %v3855, 7
        %v3857 = vsub.s32 %v3854, %v3856
        %v3858 = vrot.slane %v3807, %v3857
        %v3860 = vunpack.c.l.s4 1966171168
        %v3861 = vunpack.c.0.s8 %v3860
        %v3862 = vlaneseq
        %v3863 = vshrl.u32 %v3862, 7
        %v3864 = vsub.s32 %v3861, %v3863
        %v3865 = vrot.slane %v3809, %v3864
        %v3866 = vcombine.low %v3816, %v3844
        %v3867 = vcombine.high %v3816, %v3844
        %v3868 = vcombine.low %v3823, %v3851
        %v3869 = vcombine.high %v3823, %v3851
        %v3870 = vcombine.low %v3830, %v3858
        %v3871 = vcombine.high %v3830, %v3858
        %v3872 = vcombine.low %v3837, %v3865
        %v3873 = vcombine.high %v3837, %v3865
        %v3882 = vpack.c.bf16 %v3870, %v3866
        %v3883 = vpack.c.bf16 %v3871, %v3867
        %v3884 = vpack.c.bf16 %v3872, %v3868
        %v3885 = vpack.c.bf16 %v3873, %v3869
        %v3894 = vcombine.low %v3495, %v3497
        %v3895 = vcombine.high %v3495, %v3497
        %v3896 = vcombine.low %v3572, %v3574
        %v3897 = vcombine.high %v3572, %v3574
        %v3898 = vcombine.low %v3649, %v3651
        %v3899 = vcombine.high %v3649, %v3651
        %v3900 = vcombine.low %v3726, %v3728
        %v3901 = vcombine.high %v3726, %v3728
        %v3903 = vunpack.c.l.s4 1966171168
        %v3904 = vunpack.c.0.s8 %v3903
        %v3905 = vlaneseq
        %v3906 = vshrl.u32 %v3905, 7
        %v3907 = vsub.s32 %v3904, %v3906
        %v3908 = vrot.slane %v3894, %v3907
        %v3910 = vunpack.c.l.s4 1966171168
        %v3911 = vunpack.c.0.s8 %v3910
        %v3912 = vlaneseq
        %v3913 = vshrl.u32 %v3912, 7
        %v3914 = vsub.s32 %v3911, %v3913
        %v3915 = vrot.slane %v3895, %v3914
        %v3917 = vunpack.c.l.s4 1966171168
        %v3918 = vunpack.c.0.s8 %v3917
        %v3919 = vlaneseq
        %v3920 = vshrl.u32 %v3919, 7
        %v3921 = vsub.s32 %v3918, %v3920
        %v3922 = vrot.slane %v3896, %v3921
        %v3924 = vunpack.c.l.s4 1966171168
        %v3925 = vunpack.c.0.s8 %v3924
        %v3926 = vlaneseq
        %v3927 = vshrl.u32 %v3926, 7
        %v3928 = vsub.s32 %v3925, %v3927
        %v3929 = vrot.slane %v3897, %v3928
        %v3931 = vunpack.c.l.s4 1966171168
        %v3932 = vunpack.c.0.s8 %v3931
        %v3933 = vlaneseq
        %v3934 = vshrl.u32 %v3933, 7
        %v3935 = vsub.s32 %v3932, %v3934
        %v3936 = vrot.slane %v3898, %v3935
        %v3938 = vunpack.c.l.s4 1966171168
        %v3939 = vunpack.c.0.s8 %v3938
        %v3940 = vlaneseq
        %v3941 = vshrl.u32 %v3940, 7
        %v3942 = vsub.s32 %v3939, %v3941
        %v3943 = vrot.slane %v3899, %v3942
        %v3945 = vunpack.c.l.s4 1966171168
        %v3946 = vunpack.c.0.s8 %v3945
        %v3947 = vlaneseq
        %v3948 = vshrl.u32 %v3947, 7
        %v3949 = vsub.s32 %v3946, %v3948
        %v3950 = vrot.slane %v3900, %v3949
        %v3952 = vunpack.c.l.s4 1966171168
        %v3953 = vunpack.c.0.s8 %v3952
        %v3954 = vlaneseq
        %v3955 = vshrl.u32 %v3954, 7
        %v3956 = vsub.s32 %v3953, %v3955
        %v3957 = vrot.slane %v3901, %v3956
        %v3958 = vcombine.low %v3908, %v3922
        %v3959 = vcombine.high %v3908, %v3922
        %v3960 = vcombine.low %v3915, %v3929
        %v3961 = vcombine.high %v3915, %v3929
        %v3962 = vcombine.low %v3936, %v3950
        %v3963 = vcombine.high %v3936, %v3950
        %v3964 = vcombine.low %v3943, %v3957
        %v3965 = vcombine.high %v3943, %v3957
        %v3967 = vunpack.c.l.s4 1966171168
        %v3968 = vunpack.c.0.s8 %v3967
        %v3969 = vlaneseq
        %v3970 = vshrl.u32 %v3969, 7
        %v3971 = vsub.s32 %v3968, %v3970
        %v3972 = vrot.slane %v3958, %v3971
        %v3974 = vunpack.c.l.s4 1966171168
        %v3975 = vunpack.c.0.s8 %v3974
        %v3976 = vlaneseq
        %v3977 = vshrl.u32 %v3976, 7
        %v3978 = vsub.s32 %v3975, %v3977
        %v3979 = vrot.slane %v3960, %v3978
        %v3981 = vunpack.c.l.s4 1966171168
        %v3982 = vunpack.c.0.s8 %v3981
        %v3983 = vlaneseq
        %v3984 = vshrl.u32 %v3983, 7
        %v3985 = vsub.s32 %v3982, %v3984
        %v3986 = vrot.slane %v3959, %v3985
        %v3988 = vunpack.c.l.s4 1966171168
        %v3989 = vunpack.c.0.s8 %v3988
        %v3990 = vlaneseq
        %v3991 = vshrl.u32 %v3990, 7
        %v3992 = vsub.s32 %v3989, %v3991
        %v3993 = vrot.slane %v3961, %v3992
        %v3995 = vunpack.c.l.s4 1966171168
        %v3996 = vunpack.c.0.s8 %v3995
        %v3997 = vlaneseq
        %v3998 = vshrl.u32 %v3997, 7
        %v3999 = vsub.s32 %v3996, %v3998
        %v4000 = vrot.slane %v3962, %v3999
        %v4002 = vunpack.c.l.s4 1966171168
        %v4003 = vunpack.c.0.s8 %v4002
        %v4004 = vlaneseq
        %v4005 = vshrl.u32 %v4004, 7
        %v4006 = vsub.s32 %v4003, %v4005
        %v4007 = vrot.slane %v3964, %v4006
        %v4009 = vunpack.c.l.s4 1966171168
        %v4010 = vunpack.c.0.s8 %v4009
        %v4011 = vlaneseq
        %v4012 = vshrl.u32 %v4011, 7
        %v4013 = vsub.s32 %v4010, %v4012
        %v4014 = vrot.slane %v3963, %v4013
        %v4016 = vunpack.c.l.s4 1966171168
        %v4017 = vunpack.c.0.s8 %v4016
        %v4018 = vlaneseq
        %v4019 = vshrl.u32 %v4018, 7
        %v4020 = vsub.s32 %v4017, %v4019
        %v4021 = vrot.slane %v3965, %v4020
        %v4022 = vcombine.low %v3972, %v4000
        %v4023 = vcombine.high %v3972, %v4000
        %v4024 = vcombine.low %v3979, %v4007
        %v4025 = vcombine.high %v3979, %v4007
        %v4026 = vcombine.low %v3986, %v4014
        %v4027 = vcombine.high %v3986, %v4014
        %v4028 = vcombine.low %v3993, %v4021
        %v4029 = vcombine.high %v3993, %v4021
        %v4038 = vpack.c.bf16 %v4026, %v4022
        %v4039 = vpack.c.bf16 %v4027, %v4023
        %v4040 = vpack.c.bf16 %v4028, %v4024
        %v4041 = vpack.c.bf16 %v4029, %v4025
        %4042 = vxpose.xlu0.c.b16.start [1/8] %v3882, 128
        %4043 = vxpose.xlu0.c.b16.cont [2/8] %v3883, 128
        %4044 = vxpose.xlu0.c.b16.cont [3/8] %v3884, 128
        %4045 = vxpose.xlu0.c.b16.cont [4/8] %v3885, 128
        %4046 = vxpose.xlu0.c.b16.cont [5/8] 0, 128
        %4047 = vxpose.xlu0.c.b16.cont [6/8] 0, 128
        %4048 = vxpose.xlu0.c.b16.cont [7/8] 0, 128
        %4049 = vxpose.xlu0.c.b16.end [8/8] 0, 128
        %v4050 = vpop.trf.xlu0
        %v4051 = vpop.trf.xlu0
        %v4052 = vpop.trf.xlu0
        %v4053 = vpop.trf.xlu0
        %v4054 = vpop.trf.xlu0
        %v4055 = vpop.trf.xlu0
        %v4056 = vpop.trf.xlu0
        %v4057 = vpop.trf.xlu0
        %v4059 = vsel %vm1334, %v4050, 0
        %v4062 = vsel %vm1334, %v4051, 0
        %v4065 = vsel %vm1334, %v4052, 0
        %v4068 = vsel %vm1334, %v4053, 0
        %v4071 = vsel %vm1334, %v4054, 0
        %v4074 = vsel %vm1334, %v4055, 0
        %v4077 = vsel %vm1334, %v4056, 0
        %v4080 = vsel %vm1334, %v4057, 0
        %4082 = vmatprep.subr.bf16.mxu0 0
        %4083 = vmatpush1.bf16.msra.mxu0 %v4038
        %4084 = vmatprep.subr.bf16.mxu0 0
        %4085 = vmatpush1.bf16.msra.mxu0 %v4039
        %4086 = vmatprep.subr.bf16.mxu0 0
        %4087 = vmatpush1.bf16.msra.mxu0 %v4040
        %4088 = vmatprep.subr.bf16.mxu0 0
        %4089 = vmatpush1.bf16.msra.mxu0 %v4041
        %4090 = vmatprep.subr.bf16.mxu0 0
        %4091 = vmatpush1.bf16.msra.mxu0 0
        %4092 = vmatprep.subr.bf16.mxu0 0
        %4093 = vmatpush1.bf16.msra.mxu0 0
        %4094 = vmatprep.subr.bf16.mxu0 0
        %4095 = vmatpush1.bf16.msra.mxu0 0
        %4096 = vmatprep.subr.bf16.mxu0 0
        %4097 = vmatpush1.bf16.msra.mxu0 0
        %4098 = vmatprep.subr.bf16.mxu0 0
        %4099 = vmatpush1.bf16.msra.mxu0 0
        %4100 = vmatprep.subr.bf16.mxu0 0
        %4101 = vmatpush1.bf16.msra.mxu0 0
        %4102 = vmatprep.subr.bf16.mxu0 0
        %4103 = vmatpush1.bf16.msra.mxu0 0
        %4104 = vmatprep.subr.bf16.mxu0 0
        %4105 = vmatpush1.bf16.msra.mxu0 0
        %4106 = vmatprep.subr.bf16.mxu0 0
        %4107 = vmatpush1.bf16.msra.mxu0 0
        %4108 = vmatprep.subr.bf16.mxu0 0
        %4109 = vmatpush1.bf16.msra.mxu0 0
        %4110 = vmatprep.subr.bf16.mxu0 0
        %4111 = vmatpush1.bf16.msra.mxu0 0
        %4112 = vmatprep.subr.bf16.mxu0 0
        %4113 = vmatpush1.bf16.msra.mxu0 0
        %4114 = vmatprep.mubr.bf16.mxu0 0
        %4115 = vmatmul.mubr.bf16.gmra.mrb[0].mxu0 %v4059
        %v4116 = vpop.f32.mrb[0].mxu0
        %v4117 = vadd.f32 0.0, %v4116
        %v4118 = vpop.f32.mrb[0].mxu0
        %v4119 = vpop.f32.mrb[0].mxu0
        %v4120 = vadd.f32 0.0, %v4119
        %v4121 = vpop.f32.mrb[0].mxu0
        %4122 = vmatprep.mubr.bf16.mxu0 0
        %4123 = vmatmul.mubr.bf16.gmra.mrb[0].mxu0 %v4062
        %v4124 = vpop.f32.mrb[0].mxu0
        %v4125 = vadd.f32 0.0, %v4124
        %v4126 = vpop.f32.mrb[0].mxu0
        %v4127 = vpop.f32.mrb[0].mxu0
        %v4128 = vadd.f32 0.0, %v4127
        %v4129 = vpop.f32.mrb[0].mxu0
        %4130 = vmatprep.mubr.bf16.mxu0 0
        %4131 = vmatmul.mubr.bf16.gmra.mrb[0].mxu0 %v4065
        %v4132 = vpop.f32.mrb[0].mxu0
        %v4133 = vadd.f32 0.0, %v4132
        %v4134 = vpop.f32.mrb[0].mxu0
        %v4135 = vpop.f32.mrb[0].mxu0
        %v4136 = vadd.f32 0.0, %v4135
        %v4137 = vpop.f32.mrb[0].mxu0
        %4138 = vmatprep.mubr.bf16.mxu0 0
        %4139 = vmatmul.mubr.bf16.gmra.mrb[0].mxu0 %v4068
        %v4140 = vpop.f32.mrb[0].mxu0
        %v4141 = vadd.f32 0.0, %v4140
        %v4142 = vpop.f32.mrb[0].mxu0
        %v4143 = vpop.f32.mrb[0].mxu0
        %v4144 = vadd.f32 0.0, %v4143
        %v4145 = vpop.f32.mrb[0].mxu0
        %4146 = vmatprep.mubr.bf16.mxu0 0
        %4147 = vmatmul.mubr.bf16.gmra.mrb[0].mxu0 %v4071
        %v4148 = vpop.f32.mrb[0].mxu0
        %v4149 = vadd.f32 0.0, %v4148
        %v4150 = vpop.f32.mrb[0].mxu0
        %v4151 = vpop.f32.mrb[0].mxu0
        %v4152 = vadd.f32 0.0, %v4151
        %v4153 = vpop.f32.mrb[0].mxu0
        %4154 = vmatprep.mubr.bf16.mxu0 0
        %4155 = vmatmul.mubr.bf16.gmra.mrb[0].mxu0 %v4074
        %v4156 = vpop.f32.mrb[0].mxu0
        %v4157 = vadd.f32 0.0, %v4156
        %v4158 = vpop.f32.mrb[0].mxu0
        %v4159 = vpop.f32.mrb[0].mxu0
        %v4160 = vadd.f32 0.0, %v4159
        %v4161 = vpop.f32.mrb[0].mxu0
        %4162 = vmatprep.mubr.bf16.mxu0 0
        %4163 = vmatmul.mubr.bf16.gmra.mrb[0].mxu0 %v4077
        %v4164 = vpop.f32.mrb[0].mxu0
        %v4165 = vadd.f32 0.0, %v4164
        %v4166 = vpop.f32.mrb[0].mxu0
        %v4167 = vpop.f32.mrb[0].mxu0
        %v4168 = vadd.f32 0.0, %v4167
        %v4169 = vpop.f32.mrb[0].mxu0
        %4170 = vmatprep.mubr.bf16.mxu0 0
        %4171 = vmatmul.mubr.bf16.gmra.mrb[0].mxu0 %v4080
        %v4172 = vpop.f32.mrb[0].mxu0
        %v4173 = vadd.f32 0.0, %v4172
        %v4174 = vpop.f32.mrb[0].mxu0
        %v4175 = vpop.f32.mrb[0].mxu0
        %v4176 = vadd.f32 0.0, %v4175
        %v4177 = vpop.f32.mrb[0].mxu0
        %4178 = vdwg.mxu0
        %s4179 = scalar_lea.vmem %s3, 256
        %v4180 = vld [vmem:[%s4179] sm:$0xff]
        %v4181 = vld [vmem:[%s4179 + $0x8] sm:$0xff]
        %v4182 = vld [vmem:[%s4179 + $0x10] sm:$0xff]
        %v4183 = vld [vmem:[%s4179 + $0x18] sm:$0xff]
        %v4184 = vld [vmem:[%s4179 + $0x20] sm:$0xff]
        %v4185 = vld [vmem:[%s4179 + $0x28] sm:$0xff]
        %v4186 = vld [vmem:[%s4179 + $0x30] sm:$0xff]
        %v4187 = vld [vmem:[%s4179 + $0x38] sm:$0xff]
        %v4188 = vld [vmem:[%s4179 + $0x40] sm:$0xff]
        %v4189 = vld [vmem:[%s4179 + $0x48] sm:$0xff]
        %v4190 = vld [vmem:[%s4179 + $0x50] sm:$0xff]
        %v4191 = vld [vmem:[%s4179 + $0x58] sm:$0xff]
        %v4192 = vld [vmem:[%s4179 + $0x60] sm:$0xff]
        %v4193 = vld [vmem:[%s4179 + $0x68] sm:$0xff]
        %v4194 = vld [vmem:[%s4179 + $0x70] sm:$0xff]
        %v4195 = vld [vmem:[%s4179 + $0x78] sm:$0xff]
        %v4196 = vtanh.pop %v4117
        %v4197 = vtanh.pop %v4120
        %v4198 = vtanh.pop %v4125
        %v4199 = vtanh.pop %v4128
        %v4200 = vtanh.pop %v4133
        %v4201 = vtanh.pop %v4136
        %v4202 = vtanh.pop %v4141
        %v4203 = vtanh.pop %v4144
        %v4204 = vtanh.pop %v4149
        %v4205 = vtanh.pop %v4152
        %v4206 = vtanh.pop %v4157
        %v4207 = vtanh.pop %v4160
        %v4208 = vtanh.pop %v4165
        %v4209 = vtanh.pop %v4168
        %v4210 = vtanh.pop %v4173
        %v4211 = vtanh.pop %v4176
        %v4212 = vmul.f32 %v4196, %v1488
        %v4213 = vmul.f32 %v4197, %v1488
        %v4214 = vmul.f32 %v4198, %v1488
        %v4215 = vmul.f32 %v4199, %v1488
        %v4216 = vmul.f32 %v4200, %v1488
        %v4217 = vmul.f32 %v4201, %v1488
        %v4218 = vmul.f32 %v4202, %v1488
        %v4219 = vmul.f32 %v4203, %v1488
        %v4220 = vmul.f32 %v4204, %v1488
        %v4221 = vmul.f32 %v4205, %v1488
        %v4222 = vmul.f32 %v4206, %v1488
        %v4223 = vmul.f32 %v4207, %v1488
        %v4224 = vmul.f32 %v4208, %v1488
        %v4225 = vmul.f32 %v4209, %v1488
        %v4226 = vmul.f32 %v4210, %v1488
        %v4227 = vmul.f32 %v4211, %v1488
        %v4228 = vadd.f32 %v4180, %v4212
        %v4229 = vadd.f32 %v4181, %v4213
        %v4230 = vadd.f32 %v4182, %v4214
        %v4231 = vadd.f32 %v4183, %v4215
        %v4232 = vadd.f32 %v4184, %v4216
        %v4233 = vadd.f32 %v4185, %v4217
        %v4234 = vadd.f32 %v4186, %v4218
        %v4235 = vadd.f32 %v4187, %v4219
        %v4236 = vadd.f32 %v4188, %v4220
        %v4237 = vadd.f32 %v4189, %v4221
        %v4238 = vadd.f32 %v4190, %v4222
        %v4239 = vadd.f32 %v4191, %v4223
        %v4240 = vadd.f32 %v4192, %v4224
        %v4241 = vadd.f32 %v4193, %v4225
        %v4242 = vadd.f32 %v4194, %v4226
        %v4243 = vadd.f32 %v4195, %v4227
        %v4244 = vpack.c.bf16 %v4229, %v4228
        %v4245 = vpack.c.bf16 %v4231, %v4230
        %v4246 = vpack.c.bf16 %v4233, %v4232
        %v4247 = vpack.c.bf16 %v4235, %v4234
        %v4248 = vpack.c.bf16 %v4237, %v4236
        %v4249 = vpack.c.bf16 %v4239, %v4238
        %v4250 = vpack.c.bf16 %v4241, %v4240
        %v4251 = vpack.c.bf16 %v4243, %v4242
        %4252 = vmatprep.subr.bf16.mxu0 0
        %4253 = vmatpush1.bf16.msra.mxu0 %v4244
        %4254 = vmatprep.subr.bf16.mxu0 0
        %4255 = vmatpush1.bf16.msra.mxu0 %v4245
        %4256 = vmatprep.subr.bf16.mxu0 0
        %4257 = vmatpush1.bf16.msra.mxu0 %v4246
        %4258 = vmatprep.subr.bf16.mxu0 0
        %4259 = vmatpush1.bf16.msra.mxu0 %v4247
        %4260 = vmatprep.subr.bf16.mxu0 0
        %4261 = vmatpush1.bf16.msra.mxu0 %v4248
        %4262 = vmatprep.subr.bf16.mxu0 0
        %4263 = vmatpush1.bf16.msra.mxu0 %v4249
        %4264 = vmatprep.subr.bf16.mxu0 0
        %4265 = vmatpush1.bf16.msra.mxu0 %v4250
        %4266 = vmatprep.subr.bf16.mxu0 0
        %4267 = vmatpush1.bf16.msra.mxu0 %v4251
        %4268 = vmatprep.subr.bf16.mxu0 0
        %4269 = vmatpush1.bf16.msra.mxu0 0
        %4270 = vmatprep.subr.bf16.mxu0 0
        %4271 = vmatpush1.bf16.msra.mxu0 0
        %4272 = vmatprep.subr.bf16.mxu0 0
        %4273 = vmatpush1.bf16.msra.mxu0 0
        %4274 = vmatprep.subr.bf16.mxu0 0
        %4275 = vmatpush1.bf16.msra.mxu0 0
        %4276 = vmatprep.subr.bf16.mxu0 0
        %4277 = vmatpush1.bf16.msra.mxu0 0
        %4278 = vmatprep.subr.bf16.mxu0 0
        %4279 = vmatpush1.bf16.msra.mxu0 0
        %4280 = vmatprep.subr.bf16.mxu0 0
        %4281 = vmatpush1.bf16.msra.mxu0 0
        %4282 = vmatprep.subr.bf16.mxu0 0
        %4283 = vmatpush1.bf16.msra.mxu0 0
        %4284 = vmatprep.mubr.bf16.mxu0 0
        %4285 = vmatmul.mubr.bf16.gmra.mrb[0].mxu0 %v650
        %v4286 = vpop.f32.mrb[0].mxu0
        %v4287 = vadd.f32 0.0, %v4286
        %v4288 = vpop.f32.mrb[0].mxu0
        %v4289 = vpop.f32.mrb[0].mxu0
        %v4290 = vadd.f32 0.0, %v4289
        %v4291 = vpop.f32.mrb[0].mxu0
        %4292 = vmatprep.mubr.bf16.mxu0 0
        %4293 = vmatmul.mubr.bf16.gmra.mrb[0].mxu0 %v651
        %v4294 = vpop.f32.mrb[0].mxu0
        %v4295 = vadd.f32 0.0, %v4294
        %v4296 = vpop.f32.mrb[0].mxu0
        %v4297 = vpop.f32.mrb[0].mxu0
        %v4298 = vadd.f32 0.0, %v4297
        %v4299 = vpop.f32.mrb[0].mxu0
        %4300 = vdwg.mxu0
        %s4301 = scalar_lea.vmem %s6, 64
        %v4302 = vld [vmem:[%s4301] sm:$0xff]
        %v4303 = vld [vmem:[%s4301 + $0x8] sm:$0xff]
        %v4304 = vld [vmem:[%s4301 + $0x10] sm:$0xff]
        %v4305 = vld [vmem:[%s4301 + $0x18] sm:$0xff]
        %v4310 = vcombine.low %v4287, %v4290
        %v4311 = vcombine.high %v4287, %v4290
        %v4312 = vcombine.low %v4295, %v4298
        %v4313 = vcombine.high %v4295, %v4298
        %v4315 = vunpack.c.l.s4 1966171168
        %v4316 = vunpack.c.0.s8 %v4315
        %v4317 = vlaneseq
        %v4318 = vshrl.u32 %v4317, 7
        %v4319 = vsub.s32 %v4316, %v4318
        %v4320 = vrot.slane %v4310, %v4319
        %v4322 = vunpack.c.l.s4 1966171168
        %v4323 = vunpack.c.0.s8 %v4322
        %v4324 = vlaneseq
        %v4325 = vshrl.u32 %v4324, 7
        %v4326 = vsub.s32 %v4323, %v4325
        %v4327 = vrot.slane %v4311, %v4326
        %v4329 = vunpack.c.l.s4 1966171168
        %v4330 = vunpack.c.0.s8 %v4329
        %v4331 = vlaneseq
        %v4332 = vshrl.u32 %v4331, 7
        %v4333 = vsub.s32 %v4330, %v4332
        %v4334 = vrot.slane %v4312, %v4333
        %v4336 = vunpack.c.l.s4 1966171168
        %v4337 = vunpack.c.0.s8 %v4336
        %v4338 = vlaneseq
        %v4339 = vshrl.u32 %v4338, 7
        %v4340 = vsub.s32 %v4337, %v4339
        %v4341 = vrot.slane %v4313, %v4340
        %v4342 = vcombine.low %v4320, %v4334
        %v4343 = vcombine.high %v4320, %v4334
        %v4344 = vcombine.low %v4327, %v4341
        %v4345 = vcombine.high %v4327, %v4341
        %v4347 = vunpack.c.l.s4 1966171168
        %v4348 = vunpack.c.0.s8 %v4347
        %v4349 = vlaneseq
        %v4350 = vshrl.u32 %v4349, 7
        %v4351 = vsub.s32 %v4348, %v4350
        %v4352 = vrot.slane %v4342, %v4351
        %v4354 = vunpack.c.l.s4 1966171168
        %v4355 = vunpack.c.0.s8 %v4354
        %v4356 = vlaneseq
        %v4357 = vshrl.u32 %v4356, 7
        %v4358 = vsub.s32 %v4355, %v4357
        %v4359 = vrot.slane %v4344, %v4358
        %v4361 = vunpack.c.l.s4 1966171168
        %v4362 = vunpack.c.0.s8 %v4361
        %v4363 = vlaneseq
        %v4364 = vshrl.u32 %v4363, 7
        %v4365 = vsub.s32 %v4362, %v4364
        %v4366 = vrot.slane %v4343, %v4365
        %v4368 = vunpack.c.l.s4 1966171168
        %v4369 = vunpack.c.0.s8 %v4368
        %v4370 = vlaneseq
        %v4371 = vshrl.u32 %v4370, 7
        %v4372 = vsub.s32 %v4369, %v4371
        %v4373 = vrot.slane %v4345, %v4372
        %v4374 = vcombine.high %v4352, %v4352
        %v4375 = vcombine.high %v4359, %v4359
        %v4376 = vcombine.high %v4366, %v4366
        %v4377 = vcombine.high %v4373, %v4373
        %v4379 = vsel %vm666, %v4302, 0
        %v4382 = vsel %vm666, %v4303, 0
        %v4385 = vsel %vm666, %v4304, 0
        %v4388 = vsel %vm666, %v4305, 0
        %v4390 = vsel %vm673, %v4352, 0
        %v4392 = vsel %vm673, %v4366, 0
        %v4394 = vsel %vm673, %v4374, 0
        %v4396 = vsel %vm673, %v4376, 0
        %v4398 = vsel %vm673, %v4359, 0
        %v4400 = vsel %vm673, %v4373, 0
        %v4402 = vsel %vm673, %v4375, 0
        %v4404 = vsel %vm673, %v4377, 0
        %4406 = vmatprep.subr.mxu0 %v4392
        %4407 = vmatpush1.msra.mxu0 %v4390
        %4408 = vmatprep.subr.mxu0 0.0
        %4409 = vmatpush1.msra.mxu0 0.0
        %4410 = vmatprep.subr.mxu0 0.0
        %4411 = vmatpush1.msra.mxu0 0.0
        %4412 = vmatprep.subr.mxu0 0.0
        %4413 = vmatpush1.msra.mxu0 0.0
        %4414 = vmatprep.subr.mxu0 0.0
        %4415 = vmatpush1.msra.mxu0 0.0
        %4416 = vmatprep.subr.mxu0 0.0
        %4417 = vmatpush1.msra.mxu0 0.0
        %4418 = vmatprep.subr.mxu0 0.0
        %4419 = vmatpush1.msra.mxu0 0.0
        %4420 = vmatprep.subr.mxu0 0.0
        %4421 = vmatpush1.msra.mxu0 0.0
        %4422 = vmatprep.subr.mxu0 0.0
        %4423 = vmatpush1.msra.mxu0 0.0
        %4424 = vmatprep.subr.mxu0 0.0
        %4425 = vmatpush1.msra.mxu0 0.0
        %4426 = vmatprep.subr.mxu0 0.0
        %4427 = vmatpush1.msra.mxu0 0.0
        %4428 = vmatprep.subr.mxu0 0.0
        %4429 = vmatpush1.msra.mxu0 0.0
        %4430 = vmatprep.subr.mxu0 0.0
        %4431 = vmatpush1.msra.mxu0 0.0
        %4432 = vmatprep.subr.mxu0 0.0
        %4433 = vmatpush1.msra.mxu0 0.0
        %4434 = vmatprep.subr.mxu0 0.0
        %4435 = vmatpush1.msra.mxu0 0.0
        %4436 = vmatprep.subr.mxu0 0.0
        %4437 = vmatpush1.msra.mxu0 0.0
        %4438 = vmatprep.subr.mxu0 0.0
        %4439 = vmatpush1.msra.mxu0 0.0
        %4440 = vmatprep.subr.mxu0 0.0
        %4441 = vmatpush1.msra.mxu0 0.0
        %4442 = vmatprep.subr.mxu0 0.0
        %4443 = vmatpush1.msra.mxu0 0.0
        %4444 = vmatprep.subr.mxu0 0.0
        %4445 = vmatpush1.msra.mxu0 0.0
        %4446 = vmatprep.subr.mxu0 0.0
        %4447 = vmatpush1.msra.mxu0 0.0
        %4448 = vmatprep.subr.mxu0 0.0
        %4449 = vmatpush1.msra.mxu0 0.0
        %4450 = vmatprep.subr.mxu0 0.0
        %4451 = vmatpush1.msra.mxu0 0.0
        %4452 = vmatprep.subr.mxu0 0.0
        %4453 = vmatpush1.msra.mxu0 0.0
        %4454 = vmatprep.subr.mxu0 0.0
        %4455 = vmatpush1.msra.mxu0 0.0
        %4456 = vmatprep.subr.mxu0 0.0
        %4457 = vmatpush1.msra.mxu0 0.0
        %4458 = vmatprep.subr.mxu0 0.0
        %4459 = vmatpush1.msra.mxu0 0.0
        %4460 = vmatprep.subr.mxu0 0.0
        %4461 = vmatpush1.msra.mxu0 0.0
        %4462 = vmatprep.subr.mxu0 0.0
        %4463 = vmatpush1.msra.mxu0 0.0
        %4464 = vmatprep.subr.mxu0 0.0
        %4465 = vmatpush1.msra.mxu0 0.0
        %4466 = vmatprep.subr.mxu0 0.0
        %4467 = vmatpush1.msra.mxu0 0.0
        %4468 = vmatprep.subr.mxu0 0.0
        %4469 = vmatpush1.msra.mxu0 0.0
        %4470 = vmatprep.mubr.f32.mxu0 0.0
        %4471 = vmatmul.mubr.f32.gmra.mrb[0].mxu0 %v4379
        %v4472 = vpop.f32.mrb[0].mxu0
        %v4473 = vadd.f32 0.0, %v4472
        %v4474 = vpop.f32.mrb[0].mxu0
        %v4475 = vadd.f32 0.0, %v4474
        %4476 = vmatprep.mubr.f32.mxu0 0.0
        %4477 = vmatmul.mubr.f32.gmra.mrb[0].mxu0 %v4382
        %v4478 = vpop.f32.mrb[0].mxu0
        %v4479 = vadd.f32 0.0, %v4478
        %v4480 = vpop.f32.mrb[0].mxu0
        %v4481 = vadd.f32 0.0, %v4480
        %4482 = vmatprep.mubr.f32.mxu0 0.0
        %4483 = vmatmul.mubr.f32.gmra.mrb[0].mxu0 %v4385
        %v4484 = vpop.f32.mrb[0].mxu0
        %v4485 = vadd.f32 0.0, %v4484
        %v4486 = vpop.f32.mrb[0].mxu0
        %v4487 = vadd.f32 0.0, %v4486
        %4488 = vmatprep.mubr.f32.mxu0 0.0
        %4489 = vmatmul.mubr.f32.gmra.mrb[0].mxu0 %v4388
        %v4490 = vpop.f32.mrb[0].mxu0
        %v4491 = vadd.f32 0.0, %v4490
        %v4492 = vpop.f32.mrb[0].mxu0
        %v4493 = vadd.f32 0.0, %v4492
        %4494 = vdwg.mxu0
        %4495 = vmatprep.subr.mxu0 %v4396
        %4496 = vmatpush1.msra.mxu0 %v4394
        %4497 = vmatprep.subr.mxu0 0.0
        %4498 = vmatpush1.msra.mxu0 0.0
        %4499 = vmatprep.subr.mxu0 0.0
        %4500 = vmatpush1.msra.mxu0 0.0
        %4501 = vmatprep.subr.mxu0 0.0
        %4502 = vmatpush1.msra.mxu0 0.0
        %4503 = vmatprep.subr.mxu0 0.0
        %4504 = vmatpush1.msra.mxu0 0.0
        %4505 = vmatprep.subr.mxu0 0.0
        %4506 = vmatpush1.msra.mxu0 0.0
        %4507 = vmatprep.subr.mxu0 0.0
        %4508 = vmatpush1.msra.mxu0 0.0
        %4509 = vmatprep.subr.mxu0 0.0
        %4510 = vmatpush1.msra.mxu0 0.0
        %4511 = vmatprep.subr.mxu0 0.0
        %4512 = vmatpush1.msra.mxu0 0.0
        %4513 = vmatprep.subr.mxu0 0.0
        %4514 = vmatpush1.msra.mxu0 0.0
        %4515 = vmatprep.subr.mxu0 0.0
        %4516 = vmatpush1.msra.mxu0 0.0
        %4517 = vmatprep.subr.mxu0 0.0
        %4518 = vmatpush1.msra.mxu0 0.0
        %4519 = vmatprep.subr.mxu0 0.0
        %4520 = vmatpush1.msra.mxu0 0.0
        %4521 = vmatprep.subr.mxu0 0.0
        %4522 = vmatpush1.msra.mxu0 0.0
        %4523 = vmatprep.subr.mxu0 0.0
        %4524 = vmatpush1.msra.mxu0 0.0
        %4525 = vmatprep.subr.mxu0 0.0
        %4526 = vmatpush1.msra.mxu0 0.0
        %4527 = vmatprep.subr.mxu0 0.0
        %4528 = vmatpush1.msra.mxu0 0.0
        %4529 = vmatprep.subr.mxu0 0.0
        %4530 = vmatpush1.msra.mxu0 0.0
        %4531 = vmatprep.subr.mxu0 0.0
        %4532 = vmatpush1.msra.mxu0 0.0
        %4533 = vmatprep.subr.mxu0 0.0
        %4534 = vmatpush1.msra.mxu0 0.0
        %4535 = vmatprep.subr.mxu0 0.0
        %4536 = vmatpush1.msra.mxu0 0.0
        %4537 = vmatprep.subr.mxu0 0.0
        %4538 = vmatpush1.msra.mxu0 0.0
        %4539 = vmatprep.subr.mxu0 0.0
        %4540 = vmatpush1.msra.mxu0 0.0
        %4541 = vmatprep.subr.mxu0 0.0
        %4542 = vmatpush1.msra.mxu0 0.0
        %4543 = vmatprep.subr.mxu0 0.0
        %4544 = vmatpush1.msra.mxu0 0.0
        %4545 = vmatprep.subr.mxu0 0.0
        %4546 = vmatpush1.msra.mxu0 0.0
        %4547 = vmatprep.subr.mxu0 0.0
        %4548 = vmatpush1.msra.mxu0 0.0
        %4549 = vmatprep.subr.mxu0 0.0
        %4550 = vmatpush1.msra.mxu0 0.0
        %4551 = vmatprep.subr.mxu0 0.0
        %4552 = vmatpush1.msra.mxu0 0.0
        %4553 = vmatprep.subr.mxu0 0.0
        %4554 = vmatpush1.msra.mxu0 0.0
        %4555 = vmatprep.subr.mxu0 0.0
        %4556 = vmatpush1.msra.mxu0 0.0
        %4557 = vmatprep.subr.mxu0 0.0
        %4558 = vmatpush1.msra.mxu0 0.0
        %4559 = vmatprep.mubr.f32.mxu0 0.0
        %4560 = vmatmul.mubr.f32.gmra.mrb[0].mxu0 %v4379
        %v4561 = vpop.f32.mrb[0].mxu0
        %v4562 = vadd.f32 0.0, %v4561
        %v4563 = vpop.f32.mrb[0].mxu0
        %v4564 = vadd.f32 0.0, %v4563
        %4565 = vmatprep.mubr.f32.mxu0 0.0
        %4566 = vmatmul.mubr.f32.gmra.mrb[0].mxu0 %v4382
        %v4567 = vpop.f32.mrb[0].mxu0
        %v4568 = vadd.f32 0.0, %v4567
        %v4569 = vpop.f32.mrb[0].mxu0
        %v4570 = vadd.f32 0.0, %v4569
        %4571 = vmatprep.mubr.f32.mxu0 0.0
        %4572 = vmatmul.mubr.f32.gmra.mrb[0].mxu0 %v4385
        %v4573 = vpop.f32.mrb[0].mxu0
        %v4574 = vadd.f32 0.0, %v4573
        %v4575 = vpop.f32.mrb[0].mxu0
        %v4576 = vadd.f32 0.0, %v4575
        %4577 = vmatprep.mubr.f32.mxu0 0.0
        %4578 = vmatmul.mubr.f32.gmra.mrb[0].mxu0 %v4388
        %v4579 = vpop.f32.mrb[0].mxu0
        %v4580 = vadd.f32 0.0, %v4579
        %v4581 = vpop.f32.mrb[0].mxu0
        %v4582 = vadd.f32 0.0, %v4581
        %4583 = vdwg.mxu0
        %4584 = vmatprep.subr.mxu0 %v4400
        %4585 = vmatpush1.msra.mxu0 %v4398
        %4586 = vmatprep.subr.mxu0 0.0
        %4587 = vmatpush1.msra.mxu0 0.0
        %4588 = vmatprep.subr.mxu0 0.0
        %4589 = vmatpush1.msra.mxu0 0.0
        %4590 = vmatprep.subr.mxu0 0.0
        %4591 = vmatpush1.msra.mxu0 0.0
        %4592 = vmatprep.subr.mxu0 0.0
        %4593 = vmatpush1.msra.mxu0 0.0
        %4594 = vmatprep.subr.mxu0 0.0
        %4595 = vmatpush1.msra.mxu0 0.0
        %4596 = vmatprep.subr.mxu0 0.0
        %4597 = vmatpush1.msra.mxu0 0.0
        %4598 = vmatprep.subr.mxu0 0.0
        %4599 = vmatpush1.msra.mxu0 0.0
        %4600 = vmatprep.subr.mxu0 0.0
        %4601 = vmatpush1.msra.mxu0 0.0
        %4602 = vmatprep.subr.mxu0 0.0
        %4603 = vmatpush1.msra.mxu0 0.0
        %4604 = vmatprep.subr.mxu0 0.0
        %4605 = vmatpush1.msra.mxu0 0.0
        %4606 = vmatprep.subr.mxu0 0.0
        %4607 = vmatpush1.msra.mxu0 0.0
        %4608 = vmatprep.subr.mxu0 0.0
        %4609 = vmatpush1.msra.mxu0 0.0
        %4610 = vmatprep.subr.mxu0 0.0
        %4611 = vmatpush1.msra.mxu0 0.0
        %4612 = vmatprep.subr.mxu0 0.0
        %4613 = vmatpush1.msra.mxu0 0.0
        %4614 = vmatprep.subr.mxu0 0.0
        %4615 = vmatpush1.msra.mxu0 0.0
        %4616 = vmatprep.subr.mxu0 0.0
        %4617 = vmatpush1.msra.mxu0 0.0
        %4618 = vmatprep.subr.mxu0 0.0
        %4619 = vmatpush1.msra.mxu0 0.0
        %4620 = vmatprep.subr.mxu0 0.0
        %4621 = vmatpush1.msra.mxu0 0.0
        %4622 = vmatprep.subr.mxu0 0.0
        %4623 = vmatpush1.msra.mxu0 0.0
        %4624 = vmatprep.subr.mxu0 0.0
        %4625 = vmatpush1.msra.mxu0 0.0
        %4626 = vmatprep.subr.mxu0 0.0
        %4627 = vmatpush1.msra.mxu0 0.0
        %4628 = vmatprep.subr.mxu0 0.0
        %4629 = vmatpush1.msra.mxu0 0.0
        %4630 = vmatprep.subr.mxu0 0.0
        %4631 = vmatpush1.msra.mxu0 0.0
        %4632 = vmatprep.subr.mxu0 0.0
        %4633 = vmatpush1.msra.mxu0 0.0
        %4634 = vmatprep.subr.mxu0 0.0
        %4635 = vmatpush1.msra.mxu0 0.0
        %4636 = vmatprep.subr.mxu0 0.0
        %4637 = vmatpush1.msra.mxu0 0.0
        %4638 = vmatprep.subr.mxu0 0.0
        %4639 = vmatpush1.msra.mxu0 0.0
        %4640 = vmatprep.subr.mxu0 0.0
        %4641 = vmatpush1.msra.mxu0 0.0
        %4642 = vmatprep.subr.mxu0 0.0
        %4643 = vmatpush1.msra.mxu0 0.0
        %4644 = vmatprep.subr.mxu0 0.0
        %4645 = vmatpush1.msra.mxu0 0.0
        %4646 = vmatprep.subr.mxu0 0.0
        %4647 = vmatpush1.msra.mxu0 0.0
        %4648 = vmatprep.mubr.f32.mxu0 0.0
        %4649 = vmatmul.mubr.f32.gmra.mrb[0].mxu0 %v4379
        %v4650 = vpop.f32.mrb[0].mxu0
        %v4651 = vadd.f32 0.0, %v4650
        %v4652 = vpop.f32.mrb[0].mxu0
        %v4653 = vadd.f32 0.0, %v4652
        %4654 = vmatprep.mubr.f32.mxu0 0.0
        %4655 = vmatmul.mubr.f32.gmra.mrb[0].mxu0 %v4382
        %v4656 = vpop.f32.mrb[0].mxu0
        %v4657 = vadd.f32 0.0, %v4656
        %v4658 = vpop.f32.mrb[0].mxu0
        %v4659 = vadd.f32 0.0, %v4658
        %4660 = vmatprep.mubr.f32.mxu0 0.0
        %4661 = vmatmul.mubr.f32.gmra.mrb[0].mxu0 %v4385
        %v4662 = vpop.f32.mrb[0].mxu0
        %v4663 = vadd.f32 0.0, %v4662
        %v4664 = vpop.f32.mrb[0].mxu0
        %v4665 = vadd.f32 0.0, %v4664
        %4666 = vmatprep.mubr.f32.mxu0 0.0
        %4667 = vmatmul.mubr.f32.gmra.mrb[0].mxu0 %v4388
        %v4668 = vpop.f32.mrb[0].mxu0
        %v4669 = vadd.f32 0.0, %v4668
        %v4670 = vpop.f32.mrb[0].mxu0
        %v4671 = vadd.f32 0.0, %v4670
        %4672 = vdwg.mxu0
        %4673 = vmatprep.subr.mxu0 %v4404
        %4674 = vmatpush1.msra.mxu0 %v4402
        %4675 = vmatprep.subr.mxu0 0.0
        %4676 = vmatpush1.msra.mxu0 0.0
        %4677 = vmatprep.subr.mxu0 0.0
        %4678 = vmatpush1.msra.mxu0 0.0
        %4679 = vmatprep.subr.mxu0 0.0
        %4680 = vmatpush1.msra.mxu0 0.0
        %4681 = vmatprep.subr.mxu0 0.0
        %4682 = vmatpush1.msra.mxu0 0.0
        %4683 = vmatprep.subr.mxu0 0.0
        %4684 = vmatpush1.msra.mxu0 0.0
        %4685 = vmatprep.subr.mxu0 0.0
        %4686 = vmatpush1.msra.mxu0 0.0
        %4687 = vmatprep.subr.mxu0 0.0
        %4688 = vmatpush1.msra.mxu0 0.0
        %4689 = vmatprep.subr.mxu0 0.0
        %4690 = vmatpush1.msra.mxu0 0.0
        %4691 = vmatprep.subr.mxu0 0.0
        %4692 = vmatpush1.msra.mxu0 0.0
        %4693 = vmatprep.subr.mxu0 0.0
        %4694 = vmatpush1.msra.mxu0 0.0
        %4695 = vmatprep.subr.mxu0 0.0
        %4696 = vmatpush1.msra.mxu0 0.0
        %4697 = vmatprep.subr.mxu0 0.0
        %4698 = vmatpush1.msra.mxu0 0.0
        %4699 = vmatprep.subr.mxu0 0.0
        %4700 = vmatpush1.msra.mxu0 0.0
        %4701 = vmatprep.subr.mxu0 0.0
        %4702 = vmatpush1.msra.mxu0 0.0
        %4703 = vmatprep.subr.mxu0 0.0
        %4704 = vmatpush1.msra.mxu0 0.0
        %4705 = vmatprep.subr.mxu0 0.0
        %4706 = vmatpush1.msra.mxu0 0.0
        %4707 = vmatprep.subr.mxu0 0.0
        %4708 = vmatpush1.msra.mxu0 0.0
        %4709 = vmatprep.subr.mxu0 0.0
        %4710 = vmatpush1.msra.mxu0 0.0
        %4711 = vmatprep.subr.mxu0 0.0
        %4712 = vmatpush1.msra.mxu0 0.0
        %4713 = vmatprep.subr.mxu0 0.0
        %4714 = vmatpush1.msra.mxu0 0.0
        %4715 = vmatprep.subr.mxu0 0.0
        %4716 = vmatpush1.msra.mxu0 0.0
        %4717 = vmatprep.subr.mxu0 0.0
        %4718 = vmatpush1.msra.mxu0 0.0
        %4719 = vmatprep.subr.mxu0 0.0
        %4720 = vmatpush1.msra.mxu0 0.0
        %4721 = vmatprep.subr.mxu0 0.0
        %4722 = vmatpush1.msra.mxu0 0.0
        %4723 = vmatprep.subr.mxu0 0.0
        %4724 = vmatpush1.msra.mxu0 0.0
        %4725 = vmatprep.subr.mxu0 0.0
        %4726 = vmatpush1.msra.mxu0 0.0
        %4727 = vmatprep.subr.mxu0 0.0
        %4728 = vmatpush1.msra.mxu0 0.0
        %4729 = vmatprep.subr.mxu0 0.0
        %4730 = vmatpush1.msra.mxu0 0.0
        %4731 = vmatprep.subr.mxu0 0.0
        %4732 = vmatpush1.msra.mxu0 0.0
        %4733 = vmatprep.subr.mxu0 0.0
        %4734 = vmatpush1.msra.mxu0 0.0
        %4735 = vmatprep.subr.mxu0 0.0
        %4736 = vmatpush1.msra.mxu0 0.0
        %4737 = vmatprep.mubr.f32.mxu0 0.0
        %4738 = vmatmul.mubr.f32.gmra.mrb[0].mxu0 %v4379
        %v4739 = vpop.f32.mrb[0].mxu0
        %v4740 = vadd.f32 0.0, %v4739
        %v4741 = vpop.f32.mrb[0].mxu0
        %v4742 = vadd.f32 0.0, %v4741
        %4743 = vmatprep.mubr.f32.mxu0 0.0
        %4744 = vmatmul.mubr.f32.gmra.mrb[0].mxu0 %v4382
        %v4745 = vpop.f32.mrb[0].mxu0
        %v4746 = vadd.f32 0.0, %v4745
        %v4747 = vpop.f32.mrb[0].mxu0
        %v4748 = vadd.f32 0.0, %v4747
        %4749 = vmatprep.mubr.f32.mxu0 0.0
        %4750 = vmatmul.mubr.f32.gmra.mrb[0].mxu0 %v4385
        %v4751 = vpop.f32.mrb[0].mxu0
        %v4752 = vadd.f32 0.0, %v4751
        %v4753 = vpop.f32.mrb[0].mxu0
        %v4754 = vadd.f32 0.0, %v4753
        %4755 = vmatprep.mubr.f32.mxu0 0.0
        %4756 = vmatmul.mubr.f32.gmra.mrb[0].mxu0 %v4388
        %v4757 = vpop.f32.mrb[0].mxu0
        %v4758 = vadd.f32 0.0, %v4757
        %v4759 = vpop.f32.mrb[0].mxu0
        %v4760 = vadd.f32 0.0, %v4759
        %4761 = vdwg.mxu0
        %v4762 = vadd.f32 %v3111, %v4473
        %v4763 = vadd.f32 %v3113, %v4475
        %v4764 = vadd.f32 %v3200, %v4562
        %v4765 = vadd.f32 %v3202, %v4564
        %v4766 = vadd.f32 %v3289, %v4651
        %v4767 = vadd.f32 %v3291, %v4653
        %v4768 = vadd.f32 %v3378, %v4740
        %v4769 = vadd.f32 %v3380, %v4742
        %v4770 = vadd.f32 %v3117, %v4479
        %v4771 = vadd.f32 %v3119, %v4481
        %v4772 = vadd.f32 %v3206, %v4568
        %v4773 = vadd.f32 %v3208, %v4570
        %v4774 = vadd.f32 %v3295, %v4657
        %v4775 = vadd.f32 %v3297, %v4659
        %v4776 = vadd.f32 %v3384, %v4746
        %v4777 = vadd.f32 %v3386, %v4748
        %v4778 = vadd.f32 %v3123, %v4485
        %v4779 = vadd.f32 %v3125, %v4487
        %v4780 = vadd.f32 %v3212, %v4574
        %v4781 = vadd.f32 %v3214, %v4576
        %v4782 = vadd.f32 %v3301, %v4663
        %v4783 = vadd.f32 %v3303, %v4665
        %v4784 = vadd.f32 %v3390, %v4752
        %v4785 = vadd.f32 %v3392, %v4754
        %v4786 = vadd.f32 %v3129, %v4491
        %v4787 = vadd.f32 %v3131, %v4493
        %v4788 = vadd.f32 %v3218, %v4580
        %v4789 = vadd.f32 %v3220, %v4582
        %v4790 = vadd.f32 %v3307, %v4669
        %v4791 = vadd.f32 %v3309, %v4671
        %v4792 = vadd.f32 %v3396, %v4758
        %v4793 = vadd.f32 %v3398, %v4760
        %v4794 = vld [vmem:[%s7] sm:$0xff]
        %v4795 = vld [vmem:[%s7 + $0x8] sm:$0xff]
        %v4796 = vld [vmem:[%s7 + $0x10] sm:$0xff]
        %v4797 = vld [vmem:[%s7 + $0x18] sm:$0xff]
        %v4799 = vsel %vm666, %v4794, 0
        %v4802 = vsel %vm666, %v4795, 0
        %v4805 = vsel %vm666, %v4796, 0
        %v4808 = vsel %vm666, %v4797, 0
        %4810 = vmatprep.subr.mxu0 %v678
        %4811 = vmatpush1.msra.mxu0 %v675
        %4812 = vmatprep.subr.mxu0 0.0
        %4813 = vmatpush1.msra.mxu0 0.0
        %4814 = vmatprep.subr.mxu0 0.0
        %4815 = vmatpush1.msra.mxu0 0.0
        %4816 = vmatprep.subr.mxu0 0.0
        %4817 = vmatpush1.msra.mxu0 0.0
        %4818 = vmatprep.subr.mxu0 0.0
        %4819 = vmatpush1.msra.mxu0 0.0
        %4820 = vmatprep.subr.mxu0 0.0
        %4821 = vmatpush1.msra.mxu0 0.0
        %4822 = vmatprep.subr.mxu0 0.0
        %4823 = vmatpush1.msra.mxu0 0.0
        %4824 = vmatprep.subr.mxu0 0.0
        %4825 = vmatpush1.msra.mxu0 0.0
        %4826 = vmatprep.subr.mxu0 0.0
        %4827 = vmatpush1.msra.mxu0 0.0
        %4828 = vmatprep.subr.mxu0 0.0
        %4829 = vmatpush1.msra.mxu0 0.0
        %4830 = vmatprep.subr.mxu0 0.0
        %4831 = vmatpush1.msra.mxu0 0.0
        %4832 = vmatprep.subr.mxu0 0.0
        %4833 = vmatpush1.msra.mxu0 0.0
        %4834 = vmatprep.subr.mxu0 0.0
        %4835 = vmatpush1.msra.mxu0 0.0
        %4836 = vmatprep.subr.mxu0 0.0
        %4837 = vmatpush1.msra.mxu0 0.0
        %4838 = vmatprep.subr.mxu0 0.0
        %4839 = vmatpush1.msra.mxu0 0.0
        %4840 = vmatprep.subr.mxu0 0.0
        %4841 = vmatpush1.msra.mxu0 0.0
        %4842 = vmatprep.subr.mxu0 0.0
        %4843 = vmatpush1.msra.mxu0 0.0
        %4844 = vmatprep.subr.mxu0 0.0
        %4845 = vmatpush1.msra.mxu0 0.0
        %4846 = vmatprep.subr.mxu0 0.0
        %4847 = vmatpush1.msra.mxu0 0.0
        %4848 = vmatprep.subr.mxu0 0.0
        %4849 = vmatpush1.msra.mxu0 0.0
        %4850 = vmatprep.subr.mxu0 0.0
        %4851 = vmatpush1.msra.mxu0 0.0
        %4852 = vmatprep.subr.mxu0 0.0
        %4853 = vmatpush1.msra.mxu0 0.0
        %4854 = vmatprep.subr.mxu0 0.0
        %4855 = vmatpush1.msra.mxu0 0.0
        %4856 = vmatprep.subr.mxu0 0.0
        %4857 = vmatpush1.msra.mxu0 0.0
        %4858 = vmatprep.subr.mxu0 0.0
        %4859 = vmatpush1.msra.mxu0 0.0
        %4860 = vmatprep.subr.mxu0 0.0
        %4861 = vmatpush1.msra.mxu0 0.0
        %4862 = vmatprep.subr.mxu0 0.0
        %4863 = vmatpush1.msra.mxu0 0.0
        %4864 = vmatprep.subr.mxu0 0.0
        %4865 = vmatpush1.msra.mxu0 0.0
        %4866 = vmatprep.subr.mxu0 0.0
        %4867 = vmatpush1.msra.mxu0 0.0
        %4868 = vmatprep.subr.mxu0 0.0
        %4869 = vmatpush1.msra.mxu0 0.0
        %4870 = vmatprep.subr.mxu0 0.0
        %4871 = vmatpush1.msra.mxu0 0.0
        %4872 = vmatprep.subr.mxu0 0.0
        %4873 = vmatpush1.msra.mxu0 0.0
        %4874 = vmatprep.mubr.f32.mxu0 0.0
        %4875 = vmatmul.mubr.f32.gmra.mrb[0].mxu0 %v4799
        %v4876 = vpop.f32.mrb[0].mxu0
        %v4877 = vadd.f32 0.0, %v4876
        %v4878 = vpop.f32.mrb[0].mxu0
        %v4879 = vadd.f32 0.0, %v4878
        %4880 = vmatprep.mubr.f32.mxu0 0.0
        %4881 = vmatmul.mubr.f32.gmra.mrb[0].mxu0 %v4802
        %v4882 = vpop.f32.mrb[0].mxu0
        %v4883 = vadd.f32 0.0, %v4882
        %v4884 = vpop.f32.mrb[0].mxu0
        %v4885 = vadd.f32 0.0, %v4884
        %4886 = vmatprep.mubr.f32.mxu0 0.0
        %4887 = vmatmul.mubr.f32.gmra.mrb[0].mxu0 %v4805
        %v4888 = vpop.f32.mrb[0].mxu0
        %v4889 = vadd.f32 0.0, %v4888
        %v4890 = vpop.f32.mrb[0].mxu0
        %v4891 = vadd.f32 0.0, %v4890
        %4892 = vmatprep.mubr.f32.mxu0 0.0
        %4893 = vmatmul.mubr.f32.gmra.mrb[0].mxu0 %v4808
        %v4894 = vpop.f32.mrb[0].mxu0
        %v4895 = vadd.f32 0.0, %v4894
        %v4896 = vpop.f32.mrb[0].mxu0
        %v4897 = vadd.f32 0.0, %v4896
        %4898 = vdwg.mxu0
        %4899 = vmatprep.subr.mxu0 %v684
        %4900 = vmatpush1.msra.mxu0 %v681
        %4901 = vmatprep.subr.mxu0 0.0
        %4902 = vmatpush1.msra.mxu0 0.0
        %4903 = vmatprep.subr.mxu0 0.0
        %4904 = vmatpush1.msra.mxu0 0.0
        %4905 = vmatprep.subr.mxu0 0.0
        %4906 = vmatpush1.msra.mxu0 0.0
        %4907 = vmatprep.subr.mxu0 0.0
        %4908 = vmatpush1.msra.mxu0 0.0
        %4909 = vmatprep.subr.mxu0 0.0
        %4910 = vmatpush1.msra.mxu0 0.0
        %4911 = vmatprep.subr.mxu0 0.0
        %4912 = vmatpush1.msra.mxu0 0.0
        %4913 = vmatprep.subr.mxu0 0.0
        %4914 = vmatpush1.msra.mxu0 0.0
        %4915 = vmatprep.subr.mxu0 0.0
        %4916 = vmatpush1.msra.mxu0 0.0
        %4917 = vmatprep.subr.mxu0 0.0
        %4918 = vmatpush1.msra.mxu0 0.0
        %4919 = vmatprep.subr.mxu0 0.0
        %4920 = vmatpush1.msra.mxu0 0.0
        %4921 = vmatprep.subr.mxu0 0.0
        %4922 = vmatpush1.msra.mxu0 0.0
        %4923 = vmatprep.subr.mxu0 0.0
        %4924 = vmatpush1.msra.mxu0 0.0
        %4925 = vmatprep.subr.mxu0 0.0
        %4926 = vmatpush1.msra.mxu0 0.0
        %4927 = vmatprep.subr.mxu0 0.0
        %4928 = vmatpush1.msra.mxu0 0.0
        %4929 = vmatprep.subr.mxu0 0.0
        %4930 = vmatpush1.msra.mxu0 0.0
        %4931 = vmatprep.subr.mxu0 0.0
        %4932 = vmatpush1.msra.mxu0 0.0
        %4933 = vmatprep.subr.mxu0 0.0
        %4934 = vmatpush1.msra.mxu0 0.0
        %4935 = vmatprep.subr.mxu0 0.0
        %4936 = vmatpush1.msra.mxu0 0.0
        %4937 = vmatprep.subr.mxu0 0.0
        %4938 = vmatpush1.msra.mxu0 0.0
        %4939 = vmatprep.subr.mxu0 0.0
        %4940 = vmatpush1.msra.mxu0 0.0
        %4941 = vmatprep.subr.mxu0 0.0
        %4942 = vmatpush1.msra.mxu0 0.0
        %4943 = vmatprep.subr.mxu0 0.0
        %4944 = vmatpush1.msra.mxu0 0.0
        %4945 = vmatprep.subr.mxu0 0.0
        %4946 = vmatpush1.msra.mxu0 0.0
        %4947 = vmatprep.subr.mxu0 0.0
        %4948 = vmatpush1.msra.mxu0 0.0
        %4949 = vmatprep.subr.mxu0 0.0
        %4950 = vmatpush1.msra.mxu0 0.0
        %4951 = vmatprep.subr.mxu0 0.0
        %4952 = vmatpush1.msra.mxu0 0.0
        %4953 = vmatprep.subr.mxu0 0.0
        %4954 = vmatpush1.msra.mxu0 0.0
        %4955 = vmatprep.subr.mxu0 0.0
        %4956 = vmatpush1.msra.mxu0 0.0
        %4957 = vmatprep.subr.mxu0 0.0
        %4958 = vmatpush1.msra.mxu0 0.0
        %4959 = vmatprep.subr.mxu0 0.0
        %4960 = vmatpush1.msra.mxu0 0.0
        %4961 = vmatprep.subr.mxu0 0.0
        %4962 = vmatpush1.msra.mxu0 0.0
        %4963 = vmatprep.mubr.f32.mxu0 0.0
        %4964 = vmatmul.mubr.f32.gmra.mrb[0].mxu0 %v4799
        %v4965 = vpop.f32.mrb[0].mxu0
        %v4966 = vadd.f32 0.0, %v4965
        %v4967 = vpop.f32.mrb[0].mxu0
        %v4968 = vadd.f32 0.0, %v4967
        %4969 = vmatprep.mubr.f32.mxu0 0.0
        %4970 = vmatmul.mubr.f32.gmra.mrb[0].mxu0 %v4802
        %v4971 = vpop.f32.mrb[0].mxu0
        %v4972 = vadd.f32 0.0, %v4971
        %v4973 = vpop.f32.mrb[0].mxu0
        %v4974 = vadd.f32 0.0, %v4973
        %4975 = vmatprep.mubr.f32.mxu0 0.0
        %4976 = vmatmul.mubr.f32.gmra.mrb[0].mxu0 %v4805
        %v4977 = vpop.f32.mrb[0].mxu0
        %v4978 = vadd.f32 0.0, %v4977
        %v4979 = vpop.f32.mrb[0].mxu0
        %v4980 = vadd.f32 0.0, %v4979
        %4981 = vmatprep.mubr.f32.mxu0 0.0
        %4982 = vmatmul.mubr.f32.gmra.mrb[0].mxu0 %v4808
        %v4983 = vpop.f32.mrb[0].mxu0
        %v4984 = vadd.f32 0.0, %v4983
        %v4985 = vpop.f32.mrb[0].mxu0
        %v4986 = vadd.f32 0.0, %v4985
        %4987 = vdwg.mxu0
        %4988 = vmatprep.subr.mxu0 %v690
        %4989 = vmatpush1.msra.mxu0 %v687
        %4990 = vmatprep.subr.mxu0 0.0
        %4991 = vmatpush1.msra.mxu0 0.0
        %4992 = vmatprep.subr.mxu0 0.0
        %4993 = vmatpush1.msra.mxu0 0.0
        %4994 = vmatprep.subr.mxu0 0.0
        %4995 = vmatpush1.msra.mxu0 0.0
        %4996 = vmatprep.subr.mxu0 0.0
        %4997 = vmatpush1.msra.mxu0 0.0
        %4998 = vmatprep.subr.mxu0 0.0
        %4999 = vmatpush1.msra.mxu0 0.0
        %5000 = vmatprep.subr.mxu0 0.0
        %5001 = vmatpush1.msra.mxu0 0.0
        %5002 = vmatprep.subr.mxu0 0.0
        %5003 = vmatpush1.msra.mxu0 0.0
        %5004 = vmatprep.subr.mxu0 0.0
        %5005 = vmatpush1.msra.mxu0 0.0
        %5006 = vmatprep.subr.mxu0 0.0
        %5007 = vmatpush1.msra.mxu0 0.0
        %5008 = vmatprep.subr.mxu0 0.0
        %5009 = vmatpush1.msra.mxu0 0.0
        %5010 = vmatprep.subr.mxu0 0.0
        %5011 = vmatpush1.msra.mxu0 0.0
        %5012 = vmatprep.subr.mxu0 0.0
        %5013 = vmatpush1.msra.mxu0 0.0
        %5014 = vmatprep.subr.mxu0 0.0
        %5015 = vmatpush1.msra.mxu0 0.0
        %5016 = vmatprep.subr.mxu0 0.0
        %5017 = vmatpush1.msra.mxu0 0.0
        %5018 = vmatprep.subr.mxu0 0.0
        %5019 = vmatpush1.msra.mxu0 0.0
        %5020 = vmatprep.subr.mxu0 0.0
        %5021 = vmatpush1.msra.mxu0 0.0
        %5022 = vmatprep.subr.mxu0 0.0
        %5023 = vmatpush1.msra.mxu0 0.0
        %5024 = vmatprep.subr.mxu0 0.0
        %5025 = vmatpush1.msra.mxu0 0.0
        %5026 = vmatprep.subr.mxu0 0.0
        %5027 = vmatpush1.msra.mxu0 0.0
        %5028 = vmatprep.subr.mxu0 0.0
        %5029 = vmatpush1.msra.mxu0 0.0
        %5030 = vmatprep.subr.mxu0 0.0
        %5031 = vmatpush1.msra.mxu0 0.0
        %5032 = vmatprep.subr.mxu0 0.0
        %5033 = vmatpush1.msra.mxu0 0.0
        %5034 = vmatprep.subr.mxu0 0.0
        %5035 = vmatpush1.msra.mxu0 0.0
        %5036 = vmatprep.subr.mxu0 0.0
        %5037 = vmatpush1.msra.mxu0 0.0
        %5038 = vmatprep.subr.mxu0 0.0
        %5039 = vmatpush1.msra.mxu0 0.0
        %5040 = vmatprep.subr.mxu0 0.0
        %5041 = vmatpush1.msra.mxu0 0.0
        %5042 = vmatprep.subr.mxu0 0.0
        %5043 = vmatpush1.msra.mxu0 0.0
        %5044 = vmatprep.subr.mxu0 0.0
        %5045 = vmatpush1.msra.mxu0 0.0
        %5046 = vmatprep.subr.mxu0 0.0
        %5047 = vmatpush1.msra.mxu0 0.0
        %5048 = vmatprep.subr.mxu0 0.0
        %5049 = vmatpush1.msra.mxu0 0.0
        %5050 = vmatprep.subr.mxu0 0.0
        %5051 = vmatpush1.msra.mxu0 0.0
        %5052 = vmatprep.mubr.f32.mxu0 0.0
        %5053 = vmatmul.mubr.f32.gmra.mrb[0].mxu0 %v4799
        %v5054 = vpop.f32.mrb[0].mxu0
        %v5055 = vadd.f32 0.0, %v5054
        %v5056 = vpop.f32.mrb[0].mxu0
        %v5057 = vadd.f32 0.0, %v5056
        %5058 = vmatprep.mubr.f32.mxu0 0.0
        %5059 = vmatmul.mubr.f32.gmra.mrb[0].mxu0 %v4802
        %v5060 = vpop.f32.mrb[0].mxu0
        %v5061 = vadd.f32 0.0, %v5060
        %v5062 = vpop.f32.mrb[0].mxu0
        %v5063 = vadd.f32 0.0, %v5062
        %5064 = vmatprep.mubr.f32.mxu0 0.0
        %5065 = vmatmul.mubr.f32.gmra.mrb[0].mxu0 %v4805
        %v5066 = vpop.f32.mrb[0].mxu0
        %v5067 = vadd.f32 0.0, %v5066
        %v5068 = vpop.f32.mrb[0].mxu0
        %v5069 = vadd.f32 0.0, %v5068
        %5070 = vmatprep.mubr.f32.mxu0 0.0
        %5071 = vmatmul.mubr.f32.gmra.mrb[0].mxu0 %v4808
        %v5072 = vpop.f32.mrb[0].mxu0
        %v5073 = vadd.f32 0.0, %v5072
        %v5074 = vpop.f32.mrb[0].mxu0
        %v5075 = vadd.f32 0.0, %v5074
        %5076 = vdwg.mxu0
        %5077 = vmatprep.subr.mxu0 %v696
        %5078 = vmatpush1.msra.mxu0 %v693
        %5079 = vmatprep.subr.mxu0 0.0
        %5080 = vmatpush1.msra.mxu0 0.0
        %5081 = vmatprep.subr.mxu0 0.0
        %5082 = vmatpush1.msra.mxu0 0.0
        %5083 = vmatprep.subr.mxu0 0.0
        %5084 = vmatpush1.msra.mxu0 0.0
        %5085 = vmatprep.subr.mxu0 0.0
        %5086 = vmatpush1.msra.mxu0 0.0
        %5087 = vmatprep.subr.mxu0 0.0
        %5088 = vmatpush1.msra.mxu0 0.0
        %5089 = vmatprep.subr.mxu0 0.0
        %5090 = vmatpush1.msra.mxu0 0.0
        %5091 = vmatprep.subr.mxu0 0.0
        %5092 = vmatpush1.msra.mxu0 0.0
        %5093 = vmatprep.subr.mxu0 0.0
        %5094 = vmatpush1.msra.mxu0 0.0
        %5095 = vmatprep.subr.mxu0 0.0
        %5096 = vmatpush1.msra.mxu0 0.0
        %5097 = vmatprep.subr.mxu0 0.0
        %5098 = vmatpush1.msra.mxu0 0.0
        %5099 = vmatprep.subr.mxu0 0.0
        %5100 = vmatpush1.msra.mxu0 0.0
        %5101 = vmatprep.subr.mxu0 0.0
        %5102 = vmatpush1.msra.mxu0 0.0
        %5103 = vmatprep.subr.mxu0 0.0
        %5104 = vmatpush1.msra.mxu0 0.0
        %5105 = vmatprep.subr.mxu0 0.0
        %5106 = vmatpush1.msra.mxu0 0.0
        %5107 = vmatprep.subr.mxu0 0.0
        %5108 = vmatpush1.msra.mxu0 0.0
        %5109 = vmatprep.subr.mxu0 0.0
        %5110 = vmatpush1.msra.mxu0 0.0
        %5111 = vmatprep.subr.mxu0 0.0
        %5112 = vmatpush1.msra.mxu0 0.0
        %5113 = vmatprep.subr.mxu0 0.0
        %5114 = vmatpush1.msra.mxu0 0.0
        %5115 = vmatprep.subr.mxu0 0.0
        %5116 = vmatpush1.msra.mxu0 0.0
        %5117 = vmatprep.subr.mxu0 0.0
        %5118 = vmatpush1.msra.mxu0 0.0
        %5119 = vmatprep.subr.mxu0 0.0
        %5120 = vmatpush1.msra.mxu0 0.0
        %5121 = vmatprep.subr.mxu0 0.0
        %5122 = vmatpush1.msra.mxu0 0.0
        %5123 = vmatprep.subr.mxu0 0.0
        %5124 = vmatpush1.msra.mxu0 0.0
        %5125 = vmatprep.subr.mxu0 0.0
        %5126 = vmatpush1.msra.mxu0 0.0
        %5127 = vmatprep.subr.mxu0 0.0
        %5128 = vmatpush1.msra.mxu0 0.0
        %5129 = vmatprep.subr.mxu0 0.0
        %5130 = vmatpush1.msra.mxu0 0.0
        %5131 = vmatprep.subr.mxu0 0.0
        %5132 = vmatpush1.msra.mxu0 0.0
        %5133 = vmatprep.subr.mxu0 0.0
        %5134 = vmatpush1.msra.mxu0 0.0
        %5135 = vmatprep.subr.mxu0 0.0
        %5136 = vmatpush1.msra.mxu0 0.0
        %5137 = vmatprep.subr.mxu0 0.0
        %5138 = vmatpush1.msra.mxu0 0.0
        %5139 = vmatprep.subr.mxu0 0.0
        %5140 = vmatpush1.msra.mxu0 0.0
        %5141 = vmatprep.mubr.f32.mxu0 0.0
        %5142 = vmatmul.mubr.f32.gmra.mrb[0].mxu0 %v4799
        %v5143 = vpop.f32.mrb[0].mxu0
        %v5144 = vadd.f32 0.0, %v5143
        %v5145 = vpop.f32.mrb[0].mxu0
        %v5146 = vadd.f32 0.0, %v5145
        %5147 = vmatprep.mubr.f32.mxu0 0.0
        %5148 = vmatmul.mubr.f32.gmra.mrb[0].mxu0 %v4802
        %v5149 = vpop.f32.mrb[0].mxu0
        %v5150 = vadd.f32 0.0, %v5149
        %v5151 = vpop.f32.mrb[0].mxu0
        %v5152 = vadd.f32 0.0, %v5151
        %5153 = vmatprep.mubr.f32.mxu0 0.0
        %5154 = vmatmul.mubr.f32.gmra.mrb[0].mxu0 %v4805
        %v5155 = vpop.f32.mrb[0].mxu0
        %v5156 = vadd.f32 0.0, %v5155
        %v5157 = vpop.f32.mrb[0].mxu0
        %v5158 = vadd.f32 0.0, %v5157
        %5159 = vmatprep.mubr.f32.mxu0 0.0
        %5160 = vmatmul.mubr.f32.gmra.mrb[0].mxu0 %v4808
        %v5161 = vpop.f32.mrb[0].mxu0
        %v5162 = vadd.f32 0.0, %v5161
        %v5163 = vpop.f32.mrb[0].mxu0
        %v5164 = vadd.f32 0.0, %v5163
        %5165 = vdwg.mxu0
        %v5166 = vadd.f32 %v4762, %v4877
        %v5167 = vadd.f32 %v4763, %v4879
        %v5168 = vadd.f32 %v4764, %v4966
        %v5169 = vadd.f32 %v4765, %v4968
        %v5170 = vadd.f32 %v4766, %v5055
        %v5171 = vadd.f32 %v4767, %v5057
        %v5172 = vadd.f32 %v4768, %v5144
        %v5173 = vadd.f32 %v4769, %v5146
        %v5174 = vadd.f32 %v4770, %v4883
        %v5175 = vadd.f32 %v4771, %v4885
        %v5176 = vadd.f32 %v4772, %v4972
        %v5177 = vadd.f32 %v4773, %v4974
        %v5178 = vadd.f32 %v4774, %v5061
        %v5179 = vadd.f32 %v4775, %v5063
        %v5180 = vadd.f32 %v4776, %v5150
        %v5181 = vadd.f32 %v4777, %v5152
        %v5182 = vadd.f32 %v4778, %v4889
        %v5183 = vadd.f32 %v4779, %v4891
        %v5184 = vadd.f32 %v4780, %v4978
        %v5185 = vadd.f32 %v4781, %v4980
        %v5186 = vadd.f32 %v4782, %v5067
        %v5187 = vadd.f32 %v4783, %v5069
        %v5188 = vadd.f32 %v4784, %v5156
        %v5189 = vadd.f32 %v4785, %v5158
        %v5190 = vadd.f32 %v4786, %v4895
        %v5191 = vadd.f32 %v4787, %v4897
        %v5192 = vadd.f32 %v4788, %v4984
        %v5193 = vadd.f32 %v4789, %v4986
        %v5194 = vadd.f32 %v4790, %v5073
        %v5195 = vadd.f32 %v4791, %v5075
        %v5196 = vadd.f32 %v4792, %v5162
        %v5197 = vadd.f32 %v4793, %v5164
        %v5198 = vld [vmem:[%s8] sm:$0xff]
        %v5199 = vld [vmem:[%s8 + $0x8] sm:$0xff]
        %v5200 = vld [vmem:[%s8 + $0x10] sm:$0xff]
        %v5201 = vld [vmem:[%s8 + $0x18] sm:$0xff]
        %5203 = vset.pattern.permute.xlu0 0
        %5204 = vperm.xlu0 %5203, %v5198
        %v5205 = vpop.permute.xlu0 %5204
        %5208 = vset.pattern.permute.xlu0 0
        %5209 = vperm.xlu0 %5208, %v5199
        %v5210 = vpop.permute.xlu0 %5209
        %5213 = vset.pattern.permute.xlu0 0
        %5214 = vperm.xlu0 %5213, %v5200
        %v5215 = vpop.permute.xlu0 %5214
        %5218 = vset.pattern.permute.xlu0 0
        %5219 = vperm.xlu0 %5218, %v5201
        %v5220 = vpop.permute.xlu0 %5219
        %v5222 = vadd.f32 %v5166, %v5205
        %v5223 = vadd.f32 %v5167, %v5205
        %v5224 = vadd.f32 %v5168, %v5205
        %v5225 = vadd.f32 %v5169, %v5205
        %v5226 = vadd.f32 %v5170, %v5205
        %v5227 = vadd.f32 %v5171, %v5205
        %v5228 = vadd.f32 %v5172, %v5205
        %v5229 = vadd.f32 %v5173, %v5205
        %v5230 = vadd.f32 %v5174, %v5210
        %v5231 = vadd.f32 %v5175, %v5210
        %v5232 = vadd.f32 %v5176, %v5210
        %v5233 = vadd.f32 %v5177, %v5210
        %v5234 = vadd.f32 %v5178, %v5210
        %v5235 = vadd.f32 %v5179, %v5210
        %v5236 = vadd.f32 %v5180, %v5210
        %v5237 = vadd.f32 %v5181, %v5210
        %v5238 = vadd.f32 %v5182, %v5215
        %v5239 = vadd.f32 %v5183, %v5215
        %v5240 = vadd.f32 %v5184, %v5215
        %v5241 = vadd.f32 %v5185, %v5215
        %v5242 = vadd.f32 %v5186, %v5215
        %v5243 = vadd.f32 %v5187, %v5215
        %v5244 = vadd.f32 %v5188, %v5215
        %v5245 = vadd.f32 %v5189, %v5215
        %v5246 = vadd.f32 %v5190, %v5220
        %v5247 = vadd.f32 %v5191, %v5220
        %v5248 = vadd.f32 %v5192, %v5220
        %v5249 = vadd.f32 %v5193, %v5220
        %v5250 = vadd.f32 %v5194, %v5220
        %v5251 = vadd.f32 %v5195, %v5220
        %v5252 = vadd.f32 %v5196, %v5220
        %v5253 = vadd.f32 %v5197, %v5220
        %v5254 = vmax.f32 %v5222, 0.0
        %v5255 = vmax.f32 %v5223, 0.0
        %v5256 = vmax.f32 %v5224, 0.0
        %v5257 = vmax.f32 %v5225, 0.0
        %v5258 = vmax.f32 %v5226, 0.0
        %v5259 = vmax.f32 %v5227, 0.0
        %v5260 = vmax.f32 %v5228, 0.0
        %v5261 = vmax.f32 %v5229, 0.0
        %v5262 = vmax.f32 %v5230, 0.0
        %v5263 = vmax.f32 %v5231, 0.0
        %v5264 = vmax.f32 %v5232, 0.0
        %v5265 = vmax.f32 %v5233, 0.0
        %v5266 = vmax.f32 %v5234, 0.0
        %v5267 = vmax.f32 %v5235, 0.0
        %v5268 = vmax.f32 %v5236, 0.0
        %v5269 = vmax.f32 %v5237, 0.0
        %v5270 = vmax.f32 %v5238, 0.0
        %v5271 = vmax.f32 %v5239, 0.0
        %v5272 = vmax.f32 %v5240, 0.0
        %v5273 = vmax.f32 %v5241, 0.0
        %v5274 = vmax.f32 %v5242, 0.0
        %v5275 = vmax.f32 %v5243, 0.0
        %v5276 = vmax.f32 %v5244, 0.0
        %v5277 = vmax.f32 %v5245, 0.0
        %v5278 = vmax.f32 %v5246, 0.0
        %v5279 = vmax.f32 %v5247, 0.0
        %v5280 = vmax.f32 %v5248, 0.0
        %v5281 = vmax.f32 %v5249, 0.0
        %v5282 = vmax.f32 %v5250, 0.0
        %v5283 = vmax.f32 %v5251, 0.0
        %v5284 = vmax.f32 %v5252, 0.0
        %v5285 = vmax.f32 %v5253, 0.0
        %v5286 = vcombine.low %v5254, %v5256
        %v5287 = vcombine.high %v5254, %v5256
        %v5289 = vunpack.c.l.s4 1983009808
        %v5290 = vunpack.c.0.s8 %v5289
        %v5291 = vlaneseq
        %v5292 = vshrl.u32 %v5291, 7
        %v5293 = vsub.s32 %v5290, %v5292
        %v5294 = vrot.slane %v5286, %v5293
        %v5296 = vunpack.c.l.s4 1983009808
        %v5297 = vunpack.c.0.s8 %v5296
        %v5298 = vlaneseq
        %v5299 = vshrl.u32 %v5298, 7
        %v5300 = vsub.s32 %v5297, %v5299
        %v5301 = vrot.slane %v5287, %v5300
        %v5302 = vcombine.low %v5255, %v5257
        %v5303 = vcombine.high %v5255, %v5257
        %v5305 = vunpack.c.l.s4 1983009808
        %v5306 = vunpack.c.0.s8 %v5305
        %v5307 = vlaneseq
        %v5308 = vshrl.u32 %v5307, 7
        %v5309 = vsub.s32 %v5306, %v5308
        %v5310 = vrot.slane %v5302, %v5309
        %v5312 = vunpack.c.l.s4 1983009808
        %v5313 = vunpack.c.0.s8 %v5312
        %v5314 = vlaneseq
        %v5315 = vshrl.u32 %v5314, 7
        %v5316 = vsub.s32 %v5313, %v5315
        %v5317 = vrot.slane %v5303, %v5316
        %v5318 = vcombine.low %v5258, %v5260
        %v5319 = vcombine.high %v5258, %v5260
        %v5321 = vunpack.c.l.s4 1983009808
        %v5322 = vunpack.c.0.s8 %v5321
        %v5323 = vlaneseq
        %v5324 = vshrl.u32 %v5323, 7
        %v5325 = vsub.s32 %v5322, %v5324
        %v5326 = vrot.slane %v5318, %v5325
        %v5328 = vunpack.c.l.s4 1983009808
        %v5329 = vunpack.c.0.s8 %v5328
        %v5330 = vlaneseq
        %v5331 = vshrl.u32 %v5330, 7
        %v5332 = vsub.s32 %v5329, %v5331
        %v5333 = vrot.slane %v5319, %v5332
        %v5334 = vcombine.low %v5259, %v5261
        %v5335 = vcombine.high %v5259, %v5261
        %v5337 = vunpack.c.l.s4 1983009808
        %v5338 = vunpack.c.0.s8 %v5337
        %v5339 = vlaneseq
        %v5340 = vshrl.u32 %v5339, 7
        %v5341 = vsub.s32 %v5338, %v5340
        %v5342 = vrot.slane %v5334, %v5341
        %v5344 = vunpack.c.l.s4 1983009808
        %v5345 = vunpack.c.0.s8 %v5344
        %v5346 = vlaneseq
        %v5347 = vshrl.u32 %v5346, 7
        %v5348 = vsub.s32 %v5345, %v5347
        %v5349 = vrot.slane %v5335, %v5348
        %v5350 = vcombine.low %v5294, %v5310
        %v5351 = vcombine.high %v5294, %v5310
        %v5353 = vunpack.c.l.s4 1934713408
        %v5354 = vunpack.c.0.s8 %v5353
        %v5355 = vlaneseq
        %v5356 = vshrl.u32 %v5355, 7
        %v5357 = vsub.s32 %v5354, %v5356
        %v5358 = vrot.slane %v5350, %v5357
        %v5360 = vunpack.c.l.s4 1934713408
        %v5361 = vunpack.c.0.s8 %v5360
        %v5362 = vlaneseq
        %v5363 = vshrl.u32 %v5362, 7
        %v5364 = vsub.s32 %v5361, %v5363
        %v5365 = vrot.slane %v5351, %v5364
        %v5366 = vcombine.low %v5301, %v5317
        %v5367 = vcombine.high %v5301, %v5317
        %v5369 = vunpack.c.l.s4 1934713408
        %v5370 = vunpack.c.0.s8 %v5369
        %v5371 = vlaneseq
        %v5372 = vshrl.u32 %v5371, 7
        %v5373 = vsub.s32 %v5370, %v5372
        %v5374 = vrot.slane %v5366, %v5373
        %v5376 = vunpack.c.l.s4 1934713408
        %v5377 = vunpack.c.0.s8 %v5376
        %v5378 = vlaneseq
        %v5379 = vshrl.u32 %v5378, 7
        %v5380 = vsub.s32 %v5377, %v5379
        %v5381 = vrot.slane %v5367, %v5380
        %v5382 = vcombine.low %v5326, %v5342
        %v5383 = vcombine.high %v5326, %v5342
        %v5385 = vunpack.c.l.s4 1934713408
        %v5386 = vunpack.c.0.s8 %v5385
        %v5387 = vlaneseq
        %v5388 = vshrl.u32 %v5387, 7
        %v5389 = vsub.s32 %v5386, %v5388
        %v5390 = vrot.slane %v5382, %v5389
        %v5392 = vunpack.c.l.s4 1934713408
        %v5393 = vunpack.c.0.s8 %v5392
        %v5394 = vlaneseq
        %v5395 = vshrl.u32 %v5394, 7
        %v5396 = vsub.s32 %v5393, %v5395
        %v5397 = vrot.slane %v5383, %v5396
        %v5398 = vcombine.low %v5333, %v5349
        %v5399 = vcombine.high %v5333, %v5349
        %v5401 = vunpack.c.l.s4 1934713408
        %v5402 = vunpack.c.0.s8 %v5401
        %v5403 = vlaneseq
        %v5404 = vshrl.u32 %v5403, 7
        %v5405 = vsub.s32 %v5402, %v5404
        %v5406 = vrot.slane %v5398, %v5405
        %v5408 = vunpack.c.l.s4 1934713408
        %v5409 = vunpack.c.0.s8 %v5408
        %v5410 = vlaneseq
        %v5411 = vshrl.u32 %v5410, 7
        %v5412 = vsub.s32 %v5409, %v5411
        %v5413 = vrot.slane %v5399, %v5412
        %v5414 = vcombine.low %v5358, %v5390
        %v5415 = vcombine.high %v5358, %v5390
        %v5416 = vcombine.low %v5365, %v5397
        %v5417 = vcombine.high %v5365, %v5397
        %v5418 = vcombine.low %v5374, %v5406
        %v5419 = vcombine.high %v5374, %v5406
        %v5420 = vcombine.low %v5381, %v5413
        %v5421 = vcombine.high %v5381, %v5413
        %v5422 = vcombine.low %v5262, %v5264
        %v5423 = vcombine.high %v5262, %v5264
        %v5425 = vunpack.c.l.s4 1983009808
        %v5426 = vunpack.c.0.s8 %v5425
        %v5427 = vlaneseq
        %v5428 = vshrl.u32 %v5427, 7
        %v5429 = vsub.s32 %v5426, %v5428
        %v5430 = vrot.slane %v5422, %v5429
        %v5432 = vunpack.c.l.s4 1983009808
        %v5433 = vunpack.c.0.s8 %v5432
        %v5434 = vlaneseq
        %v5435 = vshrl.u32 %v5434, 7
        %v5436 = vsub.s32 %v5433, %v5435
        %v5437 = vrot.slane %v5423, %v5436
        %v5438 = vcombine.low %v5263, %v5265
        %v5439 = vcombine.high %v5263, %v5265
        %v5441 = vunpack.c.l.s4 1983009808
        %v5442 = vunpack.c.0.s8 %v5441
        %v5443 = vlaneseq
        %v5444 = vshrl.u32 %v5443, 7
        %v5445 = vsub.s32 %v5442, %v5444
        %v5446 = vrot.slane %v5438, %v5445
        %v5448 = vunpack.c.l.s4 1983009808
        %v5449 = vunpack.c.0.s8 %v5448
        %v5450 = vlaneseq
        %v5451 = vshrl.u32 %v5450, 7
        %v5452 = vsub.s32 %v5449, %v5451
        %v5453 = vrot.slane %v5439, %v5452
        %v5454 = vcombine.low %v5266, %v5268
        %v5455 = vcombine.high %v5266, %v5268
        %v5457 = vunpack.c.l.s4 1983009808
        %v5458 = vunpack.c.0.s8 %v5457
        %v5459 = vlaneseq
        %v5460 = vshrl.u32 %v5459, 7
        %v5461 = vsub.s32 %v5458, %v5460
        %v5462 = vrot.slane %v5454, %v5461
        %v5464 = vunpack.c.l.s4 1983009808
        %v5465 = vunpack.c.0.s8 %v5464
        %v5466 = vlaneseq
        %v5467 = vshrl.u32 %v5466, 7
        %v5468 = vsub.s32 %v5465, %v5467
        %v5469 = vrot.slane %v5455, %v5468
        %v5470 = vcombine.low %v5267, %v5269
        %v5471 = vcombine.high %v5267, %v5269
        %v5473 = vunpack.c.l.s4 1983009808
        %v5474 = vunpack.c.0.s8 %v5473
        %v5475 = vlaneseq
        %v5476 = vshrl.u32 %v5475, 7
        %v5477 = vsub.s32 %v5474, %v5476
        %v5478 = vrot.slane %v5470, %v5477
        %v5480 = vunpack.c.l.s4 1983009808
        %v5481 = vunpack.c.0.s8 %v5480
        %v5482 = vlaneseq
        %v5483 = vshrl.u32 %v5482, 7
        %v5484 = vsub.s32 %v5481, %v5483
        %v5485 = vrot.slane %v5471, %v5484
        %v5486 = vcombine.low %v5430, %v5446
        %v5487 = vcombine.high %v5430, %v5446
        %v5489 = vunpack.c.l.s4 1934713408
        %v5490 = vunpack.c.0.s8 %v5489
        %v5491 = vlaneseq
        %v5492 = vshrl.u32 %v5491, 7
        %v5493 = vsub.s32 %v5490, %v5492
        %v5494 = vrot.slane %v5486, %v5493
        %v5496 = vunpack.c.l.s4 1934713408
        %v5497 = vunpack.c.0.s8 %v5496
        %v5498 = vlaneseq
        %v5499 = vshrl.u32 %v5498, 7
        %v5500 = vsub.s32 %v5497, %v5499
        %v5501 = vrot.slane %v5487, %v5500
        %v5502 = vcombine.low %v5437, %v5453
        %v5503 = vcombine.high %v5437, %v5453
        %v5505 = vunpack.c.l.s4 1934713408
        %v5506 = vunpack.c.0.s8 %v5505
        %v5507 = vlaneseq
        %v5508 = vshrl.u32 %v5507, 7
        %v5509 = vsub.s32 %v5506, %v5508
        %v5510 = vrot.slane %v5502, %v5509
        %v5512 = vunpack.c.l.s4 1934713408
        %v5513 = vunpack.c.0.s8 %v5512
        %v5514 = vlaneseq
        %v5515 = vshrl.u32 %v5514, 7
        %v5516 = vsub.s32 %v5513, %v5515
        %v5517 = vrot.slane %v5503, %v5516
        %v5518 = vcombine.low %v5462, %v5478
        %v5519 = vcombine.high %v5462, %v5478
        %v5521 = vunpack.c.l.s4 1934713408
        %v5522 = vunpack.c.0.s8 %v5521
        %v5523 = vlaneseq
        %v5524 = vshrl.u32 %v5523, 7
        %v5525 = vsub.s32 %v5522, %v5524
        %v5526 = vrot.slane %v5518, %v5525
        %v5528 = vunpack.c.l.s4 1934713408
        %v5529 = vunpack.c.0.s8 %v5528
        %v5530 = vlaneseq
        %v5531 = vshrl.u32 %v5530, 7
        %v5532 = vsub.s32 %v5529, %v5531
        %v5533 = vrot.slane %v5519, %v5532
        %v5534 = vcombine.low %v5469, %v5485
        %v5535 = vcombine.high %v5469, %v5485
        %v5537 = vunpack.c.l.s4 1934713408
        %v5538 = vunpack.c.0.s8 %v5537
        %v5539 = vlaneseq
        %v5540 = vshrl.u32 %v5539, 7
        %v5541 = vsub.s32 %v5538, %v5540
        %v5542 = vrot.slane %v5534, %v5541
        %v5544 = vunpack.c.l.s4 1934713408
        %v5545 = vunpack.c.0.s8 %v5544
        %v5546 = vlaneseq
        %v5547 = vshrl.u32 %v5546, 7
        %v5548 = vsub.s32 %v5545, %v5547
        %v5549 = vrot.slane %v5535, %v5548
        %v5550 = vcombine.low %v5494, %v5526
        %v5551 = vcombine.high %v5494, %v5526
        %v5552 = vcombine.low %v5501, %v5533
        %v5553 = vcombine.high %v5501, %v5533
        %v5554 = vcombine.low %v5510, %v5542
        %v5555 = vcombine.high %v5510, %v5542
        %v5556 = vcombine.low %v5517, %v5549
        %v5557 = vcombine.high %v5517, %v5549
        %v5558 = vcombine.low %v5270, %v5272
        %v5559 = vcombine.high %v5270, %v5272
        %v5561 = vunpack.c.l.s4 1983009808
        %v5562 = vunpack.c.0.s8 %v5561
        %v5563 = vlaneseq
        %v5564 = vshrl.u32 %v5563, 7
        %v5565 = vsub.s32 %v5562, %v5564
        %v5566 = vrot.slane %v5558, %v5565
        %v5568 = vunpack.c.l.s4 1983009808
        %v5569 = vunpack.c.0.s8 %v5568
        %v5570 = vlaneseq
        %v5571 = vshrl.u32 %v5570, 7
        %v5572 = vsub.s32 %v5569, %v5571
        %v5573 = vrot.slane %v5559, %v5572
        %v5574 = vcombine.low %v5271, %v5273
        %v5575 = vcombine.high %v5271, %v5273
        %v5577 = vunpack.c.l.s4 1983009808
        %v5578 = vunpack.c.0.s8 %v5577
        %v5579 = vlaneseq
        %v5580 = vshrl.u32 %v5579, 7
        %v5581 = vsub.s32 %v5578, %v5580
        %v5582 = vrot.slane %v5574, %v5581
        %v5584 = vunpack.c.l.s4 1983009808
        %v5585 = vunpack.c.0.s8 %v5584
        %v5586 = vlaneseq
        %v5587 = vshrl.u32 %v5586, 7
        %v5588 = vsub.s32 %v5585, %v5587
        %v5589 = vrot.slane %v5575, %v5588
        %v5590 = vcombine.low %v5274, %v5276
        %v5591 = vcombine.high %v5274, %v5276
        %v5593 = vunpack.c.l.s4 1983009808
        %v5594 = vunpack.c.0.s8 %v5593
        %v5595 = vlaneseq
        %v5596 = vshrl.u32 %v5595, 7
        %v5597 = vsub.s32 %v5594, %v5596
        %v5598 = vrot.slane %v5590, %v5597
        %v5600 = vunpack.c.l.s4 1983009808
        %v5601 = vunpack.c.0.s8 %v5600
        %v5602 = vlaneseq
        %v5603 = vshrl.u32 %v5602, 7
        %v5604 = vsub.s32 %v5601, %v5603
        %v5605 = vrot.slane %v5591, %v5604
        %v5606 = vcombine.low %v5275, %v5277
        %v5607 = vcombine.high %v5275, %v5277
        %v5609 = vunpack.c.l.s4 1983009808
        %v5610 = vunpack.c.0.s8 %v5609
        %v5611 = vlaneseq
        %v5612 = vshrl.u32 %v5611, 7
        %v5613 = vsub.s32 %v5610, %v5612
        %v5614 = vrot.slane %v5606, %v5613
        %v5616 = vunpack.c.l.s4 1983009808
        %v5617 = vunpack.c.0.s8 %v5616
        %v5618 = vlaneseq
        %v5619 = vshrl.u32 %v5618, 7
        %v5620 = vsub.s32 %v5617, %v5619
        %v5621 = vrot.slane %v5607, %v5620
        %v5622 = vcombine.low %v5566, %v5582
        %v5623 = vcombine.high %v5566, %v5582
        %v5625 = vunpack.c.l.s4 1934713408
        %v5626 = vunpack.c.0.s8 %v5625
        %v5627 = vlaneseq
        %v5628 = vshrl.u32 %v5627, 7
        %v5629 = vsub.s32 %v5626, %v5628
        %v5630 = vrot.slane %v5622, %v5629
        %v5632 = vunpack.c.l.s4 1934713408
        %v5633 = vunpack.c.0.s8 %v5632
        %v5634 = vlaneseq
        %v5635 = vshrl.u32 %v5634, 7
        %v5636 = vsub.s32 %v5633, %v5635
        %v5637 = vrot.slane %v5623, %v5636
        %v5638 = vcombine.low %v5573, %v5589
        %v5639 = vcombine.high %v5573, %v5589
        %v5641 = vunpack.c.l.s4 1934713408
        %v5642 = vunpack.c.0.s8 %v5641
        %v5643 = vlaneseq
        %v5644 = vshrl.u32 %v5643, 7
        %v5645 = vsub.s32 %v5642, %v5644
        %v5646 = vrot.slane %v5638, %v5645
        %v5648 = vunpack.c.l.s4 1934713408
        %v5649 = vunpack.c.0.s8 %v5648
        %v5650 = vlaneseq
        %v5651 = vshrl.u32 %v5650, 7
        %v5652 = vsub.s32 %v5649, %v5651
        %v5653 = vrot.slane %v5639, %v5652
        %v5654 = vcombine.low %v5598, %v5614
        %v5655 = vcombine.high %v5598, %v5614
        %v5657 = vunpack.c.l.s4 1934713408
        %v5658 = vunpack.c.0.s8 %v5657
        %v5659 = vlaneseq
        %v5660 = vshrl.u32 %v5659, 7
        %v5661 = vsub.s32 %v5658, %v5660
        %v5662 = vrot.slane %v5654, %v5661
        %v5664 = vunpack.c.l.s4 1934713408
        %v5665 = vunpack.c.0.s8 %v5664
        %v5666 = vlaneseq
        %v5667 = vshrl.u32 %v5666, 7
        %v5668 = vsub.s32 %v5665, %v5667
        %v5669 = vrot.slane %v5655, %v5668
        %v5670 = vcombine.low %v5605, %v5621
        %v5671 = vcombine.high %v5605, %v5621
        %v5673 = vunpack.c.l.s4 1934713408
        %v5674 = vunpack.c.0.s8 %v5673
        %v5675 = vlaneseq
        %v5676 = vshrl.u32 %v5675, 7
        %v5677 = vsub.s32 %v5674, %v5676
        %v5678 = vrot.slane %v5670, %v5677
        %v5680 = vunpack.c.l.s4 1934713408
        %v5681 = vunpack.c.0.s8 %v5680
        %v5682 = vlaneseq
        %v5683 = vshrl.u32 %v5682, 7
        %v5684 = vsub.s32 %v5681, %v5683
        %v5685 = vrot.slane %v5671, %v5684
        %v5686 = vcombine.low %v5630, %v5662
        %v5687 = vcombine.high %v5630, %v5662
        %v5688 = vcombine.low %v5637, %v5669
        %v5689 = vcombine.high %v5637, %v5669
        %v5690 = vcombine.low %v5646, %v5678
        %v5691 = vcombine.high %v5646, %v5678
        %v5692 = vcombine.low %v5653, %v5685
        %v5693 = vcombine.high %v5653, %v5685
        %v5694 = vcombine.low %v5278, %v5280
        %v5695 = vcombine.high %v5278, %v5280
        %v5697 = vunpack.c.l.s4 1983009808
        %v5698 = vunpack.c.0.s8 %v5697
        %v5699 = vlaneseq
        %v5700 = vshrl.u32 %v5699, 7
        %v5701 = vsub.s32 %v5698, %v5700
        %v5702 = vrot.slane %v5694, %v5701
        %v5704 = vunpack.c.l.s4 1983009808
        %v5705 = vunpack.c.0.s8 %v5704
        %v5706 = vlaneseq
        %v5707 = vshrl.u32 %v5706, 7
        %v5708 = vsub.s32 %v5705, %v5707
        %v5709 = vrot.slane %v5695, %v5708
        %v5710 = vcombine.low %v5279, %v5281
        %v5711 = vcombine.high %v5279, %v5281
        %v5713 = vunpack.c.l.s4 1983009808
        %v5714 = vunpack.c.0.s8 %v5713
        %v5715 = vlaneseq
        %v5716 = vshrl.u32 %v5715, 7
        %v5717 = vsub.s32 %v5714, %v5716
        %v5718 = vrot.slane %v5710, %v5717
        %v5720 = vunpack.c.l.s4 1983009808
        %v5721 = vunpack.c.0.s8 %v5720
        %v5722 = vlaneseq
        %v5723 = vshrl.u32 %v5722, 7
        %v5724 = vsub.s32 %v5721, %v5723
        %v5725 = vrot.slane %v5711, %v5724
        %v5726 = vcombine.low %v5282, %v5284
        %v5727 = vcombine.high %v5282, %v5284
        %v5729 = vunpack.c.l.s4 1983009808
        %v5730 = vunpack.c.0.s8 %v5729
        %v5731 = vlaneseq
        %v5732 = vshrl.u32 %v5731, 7
        %v5733 = vsub.s32 %v5730, %v5732
        %v5734 = vrot.slane %v5726, %v5733
        %v5736 = vunpack.c.l.s4 1983009808
        %v5737 = vunpack.c.0.s8 %v5736
        %v5738 = vlaneseq
        %v5739 = vshrl.u32 %v5738, 7
        %v5740 = vsub.s32 %v5737, %v5739
        %v5741 = vrot.slane %v5727, %v5740
        %v5742 = vcombine.low %v5283, %v5285
        %v5743 = vcombine.high %v5283, %v5285
        %v5745 = vunpack.c.l.s4 1983009808
        %v5746 = vunpack.c.0.s8 %v5745
        %v5747 = vlaneseq
        %v5748 = vshrl.u32 %v5747, 7
        %v5749 = vsub.s32 %v5746, %v5748
        %v5750 = vrot.slane %v5742, %v5749
        %v5752 = vunpack.c.l.s4 1983009808
        %v5753 = vunpack.c.0.s8 %v5752
        %v5754 = vlaneseq
        %v5755 = vshrl.u32 %v5754, 7
        %v5756 = vsub.s32 %v5753, %v5755
        %v5757 = vrot.slane %v5743, %v5756
        %v5758 = vcombine.low %v5702, %v5718
        %v5759 = vcombine.high %v5702, %v5718
        %v5761 = vunpack.c.l.s4 1934713408
        %v5762 = vunpack.c.0.s8 %v5761
        %v5763 = vlaneseq
        %v5764 = vshrl.u32 %v5763, 7
        %v5765 = vsub.s32 %v5762, %v5764
        %v5766 = vrot.slane %v5758, %v5765
        %v5768 = vunpack.c.l.s4 1934713408
        %v5769 = vunpack.c.0.s8 %v5768
        %v5770 = vlaneseq
        %v5771 = vshrl.u32 %v5770, 7
        %v5772 = vsub.s32 %v5769, %v5771
        %v5773 = vrot.slane %v5759, %v5772
        %v5774 = vcombine.low %v5709, %v5725
        %v5775 = vcombine.high %v5709, %v5725
        %v5777 = vunpack.c.l.s4 1934713408
        %v5778 = vunpack.c.0.s8 %v5777
        %v5779 = vlaneseq
        %v5780 = vshrl.u32 %v5779, 7
        %v5781 = vsub.s32 %v5778, %v5780
        %v5782 = vrot.slane %v5774, %v5781
        %v5784 = vunpack.c.l.s4 1934713408
        %v5785 = vunpack.c.0.s8 %v5784
        %v5786 = vlaneseq
        %v5787 = vshrl.u32 %v5786, 7
        %v5788 = vsub.s32 %v5785, %v5787
        %v5789 = vrot.slane %v5775, %v5788
        %v5790 = vcombine.low %v5734, %v5750
        %v5791 = vcombine.high %v5734, %v5750
        %v5793 = vunpack.c.l.s4 1934713408
        %v5794 = vunpack.c.0.s8 %v5793
        %v5795 = vlaneseq
        %v5796 = vshrl.u32 %v5795, 7
        %v5797 = vsub.s32 %v5794, %v5796
        %v5798 = vrot.slane %v5790, %v5797
        %v5800 = vunpack.c.l.s4 1934713408
        %v5801 = vunpack.c.0.s8 %v5800
        %v5802 = vlaneseq
        %v5803 = vshrl.u32 %v5802, 7
        %v5804 = vsub.s32 %v5801, %v5803
        %v5805 = vrot.slane %v5791, %v5804
        %v5806 = vcombine.low %v5741, %v5757
        %v5807 = vcombine.high %v5741, %v5757
        %v5809 = vunpack.c.l.s4 1934713408
        %v5810 = vunpack.c.0.s8 %v5809
        %v5811 = vlaneseq
        %v5812 = vshrl.u32 %v5811, 7
        %v5813 = vsub.s32 %v5810, %v5812
        %v5814 = vrot.slane %v5806, %v5813
        %v5816 = vunpack.c.l.s4 1934713408
        %v5817 = vunpack.c.0.s8 %v5816
        %v5818 = vlaneseq
        %v5819 = vshrl.u32 %v5818, 7
        %v5820 = vsub.s32 %v5817, %v5819
        %v5821 = vrot.slane %v5807, %v5820
        %v5822 = vcombine.low %v5766, %v5798
        %v5823 = vcombine.high %v5766, %v5798
        %v5824 = vcombine.low %v5773, %v5805
        %v5825 = vcombine.high %v5773, %v5805
        %v5826 = vcombine.low %v5782, %v5814
        %v5827 = vcombine.high %v5782, %v5814
        %v5828 = vcombine.low %v5789, %v5821
        %v5829 = vcombine.high %v5789, %v5821
        %v5830 = vlaneseq
        %v5831 = vand.u32 %v5830, 127
        %vm5832 = vcmp.lt.s32.totalorder %v5831, 21
        %v5833 = vsel %vm5832, 1, 0
        %v5834 = vcvt.s32.f32 %v5833
        %v5835 = vmul.f32 %v5414, %v5834
        %v5836 = vmul.f32 %v5415, %v5834
        %v5837 = vmul.f32 %v5416, %v5834
        %v5838 = vmul.f32 %v5417, %v5834
        %v5839 = vmul.f32 %v5418, %v5834
        %v5840 = vmul.f32 %v5419, %v5834
        %v5841 = vmul.f32 %v5420, %v5834
        %v5842 = vmul.f32 %v5421, %v5834
        %v5843 = vmul.f32 %v5550, %v5834
        %v5844 = vmul.f32 %v5551, %v5834
        %v5845 = vmul.f32 %v5552, %v5834
        %v5846 = vmul.f32 %v5553, %v5834
        %v5847 = vmul.f32 %v5554, %v5834
        %v5848 = vmul.f32 %v5555, %v5834
        %v5849 = vmul.f32 %v5556, %v5834
        %v5850 = vmul.f32 %v5557, %v5834
        %v5851 = vmul.f32 %v5686, %v5834
        %v5852 = vmul.f32 %v5687, %v5834
        %v5853 = vmul.f32 %v5688, %v5834
        %v5854 = vmul.f32 %v5689, %v5834
        %v5855 = vmul.f32 %v5690, %v5834
        %v5856 = vmul.f32 %v5691, %v5834
        %v5857 = vmul.f32 %v5692, %v5834
        %v5858 = vmul.f32 %v5693, %v5834
        %v5859 = vmul.f32 %v5822, %v5834
        %v5860 = vmul.f32 %v5823, %v5834
        %v5861 = vmul.f32 %v5824, %v5834
        %v5862 = vmul.f32 %v5825, %v5834
        %v5863 = vmul.f32 %v5826, %v5834
        %v5864 = vmul.f32 %v5827, %v5834
        %v5865 = vmul.f32 %v5828, %v5834
        %v5866 = vmul.f32 %v5829, %v5834
        %v5867 = vrot.slane %v5835, 4
        %v5868 = vadd.f32 %v5835, %v5867
        %v5869 = vrot.slane %v5868, 2
        %v5870 = vadd.f32 %v5868, %v5869
        %v5871 = vrot.slane %v5870, 1
        %v5872 = vadd.f32 %v5870, %v5871
        %v5873 = vrot.slane %v5836, 4
        %v5874 = vadd.f32 %v5836, %v5873
        %v5875 = vrot.slane %v5874, 2
        %v5876 = vadd.f32 %v5874, %v5875
        %v5877 = vrot.slane %v5876, 1
        %v5878 = vadd.f32 %v5876, %v5877
        %v5879 = vrot.slane %v5837, 4
        %v5880 = vadd.f32 %v5837, %v5879
        %v5881 = vrot.slane %v5880, 2
        %v5882 = vadd.f32 %v5880, %v5881
        %v5883 = vrot.slane %v5882, 1
        %v5884 = vadd.f32 %v5882, %v5883
        %v5885 = vrot.slane %v5838, 4
        %v5886 = vadd.f32 %v5838, %v5885
        %v5887 = vrot.slane %v5886, 2
        %v5888 = vadd.f32 %v5886, %v5887
        %v5889 = vrot.slane %v5888, 1
        %v5890 = vadd.f32 %v5888, %v5889
        %v5891 = vrot.slane %v5839, 4
        %v5892 = vadd.f32 %v5839, %v5891
        %v5893 = vrot.slane %v5892, 2
        %v5894 = vadd.f32 %v5892, %v5893
        %v5895 = vrot.slane %v5894, 1
        %v5896 = vadd.f32 %v5894, %v5895
        %v5897 = vrot.slane %v5840, 4
        %v5898 = vadd.f32 %v5840, %v5897
        %v5899 = vrot.slane %v5898, 2
        %v5900 = vadd.f32 %v5898, %v5899
        %v5901 = vrot.slane %v5900, 1
        %v5902 = vadd.f32 %v5900, %v5901
        %v5903 = vrot.slane %v5841, 4
        %v5904 = vadd.f32 %v5841, %v5903
        %v5905 = vrot.slane %v5904, 2
        %v5906 = vadd.f32 %v5904, %v5905
        %v5907 = vrot.slane %v5906, 1
        %v5908 = vadd.f32 %v5906, %v5907
        %v5909 = vrot.slane %v5842, 4
        %v5910 = vadd.f32 %v5842, %v5909
        %v5911 = vrot.slane %v5910, 2
        %v5912 = vadd.f32 %v5910, %v5911
        %v5913 = vrot.slane %v5912, 1
        %v5914 = vadd.f32 %v5912, %v5913
        %v5915 = vrot.slane %v5843, 4
        %v5916 = vadd.f32 %v5843, %v5915
        %v5917 = vrot.slane %v5916, 2
        %v5918 = vadd.f32 %v5916, %v5917
        %v5919 = vrot.slane %v5918, 1
        %v5920 = vadd.f32 %v5918, %v5919
        %v5921 = vrot.slane %v5844, 4
        %v5922 = vadd.f32 %v5844, %v5921
        %v5923 = vrot.slane %v5922, 2
        %v5924 = vadd.f32 %v5922, %v5923
        %v5925 = vrot.slane %v5924, 1
        %v5926 = vadd.f32 %v5924, %v5925
        %v5927 = vrot.slane %v5845, 4
        %v5928 = vadd.f32 %v5845, %v5927
        %v5929 = vrot.slane %v5928, 2
        %v5930 = vadd.f32 %v5928, %v5929
        %v5931 = vrot.slane %v5930, 1
        %v5932 = vadd.f32 %v5930, %v5931
        %v5933 = vrot.slane %v5846, 4
        %v5934 = vadd.f32 %v5846, %v5933
        %v5935 = vrot.slane %v5934, 2
        %v5936 = vadd.f32 %v5934, %v5935
        %v5937 = vrot.slane %v5936, 1
        %v5938 = vadd.f32 %v5936, %v5937
        %v5939 = vrot.slane %v5847, 4
        %v5940 = vadd.f32 %v5847, %v5939
        %v5941 = vrot.slane %v5940, 2
        %v5942 = vadd.f32 %v5940, %v5941
        %v5943 = vrot.slane %v5942, 1
        %v5944 = vadd.f32 %v5942, %v5943
        %v5945 = vrot.slane %v5848, 4
        %v5946 = vadd.f32 %v5848, %v5945
        %v5947 = vrot.slane %v5946, 2
        %v5948 = vadd.f32 %v5946, %v5947
        %v5949 = vrot.slane %v5948, 1
        %v5950 = vadd.f32 %v5948, %v5949
        %v5951 = vrot.slane %v5849, 4
        %v5952 = vadd.f32 %v5849, %v5951
        %v5953 = vrot.slane %v5952, 2
        %v5954 = vadd.f32 %v5952, %v5953
        %v5955 = vrot.slane %v5954, 1
        %v5956 = vadd.f32 %v5954, %v5955
        %v5957 = vrot.slane %v5850, 4
        %v5958 = vadd.f32 %v5850, %v5957
        %v5959 = vrot.slane %v5958, 2
        %v5960 = vadd.f32 %v5958, %v5959
        %v5961 = vrot.slane %v5960, 1
        %v5962 = vadd.f32 %v5960, %v5961
        %v5963 = vrot.slane %v5851, 4
        %v5964 = vadd.f32 %v5851, %v5963
        %v5965 = vrot.slane %v5964, 2
        %v5966 = vadd.f32 %v5964, %v5965
        %v5967 = vrot.slane %v5966, 1
        %v5968 = vadd.f32 %v5966, %v5967
        %v5969 = vrot.slane %v5852, 4
        %v5970 = vadd.f32 %v5852, %v5969
        %v5971 = vrot.slane %v5970, 2
        %v5972 = vadd.f32 %v5970, %v5971
        %v5973 = vrot.slane %v5972, 1
        %v5974 = vadd.f32 %v5972, %v5973
        %v5975 = vrot.slane %v5853, 4
        %v5976 = vadd.f32 %v5853, %v5975
        %v5977 = vrot.slane %v5976, 2
        %v5978 = vadd.f32 %v5976, %v5977
        %v5979 = vrot.slane %v5978, 1
        %v5980 = vadd.f32 %v5978, %v5979
        %v5981 = vrot.slane %v5854, 4
        %v5982 = vadd.f32 %v5854, %v5981
        %v5983 = vrot.slane %v5982, 2
        %v5984 = vadd.f32 %v5982, %v5983
        %v5985 = vrot.slane %v5984, 1
        %v5986 = vadd.f32 %v5984, %v5985
        %v5987 = vrot.slane %v5855, 4
        %v5988 = vadd.f32 %v5855, %v5987
        %v5989 = vrot.slane %v5988, 2
        %v5990 = vadd.f32 %v5988, %v5989
        %v5991 = vrot.slane %v5990, 1
        %v5992 = vadd.f32 %v5990, %v5991
        %v5993 = vrot.slane %v5856, 4
        %v5994 = vadd.f32 %v5856, %v5993
        %v5995 = vrot.slane %v5994, 2
        %v5996 = vadd.f32 %v5994, %v5995
        %v5997 = vrot.slane %v5996, 1
        %v5998 = vadd.f32 %v5996, %v5997
        %v5999 = vrot.slane %v5857, 4
        %v6000 = vadd.f32 %v5857, %v5999
        %v6001 = vrot.slane %v6000, 2
        %v6002 = vadd.f32 %v6000, %v6001
        %v6003 = vrot.slane %v6002, 1
        %v6004 = vadd.f32 %v6002, %v6003
        %v6005 = vrot.slane %v5858, 4
        %v6006 = vadd.f32 %v5858, %v6005
        %v6007 = vrot.slane %v6006, 2
        %v6008 = vadd.f32 %v6006, %v6007
        %v6009 = vrot.slane %v6008, 1
        %v6010 = vadd.f32 %v6008, %v6009
        %v6011 = vrot.slane %v5859, 4
        %v6012 = vadd.f32 %v5859, %v6011
        %v6013 = vrot.slane %v6012, 2
        %v6014 = vadd.f32 %v6012, %v6013
        %v6015 = vrot.slane %v6014, 1
        %v6016 = vadd.f32 %v6014, %v6015
        %v6017 = vrot.slane %v5860, 4
        %v6018 = vadd.f32 %v5860, %v6017
        %v6019 = vrot.slane %v6018, 2
        %v6020 = vadd.f32 %v6018, %v6019
        %v6021 = vrot.slane %v6020, 1
        %v6022 = vadd.f32 %v6020, %v6021
        %v6023 = vrot.slane %v5861, 4
        %v6024 = vadd.f32 %v5861, %v6023
        %v6025 = vrot.slane %v6024, 2
        %v6026 = vadd.f32 %v6024, %v6025
        %v6027 = vrot.slane %v6026, 1
        %v6028 = vadd.f32 %v6026, %v6027
        %v6029 = vrot.slane %v5862, 4
        %v6030 = vadd.f32 %v5862, %v6029
        %v6031 = vrot.slane %v6030, 2
        %v6032 = vadd.f32 %v6030, %v6031
        %v6033 = vrot.slane %v6032, 1
        %v6034 = vadd.f32 %v6032, %v6033
        %v6035 = vrot.slane %v5863, 4
        %v6036 = vadd.f32 %v5863, %v6035
        %v6037 = vrot.slane %v6036, 2
        %v6038 = vadd.f32 %v6036, %v6037
        %v6039 = vrot.slane %v6038, 1
        %v6040 = vadd.f32 %v6038, %v6039
        %v6041 = vrot.slane %v5864, 4
        %v6042 = vadd.f32 %v5864, %v6041
        %v6043 = vrot.slane %v6042, 2
        %v6044 = vadd.f32 %v6042, %v6043
        %v6045 = vrot.slane %v6044, 1
        %v6046 = vadd.f32 %v6044, %v6045
        %v6047 = vrot.slane %v5865, 4
        %v6048 = vadd.f32 %v5865, %v6047
        %v6049 = vrot.slane %v6048, 2
        %v6050 = vadd.f32 %v6048, %v6049
        %v6051 = vrot.slane %v6050, 1
        %v6052 = vadd.f32 %v6050, %v6051
        %v6053 = vrot.slane %v5866, 4
        %v6054 = vadd.f32 %v5866, %v6053
        %v6055 = vrot.slane %v6054, 2
        %v6056 = vadd.f32 %v6054, %v6055
        %v6057 = vrot.slane %v6056, 1
        %v6058 = vadd.f32 %v6056, %v6057
        %v6059 = vrcp.pop 8.0
        %v6060 = vmul.f32 %v5872, %v6059
        %v6061 = vmul.f32 %v5878, %v6059
        %v6062 = vmul.f32 %v5884, %v6059
        %v6063 = vmul.f32 %v5890, %v6059
        %v6064 = vmul.f32 %v5896, %v6059
        %v6065 = vmul.f32 %v5902, %v6059
        %v6066 = vmul.f32 %v5908, %v6059
        %v6067 = vmul.f32 %v5914, %v6059
        %v6068 = vmul.f32 %v5920, %v6059
        %v6069 = vmul.f32 %v5926, %v6059
        %v6070 = vmul.f32 %v5932, %v6059
        %v6071 = vmul.f32 %v5938, %v6059
        %v6072 = vmul.f32 %v5944, %v6059
        %v6073 = vmul.f32 %v5950, %v6059
        %v6074 = vmul.f32 %v5956, %v6059
        %v6075 = vmul.f32 %v5962, %v6059
        %v6076 = vmul.f32 %v5968, %v6059
        %v6077 = vmul.f32 %v5974, %v6059
        %v6078 = vmul.f32 %v5980, %v6059
        %v6079 = vmul.f32 %v5986, %v6059
        %v6080 = vmul.f32 %v5992, %v6059
        %v6081 = vmul.f32 %v5998, %v6059
        %v6082 = vmul.f32 %v6004, %v6059
        %v6083 = vmul.f32 %v6010, %v6059
        %v6084 = vmul.f32 %v6016, %v6059
        %v6085 = vmul.f32 %v6022, %v6059
        %v6086 = vmul.f32 %v6028, %v6059
        %v6087 = vmul.f32 %v6034, %v6059
        %v6088 = vmul.f32 %v6040, %v6059
        %v6089 = vmul.f32 %v6046, %v6059
        %v6090 = vmul.f32 %v6052, %v6059
        %v6091 = vmul.f32 %v6058, %v6059
        %v6092 = vld [vmem:[%s9] sm:$0xff]
        %v6093 = vld [vmem:[%s9 + $0x8] sm:$0xff]
        %v6094 = vld [vmem:[%s9 + $0x10] sm:$0x1f]
        %vm6127 = vcmask 1041409
        %v6128 = vsel %vm6127, %v6061, %v6060
        %vm6129 = vcmask 1042434
        %v6130 = vsel %vm6129, %v6062, %v6128
        %vm6131 = vcmask 1043459
        %v6132 = vsel %vm6131, %v6063, %v6130
        %vm6133 = vcmask 1044484
        %v6134 = vsel %vm6133, %v6064, %v6132
        %vm6135 = vcmask 1045509
        %v6136 = vsel %vm6135, %v6065, %v6134
        %vm6137 = vcmask 1046534
        %v6138 = vsel %vm6137, %v6066, %v6136
        %vm6139 = vcmask 1047559
        %v6140 = vsel %vm6139, %v6067, %v6138
        %v6141 = vsel %vm6127, %v6069, %v6068
        %v6142 = vsel %vm6129, %v6070, %v6141
        %v6143 = vsel %vm6131, %v6071, %v6142
        %v6144 = vsel %vm6133, %v6072, %v6143
        %v6145 = vsel %vm6135, %v6073, %v6144
        %v6146 = vsel %vm6137, %v6074, %v6145
        %v6147 = vsel %vm6139, %v6075, %v6146
        %v6148 = vsel %vm6127, %v6077, %v6076
        %v6149 = vsel %vm6129, %v6078, %v6148
        %v6150 = vsel %vm6131, %v6079, %v6149
        %v6151 = vsel %vm6133, %v6080, %v6150
        %v6152 = vsel %vm6135, %v6081, %v6151
        %v6153 = vsel %vm6137, %v6082, %v6152
        %v6154 = vsel %vm6139, %v6083, %v6153
        %v6155 = vsel %vm6127, %v6085, %v6084
        %v6156 = vsel %vm6129, %v6086, %v6155
        %v6157 = vsel %vm6131, %v6087, %v6156
        %v6158 = vsel %vm6133, %v6088, %v6157
        %v6159 = vsel %vm6135, %v6089, %v6158
        %v6160 = vsel %vm6137, %v6090, %v6159
        %v6161 = vsel %vm6139, %v6091, %v6160
        %vm6166 = vcmask 261120
        %v6168 = vsel %vm6166, %v6092, 0
        %v6171 = vsel %vm6166, %v6093, 0
        %v6174 = vsel %vm6166, %v6094, 0
        %6176 = vmatprep.subr.mxu0 0.0
        %6177 = vmatpush1.msra.mxu0 %v6140
        %6178 = vmatprep.subr.mxu0 0.0
        %6179 = vmatpush1.msra.mxu0 %v6147
        %6180 = vmatprep.subr.mxu0 0.0
        %6181 = vmatpush1.msra.mxu0 %v6154
        %6182 = vmatprep.subr.mxu0 0.0
        %6183 = vmatpush1.msra.mxu0 %v6161
        %6184 = vmatprep.subr.mxu0 0.0
        %6185 = vmatpush1.msra.mxu0 0.0
        %6186 = vmatprep.subr.mxu0 0.0
        %6187 = vmatpush1.msra.mxu0 0.0
        %6188 = vmatprep.subr.mxu0 0.0
        %6189 = vmatpush1.msra.mxu0 0.0
        %6190 = vmatprep.subr.mxu0 0.0
        %6191 = vmatpush1.msra.mxu0 0.0
        %6192 = vmatprep.subr.mxu0 0.0
        %6193 = vmatpush1.msra.mxu0 0.0
        %6194 = vmatprep.subr.mxu0 0.0
        %6195 = vmatpush1.msra.mxu0 0.0
        %6196 = vmatprep.subr.mxu0 0.0
        %6197 = vmatpush1.msra.mxu0 0.0
        %6198 = vmatprep.subr.mxu0 0.0
        %6199 = vmatpush1.msra.mxu0 0.0
        %6200 = vmatprep.subr.mxu0 0.0
        %6201 = vmatpush1.msra.mxu0 0.0
        %6202 = vmatprep.subr.mxu0 0.0
        %6203 = vmatpush1.msra.mxu0 0.0
        %6204 = vmatprep.subr.mxu0 0.0
        %6205 = vmatpush1.msra.mxu0 0.0
        %6206 = vmatprep.subr.mxu0 0.0
        %6207 = vmatpush1.msra.mxu0 0.0
        %6208 = vmatprep.subr.mxu0 0.0
        %6209 = vmatpush1.msra.mxu0 0.0
        %6210 = vmatprep.subr.mxu0 0.0
        %6211 = vmatpush1.msra.mxu0 0.0
        %6212 = vmatprep.subr.mxu0 0.0
        %6213 = vmatpush1.msra.mxu0 0.0
        %6214 = vmatprep.subr.mxu0 0.0
        %6215 = vmatpush1.msra.mxu0 0.0
        %6216 = vmatprep.subr.mxu0 0.0
        %6217 = vmatpush1.msra.mxu0 0.0
        %6218 = vmatprep.subr.mxu0 0.0
        %6219 = vmatpush1.msra.mxu0 0.0
        %6220 = vmatprep.subr.mxu0 0.0
        %6221 = vmatpush1.msra.mxu0 0.0
        %6222 = vmatprep.subr.mxu0 0.0
        %6223 = vmatpush1.msra.mxu0 0.0
        %6224 = vmatprep.subr.mxu0 0.0
        %6225 = vmatpush1.msra.mxu0 0.0
        %6226 = vmatprep.subr.mxu0 0.0
        %6227 = vmatpush1.msra.mxu0 0.0
        %6228 = vmatprep.subr.mxu0 0.0
        %6229 = vmatpush1.msra.mxu0 0.0
        %6230 = vmatprep.subr.mxu0 0.0
        %6231 = vmatpush1.msra.mxu0 0.0
        %6232 = vmatprep.subr.mxu0 0.0
        %6233 = vmatpush1.msra.mxu0 0.0
        %6234 = vmatprep.subr.mxu0 0.0
        %6235 = vmatpush1.msra.mxu0 0.0
        %6236 = vmatprep.subr.mxu0 0.0
        %6237 = vmatpush1.msra.mxu0 0.0
        %6238 = vmatprep.subr.mxu0 0.0
        %6239 = vmatpush1.msra.mxu0 0.0
        %6240 = vmatprep.mubr.f32.mxu0 0.0
        %6241 = vmatmul.mubr.f32.gmra.mrb[0].mxu0 %v6168
        %v6242 = vpop.f32.mrb[0].mxu0
        %v6243 = vadd.f32 0.0, %v6242
        %v6244 = vpop.f32.mrb[0].mxu0
        %6245 = vmatprep.mubr.f32.mxu0 0.0
        %6246 = vmatmul.mubr.f32.gmra.mrb[0].mxu0 %v6171
        %v6247 = vpop.f32.mrb[0].mxu0
        %v6248 = vadd.f32 0.0, %v6247
        %v6249 = vpop.f32.mrb[0].mxu0
        %6250 = vmatprep.mubr.f32.mxu0 0.0
        %6251 = vmatmul.mubr.f32.gmra.mrb[0].mxu0 %v6174
        %v6252 = vpop.f32.mrb[0].mxu0
        %v6253 = vadd.f32 0.0, %v6252
        %v6254 = vpop.f32.mrb[0].mxu0
        %6255 = vdwg.mxu0
        %6259 = vrot.lane.b32.xlu0 %v6243, 10
        %v6260 = vpop.permute.xlu0 %6259
        %6261 = vrot.lane.b32.xlu0 %v6248, 10
        %v6262 = vpop.permute.xlu0 %6261
        %6263 = vrot.lane.b32.xlu0 %v6253, 10
        %v6264 = vpop.permute.xlu0 %6263
        %vm6268 = vcmask 80896
        %v6269 = vsel %vm6268, 0.0, %v6260
        %v6270 = vsel %vm6268, 0.0, %v6262
        %v6271 = vsel %vm6268, 0.0, %v6264
        %v6272 = vsel %vm6268, %v6260, 0.0
        %v6273 = vsel %vm6268, %v6262, 0.0
        %v6274 = vsel %vm6268, %v6264, 0.0
        %v6275 = vadd.f32 %v6269, 0.0
        %v6278 = vrot.slane %v6269, 1
        %v6279 = vrot.slane %v6272, 1
        %6280 = vrot.lane.b32.xlu0 %v6278, 127
        %v6281 = vpop.permute.xlu0 %6280
        %6282 = vrot.lane.b32.xlu0 %v6279, 127
        %v6283 = vpop.permute.xlu0 %6282
        %vm6284 = vcmask 1039360
        %v6285 = vsel %vm6284, %v6281, %v6283
        %v6287 = vadd.f32 %v6275, %v6285
        %v6288 = vrot.slane %v6269, 2
        %v6289 = vrot.slane %v6272, 2
        %6290 = vrot.lane.b32.xlu0 %v6288, 126
        %v6291 = vpop.permute.xlu0 %6290
        %6292 = vrot.lane.b32.xlu0 %v6289, 126
        %v6293 = vpop.permute.xlu0 %6292
        %vm6294 = vcmask 1031168
        %v6295 = vsel %vm6294, %v6291, %v6293
        %v6297 = vadd.f32 %v6287, %v6295
        %v6298 = vrot.slane %v6269, 3
        %v6299 = vrot.slane %v6272, 3
        %6300 = vrot.lane.b32.xlu0 %v6298, 125
        %v6301 = vpop.permute.xlu0 %6300
        %6302 = vrot.lane.b32.xlu0 %v6299, 125
        %v6303 = vpop.permute.xlu0 %6302
        %vm6304 = vcmask 1022976
        %v6305 = vsel %vm6304, %v6301, %v6303
        %v6307 = vadd.f32 %v6297, %v6305
        %v6308 = vrot.slane %v6269, 4
        %v6309 = vrot.slane %v6272, 4
        %6310 = vrot.lane.b32.xlu0 %v6308, 124
        %v6311 = vpop.permute.xlu0 %6310
        %6312 = vrot.lane.b32.xlu0 %v6309, 124
        %v6313 = vpop.permute.xlu0 %6312
        %vm6314 = vcmask 1014784
        %v6315 = vsel %vm6314, %v6311, %v6313
        %v6317 = vadd.f32 %v6307, %v6315
        %v6318 = vrot.slane %v6269, 5
        %v6319 = vrot.slane %v6272, 5
        %6320 = vrot.lane.b32.xlu0 %v6318, 123
        %v6321 = vpop.permute.xlu0 %6320
        %6322 = vrot.lane.b32.xlu0 %v6319, 123
        %v6323 = vpop.permute.xlu0 %6322
        %vm6324 = vcmask 1006592
        %v6325 = vsel %vm6324, %v6321, %v6323
        %v6327 = vadd.f32 %v6317, %v6325
        %v6328 = vrot.slane %v6269, 6
        %v6329 = vrot.slane %v6272, 6
        %6330 = vrot.lane.b32.xlu0 %v6328, 122
        %v6331 = vpop.permute.xlu0 %6330
        %6332 = vrot.lane.b32.xlu0 %v6329, 122
        %v6333 = vpop.permute.xlu0 %6332
        %vm6334 = vcmask 998400
        %v6335 = vsel %vm6334, %v6331, %v6333
        %v6337 = vadd.f32 %v6327, %v6335
        %v6338 = vrot.slane %v6269, 7
        %v6339 = vrot.slane %v6272, 7
        %6340 = vrot.lane.b32.xlu0 %v6338, 121
        %v6341 = vpop.permute.xlu0 %6340
        %6342 = vrot.lane.b32.xlu0 %v6339, 121
        %v6343 = vpop.permute.xlu0 %6342
        %vm6344 = vcmask 990208
        %v6345 = vsel %vm6344, %v6341, %v6343
        %v6347 = vadd.f32 %v6337, %v6345
        %6350 = vrot.lane.b32.xlu0 %v6270, 120
        %v6351 = vpop.permute.xlu0 %6350
        %6352 = vrot.lane.b32.xlu0 %v6273, 120
        %v6353 = vpop.permute.xlu0 %6352
        %vm6354 = vcmask 982016
        %v6355 = vsel %vm6354, %v6351, %v6353
        %v6357 = vadd.f32 %v6347, %v6355
        %v6358 = vrot.slane %v6270, 1
        %v6359 = vrot.slane %v6273, 1
        %6360 = vrot.lane.b32.xlu0 %v6358, 119
        %v6361 = vpop.permute.xlu0 %6360
        %6362 = vrot.lane.b32.xlu0 %v6359, 119
        %v6363 = vpop.permute.xlu0 %6362
        %vm6364 = vcmask 973824
        %v6365 = vsel %vm6364, %v6361, %v6363
        %v6367 = vadd.f32 %v6357, %v6365
        %v6368 = vrot.slane %v6270, 2
        %v6369 = vrot.slane %v6273, 2
        %6370 = vrot.lane.b32.xlu0 %v6368, 118
        %v6371 = vpop.permute.xlu0 %6370
        %6372 = vrot.lane.b32.xlu0 %v6369, 118
        %v6373 = vpop.permute.xlu0 %6372
        %vm6374 = vcmask 965632
        %v6375 = vsel %vm6374, %v6371, %v6373
        %v6377 = vadd.f32 %v6367, %v6375
        %v6378 = vrot.slane %v6270, 3
        %v6379 = vrot.slane %v6273, 3
        %6380 = vrot.lane.b32.xlu0 %v6378, 117
        %v6381 = vpop.permute.xlu0 %6380
        %6382 = vrot.lane.b32.xlu0 %v6379, 117
        %v6383 = vpop.permute.xlu0 %6382
        %vm6384 = vcmask 957440
        %v6385 = vsel %vm6384, %v6381, %v6383
        %v6387 = vadd.f32 %v6377, %v6385
        %v6388 = vrot.slane %v6270, 4
        %v6389 = vrot.slane %v6273, 4
        %6390 = vrot.lane.b32.xlu0 %v6388, 116
        %v6391 = vpop.permute.xlu0 %6390
        %6392 = vrot.lane.b32.xlu0 %v6389, 116
        %v6393 = vpop.permute.xlu0 %6392
        %vm6394 = vcmask 949248
        %v6395 = vsel %vm6394, %v6391, %v6393
        %v6397 = vadd.f32 %v6387, %v6395
        %v6398 = vrot.slane %v6270, 5
        %v6399 = vrot.slane %v6273, 5
        %6400 = vrot.lane.b32.xlu0 %v6398, 115
        %v6401 = vpop.permute.xlu0 %6400
        %6402 = vrot.lane.b32.xlu0 %v6399, 115
        %v6403 = vpop.permute.xlu0 %6402
        %vm6404 = vcmask 941056
        %v6405 = vsel %vm6404, %v6401, %v6403
        %v6407 = vadd.f32 %v6397, %v6405
        %v6408 = vrot.slane %v6270, 6
        %v6409 = vrot.slane %v6273, 6
        %6410 = vrot.lane.b32.xlu0 %v6408, 114
        %v6411 = vpop.permute.xlu0 %6410
        %6412 = vrot.lane.b32.xlu0 %v6409, 114
        %v6413 = vpop.permute.xlu0 %6412
        %vm6414 = vcmask 932864
        %v6415 = vsel %vm6414, %v6411, %v6413
        %v6417 = vadd.f32 %v6407, %v6415
        %v6418 = vrot.slane %v6270, 7
        %v6419 = vrot.slane %v6273, 7
        %6420 = vrot.lane.b32.xlu0 %v6418, 113
        %v6421 = vpop.permute.xlu0 %6420
        %6422 = vrot.lane.b32.xlu0 %v6419, 113
        %v6423 = vpop.permute.xlu0 %6422
        %vm6424 = vcmask 924672
        %v6425 = vsel %vm6424, %v6421, %v6423
        %v6427 = vadd.f32 %v6417, %v6425
        %6430 = vrot.lane.b32.xlu0 %v6271, 112
        %v6431 = vpop.permute.xlu0 %6430
        %6432 = vrot.lane.b32.xlu0 %v6274, 112
        %v6433 = vpop.permute.xlu0 %6432
        %vm6434 = vcmask 916480
        %v6435 = vsel %vm6434, %v6431, %v6433
        %v6437 = vadd.f32 %v6427, %v6435
        %v6438 = vrot.slane %v6271, 1
        %v6439 = vrot.slane %v6274, 1
        %6440 = vrot.lane.b32.xlu0 %v6438, 111
        %v6441 = vpop.permute.xlu0 %6440
        %6442 = vrot.lane.b32.xlu0 %v6439, 111
        %v6443 = vpop.permute.xlu0 %6442
        %vm6444 = vcmask 908288
        %v6445 = vsel %vm6444, %v6441, %v6443
        %v6447 = vadd.f32 %v6437, %v6445
        %v6448 = vrot.slane %v6271, 2
        %v6449 = vrot.slane %v6274, 2
        %6450 = vrot.lane.b32.xlu0 %v6448, 110
        %v6451 = vpop.permute.xlu0 %6450
        %6452 = vrot.lane.b32.xlu0 %v6449, 110
        %v6453 = vpop.permute.xlu0 %6452
        %vm6454 = vcmask 900096
        %v6455 = vsel %vm6454, %v6451, %v6453
        %v6457 = vadd.f32 %v6447, %v6455
        %v6458 = vrot.slane %v6271, 3
        %v6459 = vrot.slane %v6274, 3
        %6460 = vrot.lane.b32.xlu0 %v6458, 109
        %v6461 = vpop.permute.xlu0 %6460
        %6462 = vrot.lane.b32.xlu0 %v6459, 109
        %v6463 = vpop.permute.xlu0 %6462
        %vm6464 = vcmask 891904
        %v6465 = vsel %vm6464, %v6461, %v6463
        %v6467 = vadd.f32 %v6457, %v6465
        %v6468 = vrot.slane %v6271, 4
        %v6469 = vrot.slane %v6274, 4
        %6470 = vrot.lane.b32.xlu0 %v6468, 108
        %v6471 = vpop.permute.xlu0 %6470
        %6472 = vrot.lane.b32.xlu0 %v6469, 108
        %v6473 = vpop.permute.xlu0 %6472
        %vm6474 = vcmask 883712
        %v6475 = vsel %vm6474, %v6471, %v6473
        %v6477 = vadd.f32 %v6467, %v6475
        %v6478 = vstv %s475
        %v6479 = vadd.f32 %v6477, %v6478
        %v6480 = vxor.u32 %v6479, 2147483648
        %v6481 = vmul.f32 %v6480, 1.442695
        %v6482 = vpow.pop %v6481
        %v6483 = vadd.f32 %v6482, 1.0
        %v6484 = vrcp.pop %v6483
        %v6485 = vmul.f32 1.0, %v6484
        %v6486 = vlaneseq
        %v6487 = vshrl.u32 %v6486, 7
        %v6488 = vsub.s32 0, %v6487
        %v6489 = vrot.slane %v6485, %v6488
        %v6490 = vmul.f32 %v5835, %v6489
        %v6491 = vmul.f32 %v5836, %v6489
        %v6492 = vmul.f32 %v5837, %v6489
        %v6493 = vmul.f32 %v5838, %v6489
        %v6494 = vmul.f32 %v5839, %v6489
        %v6495 = vmul.f32 %v5840, %v6489
        %v6496 = vmul.f32 %v5841, %v6489
        %v6497 = vmul.f32 %v5842, %v6489
        %v6498 = vmul.f32 %v5843, %v6489
        %v6499 = vmul.f32 %v5844, %v6489
        %v6500 = vmul.f32 %v5845, %v6489
        %v6501 = vmul.f32 %v5846, %v6489
        %v6502 = vmul.f32 %v5847, %v6489
        %v6503 = vmul.f32 %v5848, %v6489
        %v6504 = vmul.f32 %v5849, %v6489
        %v6505 = vmul.f32 %v5850, %v6489
        %v6506 = vmul.f32 %v5851, %v6489
        %v6507 = vmul.f32 %v5852, %v6489
        %v6508 = vmul.f32 %v5853, %v6489
        %v6509 = vmul.f32 %v5854, %v6489
        %v6510 = vmul.f32 %v5855, %v6489
        %v6511 = vmul.f32 %v5856, %v6489
        %v6512 = vmul.f32 %v5857, %v6489
        %v6513 = vmul.f32 %v5858, %v6489
        %v6514 = vmul.f32 %v5859, %v6489
        %v6515 = vmul.f32 %v5860, %v6489
        %v6516 = vmul.f32 %v5861, %v6489
        %v6517 = vmul.f32 %v5862, %v6489
        %v6518 = vmul.f32 %v5863, %v6489
        %v6519 = vmul.f32 %v5864, %v6489
        %v6520 = vmul.f32 %v5865, %v6489
        %v6521 = vmul.f32 %v5866, %v6489
        %v6522 = vadd.f32 %v6490, %v5835
        %v6523 = vadd.f32 %v6491, %v5836
        %v6524 = vadd.f32 %v6492, %v5837
        %v6525 = vadd.f32 %v6493, %v5838
        %v6526 = vadd.f32 %v6494, %v5839
        %v6527 = vadd.f32 %v6495, %v5840
        %v6528 = vadd.f32 %v6496, %v5841
        %v6529 = vadd.f32 %v6497, %v5842
        %v6530 = vadd.f32 %v6498, %v5843
        %v6531 = vadd.f32 %v6499, %v5844
        %v6532 = vadd.f32 %v6500, %v5845
        %v6533 = vadd.f32 %v6501, %v5846
        %v6534 = vadd.f32 %v6502, %v5847
        %v6535 = vadd.f32 %v6503, %v5848
        %v6536 = vadd.f32 %v6504, %v5849
        %v6537 = vadd.f32 %v6505, %v5850
        %v6538 = vadd.f32 %v6506, %v5851
        %v6539 = vadd.f32 %v6507, %v5852
        %v6540 = vadd.f32 %v6508, %v5853
        %v6541 = vadd.f32 %v6509, %v5854
        %v6542 = vadd.f32 %v6510, %v5855
        %v6543 = vadd.f32 %v6511, %v5856
        %v6544 = vadd.f32 %v6512, %v5857
        %v6545 = vadd.f32 %v6513, %v5858
        %v6546 = vadd.f32 %v6514, %v5859
        %v6547 = vadd.f32 %v6515, %v5860
        %v6548 = vadd.f32 %v6516, %v5861
        %v6549 = vadd.f32 %v6517, %v5862
        %v6550 = vadd.f32 %v6518, %v5863
        %v6551 = vadd.f32 %v6519, %v5864
        %v6552 = vadd.f32 %v6520, %v5865
        %v6553 = vadd.f32 %v6521, %v5866
        %6554 = vadd.xlane.f32.xlu0 %v6522
        %v6555 = vpop.xlane.xlu0 %6554
        %6556 = vadd.xlane.f32.xlu0 %v6523
        %v6557 = vpop.xlane.xlu0 %6556
        %6558 = vadd.xlane.f32.xlu0 %v6524
        %v6559 = vpop.xlane.xlu0 %6558
        %6560 = vadd.xlane.f32.xlu0 %v6525
        %v6561 = vpop.xlane.xlu0 %6560
        %6562 = vadd.xlane.f32.xlu0 %v6526
        %v6563 = vpop.xlane.xlu0 %6562
        %6564 = vadd.xlane.f32.xlu0 %v6527
        %v6565 = vpop.xlane.xlu0 %6564
        %6566 = vadd.xlane.f32.xlu0 %v6528
        %v6567 = vpop.xlane.xlu0 %6566
        %6568 = vadd.xlane.f32.xlu0 %v6529
        %v6569 = vpop.xlane.xlu0 %6568
        %6570 = vadd.xlane.f32.xlu0 %v6530
        %v6571 = vpop.xlane.xlu0 %6570
        %6572 = vadd.xlane.f32.xlu0 %v6531
        %v6573 = vpop.xlane.xlu0 %6572
        %6574 = vadd.xlane.f32.xlu0 %v6532
        %v6575 = vpop.xlane.xlu0 %6574
        %6576 = vadd.xlane.f32.xlu0 %v6533
        %v6577 = vpop.xlane.xlu0 %6576
        %6578 = vadd.xlane.f32.xlu0 %v6534
        %v6579 = vpop.xlane.xlu0 %6578
        %6580 = vadd.xlane.f32.xlu0 %v6535
        %v6581 = vpop.xlane.xlu0 %6580
        %6582 = vadd.xlane.f32.xlu0 %v6536
        %v6583 = vpop.xlane.xlu0 %6582
        %6584 = vadd.xlane.f32.xlu0 %v6537
        %v6585 = vpop.xlane.xlu0 %6584
        %6586 = vadd.xlane.f32.xlu0 %v6538
        %v6587 = vpop.xlane.xlu0 %6586
        %6588 = vadd.xlane.f32.xlu0 %v6539
        %v6589 = vpop.xlane.xlu0 %6588
        %6590 = vadd.xlane.f32.xlu0 %v6540
        %v6591 = vpop.xlane.xlu0 %6590
        %6592 = vadd.xlane.f32.xlu0 %v6541
        %v6593 = vpop.xlane.xlu0 %6592
        %6594 = vadd.xlane.f32.xlu0 %v6542
        %v6595 = vpop.xlane.xlu0 %6594
        %6596 = vadd.xlane.f32.xlu0 %v6543
        %v6597 = vpop.xlane.xlu0 %6596
        %6598 = vadd.xlane.f32.xlu0 %v6544
        %v6599 = vpop.xlane.xlu0 %6598
        %6600 = vadd.xlane.f32.xlu0 %v6545
        %v6601 = vpop.xlane.xlu0 %6600
        %6602 = vadd.xlane.f32.xlu0 %v6546
        %v6603 = vpop.xlane.xlu0 %6602
        %6604 = vadd.xlane.f32.xlu0 %v6547
        %v6605 = vpop.xlane.xlu0 %6604
        %6606 = vadd.xlane.f32.xlu0 %v6548
        %v6607 = vpop.xlane.xlu0 %6606
        %6608 = vadd.xlane.f32.xlu0 %v6549
        %v6609 = vpop.xlane.xlu0 %6608
        %6610 = vadd.xlane.f32.xlu0 %v6550
        %v6611 = vpop.xlane.xlu0 %6610
        %6612 = vadd.xlane.f32.xlu0 %v6551
        %v6613 = vpop.xlane.xlu0 %6612
        %6614 = vadd.xlane.f32.xlu0 %v6552
        %v6615 = vpop.xlane.xlu0 %6614
        %6616 = vadd.xlane.f32.xlu0 %v6553
        %v6617 = vpop.xlane.xlu0 %6616
        %v6618 = vmul.f32 %v6555, 0.04761905
        %v6619 = vmul.f32 %v6557, 0.04761905
        %v6620 = vmul.f32 %v6559, 0.04761905
        %v6621 = vmul.f32 %v6561, 0.04761905
        %v6622 = vmul.f32 %v6563, 0.04761905
        %v6623 = vmul.f32 %v6565, 0.04761905
        %v6624 = vmul.f32 %v6567, 0.04761905
        %v6625 = vmul.f32 %v6569, 0.04761905
        %v6626 = vmul.f32 %v6571, 0.04761905
        %v6627 = vmul.f32 %v6573, 0.04761905
        %v6628 = vmul.f32 %v6575, 0.04761905
        %v6629 = vmul.f32 %v6577, 0.04761905
        %v6630 = vmul.f32 %v6579, 0.04761905
        %v6631 = vmul.f32 %v6581, 0.04761905
        %v6632 = vmul.f32 %v6583, 0.04761905
        %v6633 = vmul.f32 %v6585, 0.04761905
        %v6634 = vmul.f32 %v6587, 0.04761905
        %v6635 = vmul.f32 %v6589, 0.04761905
        %v6636 = vmul.f32 %v6591, 0.04761905
        %v6637 = vmul.f32 %v6593, 0.04761905
        %v6638 = vmul.f32 %v6595, 0.04761905
        %v6639 = vmul.f32 %v6597, 0.04761905
        %v6640 = vmul.f32 %v6599, 0.04761905
        %v6641 = vmul.f32 %v6601, 0.04761905
        %v6642 = vmul.f32 %v6603, 0.04761905
        %v6643 = vmul.f32 %v6605, 0.04761905
        %v6644 = vmul.f32 %v6607, 0.04761905
        %v6645 = vmul.f32 %v6609, 0.04761905
        %v6646 = vmul.f32 %v6611, 0.04761905
        %v6647 = vmul.f32 %v6613, 0.04761905
        %v6648 = vmul.f32 %v6615, 0.04761905
        %v6649 = vmul.f32 %v6617, 0.04761905
        %v6650 = vld [vmem:[%s10] sm:$0xff]
        %v6651 = vld [vmem:[%s10 + $0x8] sm:$0xff]
        %v6652 = vld [vmem:[%s10 + $0x10] sm:$0xff]
        %v6653 = vld [vmem:[%s10 + $0x18] sm:$0xff]
        %v6654 = vld [vmem:[%s10 + $0x20] sm:$0xff]
        %v6655 = vld [vmem:[%s10 + $0x28] sm:$0xff]
        %v6656 = vld [vmem:[%s10 + $0x30] sm:$0xff]
        %v6657 = vld [vmem:[%s10 + $0x38] sm:$0xff]
        %v6658 = vld [vmem:[%s10 + $0x40] sm:$0xff]
        %v6659 = vld [vmem:[%s10 + $0x48] sm:$0xff]
        %v6660 = vld [vmem:[%s10 + $0x50] sm:$0xff]
        %v6661 = vld [vmem:[%s10 + $0x58] sm:$0xff]
        %v6662 = vld [vmem:[%s10 + $0x60] sm:$0xff]
        %v6663 = vld [vmem:[%s10 + $0x68] sm:$0xff]
        %v6664 = vld [vmem:[%s10 + $0x70] sm:$0xff]
        %v6665 = vld [vmem:[%s10 + $0x78] sm:$0xff]
        %v6666 = vld [vmem:[%s10 + $0x80] sm:$0xff]
        %v6667 = vld [vmem:[%s10 + $0x88] sm:$0xff]
        %v6668 = vld [vmem:[%s10 + $0x90] sm:$0xff]
        %v6669 = vld [vmem:[%s10 + $0x98] sm:$0xff]
        %v6670 = vld [vmem:[%s10 + $0xa0] sm:$0xff]
        %v6671 = vld [vmem:[%s10 + $0xa8] sm:$0xff]
        %v6672 = vld [vmem:[%s10 + $0xb0] sm:$0xff]
        %v6673 = vld [vmem:[%s10 + $0xb8] sm:$0xff]
        %v6674 = vld [vmem:[%s10 + $0xc0] sm:$0xff]
        %v6675 = vld [vmem:[%s10 + $0xc8] sm:$0xff]
        %v6676 = vld [vmem:[%s10 + $0xd0] sm:$0xff]
        %v6677 = vld [vmem:[%s10 + $0xd8] sm:$0xff]
        %v6678 = vld [vmem:[%s10 + $0xe0] sm:$0xff]
        %v6679 = vld [vmem:[%s10 + $0xe8] sm:$0xff]
        %v6680 = vld [vmem:[%s10 + $0xf0] sm:$0xff]
        %v6681 = vld [vmem:[%s10 + $0xf8] sm:$0xff]
        %v6682 = vstv %s476
        %v6715 = vlaneseq
        %v6716 = vshrl.u32 %v6715, 7
        %v6717 = vsub.s32 %v5831, %v6716
        %v6718 = vrot.slane %v6618, %v6717
        %v6719 = vadd.s32 %v5831, 4294967288
        %v6720 = vlaneseq
        %v6721 = vshrl.u32 %v6720, 7
        %v6722 = vsub.s32 %v6719, %v6721
        %v6723 = vrot.slane %v6619, %v6722
        %vm6724 = vcmask 130112
        %v6725 = vsel %vm6724, %v6723, %v6718
        %v6726 = vadd.s32 %v5831, 4294967280
        %v6727 = vlaneseq
        %v6728 = vshrl.u32 %v6727, 7
        %v6729 = vsub.s32 %v6726, %v6728
        %v6730 = vrot.slane %v6620, %v6729
        %vm6731 = vcmask 195712
        %v6732 = vsel %vm6731, %v6730, %v6725
        %v6733 = vadd.s32 %v5831, 4294967272
        %v6734 = vlaneseq
        %v6735 = vshrl.u32 %v6734, 7
        %v6736 = vsub.s32 %v6733, %v6735
        %v6737 = vrot.slane %v6621, %v6736
        %vm6738 = vcmask 261312
        %v6739 = vsel %vm6738, %v6737, %v6732
        %v6740 = vadd.s32 %v5831, 4294967264
        %v6741 = vlaneseq
        %v6742 = vshrl.u32 %v6741, 7
        %v6743 = vsub.s32 %v6740, %v6742
        %v6744 = vrot.slane %v6622, %v6743
        %vm6745 = vcmask 326912
        %v6746 = vsel %vm6745, %v6744, %v6739
        %v6747 = vadd.s32 %v5831, 4294967256
        %v6748 = vlaneseq
        %v6749 = vshrl.u32 %v6748, 7
        %v6750 = vsub.s32 %v6747, %v6749
        %v6751 = vrot.slane %v6623, %v6750
        %vm6752 = vcmask 392512
        %v6753 = vsel %vm6752, %v6751, %v6746
        %v6754 = vadd.s32 %v5831, 4294967248
        %v6755 = vlaneseq
        %v6756 = vshrl.u32 %v6755, 7
        %v6757 = vsub.s32 %v6754, %v6756
        %v6758 = vrot.slane %v6624, %v6757
        %vm6759 = vcmask 458112
        %v6760 = vsel %vm6759, %v6758, %v6753
        %v6761 = vadd.s32 %v5831, 4294967240
        %v6762 = vlaneseq
        %v6763 = vshrl.u32 %v6762, 7
        %v6764 = vsub.s32 %v6761, %v6763
        %v6765 = vrot.slane %v6625, %v6764
        %vm6766 = vcmask 523712
        %v6767 = vsel %vm6766, %v6765, %v6760
        %v6768 = vadd.s32 %v5831, 4294967232
        %v6769 = vlaneseq
        %v6770 = vshrl.u32 %v6769, 7
        %v6771 = vsub.s32 %v6768, %v6770
        %v6772 = vrot.slane %v6626, %v6771
        %vm6773 = vcmask 589312
        %v6774 = vsel %vm6773, %v6772, %v6767
        %v6775 = vadd.s32 %v5831, 4294967224
        %v6776 = vlaneseq
        %v6777 = vshrl.u32 %v6776, 7
        %v6778 = vsub.s32 %v6775, %v6777
        %v6779 = vrot.slane %v6627, %v6778
        %vm6780 = vcmask 654912
        %v6781 = vsel %vm6780, %v6779, %v6774
        %v6782 = vadd.s32 %v5831, 4294967216
        %v6783 = vlaneseq
        %v6784 = vshrl.u32 %v6783, 7
        %v6785 = vsub.s32 %v6782, %v6784
        %v6786 = vrot.slane %v6628, %v6785
        %vm6787 = vcmask 720512
        %v6788 = vsel %vm6787, %v6786, %v6781
        %v6789 = vadd.s32 %v5831, 4294967208
        %v6790 = vlaneseq
        %v6791 = vshrl.u32 %v6790, 7
        %v6792 = vsub.s32 %v6789, %v6791
        %v6793 = vrot.slane %v6629, %v6792
        %vm6794 = vcmask 786112
        %v6795 = vsel %vm6794, %v6793, %v6788
        %v6796 = vadd.s32 %v5831, 4294967200
        %v6797 = vlaneseq
        %v6798 = vshrl.u32 %v6797, 7
        %v6799 = vsub.s32 %v6796, %v6798
        %v6800 = vrot.slane %v6630, %v6799
        %vm6801 = vcmask 851712
        %v6802 = vsel %vm6801, %v6800, %v6795
        %v6803 = vadd.s32 %v5831, 4294967192
        %v6804 = vlaneseq
        %v6805 = vshrl.u32 %v6804, 7
        %v6806 = vsub.s32 %v6803, %v6805
        %v6807 = vrot.slane %v6631, %v6806
        %vm6808 = vcmask 917312
        %v6809 = vsel %vm6808, %v6807, %v6802
        %v6810 = vadd.s32 %v5831, 4294967184
        %v6811 = vlaneseq
        %v6812 = vshrl.u32 %v6811, 7
        %v6813 = vsub.s32 %v6810, %v6812
        %v6814 = vrot.slane %v6632, %v6813
        %vm6815 = vcmask 982912
        %v6816 = vsel %vm6815, %v6814, %v6809
        %v6817 = vadd.s32 %v5831, 4294967176
        %v6818 = vlaneseq
        %v6819 = vshrl.u32 %v6818, 7
        %v6820 = vsub.s32 %v6817, %v6819
        %v6821 = vrot.slane %v6633, %v6820
        %vm6822 = vcmask 1048512
        %v6823 = vsel %vm6822, %v6821, %v6816
        %v6824 = vlaneseq
        %v6825 = vshrl.u32 %v6824, 7
        %v6826 = vsub.s32 %v5831, %v6825
        %v6827 = vrot.slane %v6634, %v6826
        %v6828 = vlaneseq
        %v6829 = vshrl.u32 %v6828, 7
        %v6830 = vsub.s32 %v6719, %v6829
        %v6831 = vrot.slane %v6635, %v6830
        %v6832 = vsel %vm6724, %v6831, %v6827
        %v6833 = vlaneseq
        %v6834 = vshrl.u32 %v6833, 7
        %v6835 = vsub.s32 %v6726, %v6834
        %v6836 = vrot.slane %v6636, %v6835
        %v6837 = vsel %vm6731, %v6836, %v6832
        %v6838 = vlaneseq
        %v6839 = vshrl.u32 %v6838, 7
        %v6840 = vsub.s32 %v6733, %v6839
        %v6841 = vrot.slane %v6637, %v6840
        %v6842 = vsel %vm6738, %v6841, %v6837
        %v6843 = vlaneseq
        %v6844 = vshrl.u32 %v6843, 7
        %v6845 = vsub.s32 %v6740, %v6844
        %v6846 = vrot.slane %v6638, %v6845
        %v6847 = vsel %vm6745, %v6846, %v6842
        %v6848 = vlaneseq
        %v6849 = vshrl.u32 %v6848, 7
        %v6850 = vsub.s32 %v6747, %v6849
        %v6851 = vrot.slane %v6639, %v6850
        %v6852 = vsel %vm6752, %v6851, %v6847
        %v6853 = vlaneseq
        %v6854 = vshrl.u32 %v6853, 7
        %v6855 = vsub.s32 %v6754, %v6854
        %v6856 = vrot.slane %v6640, %v6855
        %v6857 = vsel %vm6759, %v6856, %v6852
        %v6858 = vlaneseq
        %v6859 = vshrl.u32 %v6858, 7
        %v6860 = vsub.s32 %v6761, %v6859
        %v6861 = vrot.slane %v6641, %v6860
        %v6862 = vsel %vm6766, %v6861, %v6857
        %v6863 = vlaneseq
        %v6864 = vshrl.u32 %v6863, 7
        %v6865 = vsub.s32 %v6768, %v6864
        %v6866 = vrot.slane %v6642, %v6865
        %v6867 = vsel %vm6773, %v6866, %v6862
        %v6868 = vlaneseq
        %v6869 = vshrl.u32 %v6868, 7
        %v6870 = vsub.s32 %v6775, %v6869
        %v6871 = vrot.slane %v6643, %v6870
        %v6872 = vsel %vm6780, %v6871, %v6867
        %v6873 = vlaneseq
        %v6874 = vshrl.u32 %v6873, 7
        %v6875 = vsub.s32 %v6782, %v6874
        %v6876 = vrot.slane %v6644, %v6875
        %v6877 = vsel %vm6787, %v6876, %v6872
        %v6878 = vlaneseq
        %v6879 = vshrl.u32 %v6878, 7
        %v6880 = vsub.s32 %v6789, %v6879
        %v6881 = vrot.slane %v6645, %v6880
        %v6882 = vsel %vm6794, %v6881, %v6877
        %v6883 = vlaneseq
        %v6884 = vshrl.u32 %v6883, 7
        %v6885 = vsub.s32 %v6796, %v6884
        %v6886 = vrot.slane %v6646, %v6885
        %v6887 = vsel %vm6801, %v6886, %v6882
        %v6888 = vlaneseq
        %v6889 = vshrl.u32 %v6888, 7
        %v6890 = vsub.s32 %v6803, %v6889
        %v6891 = vrot.slane %v6647, %v6890
        %v6892 = vsel %vm6808, %v6891, %v6887
        %v6893 = vlaneseq
        %v6894 = vshrl.u32 %v6893, 7
        %v6895 = vsub.s32 %v6810, %v6894
        %v6896 = vrot.slane %v6648, %v6895
        %v6897 = vsel %vm6815, %v6896, %v6892
        %v6898 = vlaneseq
        %v6899 = vshrl.u32 %v6898, 7
        %v6900 = vsub.s32 %v6817, %v6899
        %v6901 = vrot.slane %v6649, %v6900
        %v6902 = vsel %vm6822, %v6901, %v6897
        %6905 = vmatprep.subr.mxu0 0.0
        %6906 = vmatpush1.msra.mxu0 %v6650
        %6907 = vmatprep.subr.mxu0 0.0
        %6908 = vmatpush1.msra.mxu0 %v6651
        %6909 = vmatprep.subr.mxu0 0.0
        %6910 = vmatpush1.msra.mxu0 %v6652
        %6911 = vmatprep.subr.mxu0 0.0
        %6912 = vmatpush1.msra.mxu0 %v6653
        %6913 = vmatprep.subr.mxu0 0.0
        %6914 = vmatpush1.msra.mxu0 %v6654
        %6915 = vmatprep.subr.mxu0 0.0
        %6916 = vmatpush1.msra.mxu0 %v6655
        %6917 = vmatprep.subr.mxu0 0.0
        %6918 = vmatpush1.msra.mxu0 %v6656
        %6919 = vmatprep.subr.mxu0 0.0
        %6920 = vmatpush1.msra.mxu0 %v6657
        %6921 = vmatprep.subr.mxu0 0.0
        %6922 = vmatpush1.msra.mxu0 %v6658
        %6923 = vmatprep.subr.mxu0 0.0
        %6924 = vmatpush1.msra.mxu0 %v6659
        %6925 = vmatprep.subr.mxu0 0.0
        %6926 = vmatpush1.msra.mxu0 %v6660
        %6927 = vmatprep.subr.mxu0 0.0
        %6928 = vmatpush1.msra.mxu0 %v6661
        %6929 = vmatprep.subr.mxu0 0.0
        %6930 = vmatpush1.msra.mxu0 %v6662
        %6931 = vmatprep.subr.mxu0 0.0
        %6932 = vmatpush1.msra.mxu0 %v6663
        %6933 = vmatprep.subr.mxu0 0.0
        %6934 = vmatpush1.msra.mxu0 %v6664
        %6935 = vmatprep.subr.mxu0 0.0
        %6936 = vmatpush1.msra.mxu0 %v6665
        %6937 = vmatprep.subr.mxu0 0.0
        %6938 = vmatpush1.msra.mxu0 %v6666
        %6939 = vmatprep.subr.mxu0 0.0
        %6940 = vmatpush1.msra.mxu0 %v6667
        %6941 = vmatprep.subr.mxu0 0.0
        %6942 = vmatpush1.msra.mxu0 %v6668
        %6943 = vmatprep.subr.mxu0 0.0
        %6944 = vmatpush1.msra.mxu0 %v6669
        %6945 = vmatprep.subr.mxu0 0.0
        %6946 = vmatpush1.msra.mxu0 %v6670
        %6947 = vmatprep.subr.mxu0 0.0
        %6948 = vmatpush1.msra.mxu0 %v6671
        %6949 = vmatprep.subr.mxu0 0.0
        %6950 = vmatpush1.msra.mxu0 %v6672
        %6951 = vmatprep.subr.mxu0 0.0
        %6952 = vmatpush1.msra.mxu0 %v6673
        %6953 = vmatprep.subr.mxu0 0.0
        %6954 = vmatpush1.msra.mxu0 %v6674
        %6955 = vmatprep.subr.mxu0 0.0
        %6956 = vmatpush1.msra.mxu0 %v6675
        %6957 = vmatprep.subr.mxu0 0.0
        %6958 = vmatpush1.msra.mxu0 %v6676
        %6959 = vmatprep.subr.mxu0 0.0
        %6960 = vmatpush1.msra.mxu0 %v6677
        %6961 = vmatprep.subr.mxu0 0.0
        %6962 = vmatpush1.msra.mxu0 %v6678
        %6963 = vmatprep.subr.mxu0 0.0
        %6964 = vmatpush1.msra.mxu0 %v6679
        %6965 = vmatprep.subr.mxu0 0.0
        %6966 = vmatpush1.msra.mxu0 %v6680
        %6967 = vmatprep.subr.mxu0 0.0
        %6968 = vmatpush1.msra.mxu0 %v6681
        %6969 = vmatprep.mubr.f32.mxu0 %v6902
        %6970 = vmatmul.mubr.f32.gmra.mrb[0].mxu0 %v6823
        %v6971 = vpop.f32.mrb[0].mxu0
        %v6972 = vadd.f32 %v6682, %v6971
        %v6973 = vpop.f32.mrb[0].mxu0
        %6974 = vdwg.mxu0
        %v6975 = vxor.u32 %v6972, 2147483648
        %v6976 = vmul.f32 %v6975, 1.442695
        %v6977 = vpow.pop %v6976
        %v6978 = vadd.f32 %v6977, 1.0
        %v6979 = vrcp.pop %v6978
        %v6980 = vmul.f32 1.0, %v6979
        %v6981 = vlaneseq
        %v6982 = vshrl.u32 %v6981, 7
        %v6983 = vsub.s32 0, %v6982
        %v6984 = vrot.slane %v6980, %v6983
        %6986 = vbcast.lane.b32.xlu0 %v6984, 256
        %v6987 = vpop.permute.xlu0 %6986
        %v6988 = vmul.f32 %v6522, %v6987
        %v6989 = vmul.f32 %v6523, %v6987
        %v6990 = vmul.f32 %v6524, %v6987
        %v6991 = vmul.f32 %v6525, %v6987
        %v6992 = vmul.f32 %v6526, %v6987
        %v6993 = vmul.f32 %v6527, %v6987
        %v6994 = vmul.f32 %v6528, %v6987
        %v6995 = vmul.f32 %v6529, %v6987
        %v6996 = vmul.f32 %v6530, %v6987
        %v6997 = vmul.f32 %v6531, %v6987
        %v6998 = vmul.f32 %v6532, %v6987
        %v6999 = vmul.f32 %v6533, %v6987
        %v7000 = vmul.f32 %v6534, %v6987
        %v7001 = vmul.f32 %v6535, %v6987
        %v7002 = vmul.f32 %v6536, %v6987
        %v7003 = vmul.f32 %v6537, %v6987
        %v7004 = vmul.f32 %v6538, %v6987
        %v7005 = vmul.f32 %v6539, %v6987
        %v7006 = vmul.f32 %v6540, %v6987
        %v7007 = vmul.f32 %v6541, %v6987
        %v7008 = vmul.f32 %v6542, %v6987
        %v7009 = vmul.f32 %v6543, %v6987
        %v7010 = vmul.f32 %v6544, %v6987
        %v7011 = vmul.f32 %v6545, %v6987
        %v7012 = vmul.f32 %v6546, %v6987
        %v7013 = vmul.f32 %v6547, %v6987
        %v7014 = vmul.f32 %v6548, %v6987
        %v7015 = vmul.f32 %v6549, %v6987
        %v7016 = vmul.f32 %v6550, %v6987
        %v7017 = vmul.f32 %v6551, %v6987
        %v7018 = vmul.f32 %v6552, %v6987
        %v7019 = vmul.f32 %v6553, %v6987
        %v7020 = vadd.f32 %v6988, %v6522
        %v7021 = vadd.f32 %v6989, %v6523
        %v7022 = vadd.f32 %v6990, %v6524
        %v7023 = vadd.f32 %v6991, %v6525
        %v7024 = vadd.f32 %v6992, %v6526
        %v7025 = vadd.f32 %v6993, %v6527
        %v7026 = vadd.f32 %v6994, %v6528
        %v7027 = vadd.f32 %v6995, %v6529
        %v7028 = vadd.f32 %v6996, %v6530
        %v7029 = vadd.f32 %v6997, %v6531
        %v7030 = vadd.f32 %v6998, %v6532
        %v7031 = vadd.f32 %v6999, %v6533
        %v7032 = vadd.f32 %v7000, %v6534
        %v7033 = vadd.f32 %v7001, %v6535
        %v7034 = vadd.f32 %v7002, %v6536
        %v7035 = vadd.f32 %v7003, %v6537
        %v7036 = vadd.f32 %v7004, %v6538
        %v7037 = vadd.f32 %v7005, %v6539
        %v7038 = vadd.f32 %v7006, %v6540
        %v7039 = vadd.f32 %v7007, %v6541
        %v7040 = vadd.f32 %v7008, %v6542
        %v7041 = vadd.f32 %v7009, %v6543
        %v7042 = vadd.f32 %v7010, %v6544
        %v7043 = vadd.f32 %v7011, %v6545
        %v7044 = vadd.f32 %v7012, %v6546
        %v7045 = vadd.f32 %v7013, %v6547
        %v7046 = vadd.f32 %v7014, %v6548
        %v7047 = vadd.f32 %v7015, %v6549
        %v7048 = vadd.f32 %v7016, %v6550
        %v7049 = vadd.f32 %v7017, %v6551
        %v7050 = vadd.f32 %v7018, %v6552
        %v7051 = vadd.f32 %v7019, %v6553
        %7052 = vadd.xlane.f32.xlu0 %v7020
        %v7053 = vpop.xlane.xlu0 %7052
        %7054 = vadd.xlane.f32.xlu0 %v7021
        %v7055 = vpop.xlane.xlu0 %7054
        %7056 = vadd.xlane.f32.xlu0 %v7022
        %v7057 = vpop.xlane.xlu0 %7056
        %7058 = vadd.xlane.f32.xlu0 %v7023
        %v7059 = vpop.xlane.xlu0 %7058
        %7060 = vadd.xlane.f32.xlu0 %v7024
        %v7061 = vpop.xlane.xlu0 %7060
        %7062 = vadd.xlane.f32.xlu0 %v7025
        %v7063 = vpop.xlane.xlu0 %7062
        %7064 = vadd.xlane.f32.xlu0 %v7026
        %v7065 = vpop.xlane.xlu0 %7064
        %7066 = vadd.xlane.f32.xlu0 %v7027
        %v7067 = vpop.xlane.xlu0 %7066
        %7068 = vadd.xlane.f32.xlu0 %v7028
        %v7069 = vpop.xlane.xlu0 %7068
        %7070 = vadd.xlane.f32.xlu0 %v7029
        %v7071 = vpop.xlane.xlu0 %7070
        %7072 = vadd.xlane.f32.xlu0 %v7030
        %v7073 = vpop.xlane.xlu0 %7072
        %7074 = vadd.xlane.f32.xlu0 %v7031
        %v7075 = vpop.xlane.xlu0 %7074
        %7076 = vadd.xlane.f32.xlu0 %v7032
        %v7077 = vpop.xlane.xlu0 %7076
        %7078 = vadd.xlane.f32.xlu0 %v7033
        %v7079 = vpop.xlane.xlu0 %7078
        %7080 = vadd.xlane.f32.xlu0 %v7034
        %v7081 = vpop.xlane.xlu0 %7080
        %7082 = vadd.xlane.f32.xlu0 %v7035
        %v7083 = vpop.xlane.xlu0 %7082
        %7084 = vadd.xlane.f32.xlu0 %v7036
        %v7085 = vpop.xlane.xlu0 %7084
        %7086 = vadd.xlane.f32.xlu0 %v7037
        %v7087 = vpop.xlane.xlu0 %7086
        %7088 = vadd.xlane.f32.xlu0 %v7038
        %v7089 = vpop.xlane.xlu0 %7088
        %7090 = vadd.xlane.f32.xlu0 %v7039
        %v7091 = vpop.xlane.xlu0 %7090
        %7092 = vadd.xlane.f32.xlu0 %v7040
        %v7093 = vpop.xlane.xlu0 %7092
        %7094 = vadd.xlane.f32.xlu0 %v7041
        %v7095 = vpop.xlane.xlu0 %7094
        %7096 = vadd.xlane.f32.xlu0 %v7042
        %v7097 = vpop.xlane.xlu0 %7096
        %7098 = vadd.xlane.f32.xlu0 %v7043
        %v7099 = vpop.xlane.xlu0 %7098
        %7100 = vadd.xlane.f32.xlu0 %v7044
        %v7101 = vpop.xlane.xlu0 %7100
        %7102 = vadd.xlane.f32.xlu0 %v7045
        %v7103 = vpop.xlane.xlu0 %7102
        %7104 = vadd.xlane.f32.xlu0 %v7046
        %v7105 = vpop.xlane.xlu0 %7104
        %7106 = vadd.xlane.f32.xlu0 %v7047
        %v7107 = vpop.xlane.xlu0 %7106
        %7108 = vadd.xlane.f32.xlu0 %v7048
        %v7109 = vpop.xlane.xlu0 %7108
        %7110 = vadd.xlane.f32.xlu0 %v7049
        %v7111 = vpop.xlane.xlu0 %7110
        %7112 = vadd.xlane.f32.xlu0 %v7050
        %v7113 = vpop.xlane.xlu0 %7112
        %7114 = vadd.xlane.f32.xlu0 %v7051
        %v7115 = vpop.xlane.xlu0 %7114
        %v7148 = vlaneseq
        %v7149 = vshrl.u32 %v7148, 7
        %v7150 = vsub.s32 %v5831, %v7149
        %v7151 = vrot.slane %v7053, %v7150
        %v7152 = vlaneseq
        %v7153 = vshrl.u32 %v7152, 7
        %v7154 = vsub.s32 %v5831, %v7153
        %v7155 = vrot.slane %v7055, %v7154
        %v7156 = vlaneseq
        %v7157 = vshrl.u32 %v7156, 7
        %v7158 = vsub.s32 %v5831, %v7157
        %v7159 = vrot.slane %v7057, %v7158
        %v7160 = vlaneseq
        %v7161 = vshrl.u32 %v7160, 7
        %v7162 = vsub.s32 %v5831, %v7161
        %v7163 = vrot.slane %v7059, %v7162
        %v7164 = vlaneseq
        %v7165 = vshrl.u32 %v7164, 7
        %v7166 = vsub.s32 %v5831, %v7165
        %v7167 = vrot.slane %v7061, %v7166
        %v7168 = vlaneseq
        %v7169 = vshrl.u32 %v7168, 7
        %v7170 = vsub.s32 %v5831, %v7169
        %v7171 = vrot.slane %v7063, %v7170
        %v7172 = vlaneseq
        %v7173 = vshrl.u32 %v7172, 7
        %v7174 = vsub.s32 %v5831, %v7173
        %v7175 = vrot.slane %v7065, %v7174
        %v7176 = vlaneseq
        %v7177 = vshrl.u32 %v7176, 7
        %v7178 = vsub.s32 %v5831, %v7177
        %v7179 = vrot.slane %v7067, %v7178
        %v7180 = vlaneseq
        %v7181 = vshrl.u32 %v7180, 7
        %v7182 = vsub.s32 %v5831, %v7181
        %v7183 = vrot.slane %v7069, %v7182
        %v7184 = vlaneseq
        %v7185 = vshrl.u32 %v7184, 7
        %v7186 = vsub.s32 %v5831, %v7185
        %v7187 = vrot.slane %v7071, %v7186
        %v7188 = vlaneseq
        %v7189 = vshrl.u32 %v7188, 7
        %v7190 = vsub.s32 %v5831, %v7189
        %v7191 = vrot.slane %v7073, %v7190
        %v7192 = vlaneseq
        %v7193 = vshrl.u32 %v7192, 7
        %v7194 = vsub.s32 %v5831, %v7193
        %v7195 = vrot.slane %v7075, %v7194
        %v7196 = vlaneseq
        %v7197 = vshrl.u32 %v7196, 7
        %v7198 = vsub.s32 %v5831, %v7197
        %v7199 = vrot.slane %v7077, %v7198
        %v7200 = vlaneseq
        %v7201 = vshrl.u32 %v7200, 7
        %v7202 = vsub.s32 %v5831, %v7201
        %v7203 = vrot.slane %v7079, %v7202
        %v7204 = vlaneseq
        %v7205 = vshrl.u32 %v7204, 7
        %v7206 = vsub.s32 %v5831, %v7205
        %v7207 = vrot.slane %v7081, %v7206
        %v7208 = vlaneseq
        %v7209 = vshrl.u32 %v7208, 7
        %v7210 = vsub.s32 %v5831, %v7209
        %v7211 = vrot.slane %v7083, %v7210
        %v7212 = vlaneseq
        %v7213 = vshrl.u32 %v7212, 7
        %v7214 = vsub.s32 %v5831, %v7213
        %v7215 = vrot.slane %v7085, %v7214
        %v7216 = vlaneseq
        %v7217 = vshrl.u32 %v7216, 7
        %v7218 = vsub.s32 %v5831, %v7217
        %v7219 = vrot.slane %v7087, %v7218
        %v7220 = vlaneseq
        %v7221 = vshrl.u32 %v7220, 7
        %v7222 = vsub.s32 %v5831, %v7221
        %v7223 = vrot.slane %v7089, %v7222
        %v7224 = vlaneseq
        %v7225 = vshrl.u32 %v7224, 7
        %v7226 = vsub.s32 %v5831, %v7225
        %v7227 = vrot.slane %v7091, %v7226
        %v7228 = vlaneseq
        %v7229 = vshrl.u32 %v7228, 7
        %v7230 = vsub.s32 %v5831, %v7229
        %v7231 = vrot.slane %v7093, %v7230
        %v7232 = vlaneseq
        %v7233 = vshrl.u32 %v7232, 7
        %v7234 = vsub.s32 %v5831, %v7233
        %v7235 = vrot.slane %v7095, %v7234
        %v7236 = vlaneseq
        %v7237 = vshrl.u32 %v7236, 7
        %v7238 = vsub.s32 %v5831, %v7237
        %v7239 = vrot.slane %v7097, %v7238
        %v7240 = vlaneseq
        %v7241 = vshrl.u32 %v7240, 7
        %v7242 = vsub.s32 %v5831, %v7241
        %v7243 = vrot.slane %v7099, %v7242
        %v7244 = vlaneseq
        %v7245 = vshrl.u32 %v7244, 7
        %v7246 = vsub.s32 %v5831, %v7245
        %v7247 = vrot.slane %v7101, %v7246
        %v7248 = vlaneseq
        %v7249 = vshrl.u32 %v7248, 7
        %v7250 = vsub.s32 %v5831, %v7249
        %v7251 = vrot.slane %v7103, %v7250
        %v7252 = vlaneseq
        %v7253 = vshrl.u32 %v7252, 7
        %v7254 = vsub.s32 %v5831, %v7253
        %v7255 = vrot.slane %v7105, %v7254
        %v7256 = vlaneseq
        %v7257 = vshrl.u32 %v7256, 7
        %v7258 = vsub.s32 %v5831, %v7257
        %v7259 = vrot.slane %v7107, %v7258
        %v7260 = vlaneseq
        %v7261 = vshrl.u32 %v7260, 7
        %v7262 = vsub.s32 %v5831, %v7261
        %v7263 = vrot.slane %v7109, %v7262
        %v7264 = vlaneseq
        %v7265 = vshrl.u32 %v7264, 7
        %v7266 = vsub.s32 %v5831, %v7265
        %v7267 = vrot.slane %v7111, %v7266
        %v7268 = vlaneseq
        %v7269 = vshrl.u32 %v7268, 7
        %v7270 = vsub.s32 %v5831, %v7269
        %v7271 = vrot.slane %v7113, %v7270
        %v7272 = vlaneseq
        %v7273 = vshrl.u32 %v7272, 7
        %v7274 = vsub.s32 %v5831, %v7273
        %v7275 = vrot.slane %v7115, %v7274
        %v7276 = vsel %vm6127, %v7155, %v7151
        %v7277 = vsel %vm6129, %v7159, %v7276
        %v7278 = vsel %vm6131, %v7163, %v7277
        %v7279 = vsel %vm6133, %v7167, %v7278
        %v7280 = vsel %vm6135, %v7171, %v7279
        %v7281 = vsel %vm6137, %v7175, %v7280
        %v7282 = vsel %vm6139, %v7179, %v7281
        %v7283 = vsel %vm6127, %v7187, %v7183
        %v7284 = vsel %vm6129, %v7191, %v7283
        %v7285 = vsel %vm6131, %v7195, %v7284
        %v7286 = vsel %vm6133, %v7199, %v7285
        %v7287 = vsel %vm6135, %v7203, %v7286
        %v7288 = vsel %vm6137, %v7207, %v7287
        %v7289 = vsel %vm6139, %v7211, %v7288
        %v7290 = vsel %vm6127, %v7219, %v7215
        %v7291 = vsel %vm6129, %v7223, %v7290
        %v7292 = vsel %vm6131, %v7227, %v7291
        %v7293 = vsel %vm6133, %v7231, %v7292
        %v7294 = vsel %vm6135, %v7235, %v7293
        %v7295 = vsel %vm6137, %v7239, %v7294
        %v7296 = vsel %vm6139, %v7243, %v7295
        %v7297 = vsel %vm6127, %v7251, %v7247
        %v7298 = vsel %vm6129, %v7255, %v7297
        %v7299 = vsel %vm6131, %v7259, %v7298
        %v7300 = vsel %vm6133, %v7263, %v7299
        %v7301 = vsel %vm6135, %v7267, %v7300
        %v7302 = vsel %vm6137, %v7271, %v7301
        %v7303 = vsel %vm6139, %v7275, %v7302
        %vm7308 = vcmask 64512
        %v7309 = vsel %vm7308, %v7282, 0.0
        %7310 = vadd.xlane.f32.xlu0 %v7309
        %v7311 = vpop.xlane.xlu0 %7310
        %v7312 = vsel %vm7308, %v7289, 0.0
        %7313 = vadd.xlane.f32.xlu0 %v7312
        %v7314 = vpop.xlane.xlu0 %7313
        %v7315 = vsel %vm7308, %v7296, 0.0
        %7316 = vadd.xlane.f32.xlu0 %v7315
        %v7317 = vpop.xlane.xlu0 %7316
        %v7318 = vsel %vm7308, %v7303, 0.0
        %7319 = vadd.xlane.f32.xlu0 %v7318
        %v7320 = vpop.xlane.xlu0 %7319
        %v7321 = vmul.f32 %v7311, 0.005952381
        %v7322 = vmul.f32 %v7314, 0.005952381
        %v7323 = vmul.f32 %v7317, 0.005952381
        %v7324 = vmul.f32 %v7320, 0.005952381
        %v7325 = vld [vmem:[%s11] sm:$0xff]
        %v7326 = vld [vmem:[%s11 + $0x8] sm:$0xff]
        %v7327 = vld [vmem:[%s12] sm:$0xff]
        %v7328 = vld [vmem:[%s12 + $0x8] sm:$0xff]
        %v7330 = vsel %vm6166, %v7325, 0
        %v7333 = vsel %vm6166, %v7326, 0
        %7335 = vmatprep.subr.mxu0 0.0
        %7336 = vmatpush1.msra.mxu0 %v7321
        %7337 = vmatprep.subr.mxu0 0.0
        %7338 = vmatpush1.msra.mxu0 %v7322
        %7339 = vmatprep.subr.mxu0 0.0
        %7340 = vmatpush1.msra.mxu0 %v7323
        %7341 = vmatprep.subr.mxu0 0.0
        %7342 = vmatpush1.msra.mxu0 %v7324
        %7343 = vmatprep.subr.mxu0 0.0
        %7344 = vmatpush1.msra.mxu0 0.0
        %7345 = vmatprep.subr.mxu0 0.0
        %7346 = vmatpush1.msra.mxu0 0.0
        %7347 = vmatprep.subr.mxu0 0.0
        %7348 = vmatpush1.msra.mxu0 0.0
        %7349 = vmatprep.subr.mxu0 0.0
        %7350 = vmatpush1.msra.mxu0 0.0
        %7351 = vmatprep.subr.mxu0 0.0
        %7352 = vmatpush1.msra.mxu0 0.0
        %7353 = vmatprep.subr.mxu0 0.0
        %7354 = vmatpush1.msra.mxu0 0.0
        %7355 = vmatprep.subr.mxu0 0.0
        %7356 = vmatpush1.msra.mxu0 0.0
        %7357 = vmatprep.subr.mxu0 0.0
        %7358 = vmatpush1.msra.mxu0 0.0
        %7359 = vmatprep.subr.mxu0 0.0
        %7360 = vmatpush1.msra.mxu0 0.0
        %7361 = vmatprep.subr.mxu0 0.0
        %7362 = vmatpush1.msra.mxu0 0.0
        %7363 = vmatprep.subr.mxu0 0.0
        %7364 = vmatpush1.msra.mxu0 0.0
        %7365 = vmatprep.subr.mxu0 0.0
        %7366 = vmatpush1.msra.mxu0 0.0
        %7367 = vmatprep.subr.mxu0 0.0
        %7368 = vmatpush1.msra.mxu0 0.0
        %7369 = vmatprep.subr.mxu0 0.0
        %7370 = vmatpush1.msra.mxu0 0.0
        %7371 = vmatprep.subr.mxu0 0.0
        %7372 = vmatpush1.msra.mxu0 0.0
        %7373 = vmatprep.subr.mxu0 0.0
        %7374 = vmatpush1.msra.mxu0 0.0
        %7375 = vmatprep.subr.mxu0 0.0
        %7376 = vmatpush1.msra.mxu0 0.0
        %7377 = vmatprep.subr.mxu0 0.0
        %7378 = vmatpush1.msra.mxu0 0.0
        %7379 = vmatprep.subr.mxu0 0.0
        %7380 = vmatpush1.msra.mxu0 0.0
        %7381 = vmatprep.subr.mxu0 0.0
        %7382 = vmatpush1.msra.mxu0 0.0
        %7383 = vmatprep.subr.mxu0 0.0
        %7384 = vmatpush1.msra.mxu0 0.0
        %7385 = vmatprep.subr.mxu0 0.0
        %7386 = vmatpush1.msra.mxu0 0.0
        %7387 = vmatprep.subr.mxu0 0.0
        %7388 = vmatpush1.msra.mxu0 0.0
        %7389 = vmatprep.subr.mxu0 0.0
        %7390 = vmatpush1.msra.mxu0 0.0
        %7391 = vmatprep.subr.mxu0 0.0
        %7392 = vmatpush1.msra.mxu0 0.0
        %7393 = vmatprep.subr.mxu0 0.0
        %7394 = vmatpush1.msra.mxu0 0.0
        %7395 = vmatprep.subr.mxu0 0.0
        %7396 = vmatpush1.msra.mxu0 0.0
        %7397 = vmatprep.subr.mxu0 0.0
        %7398 = vmatpush1.msra.mxu0 0.0
        %7399 = vmatprep.mubr.f32.mxu0 0.0
        %7400 = vmatmul.mubr.f32.gmra.mrb[0].mxu0 %v7330
        %v7401 = vpop.f32.mrb[0].mxu0
        %v7402 = vadd.f32 %v7327, %v7401
        %v7403 = vpop.f32.mrb[0].mxu0
        %7404 = vmatprep.mubr.f32.mxu0 0.0
        %7405 = vmatmul.mubr.f32.gmra.mrb[0].mxu0 %v7333
        %v7406 = vpop.f32.mrb[0].mxu0
        %v7407 = vadd.f32 %v7328, %v7406
        %v7408 = vpop.f32.mrb[0].mxu0
        %7409 = vdwg.mxu0
        %v7410 = vmax.f32 %v7402, 0.0
        %v7411 = vmax.f32 %v7407, 0.0
        %v7412 = vld [vmem:[%s13] sm:$0xff]
        %v7413 = vld [vmem:[%s13 + $0x8] sm:$0xff]
        %v7414 = vld [vmem:[%s13 + $0x10] sm:$0xff]
        %v7415 = vld [vmem:[%s13 + $0x18] sm:$0xff]
        %v7416 = vld [vmem:[%s14] sm:$0xff]
        %v7417 = vld [vmem:[%s14 + $0x8] sm:$0xff]
        %v7418 = vld [vmem:[%s14 + $0x10] sm:$0xff]
        %v7419 = vld [vmem:[%s14 + $0x18] sm:$0xff]
        %vm7420 = vcmask 130048
        %v7422 = vsel %vm7420, %v7412, 0
        %v7425 = vsel %vm7420, %v7413, 0
        %v7428 = vsel %vm7420, %v7414, 0
        %v7431 = vsel %vm7420, %v7415, 0
        %7433 = vmatprep.subr.mxu0 0.0
        %7434 = vmatpush1.msra.mxu0 %v7410
        %7435 = vmatprep.subr.mxu0 0.0
        %7436 = vmatpush1.msra.mxu0 %v7411
        %7437 = vmatprep.subr.mxu0 0.0
        %7438 = vmatpush1.msra.mxu0 0.0
        %7439 = vmatprep.subr.mxu0 0.0
        %7440 = vmatpush1.msra.mxu0 0.0
        %7441 = vmatprep.subr.mxu0 0.0
        %7442 = vmatpush1.msra.mxu0 0.0
        %7443 = vmatprep.subr.mxu0 0.0
        %7444 = vmatpush1.msra.mxu0 0.0
        %7445 = vmatprep.subr.mxu0 0.0
        %7446 = vmatpush1.msra.mxu0 0.0
        %7447 = vmatprep.subr.mxu0 0.0
        %7448 = vmatpush1.msra.mxu0 0.0
        %7449 = vmatprep.subr.mxu0 0.0
        %7450 = vmatpush1.msra.mxu0 0.0
        %7451 = vmatprep.subr.mxu0 0.0
        %7452 = vmatpush1.msra.mxu0 0.0
        %7453 = vmatprep.subr.mxu0 0.0
        %7454 = vmatpush1.msra.mxu0 0.0
        %7455 = vmatprep.subr.mxu0 0.0
        %7456 = vmatpush1.msra.mxu0 0.0
        %7457 = vmatprep.subr.mxu0 0.0
        %7458 = vmatpush1.msra.mxu0 0.0
        %7459 = vmatprep.subr.mxu0 0.0
        %7460 = vmatpush1.msra.mxu0 0.0
        %7461 = vmatprep.subr.mxu0 0.0
        %7462 = vmatpush1.msra.mxu0 0.0
        %7463 = vmatprep.subr.mxu0 0.0
        %7464 = vmatpush1.msra.mxu0 0.0
        %7465 = vmatprep.subr.mxu0 0.0
        %7466 = vmatpush1.msra.mxu0 0.0
        %7467 = vmatprep.subr.mxu0 0.0
        %7468 = vmatpush1.msra.mxu0 0.0
        %7469 = vmatprep.subr.mxu0 0.0
        %7470 = vmatpush1.msra.mxu0 0.0
        %7471 = vmatprep.subr.mxu0 0.0
        %7472 = vmatpush1.msra.mxu0 0.0
        %7473 = vmatprep.subr.mxu0 0.0
        %7474 = vmatpush1.msra.mxu0 0.0
        %7475 = vmatprep.subr.mxu0 0.0
        %7476 = vmatpush1.msra.mxu0 0.0
        %7477 = vmatprep.subr.mxu0 0.0
        %7478 = vmatpush1.msra.mxu0 0.0
        %7479 = vmatprep.subr.mxu0 0.0
        %7480 = vmatpush1.msra.mxu0 0.0
        %7481 = vmatprep.subr.mxu0 0.0
        %7482 = vmatpush1.msra.mxu0 0.0
        %7483 = vmatprep.subr.mxu0 0.0
        %7484 = vmatpush1.msra.mxu0 0.0
        %7485 = vmatprep.subr.mxu0 0.0
        %7486 = vmatpush1.msra.mxu0 0.0
        %7487 = vmatprep.subr.mxu0 0.0
        %7488 = vmatpush1.msra.mxu0 0.0
        %7489 = vmatprep.subr.mxu0 0.0
        %7490 = vmatpush1.msra.mxu0 0.0
        %7491 = vmatprep.subr.mxu0 0.0
        %7492 = vmatpush1.msra.mxu0 0.0
        %7493 = vmatprep.subr.mxu0 0.0
        %7494 = vmatpush1.msra.mxu0 0.0
        %7495 = vmatprep.subr.mxu0 0.0
        %7496 = vmatpush1.msra.mxu0 0.0
        %7497 = vmatprep.mubr.f32.mxu0 0.0
        %7498 = vmatmul.mubr.f32.gmra.mrb[0].mxu0 %v7422
        %v7499 = vpop.f32.mrb[0].mxu0
        %v7500 = vadd.f32 %v7416, %v7499
        %v7501 = vpop.f32.mrb[0].mxu0
        %7502 = vmatprep.mubr.f32.mxu0 0.0
        %7503 = vmatmul.mubr.f32.gmra.mrb[0].mxu0 %v7425
        %v7504 = vpop.f32.mrb[0].mxu0
        %v7505 = vadd.f32 %v7417, %v7504
        %v7506 = vpop.f32.mrb[0].mxu0
        %7507 = vmatprep.mubr.f32.mxu0 0.0
        %7508 = vmatmul.mubr.f32.gmra.mrb[0].mxu0 %v7428
        %v7509 = vpop.f32.mrb[0].mxu0
        %v7510 = vadd.f32 %v7418, %v7509
        %v7511 = vpop.f32.mrb[0].mxu0
        %7512 = vmatprep.mubr.f32.mxu0 0.0
        %7513 = vmatmul.mubr.f32.gmra.mrb[0].mxu0 %v7431
        %v7514 = vpop.f32.mrb[0].mxu0
        %v7515 = vadd.f32 %v7419, %v7514
        %v7516 = vpop.f32.mrb[0].mxu0
        %7517 = vdwg.mxu0
        %v7518 = vxor.u32 %v7500, 2147483648
        %v7519 = vxor.u32 %v7505, 2147483648
        %v7520 = vxor.u32 %v7510, 2147483648
        %v7521 = vxor.u32 %v7515, 2147483648
        %v7522 = vmul.f32 %v7518, 1.442695
        %v7523 = vpow.pop %v7522
        %v7524 = vmul.f32 %v7519, 1.442695
        %v7525 = vpow.pop %v7524
        %v7526 = vmul.f32 %v7520, 1.442695
        %v7527 = vpow.pop %v7526
        %v7528 = vmul.f32 %v7521, 1.442695
        %v7529 = vpow.pop %v7528
        %v7530 = vadd.f32 %v7523, 1.0
        %v7531 = vadd.f32 %v7525, 1.0
        %v7532 = vadd.f32 %v7527, 1.0
        %v7533 = vadd.f32 %v7529, 1.0
        %v7534 = vrcp.pop %v7530
        %v7535 = vmul.f32 1.0, %v7534
        %v7536 = vrcp.pop %v7531
        %v7537 = vmul.f32 1.0, %v7536
        %v7538 = vrcp.pop %v7532
        %v7539 = vmul.f32 1.0, %v7538
        %v7540 = vrcp.pop %v7533
        %v7541 = vmul.f32 1.0, %v7540
        %v7546 = vcombine.high %v7535, %v7535
        %v7548 = vunpack.c.l.s4 1966171168
        %v7549 = vunpack.c.0.s8 %v7548
        %v7550 = vlaneseq
        %v7551 = vshrl.u32 %v7550, 7
        %v7552 = vsub.s32 %v7549, %v7551
        %v7553 = vrot.slane %v7535, %v7552
        %v7555 = vunpack.c.l.s4 1966171168
        %v7556 = vunpack.c.0.s8 %v7555
        %v7557 = vlaneseq
        %v7558 = vshrl.u32 %v7557, 7
        %v7559 = vsub.s32 %v7556, %v7558
        %v7560 = vrot.slane %v7546, %v7559
        %v7561 = vcombine.high %v7553, %v7553
        %v7562 = vcombine.high %v7560, %v7560
        %v7564 = vunpack.c.l.s4 1966171168
        %v7565 = vunpack.c.0.s8 %v7564
        %v7566 = vlaneseq
        %v7567 = vshrl.u32 %v7566, 7
        %v7568 = vsub.s32 %v7565, %v7567
        %v7569 = vrot.slane %v7553, %v7568
        %v7571 = vunpack.c.l.s4 1966171168
        %v7572 = vunpack.c.0.s8 %v7571
        %v7573 = vlaneseq
        %v7574 = vshrl.u32 %v7573, 7
        %v7575 = vsub.s32 %v7572, %v7574
        %v7576 = vrot.slane %v7560, %v7575
        %v7578 = vunpack.c.l.s4 1966171168
        %v7579 = vunpack.c.0.s8 %v7578
        %v7580 = vlaneseq
        %v7581 = vshrl.u32 %v7580, 7
        %v7582 = vsub.s32 %v7579, %v7581
        %v7583 = vrot.slane %v7561, %v7582
        %v7585 = vunpack.c.l.s4 1966171168
        %v7586 = vunpack.c.0.s8 %v7585
        %v7587 = vlaneseq
        %v7588 = vshrl.u32 %v7587, 7
        %v7589 = vsub.s32 %v7586, %v7588
        %v7590 = vrot.slane %v7562, %v7589
        %v7591 = vcombine.high %v7569, %v7569
        %v7592 = vcombine.high %v7576, %v7576
        %v7593 = vcombine.high %v7583, %v7583
        %v7594 = vcombine.high %v7590, %v7590
        %v7595 = vcombine.high %v7537, %v7537
        %v7597 = vunpack.c.l.s4 1966171168
        %v7598 = vunpack.c.0.s8 %v7597
        %v7599 = vlaneseq
        %v7600 = vshrl.u32 %v7599, 7
        %v7601 = vsub.s32 %v7598, %v7600
        %v7602 = vrot.slane %v7537, %v7601
        %v7604 = vunpack.c.l.s4 1966171168
        %v7605 = vunpack.c.0.s8 %v7604
        %v7606 = vlaneseq
        %v7607 = vshrl.u32 %v7606, 7
        %v7608 = vsub.s32 %v7605, %v7607
        %v7609 = vrot.slane %v7595, %v7608
        %v7610 = vcombine.high %v7602, %v7602
        %v7611 = vcombine.high %v7609, %v7609
        %v7613 = vunpack.c.l.s4 1966171168
        %v7614 = vunpack.c.0.s8 %v7613
        %v7615 = vlaneseq
        %v7616 = vshrl.u32 %v7615, 7
        %v7617 = vsub.s32 %v7614, %v7616
        %v7618 = vrot.slane %v7602, %v7617
        %v7620 = vunpack.c.l.s4 1966171168
        %v7621 = vunpack.c.0.s8 %v7620
        %v7622 = vlaneseq
        %v7623 = vshrl.u32 %v7622, 7
        %v7624 = vsub.s32 %v7621, %v7623
        %v7625 = vrot.slane %v7609, %v7624
        %v7627 = vunpack.c.l.s4 1966171168
        %v7628 = vunpack.c.0.s8 %v7627
        %v7629 = vlaneseq
        %v7630 = vshrl.u32 %v7629, 7
        %v7631 = vsub.s32 %v7628, %v7630
        %v7632 = vrot.slane %v7610, %v7631
        %v7634 = vunpack.c.l.s4 1966171168
        %v7635 = vunpack.c.0.s8 %v7634
        %v7636 = vlaneseq
        %v7637 = vshrl.u32 %v7636, 7
        %v7638 = vsub.s32 %v7635, %v7637
        %v7639 = vrot.slane %v7611, %v7638
        %v7640 = vcombine.high %v7618, %v7618
        %v7641 = vcombine.high %v7625, %v7625
        %v7642 = vcombine.high %v7632, %v7632
        %v7643 = vcombine.high %v7639, %v7639
        %v7644 = vcombine.high %v7539, %v7539
        %v7646 = vunpack.c.l.s4 1966171168
        %v7647 = vunpack.c.0.s8 %v7646
        %v7648 = vlaneseq
        %v7649 = vshrl.u32 %v7648, 7
        %v7650 = vsub.s32 %v7647, %v7649
        %v7651 = vrot.slane %v7539, %v7650
        %v7653 = vunpack.c.l.s4 1966171168
        %v7654 = vunpack.c.0.s8 %v7653
        %v7655 = vlaneseq
        %v7656 = vshrl.u32 %v7655, 7
        %v7657 = vsub.s32 %v7654, %v7656
        %v7658 = vrot.slane %v7644, %v7657
        %v7659 = vcombine.high %v7651, %v7651
        %v7660 = vcombine.high %v7658, %v7658
        %v7662 = vunpack.c.l.s4 1966171168
        %v7663 = vunpack.c.0.s8 %v7662
        %v7664 = vlaneseq
        %v7665 = vshrl.u32 %v7664, 7
        %v7666 = vsub.s32 %v7663, %v7665
        %v7667 = vrot.slane %v7651, %v7666
        %v7669 = vunpack.c.l.s4 1966171168
        %v7670 = vunpack.c.0.s8 %v7669
        %v7671 = vlaneseq
        %v7672 = vshrl.u32 %v7671, 7
        %v7673 = vsub.s32 %v7670, %v7672
        %v7674 = vrot.slane %v7658, %v7673
        %v7676 = vunpack.c.l.s4 1966171168
        %v7677 = vunpack.c.0.s8 %v7676
        %v7678 = vlaneseq
        %v7679 = vshrl.u32 %v7678, 7
        %v7680 = vsub.s32 %v7677, %v7679
        %v7681 = vrot.slane %v7659, %v7680
        %v7683 = vunpack.c.l.s4 1966171168
        %v7684 = vunpack.c.0.s8 %v7683
        %v7685 = vlaneseq
        %v7686 = vshrl.u32 %v7685, 7
        %v7687 = vsub.s32 %v7684, %v7686
        %v7688 = vrot.slane %v7660, %v7687
        %v7689 = vcombine.high %v7667, %v7667
        %v7690 = vcombine.high %v7674, %v7674
        %v7691 = vcombine.high %v7681, %v7681
        %v7692 = vcombine.high %v7688, %v7688
        %v7693 = vcombine.high %v7541, %v7541
        %v7695 = vunpack.c.l.s4 1966171168
        %v7696 = vunpack.c.0.s8 %v7695
        %v7697 = vlaneseq
        %v7698 = vshrl.u32 %v7697, 7
        %v7699 = vsub.s32 %v7696, %v7698
        %v7700 = vrot.slane %v7541, %v7699
        %v7702 = vunpack.c.l.s4 1966171168
        %v7703 = vunpack.c.0.s8 %v7702
        %v7704 = vlaneseq
        %v7705 = vshrl.u32 %v7704, 7
        %v7706 = vsub.s32 %v7703, %v7705
        %v7707 = vrot.slane %v7693, %v7706
        %v7708 = vcombine.high %v7700, %v7700
        %v7709 = vcombine.high %v7707, %v7707
        %v7711 = vunpack.c.l.s4 1966171168
        %v7712 = vunpack.c.0.s8 %v7711
        %v7713 = vlaneseq
        %v7714 = vshrl.u32 %v7713, 7
        %v7715 = vsub.s32 %v7712, %v7714
        %v7716 = vrot.slane %v7700, %v7715
        %v7718 = vunpack.c.l.s4 1966171168
        %v7719 = vunpack.c.0.s8 %v7718
        %v7720 = vlaneseq
        %v7721 = vshrl.u32 %v7720, 7
        %v7722 = vsub.s32 %v7719, %v7721
        %v7723 = vrot.slane %v7707, %v7722
        %v7725 = vunpack.c.l.s4 1966171168
        %v7726 = vunpack.c.0.s8 %v7725
        %v7727 = vlaneseq
        %v7728 = vshrl.u32 %v7727, 7
        %v7729 = vsub.s32 %v7726, %v7728
        %v7730 = vrot.slane %v7708, %v7729
        %v7732 = vunpack.c.l.s4 1966171168
        %v7733 = vunpack.c.0.s8 %v7732
        %v7734 = vlaneseq
        %v7735 = vshrl.u32 %v7734, 7
        %v7736 = vsub.s32 %v7733, %v7735
        %v7737 = vrot.slane %v7709, %v7736
        %v7738 = vcombine.high %v7716, %v7716
        %v7739 = vcombine.high %v7723, %v7723
        %v7740 = vcombine.high %v7730, %v7730
        %v7741 = vcombine.high %v7737, %v7737
        %v7742 = vlaneseq
        %v7743 = vshrl.u32 %v7742, 7
        %v7744 = vsub.s32 0, %v7743
        %v7745 = vrot.slane %v7569, %v7744
        %v7746 = vlaneseq
        %v7747 = vshrl.u32 %v7746, 7
        %v7748 = vsub.s32 0, %v7747
        %v7749 = vrot.slane %v7583, %v7748
        %v7750 = vlaneseq
        %v7751 = vshrl.u32 %v7750, 7
        %v7752 = vsub.s32 0, %v7751
        %v7753 = vrot.slane %v7591, %v7752
        %v7754 = vlaneseq
        %v7755 = vshrl.u32 %v7754, 7
        %v7756 = vsub.s32 0, %v7755
        %v7757 = vrot.slane %v7593, %v7756
        %v7758 = vlaneseq
        %v7759 = vshrl.u32 %v7758, 7
        %v7760 = vsub.s32 0, %v7759
        %v7761 = vrot.slane %v7576, %v7760
        %v7762 = vlaneseq
        %v7763 = vshrl.u32 %v7762, 7
        %v7764 = vsub.s32 0, %v7763
        %v7765 = vrot.slane %v7590, %v7764
        %v7766 = vlaneseq
        %v7767 = vshrl.u32 %v7766, 7
        %v7768 = vsub.s32 0, %v7767
        %v7769 = vrot.slane %v7592, %v7768
        %v7770 = vlaneseq
        %v7771 = vshrl.u32 %v7770, 7
        %v7772 = vsub.s32 0, %v7771
        %v7773 = vrot.slane %v7594, %v7772
        %v7774 = vlaneseq
        %v7775 = vshrl.u32 %v7774, 7
        %v7776 = vsub.s32 0, %v7775
        %v7777 = vrot.slane %v7618, %v7776
        %v7778 = vlaneseq
        %v7779 = vshrl.u32 %v7778, 7
        %v7780 = vsub.s32 0, %v7779
        %v7781 = vrot.slane %v7632, %v7780
        %v7782 = vlaneseq
        %v7783 = vshrl.u32 %v7782, 7
        %v7784 = vsub.s32 0, %v7783
        %v7785 = vrot.slane %v7640, %v7784
        %v7786 = vlaneseq
        %v7787 = vshrl.u32 %v7786, 7
        %v7788 = vsub.s32 0, %v7787
        %v7789 = vrot.slane %v7642, %v7788
        %v7790 = vlaneseq
        %v7791 = vshrl.u32 %v7790, 7
        %v7792 = vsub.s32 0, %v7791
        %v7793 = vrot.slane %v7625, %v7792
        %v7794 = vlaneseq
        %v7795 = vshrl.u32 %v7794, 7
        %v7796 = vsub.s32 0, %v7795
        %v7797 = vrot.slane %v7639, %v7796
        %v7798 = vlaneseq
        %v7799 = vshrl.u32 %v7798, 7
        %v7800 = vsub.s32 0, %v7799
        %v7801 = vrot.slane %v7641, %v7800
        %v7802 = vlaneseq
        %v7803 = vshrl.u32 %v7802, 7
        %v7804 = vsub.s32 0, %v7803
        %v7805 = vrot.slane %v7643, %v7804
        %v7806 = vlaneseq
        %v7807 = vshrl.u32 %v7806, 7
        %v7808 = vsub.s32 0, %v7807
        %v7809 = vrot.slane %v7667, %v7808
        %v7810 = vlaneseq
        %v7811 = vshrl.u32 %v7810, 7
        %v7812 = vsub.s32 0, %v7811
        %v7813 = vrot.slane %v7681, %v7812
        %v7814 = vlaneseq
        %v7815 = vshrl.u32 %v7814, 7
        %v7816 = vsub.s32 0, %v7815
        %v7817 = vrot.slane %v7689, %v7816
        %v7818 = vlaneseq
        %v7819 = vshrl.u32 %v7818, 7
        %v7820 = vsub.s32 0, %v7819
        %v7821 = vrot.slane %v7691, %v7820
        %v7822 = vlaneseq
        %v7823 = vshrl.u32 %v7822, 7
        %v7824 = vsub.s32 0, %v7823
        %v7825 = vrot.slane %v7674, %v7824
        %v7826 = vlaneseq
        %v7827 = vshrl.u32 %v7826, 7
        %v7828 = vsub.s32 0, %v7827
        %v7829 = vrot.slane %v7688, %v7828
        %v7830 = vlaneseq
        %v7831 = vshrl.u32 %v7830, 7
        %v7832 = vsub.s32 0, %v7831
        %v7833 = vrot.slane %v7690, %v7832
        %v7834 = vlaneseq
        %v7835 = vshrl.u32 %v7834, 7
        %v7836 = vsub.s32 0, %v7835
        %v7837 = vrot.slane %v7692, %v7836
        %v7838 = vlaneseq
        %v7839 = vshrl.u32 %v7838, 7
        %v7840 = vsub.s32 0, %v7839
        %v7841 = vrot.slane %v7716, %v7840
        %v7842 = vlaneseq
        %v7843 = vshrl.u32 %v7842, 7
        %v7844 = vsub.s32 0, %v7843
        %v7845 = vrot.slane %v7730, %v7844
        %v7846 = vlaneseq
        %v7847 = vshrl.u32 %v7846, 7
        %v7848 = vsub.s32 0, %v7847
        %v7849 = vrot.slane %v7738, %v7848
        %v7850 = vlaneseq
        %v7851 = vshrl.u32 %v7850, 7
        %v7852 = vsub.s32 0, %v7851
        %v7853 = vrot.slane %v7740, %v7852
        %v7854 = vlaneseq
        %v7855 = vshrl.u32 %v7854, 7
        %v7856 = vsub.s32 0, %v7855
        %v7857 = vrot.slane %v7723, %v7856
        %v7858 = vlaneseq
        %v7859 = vshrl.u32 %v7858, 7
        %v7860 = vsub.s32 0, %v7859
        %v7861 = vrot.slane %v7737, %v7860
        %v7862 = vlaneseq
        %v7863 = vshrl.u32 %v7862, 7
        %v7864 = vsub.s32 0, %v7863
        %v7865 = vrot.slane %v7739, %v7864
        %v7866 = vlaneseq
        %v7867 = vshrl.u32 %v7866, 7
        %v7868 = vsub.s32 0, %v7867
        %v7869 = vrot.slane %v7741, %v7868
        %7870 = vset.pattern.permute.xlu0 0
        %7871 = vperm.xlu0 %7870, %v7745
        %v7872 = vpop.permute.xlu0 %7871
        %7874 = vset.pattern.permute.xlu0 0
        %7875 = vperm.xlu0 %7874, %v7749
        %v7876 = vpop.permute.xlu0 %7875
        %7878 = vset.pattern.permute.xlu0 0
        %7879 = vperm.xlu0 %7878, %v7753
        %v7880 = vpop.permute.xlu0 %7879
        %7882 = vset.pattern.permute.xlu0 0
        %7883 = vperm.xlu0 %7882, %v7757
        %v7884 = vpop.permute.xlu0 %7883
        %7886 = vset.pattern.permute.xlu0 0
        %7887 = vperm.xlu0 %7886, %v7761
        %v7888 = vpop.permute.xlu0 %7887
        %7890 = vset.pattern.permute.xlu0 0
        %7891 = vperm.xlu0 %7890, %v7765
        %v7892 = vpop.permute.xlu0 %7891
        %7894 = vset.pattern.permute.xlu0 0
        %7895 = vperm.xlu0 %7894, %v7769
        %v7896 = vpop.permute.xlu0 %7895
        %7898 = vset.pattern.permute.xlu0 0
        %7899 = vperm.xlu0 %7898, %v7773
        %v7900 = vpop.permute.xlu0 %7899
        %7902 = vset.pattern.permute.xlu0 0
        %7903 = vperm.xlu0 %7902, %v7777
        %v7904 = vpop.permute.xlu0 %7903
        %7906 = vset.pattern.permute.xlu0 0
        %7907 = vperm.xlu0 %7906, %v7781
        %v7908 = vpop.permute.xlu0 %7907
        %7910 = vset.pattern.permute.xlu0 0
        %7911 = vperm.xlu0 %7910, %v7785
        %v7912 = vpop.permute.xlu0 %7911
        %7914 = vset.pattern.permute.xlu0 0
        %7915 = vperm.xlu0 %7914, %v7789
        %v7916 = vpop.permute.xlu0 %7915
        %7918 = vset.pattern.permute.xlu0 0
        %7919 = vperm.xlu0 %7918, %v7793
        %v7920 = vpop.permute.xlu0 %7919
        %7922 = vset.pattern.permute.xlu0 0
        %7923 = vperm.xlu0 %7922, %v7797
        %v7924 = vpop.permute.xlu0 %7923
        %7926 = vset.pattern.permute.xlu0 0
        %7927 = vperm.xlu0 %7926, %v7801
        %v7928 = vpop.permute.xlu0 %7927
        %7930 = vset.pattern.permute.xlu0 0
        %7931 = vperm.xlu0 %7930, %v7805
        %v7932 = vpop.permute.xlu0 %7931
        %7934 = vset.pattern.permute.xlu0 0
        %7935 = vperm.xlu0 %7934, %v7809
        %v7936 = vpop.permute.xlu0 %7935
        %7938 = vset.pattern.permute.xlu0 0
        %7939 = vperm.xlu0 %7938, %v7813
        %v7940 = vpop.permute.xlu0 %7939
        %7942 = vset.pattern.permute.xlu0 0
        %7943 = vperm.xlu0 %7942, %v7817
        %v7944 = vpop.permute.xlu0 %7943
        %7946 = vset.pattern.permute.xlu0 0
        %7947 = vperm.xlu0 %7946, %v7821
        %v7948 = vpop.permute.xlu0 %7947
        %7950 = vset.pattern.permute.xlu0 0
        %7951 = vperm.xlu0 %7950, %v7825
        %v7952 = vpop.permute.xlu0 %7951
        %7954 = vset.pattern.permute.xlu0 0
        %7955 = vperm.xlu0 %7954, %v7829
        %v7956 = vpop.permute.xlu0 %7955
        %7958 = vset.pattern.permute.xlu0 0
        %7959 = vperm.xlu0 %7958, %v7833
        %v7960 = vpop.permute.xlu0 %7959
        %7962 = vset.pattern.permute.xlu0 0
        %7963 = vperm.xlu0 %7962, %v7837
        %v7964 = vpop.permute.xlu0 %7963
        %7966 = vset.pattern.permute.xlu0 0
        %7967 = vperm.xlu0 %7966, %v7841
        %v7968 = vpop.permute.xlu0 %7967
        %7970 = vset.pattern.permute.xlu0 0
        %7971 = vperm.xlu0 %7970, %v7845
        %v7972 = vpop.permute.xlu0 %7971
        %7974 = vset.pattern.permute.xlu0 0
        %7975 = vperm.xlu0 %7974, %v7849
        %v7976 = vpop.permute.xlu0 %7975
        %7978 = vset.pattern.permute.xlu0 0
        %7979 = vperm.xlu0 %7978, %v7853
        %v7980 = vpop.permute.xlu0 %7979
        %7982 = vset.pattern.permute.xlu0 0
        %7983 = vperm.xlu0 %7982, %v7857
        %v7984 = vpop.permute.xlu0 %7983
        %7986 = vset.pattern.permute.xlu0 0
        %7987 = vperm.xlu0 %7986, %v7861
        %v7988 = vpop.permute.xlu0 %7987
        %7990 = vset.pattern.permute.xlu0 0
        %7991 = vperm.xlu0 %7990, %v7865
        %v7992 = vpop.permute.xlu0 %7991
        %7994 = vset.pattern.permute.xlu0 0
        %7995 = vperm.xlu0 %7994, %v7869
        %v7996 = vpop.permute.xlu0 %7995
        %v7998 = vmul.f32 %v7020, %v7872
        %v7999 = vmul.f32 %v7021, %v7876
        %v8000 = vmul.f32 %v7022, %v7880
        %v8001 = vmul.f32 %v7023, %v7884
        %v8002 = vmul.f32 %v7024, %v7888
        %v8003 = vmul.f32 %v7025, %v7892
        %v8004 = vmul.f32 %v7026, %v7896
        %v8005 = vmul.f32 %v7027, %v7900
        %v8006 = vmul.f32 %v7028, %v7904
        %v8007 = vmul.f32 %v7029, %v7908
        %v8008 = vmul.f32 %v7030, %v7912
        %v8009 = vmul.f32 %v7031, %v7916
        %v8010 = vmul.f32 %v7032, %v7920
        %v8011 = vmul.f32 %v7033, %v7924
        %v8012 = vmul.f32 %v7034, %v7928
        %v8013 = vmul.f32 %v7035, %v7932
        %v8014 = vmul.f32 %v7036, %v7936
        %v8015 = vmul.f32 %v7037, %v7940
        %v8016 = vmul.f32 %v7038, %v7944
        %v8017 = vmul.f32 %v7039, %v7948
        %v8018 = vmul.f32 %v7040, %v7952
        %v8019 = vmul.f32 %v7041, %v7956
        %v8020 = vmul.f32 %v7042, %v7960
        %v8021 = vmul.f32 %v7043, %v7964
        %v8022 = vmul.f32 %v7044, %v7968
        %v8023 = vmul.f32 %v7045, %v7972
        %v8024 = vmul.f32 %v7046, %v7976
        %v8025 = vmul.f32 %v7047, %v7980
        %v8026 = vmul.f32 %v7048, %v7984
        %v8027 = vmul.f32 %v7049, %v7988
        %v8028 = vmul.f32 %v7050, %v7992
        %v8029 = vmul.f32 %v7051, %v7996
        %v8030 = vadd.f32 %v7998, %v7020
        %v8031 = vadd.f32 %v7999, %v7021
        %v8032 = vadd.f32 %v8000, %v7022
        %v8033 = vadd.f32 %v8001, %v7023
        %v8034 = vadd.f32 %v8002, %v7024
        %v8035 = vadd.f32 %v8003, %v7025
        %v8036 = vadd.f32 %v8004, %v7026
        %v8037 = vadd.f32 %v8005, %v7027
        %v8038 = vadd.f32 %v8006, %v7028
        %v8039 = vadd.f32 %v8007, %v7029
        %v8040 = vadd.f32 %v8008, %v7030
        %v8041 = vadd.f32 %v8009, %v7031
        %v8042 = vadd.f32 %v8010, %v7032
        %v8043 = vadd.f32 %v8011, %v7033
        %v8044 = vadd.f32 %v8012, %v7034
        %v8045 = vadd.f32 %v8013, %v7035
        %v8046 = vadd.f32 %v8014, %v7036
        %v8047 = vadd.f32 %v8015, %v7037
        %v8048 = vadd.f32 %v8016, %v7038
        %v8049 = vadd.f32 %v8017, %v7039
        %v8050 = vadd.f32 %v8018, %v7040
        %v8051 = vadd.f32 %v8019, %v7041
        %v8052 = vadd.f32 %v8020, %v7042
        %v8053 = vadd.f32 %v8021, %v7043
        %v8054 = vadd.f32 %v8022, %v7044
        %v8055 = vadd.f32 %v8023, %v7045
        %v8056 = vadd.f32 %v8024, %v7046
        %v8057 = vadd.f32 %v8025, %v7047
        %v8058 = vadd.f32 %v8026, %v7048
        %v8059 = vadd.f32 %v8027, %v7049
        %v8060 = vadd.f32 %v8028, %v7050
        %v8061 = vadd.f32 %v8029, %v7051
        %v8062 = vmax.f32 %v8030, 0.0
        %v8063 = vmax.f32 %v8031, 0.0
        %v8064 = vmax.f32 %v8032, 0.0
        %v8065 = vmax.f32 %v8033, 0.0
        %v8066 = vmax.f32 %v8034, 0.0
        %v8067 = vmax.f32 %v8035, 0.0
        %v8068 = vmax.f32 %v8036, 0.0
        %v8069 = vmax.f32 %v8037, 0.0
        %v8070 = vmax.f32 %v8038, 0.0
        %v8071 = vmax.f32 %v8039, 0.0
        %v8072 = vmax.f32 %v8040, 0.0
        %v8073 = vmax.f32 %v8041, 0.0
        %v8074 = vmax.f32 %v8042, 0.0
        %v8075 = vmax.f32 %v8043, 0.0
        %v8076 = vmax.f32 %v8044, 0.0
        %v8077 = vmax.f32 %v8045, 0.0
        %v8078 = vmax.f32 %v8046, 0.0
        %v8079 = vmax.f32 %v8047, 0.0
        %v8080 = vmax.f32 %v8048, 0.0
        %v8081 = vmax.f32 %v8049, 0.0
        %v8082 = vmax.f32 %v8050, 0.0
        %v8083 = vmax.f32 %v8051, 0.0
        %v8084 = vmax.f32 %v8052, 0.0
        %v8085 = vmax.f32 %v8053, 0.0
        %v8086 = vmax.f32 %v8054, 0.0
        %v8087 = vmax.f32 %v8055, 0.0
        %v8088 = vmax.f32 %v8056, 0.0
        %v8089 = vmax.f32 %v8057, 0.0
        %v8090 = vmax.f32 %v8058, 0.0
        %v8091 = vmax.f32 %v8059, 0.0
        %v8092 = vmax.f32 %v8060, 0.0
        %v8093 = vmax.f32 %v8061, 0.0
        %8094 = vst [vmem:[%s467] sm:$0xff] %v8062
        %8095 = vst [vmem:[%s467 + $0x8] sm:$0xff] %v8063
        %8096 = vst [vmem:[%s467 + $0x10] sm:$0xff] %v8064
        %8097 = vst [vmem:[%s467 + $0x18] sm:$0xff] %v8065
        %8098 = vst [vmem:[%s467 + $0x20] sm:$0xff] %v8066
        %8099 = vst [vmem:[%s467 + $0x28] sm:$0xff] %v8067
        %8100 = vst [vmem:[%s467 + $0x30] sm:$0xff] %v8068
        %8101 = vst [vmem:[%s467 + $0x38] sm:$0xff] %v8069
        %8102 = vst [vmem:[%s467 + $0x40] sm:$0xff] %v8070
        %8103 = vst [vmem:[%s467 + $0x48] sm:$0xff] %v8071
        %8104 = vst [vmem:[%s467 + $0x50] sm:$0xff] %v8072
        %8105 = vst [vmem:[%s467 + $0x58] sm:$0xff] %v8073
        %8106 = vst [vmem:[%s467 + $0x60] sm:$0xff] %v8074
        %8107 = vst [vmem:[%s467 + $0x68] sm:$0xff] %v8075
        %8108 = vst [vmem:[%s467 + $0x70] sm:$0xff] %v8076
        %8109 = vst [vmem:[%s467 + $0x78] sm:$0xff] %v8077
        %8110 = vst [vmem:[%s467 + $0x80] sm:$0xff] %v8078
        %8111 = vst [vmem:[%s467 + $0x88] sm:$0xff] %v8079
        %8112 = vst [vmem:[%s467 + $0x90] sm:$0xff] %v8080
        %8113 = vst [vmem:[%s467 + $0x98] sm:$0xff] %v8081
        %8114 = vst [vmem:[%s467 + $0xa0] sm:$0xff] %v8082
        %8115 = vst [vmem:[%s467 + $0xa8] sm:$0xff] %v8083
        %8116 = vst [vmem:[%s467 + $0xb0] sm:$0xff] %v8084
        %8117 = vst [vmem:[%s467 + $0xb8] sm:$0xff] %v8085
        %8118 = vst [vmem:[%s467 + $0xc0] sm:$0xff] %v8086
        %8119 = vst [vmem:[%s467 + $0xc8] sm:$0xff] %v8087
        %8120 = vst [vmem:[%s467 + $0xd0] sm:$0xff] %v8088
        %8121 = vst [vmem:[%s467 + $0xd8] sm:$0xff] %v8089
        %8122 = vst [vmem:[%s467 + $0xe0] sm:$0xff] %v8090
        %8123 = vst [vmem:[%s467 + $0xe8] sm:$0xff] %v8091
        %8124 = vst [vmem:[%s467 + $0xf0] sm:$0xff] %v8092
        %8125 = vst [vmem:[%s467 + $0xf8] sm:$0xff] %v8093
        %s8126 = sand.u32 %s342, 1
        %s8127 = scalar_lea.sflag [#allocation5], %s8126
        %s8128 = sand.u32 %s342, 1
        %s8129 = smul.addr %s8128, 256
        %s8130 = scalar_lea.vmem [#allocation4], %s8129
        // Predicated region
        $region77: #{tpu_custom_call.1} parent=75 // pred_check
          %p8131 = pneg %p352
        $region78: #{tpu_custom_call.1} parent=75 // pred_check_branch
          %8133 = sbr.rel (%p8131) target = $region80
        $region79: #{tpu_custom_call.1} parent=75 // pred_region
          %s8135 = ssub.s32 4096, 4096
          %8136 = vsyncadd %s8127, %s8135
          %s8137 = smul.addr %s35, 32
          %s8138 = smul.addr %s8137, 128
          %s8139 = scalar_lea.hbm %s15, %s8138
          %s8140 = sshll.u32 %s8130, 4
          %s8141 = int_to_ptr.vmem [resolvable:$true] %s8140
          %8146 = dma.vmem_to_hbm [thread:$0]  %s8141, 4096, %s8139, %s8127, 128, 128, 8
        $region80: #{tpu_custom_call.1} parent=75 // pred_fallthru
          _
      $region76: #{tpu_custom_call.1} parent=5 // pred_fallthru
        _
      %p8147 = scmp.le.s32.totalorder 2, %s30
      // Predicated region
      $region81: #{tpu_custom_call.1} parent=5 // pred_check
        %p8148 = pneg %p8147
      $region82: #{tpu_custom_call.1} parent=5 // pred_check_branch
        %8150 = sbr.rel (%p8148) target = $region84
      $region83: #{tpu_custom_call.1} parent=5 // pred_region
        %s8151 = ssub.s32 %s30, 2
        // Predicated region
        $region85: #{tpu_custom_call.1} parent=83 // pred_check
          %p8152 = pneg %p358
        $region86: #{tpu_custom_call.1} parent=83 // pred_check_branch
          %8154 = sbr.rel (%p8152) target = $region88
        $region87: #{tpu_custom_call.1} parent=83 // pred_region
          %s8155 = sand.u32 %s343, 1
          %s8156 = scalar_lea.sflag [#allocation5], %s8155
          %s8157 = sand.u32 %s343, 1
          %s8158 = smul.addr %s8157, 256
          %s8159 = scalar_lea.vmem [#allocation4], %s8158
          %8160 = dma.done %s8156, 4096
        $region88: #{tpu_custom_call.1} parent=83 // pred_fallthru
          _
      $region84: #{tpu_custom_call.1} parent=5 // pred_fallthru
        _
    $region6: #{tpu_custom_call.1} parent=1 // loop_footer
      %s34 = sadd.s32 1, %s30
    $region7: #{tpu_custom_call.1} parent=1 // loop_footer_branch
      %29 = sbr.rel target = $region3
    $region8: #{tpu_custom_call.1} parent=1 // loop_exit
      _
    %8161 = vsyncpa [#allocation5], 1
    %s8162 = scalar_lea.sflag [#allocation5], 1
    %8163 = vsyncpa %s8162, 1

</llo_original>
